<compile_context>
chip_gen: v5e
topology: v5e:2x2
jax: 0.10.0
libtpu: 0.0.40
codegen_flags: <defaults>
</compile_context>

<pallas_src>
import jax
import jax.numpy as jnp
from jax.experimental import pallas as pl
from jax.experimental.pallas import tpu as pltpu


# ----------------------------------------------------------------------------
# Kernel body (shared by the 1-D and 2-D grid variants).
# ----------------------------------------------------------------------------
def generator_kernel(x_ref,
                     w1_ref, b1_ref,
                     w2_ref, b2_ref,
                     w3_ref, b3_ref,
                     w4_ref, b4_ref,
                     o_ref):
    # Layer 1: Linear(128[padded from 100] -> 256) + ReLU  (bf16 MXU, f32 acc)
    h = jnp.dot(x_ref[...], w1_ref[...], preferred_element_type=jnp.float32)
    h = jnp.maximum(h + b1_ref[...], 0.0)

    # Layer 2: Linear(256 -> 512) + ReLU
    h = jnp.dot(h.astype(jnp.bfloat16), w2_ref[...],
                preferred_element_type=jnp.float32)
    h = jnp.maximum(h + b2_ref[...], 0.0)

    # Layer 3: Linear(512 -> 1024) + ReLU
    h = jnp.dot(h.astype(jnp.bfloat16), w3_ref[...],
                preferred_element_type=jnp.float32)
    h = jnp.maximum(h + b3_ref[...], 0.0)

    # Layer 4: Linear(1024 -> 2048 or a 1024-wide half of it) + Tanh (EUP)
    h = jnp.dot(h.astype(jnp.bfloat16), w4_ref[...],
                preferred_element_type=jnp.float32)
    o_ref[...] = jnp.tanh(h + b4_ref[...])


# ----------------------------------------------------------------------------
# Helpers
# ----------------------------------------------------------------------------
def _round_up(x, m):
    return (x + m - 1) // m * m


_K_PAD = 128        # latent dim padded 100 -> 128 (exact: zero rows in w1)
_N_OUT = 2048


def _is_two_core_chip():
    """True on chips with 2 TensorCores presented per device (v7x)."""
    try:
        kind = jax.devices()[0].device_kind.lower()
    except Exception:
        return False
    return ("v7" in kind) or ("7x" in kind)


def prepare_params(params):
    """One-time preprocessing of f32 params (done OUTSIDE the per-call path).

    params: (w1,b1,w2,b2,w3,b3,w4,b4) with weights laid out (in, out), biases
    (1, out).  Returns weights zero-padded (w1: 100->128 rows) and cast to
    bf16; biases stay f32.
    """
    w1, b1, w2, b2, w3, b3, w4, b4 = params
    assert w1.shape == (100, 256)
    w1_p = jnp.zeros((_K_PAD, 256), w1.dtype).at[:100, :].set(w1)
    return (w1_p.astype(jnp.bfloat16), b1.astype(jnp.float32),
            w2.astype(jnp.bfloat16), b2.astype(jnp.float32),
            w3.astype(jnp.bfloat16), b3.astype(jnp.float32),
            w4.astype(jnp.bfloat16), b4.astype(jnp.float32))


def _call_generator(x_bf, prep, *, tb, nsplit, core_parallel):
    """Build and invoke the pallas_call for a given N-split configuration."""
    w1, b1, w2, b2, w3, b3, w4, b4 = prep
    Bp, Kp = x_bf.shape
    nb = Bp // tb
    TN = _N_OUT // nsplit

    if nsplit == 1:
        grid = (nb,)
        x_spec = pl.BlockSpec((tb, Kp), lambda i: (i, 0))

        def const(shape):
            return pl.BlockSpec(shape, lambda i: (0, 0))

        w4_spec = const((1024, TN))
        b4_spec = const((1, TN))
        out_spec = pl.BlockSpec((tb, TN), lambda i: (i, 0))
        dims = (pltpu.PARALLEL,)
    else:
        grid = (nsplit, nb)
        x_spec = pl.BlockSpec((tb, Kp), lambda j, i: (i, 0))

        def const(shape):
            return pl.BlockSpec(shape, lambda j, i: (0, 0))

        w4_spec = pl.BlockSpec((1024, TN), lambda j, i: (0, j))
        b4_spec = pl.BlockSpec((1, TN), lambda j, i: (0, j))
        out_spec = pl.BlockSpec((tb, TN), lambda j, i: (i, j))
        dims = ((pltpu.CORE_PARALLEL if core_parallel else pltpu.PARALLEL),
                pltpu.PARALLEL)

    in_specs = [
        x_spec,                  # x tile
        const((Kp, 256)),        # w1 (resident)
        const((1, 256)),         # b1
        const((256, 512)),       # w2 (resident)
        const((1, 512)),         # b2
        const((512, 1024)),      # w3 (resident)
        const((1, 1024)),        # b3
        w4_spec,                 # w4 (full or per-core half)
        b4_spec,                 # b4
    ]

    # Advisory cost estimate (per call, padded shapes).
    mac = Kp * 256 + 256 * 512 + 512 * 1024 + 1024 * _N_OUT
    w_bytes = 2 * mac                               # bf16 weights
    b_bytes = 4 * (256 + 512 + 1024 + _N_OUT)       # f32 biases
    cost = pl.CostEstimate(
        flops=2 * Bp * mac,
        transcendentals=Bp * _N_OUT,
        bytes_accessed=w_bytes + b_bytes + Bp * Kp * 2 + Bp * _N_OUT * 4,
    )

    return pl.pallas_call(
        generator_kernel,
        out_shape=jax.ShapeDtypeStruct((Bp, _N_OUT), jnp.float32),
        grid=grid,
        in_specs=in_specs,
        out_specs=out_spec,
        compiler_params=pltpu.CompilerParams(
            dimension_semantics=dims,
            vmem_limit_bytes=32 << 20,
        ),
        cost_estimate=cost,
    )(x_bf, w1, b1, w2, b2, w3, b3, w4, b4)


def generator_forward(x, prep_params):
    """x: (B, 100) float32.  prep_params: output of prepare_params()."""
    B, K = x.shape
    assert K == 100

    # Batch tile: multiple of 16 (dense bf16 sublane packing), capped at 256.
    if B <= 256:
        tb = _round_up(B, 16)
    else:
        tb = 256
    Bp = _round_up(B, tb)

    # Only per-call input prep: zero-pad latent 100 -> 128 and batch -> Bp,
    # cast the (tiny) input to bf16.  Weights were prepared once up front.
    x_p = jnp.zeros((Bp, _K_PAD), x.dtype).at[:B, :K].set(x)
    x_bf = x_p.astype(jnp.bfloat16)

    if _is_two_core_chip():
        # v7x: split layer-4 output across the two TensorCores so each core
        # streams only its half of w4.  Fall back to the single-core path if
        # the CORE_PARALLEL configuration is rejected.
        try:
            out = _call_generator(x_bf, prep_params, tb=tb, nsplit=2,
                                  core_parallel=True)
        except Exception:
            out = _call_generator(x_bf, prep_params, tb=tb, nsplit=1,
                                  core_parallel=False)
    else:
        # v5e / v6e: single TensorCore -> keep all weights resident, no split.
        out = _call_generator(x_bf, prep_params, tb=tb, nsplit=1,
                              core_parallel=False)

    return out[:B]


# ----------------------------------------------------------------------------
# Init + reference
# ----------------------------------------------------------------------------
def init_generator_params(key):
    """Deterministic PyTorch-style (Kaiming-uniform) init for the 4 linears."""
    dims = [(100, 256), (256, 512), (512, 1024), (1024, 2048)]
    keys = jax.random.split(key, 2 * len(dims))
    params = []
    for li, (fan_in, fan_out) in enumerate(dims):
        bound = 1.0 / (fan_in ** 0.5)
        w = jax.random.uniform(keys[2 * li], (fan_in, fan_out),
                               minval=-bound, maxval=bound, dtype=jnp.float32)
        b = jax.random.uniform(keys[2 * li + 1], (1, fan_out),
                               minval=-bound, maxval=bound, dtype=jnp.float32)
        params += [w, b]
    return tuple(params)


def _reference_forward_bf16(x, params):
    """Pure-JAX reference with the same bf16 weight/activation quantization."""
    w1, b1, w2, b2, w3, b3, w4, b4 = params
    bf = jnp.bfloat16
    f32 = jnp.float32
    h = jnp.dot(x.astype(bf), w1.astype(bf), preferred_element_type=f32) + b1
    h = jnp.maximum(h, 0.0)
    h = jnp.dot(h.astype(bf), w2.astype(bf), preferred_element_type=f32) + b2
    h = jnp.maximum(h, 0.0)
    h = jnp.dot(h.astype(bf), w3.astype(bf), preferred_element_type=f32) + b3
    h = jnp.maximum(h, 0.0)
    h = jnp.dot(h.astype(bf), w4.astype(bf), preferred_element_type=f32) + b4
    return jnp.tanh(h)


if __name__ == "__main__":
    key = jax.random.PRNGKey(0)
    k_param, k_input = jax.random.split(key)

    params = init_generator_params(k_param)
    prep = prepare_params(params)          # one-time pad + bf16 cast
    prep = jax.block_until_ready(prep)

    # Latent input: small batch of 8 latent vectors of size 100.
    x = jax.random.normal(k_input, (8, 100), dtype=jnp.float32)

    out = generator_forward(x, prep)
    out = jax.block_until_ready(out)

    ref = jax.block_until_ready(_reference_forward_bf16(x, params))
    assert out.shape == (8, 2048)
    assert bool(jnp.all(jnp.isfinite(out)))
    assert jnp.allclose(out, ref, atol=2e-3, rtol=2e-3)

    print("KERNEL_OK")
</pallas_src>

<mosaic_0001>
module attributes {stable_mosaic.version = 11 : i64} {
  func.func @generator_kernel(%arg0: i32, %arg1: memref<16x128xbf16, #tpu.memory_space<vmem>>, %arg2: memref<128x256xbf16, #tpu.memory_space<vmem>>, %arg3: memref<1x256xf32, #tpu.memory_space<vmem>>, %arg4: memref<256x512xbf16, #tpu.memory_space<vmem>>, %arg5: memref<1x512xf32, #tpu.memory_space<vmem>>, %arg6: memref<512x1024xbf16, #tpu.memory_space<vmem>>, %arg7: memref<1x1024xf32, #tpu.memory_space<vmem>>, %arg8: memref<1024x2048xbf16, #tpu.memory_space<vmem>>, %arg9: memref<1x2048xf32, #tpu.memory_space<vmem>>, %arg10: memref<16x2048xf32, #tpu.memory_space<vmem>>) attributes {dimension_semantics = [#tpu.dimension_semantics<parallel>], iteration_bounds = array<i64: 1>, scalar_prefetch = 0 : i64, scratch_operands = 0 : i64, tpu.core_type = #tpu.core_type<tc>, window_params = [{transform_indices = @transform_0, window_bounds = array<i64: 16, 128>}, {pipeline_mode = #tpu.pipeline_mode<synchronous>, transform_indices = @transform_1, window_bounds = array<i64: 128, 256>}, {pipeline_mode = #tpu.pipeline_mode<synchronous>, transform_indices = @transform_2, window_bounds = array<i64: 1, 256>}, {pipeline_mode = #tpu.pipeline_mode<synchronous>, transform_indices = @transform_3, window_bounds = array<i64: 256, 512>}, {pipeline_mode = #tpu.pipeline_mode<synchronous>, transform_indices = @transform_4, window_bounds = array<i64: 1, 512>}, {pipeline_mode = #tpu.pipeline_mode<synchronous>, transform_indices = @transform_5, window_bounds = array<i64: 512, 1024>}, {pipeline_mode = #tpu.pipeline_mode<synchronous>, transform_indices = @transform_6, window_bounds = array<i64: 1, 1024>}, {pipeline_mode = #tpu.pipeline_mode<synchronous>, transform_indices = @transform_7, window_bounds = array<i64: 1024, 2048>}, {pipeline_mode = #tpu.pipeline_mode<synchronous>, transform_indices = @transform_8, window_bounds = array<i64: 1, 2048>}, {transform_indices = @transform_9, window_bounds = array<i64: 16, 2048>}]} {
    %c0 = arith.constant 0 : index
    %c0_0 = arith.constant 0 : index
    %0 = vector.load %arg1[%c0, %c0_0] : memref<16x128xbf16, #tpu.memory_space<vmem>>, vector<16x128xbf16>
    %c0_1 = arith.constant 0 : index
    %c0_2 = arith.constant 0 : index
    %1 = vector.load %arg2[%c0_1, %c0_2] : memref<128x256xbf16, #tpu.memory_space<vmem>>, vector<128x256xbf16>
    %cst = arith.constant dense<0.000000e+00> : vector<16x256xf32>
    %2 = tpu.matmul %0, %1, %cst {dimension_numbers = #tpu.dot_dimension_numbers<[1], [0], [0], [1], [0, 0, 1, 1], [], []>} : vector<16x128xbf16>, vector<128x256xbf16>, vector<16x256xf32> -> vector<16x256xf32>
    %c0_3 = arith.constant 0 : index
    %c0_4 = arith.constant 0 : index
    %3 = vector.load %arg3[%c0_3, %c0_4] : memref<1x256xf32, #tpu.memory_space<vmem>>, vector<1x256xf32>
    %4 = vector.broadcast %3 : vector<1x256xf32> to vector<16x256xf32>
    %5 = arith.addf %2, %4 : vector<16x256xf32>
    %cst_5 = arith.constant 0.000000e+00 : f32
    %6 = vector.broadcast %cst_5 : f32 to vector<16x256xf32>
    %7 = arith.maximumf %5, %6 : vector<16x256xf32>
    %8 = arith.truncf %7 : vector<16x256xf32> to vector<16x256xbf16>
    %c0_6 = arith.constant 0 : index
    %c0_7 = arith.constant 0 : index
    %9 = vector.load %arg4[%c0_6, %c0_7] : memref<256x512xbf16, #tpu.memory_space<vmem>>, vector<256x512xbf16>
    %cst_8 = arith.constant dense<0.000000e+00> : vector<16x512xf32>
    %10 = tpu.matmul %8, %9, %cst_8 {dimension_numbers = #tpu.dot_dimension_numbers<[1], [0], [0], [1], [0, 0, 1, 1], [], []>} : vector<16x256xbf16>, vector<256x512xbf16>, vector<16x512xf32> -> vector<16x512xf32>
    %c0_9 = arith.constant 0 : index
    %c0_10 = arith.constant 0 : index
    %11 = vector.load %arg5[%c0_9, %c0_10] : memref<1x512xf32, #tpu.memory_space<vmem>>, vector<1x512xf32>
    %12 = vector.broadcast %11 : vector<1x512xf32> to vector<16x512xf32>
    %13 = arith.addf %10, %12 : vector<16x512xf32>
    %cst_11 = arith.constant 0.000000e+00 : f32
    %14 = vector.broadcast %cst_11 : f32 to vector<16x512xf32>
    %15 = arith.maximumf %13, %14 : vector<16x512xf32>
    %16 = arith.truncf %15 : vector<16x512xf32> to vector<16x512xbf16>
    %c0_12 = arith.constant 0 : index
    %c0_13 = arith.constant 0 : index
    %17 = vector.load %arg6[%c0_12, %c0_13] : memref<512x1024xbf16, #tpu.memory_space<vmem>>, vector<512x1024xbf16>
    %cst_14 = arith.constant dense<0.000000e+00> : vector<16x1024xf32>
    %18 = tpu.matmul %16, %17, %cst_14 {dimension_numbers = #tpu.dot_dimension_numbers<[1], [0], [0], [1], [0, 0, 1, 1], [], []>} : vector<16x512xbf16>, vector<512x1024xbf16>, vector<16x1024xf32> -> vector<16x1024xf32>
    %c0_15 = arith.constant 0 : index
    %c0_16 = arith.constant 0 : index
    %19 = vector.load %arg7[%c0_15, %c0_16] : memref<1x1024xf32, #tpu.memory_space<vmem>>, vector<1x1024xf32>
    %20 = vector.broadcast %19 : vector<1x1024xf32> to vector<16x1024xf32>
    %21 = arith.addf %18, %20 : vector<16x1024xf32>
    %cst_17 = arith.constant 0.000000e+00 : f32
    %22 = vector.broadcast %cst_17 : f32 to vector<16x1024xf32>
    %23 = arith.maximumf %21, %22 : vector<16x1024xf32>
    %24 = arith.truncf %23 : vector<16x1024xf32> to vector<16x1024xbf16>
    %c0_18 = arith.constant 0 : index
    %c0_19 = arith.constant 0 : index
    %25 = vector.load %arg8[%c0_18, %c0_19] : memref<1024x2048xbf16, #tpu.memory_space<vmem>>, vector<1024x2048xbf16>
    %cst_20 = arith.constant dense<0.000000e+00> : vector<16x2048xf32>
    %26 = tpu.matmul %24, %25, %cst_20 {dimension_numbers = #tpu.dot_dimension_numbers<[1], [0], [0], [1], [0, 0, 1, 1], [], []>} : vector<16x1024xbf16>, vector<1024x2048xbf16>, vector<16x2048xf32> -> vector<16x2048xf32>
    %c0_21 = arith.constant 0 : index
    %c0_22 = arith.constant 0 : index
    %27 = vector.load %arg9[%c0_21, %c0_22] : memref<1x2048xf32, #tpu.memory_space<vmem>>, vector<1x2048xf32>
    %28 = vector.broadcast %27 : vector<1x2048xf32> to vector<16x2048xf32>
    %29 = arith.addf %26, %28 : vector<16x2048xf32>
    %30 = math.tanh %29 : vector<16x2048xf32>
    %c0_23 = arith.constant 0 : index
    %c0_24 = arith.constant 0 : index
    %31 = vector.load %arg10[%c0_23, %c0_24] : memref<16x2048xf32, #tpu.memory_space<vmem>>, vector<16x2048xf32>
    tpu.vector_store %arg10[%c0_23, %c0_24], %30 {strides = array<i32>} : memref<16x2048xf32, #tpu.memory_space<vmem>>, vector<16x2048xf32>,
    return
  }
  func.func @transform_0(%arg0: i32) -> (i32, i32) {
    %c0_i32 = arith.constant 0 : i32
    %c0_i32_0 = arith.constant 0 : i32
    return %arg0, %c0_i32 : i32, i32
  }
  func.func @transform_1(%arg0: i32) -> (i32, i32) {
    %c0_i32 = arith.constant 0 : i32
    %c0_i32_0 = arith.constant 0 : i32
    %c0_i32_1 = arith.constant 0 : i32
    return %c0_i32, %c0_i32_0 : i32, i32
  }
  func.func @transform_2(%arg0: i32) -> (i32, i32) {
    %c0_i32 = arith.constant 0 : i32
    %c0_i32_0 = arith.constant 0 : i32
    %c0_i32_1 = arith.constant 0 : i32
    return %c0_i32, %c0_i32_0 : i32, i32
  }
  func.func @transform_3(%arg0: i32) -> (i32, i32) {
    %c0_i32 = arith.constant 0 : i32
    %c0_i32_0 = arith.constant 0 : i32
    %c0_i32_1 = arith.constant 0 : i32
    return %c0_i32, %c0_i32_0 : i32, i32
  }
  func.func @transform_4(%arg0: i32) -> (i32, i32) {
    %c0_i32 = arith.constant 0 : i32
    %c0_i32_0 = arith.constant 0 : i32
    %c0_i32_1 = arith.constant 0 : i32
    return %c0_i32, %c0_i32_0 : i32, i32
  }
  func.func @transform_5(%arg0: i32) -> (i32, i32) {
    %c0_i32 = arith.constant 0 : i32
    %c0_i32_0 = arith.constant 0 : i32
    %c0_i32_1 = arith.constant 0 : i32
    return %c0_i32, %c0_i32_0 : i32, i32
  }
  func.func @transform_6(%arg0: i32) -> (i32, i32) {
    %c0_i32 = arith.constant 0 : i32
    %c0_i32_0 = arith.constant 0 : i32
    %c0_i32_1 = arith.constant 0 : i32
    return %c0_i32, %c0_i32_0 : i32, i32
  }
  func.func @transform_7(%arg0: i32) -> (i32, i32) {
    %c0_i32 = arith.constant 0 : i32
    %c0_i32_0 = arith.constant 0 : i32
    %c0_i32_1 = arith.constant 0 : i32
    return %c0_i32, %c0_i32_0 : i32, i32
  }
  func.func @transform_8(%arg0: i32) -> (i32, i32) {
    %c0_i32 = arith.constant 0 : i32
    %c0_i32_0 = arith.constant 0 : i32
    %c0_i32_1 = arith.constant 0 : i32
    return %c0_i32, %c0_i32_0 : i32, i32
  }
  func.func @transform_9(%arg0: i32) -> (i32, i32) {
    %c0_i32 = arith.constant 0 : i32
    %c0_i32_0 = arith.constant 0 : i32
    return %arg0, %c0_i32 : i32, i32
  }
}

</mosaic_0001>

<llo_original>
// kernel: tpu_custom_call.1
$region0: #{tpu_custom_call.1}
  #allocation0 [shape = 'u32[]', space=smem, size = 0x4, offset = 0x4, fixed_abs, tag = 'smem constant byte address 0x4 - core index']
  #allocation1 [shape = 'u32[72,128]{1,0:T(1,128)}', space=vmem, size = 0x9000, scoped, tag = 'internal scratch']
  %s0 = inlined_call_operand.hbm [shape: bf16[16,128], index: 0, kind: input, shape index: {}]
  %s1 = inlined_call_operand.hbm [shape: bf16[128,256], index: 1, kind: input, shape index: {}]
  %s2 = inlined_call_operand.hbm [shape: f32[1,256], index: 2, kind: input, shape index: {}]
  %s3 = inlined_call_operand.hbm [shape: bf16[256,512], index: 3, kind: input, shape index: {}]
  %s4 = inlined_call_operand.hbm [shape: f32[1,512], index: 4, kind: input, shape index: {}]
  %s5 = inlined_call_operand.hbm [shape: bf16[512,1024], index: 5, kind: input, shape index: {}]
  %s6 = inlined_call_operand.hbm [shape: f32[1,1024], index: 6, kind: input, shape index: {}]
  %s7 = inlined_call_operand.hbm [shape: bf16[1024,2048], index: 7, kind: input, shape index: {}]
  %s8 = inlined_call_operand.hbm [shape: f32[1,2048], index: 8, kind: input, shape index: {}]
  %s9 = inlined_call_operand.hbm [shape: f32[16,2048], index: 9, kind: output, shape index: {}]
  %s10 = sld [smem:[#allocation0]]
  $region82: #{tpu_custom_call.1} parent=0
    _
  %s12 = ssub.s32 1, %s10
  %s13 = scalar_select 0, %s12, %s10
  $region1: #{tpu_custom_call.1} parent=0
    #allocation2 [shape = 'u8[4096]{0}', space=vmem, size = 0x1000, scoped, tag = 'input window, operand 0, single buffered']
    #allocation3 [shape = 's32[1]{0}', space=sflag, size = 0x4, scoped, tag = 'scoped memory for tpu_custom_call.1']
    #allocation4 [shape = 's32[1]{0}', space=sflag, size = 0x4, scoped, tag = 'scoped memory for tpu_custom_call.1']
    #allocation5 [shape = 'u8[65536]{0}', space=vmem, size = 0x10000, scoped, tag = 'input window, operand 1, single buffered']
    #allocation6 [shape = 's32[1]{0}', space=sflag, size = 0x4, scoped, tag = 'scoped memory for tpu_custom_call.1']
    #allocation7 [shape = 'u8[1024]{0}', space=vmem, size = 0x400, scoped, tag = 'input window, operand 2, single buffered']
    #allocation8 [shape = 'u8[262144]{0}', space=vmem, size = 0x40000, scoped, tag = 'input window, operand 3, single buffered']
    #allocation9 [shape = 's32[1]{0}', space=sflag, size = 0x4, scoped, tag = 'scoped memory for tpu_custom_call.1']
    #allocation10 [shape = 'u8[2048]{0}', space=vmem, size = 0x800, scoped, tag = 'input window, operand 4, single buffered']
    #allocation11 [shape = 'u8[1048576]{0}', space=vmem, size = 0x100000, scoped, tag = 'input window, operand 5, single buffered']
    #allocation12 [shape = 's32[1]{0}', space=sflag, size = 0x4, scoped, tag = 'scoped memory for tpu_custom_call.1']
    #allocation13 [shape = 'u8[4096]{0}', space=vmem, size = 0x1000, scoped, tag = 'input window, operand 6, single buffered']
    #allocation14 [shape = 'u8[4194304]{0}', space=vmem, size = 0x400000, scoped, tag = 'input window, operand 7, single buffered']
    #allocation15 [shape = 's32[1]{0}', space=sflag, size = 0x4, scoped, tag = 'scoped memory for tpu_custom_call.1']
    #allocation16 [shape = 'u8[8192]{0}', space=vmem, size = 0x2000, scoped, tag = 'input window, operand 8, single buffered']
    #allocation17 [shape = 'u8[131072]{0}', space=vmem, size = 0x20000, scoped, tag = 'output window, operand 0, single buffered']
    %14 = vsyncpa [#allocation3], 0
    %15 = vsyncpa [#allocation6], 0
    %16 = vsyncpa [#allocation9], 0
    %17 = vsyncpa [#allocation12], 0
    %18 = vsyncpa [#allocation15], 0
    %19 = vsyncpa [#allocation4], 0
    // Predicated region
    $region2: #{tpu_custom_call.1} parent=1 // pred_check
      _
    $region3: #{tpu_custom_call.1} parent=1 // pred_check_branch
      %21 = sbr.rel (0) target = $region5
    $region4: #{tpu_custom_call.1} parent=1 // pred_region
      %23 = vsyncadd [#allocation3], 0
      %s24 = sshll.u32 %s0, 4
      %s25 = int_to_ptr.hbm [resolvable:$true] %s24
      %s26 = sshll.u32 [#allocation2], 4
      %s27 = int_to_ptr.vmem [resolvable:$true] %s26
      %32 = dma.hbm_to_vmem [thread:$0]  %s25, 128, %s27, [#allocation3], 64, 64, 4
    $region5: #{tpu_custom_call.1} parent=1 // pred_fallthru
      _
    // Predicated region
    $region6: #{tpu_custom_call.1} parent=1 // pred_check
      _
    $region7: #{tpu_custom_call.1} parent=1 // pred_check_branch
      %34 = sbr.rel (0) target = $region9
    $region8: #{tpu_custom_call.1} parent=1 // pred_region
      %36 = vsyncadd [#allocation6], 0
      %s37 = sshll.u32 %s1, 4
      %s38 = int_to_ptr.hbm [resolvable:$true] %s37
      %s39 = sshll.u32 [#allocation5], 4
      %s40 = int_to_ptr.vmem [resolvable:$true] %s39
      %45 = dma.hbm_to_vmem [thread:$0]  %s38, 2048, %s40, [#allocation6], 128, 128, 8
    $region9: #{tpu_custom_call.1} parent=1 // pred_fallthru
      _
    // Predicated region
    $region10: #{tpu_custom_call.1} parent=1 // pred_check
      _
    $region11: #{tpu_custom_call.1} parent=1 // pred_check_branch
      %47 = sbr.rel (0) target = $region13
    $region12: #{tpu_custom_call.1} parent=1 // pred_region
      %49 = vsyncadd [#allocation6], 0
      %s51 = sshll.u32 %s2, 4
      %s52 = int_to_ptr.hbm [resolvable:$true] %s51
      %s53 = sshll.u32 [#allocation7], 4
      %s54 = int_to_ptr.vmem [resolvable:$true] %s53
      %56 = dma.hbm_to_vmem [thread:$0]  %s52, 32, %s54, [#allocation6]
    $region13: #{tpu_custom_call.1} parent=1 // pred_fallthru
      _
    // Predicated region
    $region14: #{tpu_custom_call.1} parent=1 // pred_check
      _
    $region15: #{tpu_custom_call.1} parent=1 // pred_check_branch
      %58 = sbr.rel (0) target = $region17
    $region16: #{tpu_custom_call.1} parent=1 // pred_region
      %60 = vsyncadd [#allocation9], 0
      %s61 = sshll.u32 %s3, 4
      %s62 = int_to_ptr.hbm [resolvable:$true] %s61
      %s63 = sshll.u32 [#allocation8], 4
      %s64 = int_to_ptr.vmem [resolvable:$true] %s63
      %69 = dma.hbm_to_vmem [thread:$0]  %s62, 8192, %s64, [#allocation9], 256, 256, 16
    $region17: #{tpu_custom_call.1} parent=1 // pred_fallthru
      _
    // Predicated region
    $region18: #{tpu_custom_call.1} parent=1 // pred_check
      _
    $region19: #{tpu_custom_call.1} parent=1 // pred_check_branch
      %71 = sbr.rel (0) target = $region21
    $region20: #{tpu_custom_call.1} parent=1 // pred_region
      %73 = vsyncadd [#allocation9], 0
      %s75 = sshll.u32 %s4, 4
      %s76 = int_to_ptr.hbm [resolvable:$true] %s75
      %s77 = sshll.u32 [#allocation10], 4
      %s78 = int_to_ptr.vmem [resolvable:$true] %s77
      %80 = dma.hbm_to_vmem [thread:$0]  %s76, 64, %s78, [#allocation9]
    $region21: #{tpu_custom_call.1} parent=1 // pred_fallthru
      _
    // Predicated region
    $region22: #{tpu_custom_call.1} parent=1 // pred_check
      _
    $region23: #{tpu_custom_call.1} parent=1 // pred_check_branch
      %82 = sbr.rel (0) target = $region25
    $region24: #{tpu_custom_call.1} parent=1 // pred_region
      %84 = vsyncadd [#allocation12], 0
      %s85 = sshll.u32 %s5, 4
      %s86 = int_to_ptr.hbm [resolvable:$true] %s85
      %s87 = sshll.u32 [#allocation11], 4
      %s88 = int_to_ptr.vmem [resolvable:$true] %s87
      %93 = dma.hbm_to_vmem [thread:$0]  %s86, 32768, %s88, [#allocation12], 512, 512, 32
    $region25: #{tpu_custom_call.1} parent=1 // pred_fallthru
      _
    // Predicated region
    $region26: #{tpu_custom_call.1} parent=1 // pred_check
      _
    $region27: #{tpu_custom_call.1} parent=1 // pred_check_branch
      %95 = sbr.rel (0) target = $region29
    $region28: #{tpu_custom_call.1} parent=1 // pred_region
      %97 = vsyncadd [#allocation12], 0
      %s99 = sshll.u32 %s6, 4
      %s100 = int_to_ptr.hbm [resolvable:$true] %s99
      %s101 = sshll.u32 [#allocation13], 4
      %s102 = int_to_ptr.vmem [resolvable:$true] %s101
      %104 = dma.hbm_to_vmem [thread:$0]  %s100, 128, %s102, [#allocation12]
    $region29: #{tpu_custom_call.1} parent=1 // pred_fallthru
      _
    // Predicated region
    $region30: #{tpu_custom_call.1} parent=1 // pred_check
      _
    $region31: #{tpu_custom_call.1} parent=1 // pred_check_branch
      %106 = sbr.rel (0) target = $region33
    $region32: #{tpu_custom_call.1} parent=1 // pred_region
      %108 = vsyncadd [#allocation15], 0
      %s109 = sshll.u32 %s7, 4
      %s110 = int_to_ptr.hbm [resolvable:$true] %s109
      %s111 = sshll.u32 [#allocation14], 4
      %s112 = int_to_ptr.vmem [resolvable:$true] %s111
      %117 = dma.hbm_to_vmem [thread:$0]  %s110, 131072, %s112, [#allocation15], 1024, 1024, 64
    $region33: #{tpu_custom_call.1} parent=1 // pred_fallthru
      _
    // Predicated region
    $region34: #{tpu_custom_call.1} parent=1 // pred_check
      _
    $region35: #{tpu_custom_call.1} parent=1 // pred_check_branch
      %119 = sbr.rel (0) target = $region37
    $region36: #{tpu_custom_call.1} parent=1 // pred_region
      %121 = vsyncadd [#allocation15], 0
      %s123 = sshll.u32 %s8, 4
      %s124 = int_to_ptr.hbm [resolvable:$true] %s123
      %s125 = sshll.u32 [#allocation16], 4
      %s126 = int_to_ptr.vmem [resolvable:$true] %s125
      %128 = dma.hbm_to_vmem [thread:$0]  %s124, 256, %s126, [#allocation15]
    $region37: #{tpu_custom_call.1} parent=1 // pred_fallthru
      _
    // Predicated region
    $region38: #{tpu_custom_call.1} parent=1 // pred_check
      _
    $region39: #{tpu_custom_call.1} parent=1 // pred_check_branch
      %130 = sbr.rel (0) target = $region41
    $region40: #{tpu_custom_call.1} parent=1 // pred_region
      %132 = dma.done [#allocation3], 128
    $region41: #{tpu_custom_call.1} parent=1 // pred_fallthru
      _
    // Predicated region
    $region42: #{tpu_custom_call.1} parent=1 // pred_check
      _
    $region43: #{tpu_custom_call.1} parent=1 // pred_check_branch
      %134 = sbr.rel (0) target = $region45
    $region44: #{tpu_custom_call.1} parent=1 // pred_region
      %136 = dma.done [#allocation6], 2048
    $region45: #{tpu_custom_call.1} parent=1 // pred_fallthru
      _
    // Predicated region
    $region46: #{tpu_custom_call.1} parent=1 // pred_check
      _
    $region47: #{tpu_custom_call.1} parent=1 // pred_check_branch
      %138 = sbr.rel (0) target = $region49
    $region48: #{tpu_custom_call.1} parent=1 // pred_region
      %140 = dma.done [#allocation6], 32
    $region49: #{tpu_custom_call.1} parent=1 // pred_fallthru
      _
    // Predicated region
    $region50: #{tpu_custom_call.1} parent=1 // pred_check
      _
    $region51: #{tpu_custom_call.1} parent=1 // pred_check_branch
      %142 = sbr.rel (0) target = $region53
    $region52: #{tpu_custom_call.1} parent=1 // pred_region
      %144 = dma.done [#allocation9], 8192
    $region53: #{tpu_custom_call.1} parent=1 // pred_fallthru
      _
    // Predicated region
    $region54: #{tpu_custom_call.1} parent=1 // pred_check
      _
    $region55: #{tpu_custom_call.1} parent=1 // pred_check_branch
      %146 = sbr.rel (0) target = $region57
    $region56: #{tpu_custom_call.1} parent=1 // pred_region
      %148 = dma.done [#allocation9], 64
    $region57: #{tpu_custom_call.1} parent=1 // pred_fallthru
      _
    // Predicated region
    $region58: #{tpu_custom_call.1} parent=1 // pred_check
      _
    $region59: #{tpu_custom_call.1} parent=1 // pred_check_branch
      %150 = sbr.rel (0) target = $region61
    $region60: #{tpu_custom_call.1} parent=1 // pred_region
      %152 = dma.done [#allocation12], 32768
    $region61: #{tpu_custom_call.1} parent=1 // pred_fallthru
      _
    // Predicated region
    $region62: #{tpu_custom_call.1} parent=1 // pred_check
      _
    $region63: #{tpu_custom_call.1} parent=1 // pred_check_branch
      %154 = sbr.rel (0) target = $region65
    $region64: #{tpu_custom_call.1} parent=1 // pred_region
      %156 = dma.done [#allocation12], 128
    $region65: #{tpu_custom_call.1} parent=1 // pred_fallthru
      _
    // Predicated region
    $region66: #{tpu_custom_call.1} parent=1 // pred_check
      _
    $region67: #{tpu_custom_call.1} parent=1 // pred_check_branch
      %158 = sbr.rel (0) target = $region69
    $region68: #{tpu_custom_call.1} parent=1 // pred_region
      %160 = dma.done [#allocation15], 131072
    $region69: #{tpu_custom_call.1} parent=1 // pred_fallthru
      _
    // Predicated region
    $region70: #{tpu_custom_call.1} parent=1 // pred_check
      _
    $region71: #{tpu_custom_call.1} parent=1 // pred_check_branch
      %162 = sbr.rel (0) target = $region73
    $region72: #{tpu_custom_call.1} parent=1 // pred_region
      %164 = dma.done [#allocation15], 256
    $region73: #{tpu_custom_call.1} parent=1 // pred_fallthru
      _
    %v165 = vld [vmem:[#allocation2] sm:$0xf]
    %v166 = vld [vmem:[#allocation2 + $0x4] sm:$0xf]
    %v167 = vld [vmem:[#allocation5] sm:$0xff]
    %v168 = vld [vmem:[#allocation5 + $0x8] sm:$0xff]
    %v169 = vld [vmem:[#allocation5 + $0x10] sm:$0xff]
    %v170 = vld [vmem:[#allocation5 + $0x18] sm:$0xff]
    %v171 = vld [vmem:[#allocation5 + $0x20] sm:$0xff]
    %v172 = vld [vmem:[#allocation5 + $0x28] sm:$0xff]
    %v173 = vld [vmem:[#allocation5 + $0x30] sm:$0xff]
    %v174 = vld [vmem:[#allocation5 + $0x38] sm:$0xff]
    %v175 = vld [vmem:[#allocation5 + $0x40] sm:$0xff]
    %v176 = vld [vmem:[#allocation5 + $0x48] sm:$0xff]
    %v177 = vld [vmem:[#allocation5 + $0x50] sm:$0xff]
    %v178 = vld [vmem:[#allocation5 + $0x58] sm:$0xff]
    %v179 = vld [vmem:[#allocation5 + $0x60] sm:$0xff]
    %v180 = vld [vmem:[#allocation5 + $0x68] sm:$0xff]
    %v181 = vld [vmem:[#allocation5 + $0x70] sm:$0xff]
    %v182 = vld [vmem:[#allocation5 + $0x78] sm:$0xff]
    %v183 = vld [vmem:[#allocation7] sm:$0x3]
    %v185 = vperm.slane %v183, 0
    %v186 = vperm.slane %v183, 1
    %v191 = vunpack.c.l.b16 %v165
    %v192 = vunpack.c.l.b16 %v166
    %v193 = vpack.c.b16 %v192, %v191
    %v211 = vunpack.c.l.b16 %v167
    %v212 = vunpack.c.h.b16 %v167
    %v213 = vunpack.c.l.b16 %v168
    %v214 = vunpack.c.h.b16 %v168
    %v215 = vunpack.c.l.b16 %v169
    %v216 = vunpack.c.h.b16 %v169
    %v217 = vunpack.c.l.b16 %v170
    %v218 = vunpack.c.h.b16 %v170
    %v219 = vunpack.c.l.b16 %v171
    %v220 = vunpack.c.h.b16 %v171
    %v221 = vunpack.c.l.b16 %v172
    %v222 = vunpack.c.h.b16 %v172
    %v223 = vunpack.c.l.b16 %v173
    %v224 = vunpack.c.h.b16 %v173
    %v225 = vunpack.c.l.b16 %v174
    %v226 = vunpack.c.h.b16 %v174
    %v227 = vunpack.c.l.b16 %v175
    %v228 = vunpack.c.h.b16 %v175
    %v229 = vunpack.c.l.b16 %v176
    %v230 = vunpack.c.h.b16 %v176
    %v231 = vunpack.c.l.b16 %v177
    %v232 = vunpack.c.h.b16 %v177
    %v233 = vunpack.c.l.b16 %v178
    %v234 = vunpack.c.h.b16 %v178
    %v235 = vunpack.c.l.b16 %v179
    %v236 = vunpack.c.h.b16 %v179
    %v237 = vunpack.c.l.b16 %v180
    %v238 = vunpack.c.h.b16 %v180
    %v239 = vunpack.c.l.b16 %v181
    %v240 = vunpack.c.h.b16 %v181
    %v241 = vunpack.c.l.b16 %v182
    %v242 = vunpack.c.h.b16 %v182
    %v243 = vpack.c.b16 %v213, %v211
    %v244 = vpack.c.b16 %v214, %v212
    %v245 = vpack.c.b16 %v217, %v215
    %v246 = vpack.c.b16 %v218, %v216
    %v247 = vpack.c.b16 %v221, %v219
    %v248 = vpack.c.b16 %v222, %v220
    %v249 = vpack.c.b16 %v225, %v223
    %v250 = vpack.c.b16 %v226, %v224
    %v251 = vpack.c.b16 %v229, %v227
    %v252 = vpack.c.b16 %v230, %v228
    %v253 = vpack.c.b16 %v233, %v231
    %v254 = vpack.c.b16 %v234, %v232
    %v255 = vpack.c.b16 %v237, %v235
    %v256 = vpack.c.b16 %v238, %v236
    %v257 = vpack.c.b16 %v241, %v239
    %v258 = vpack.c.b16 %v242, %v240
    %275 = vmatpush.bf16.msra.mxu0 %v257
    %276 = vmatpush.bf16.msra.mxu0 %v255
    %277 = vmatpush.bf16.msra.mxu0 %v253
    %278 = vmatpush.bf16.msra.mxu0 %v251
    %279 = vmatpush.bf16.msra.mxu0 %v249
    %280 = vmatpush.bf16.msra.mxu0 %v247
    %281 = vmatpush.bf16.msra.mxu0 %v245
    %282 = vmatpush.bf16.msra.mxu0 %v243
    %283 = vmatmul.bf16.gmra.mxu0 %v193
    %v284 = vpop.f32.mrf.mxu0
    %v285 = vadd.f32 %v185, %v284
    %v286 = vpop.f32.mrf.mxu0
    %v287 = vadd.f32 %v185, %v286
    %288 = vdwg.mxu0
    %289 = vmatpush.bf16.msra.mxu0 %v258
    %290 = vmatpush.bf16.msra.mxu0 %v256
    %291 = vmatpush.bf16.msra.mxu0 %v254
    %292 = vmatpush.bf16.msra.mxu0 %v252
    %293 = vmatpush.bf16.msra.mxu0 %v250
    %294 = vmatpush.bf16.msra.mxu0 %v248
    %295 = vmatpush.bf16.msra.mxu0 %v246
    %296 = vmatpush.bf16.msra.mxu0 %v244
    %297 = vmatmul.bf16.gmra.mxu0 %v193
    %v298 = vpop.f32.mrf.mxu0
    %v299 = vadd.f32 %v186, %v298
    %v300 = vpop.f32.mrf.mxu0
    %v301 = vadd.f32 %v186, %v300
    %302 = vdwg.mxu0
    %v303 = vmax.f32 %v285, 0.0
    %v304 = vmax.f32 %v299, 0.0
    %v305 = vmax.f32 %v287, 0.0
    %v306 = vmax.f32 %v301, 0.0
    %v307 = vpack.c.bf16 %v305, %v303
    %v308 = vpack.c.bf16 %v306, %v304
    %v309 = vld [vmem:[#allocation8] sm:$0xff]
    %v310 = vld [vmem:[#allocation8 + $0x8] sm:$0xff]
    %v311 = vld [vmem:[#allocation8 + $0x10] sm:$0xff]
    %v312 = vld [vmem:[#allocation8 + $0x18] sm:$0xff]
    %v313 = vld [vmem:[#allocation8 + $0x20] sm:$0xff]
    %v314 = vld [vmem:[#allocation8 + $0x28] sm:$0xff]
    %v315 = vld [vmem:[#allocation8 + $0x30] sm:$0xff]
    %v316 = vld [vmem:[#allocation8 + $0x38] sm:$0xff]
    %v317 = vld [vmem:[#allocation8 + $0x40] sm:$0xff]
    %v318 = vld [vmem:[#allocation8 + $0x48] sm:$0xff]
    %v319 = vld [vmem:[#allocation8 + $0x50] sm:$0xff]
    %v320 = vld [vmem:[#allocation8 + $0x58] sm:$0xff]
    %v321 = vld [vmem:[#allocation8 + $0x60] sm:$0xff]
    %v322 = vld [vmem:[#allocation8 + $0x68] sm:$0xff]
    %v323 = vld [vmem:[#allocation8 + $0x70] sm:$0xff]
    %v324 = vld [vmem:[#allocation8 + $0x78] sm:$0xff]
    %v325 = vld [vmem:[#allocation8 + $0x80] sm:$0xff]
    %v326 = vld [vmem:[#allocation8 + $0x88] sm:$0xff]
    %v327 = vld [vmem:[#allocation8 + $0x90] sm:$0xff]
    %v328 = vld [vmem:[#allocation8 + $0x98] sm:$0xff]
    %v329 = vld [vmem:[#allocation8 + $0xa0] sm:$0xff]
    %v330 = vld [vmem:[#allocation8 + $0xa8] sm:$0xff]
    %v331 = vld [vmem:[#allocation8 + $0xb0] sm:$0xff]
    %v332 = vld [vmem:[#allocation8 + $0xb8] sm:$0xff]
    %v333 = vld [vmem:[#allocation8 + $0xc0] sm:$0xff]
    %v334 = vld [vmem:[#allocation8 + $0xc8] sm:$0xff]
    %v335 = vld [vmem:[#allocation8 + $0xd0] sm:$0xff]
    %v336 = vld [vmem:[#allocation8 + $0xd8] sm:$0xff]
    %v337 = vld [vmem:[#allocation8 + $0xe0] sm:$0xff]
    %v338 = vld [vmem:[#allocation8 + $0xe8] sm:$0xff]
    %v339 = vld [vmem:[#allocation8 + $0xf0] sm:$0xff]
    %v340 = vld [vmem:[#allocation8 + $0xf8] sm:$0xff]
    %v341 = vld [vmem:[#allocation8 + $0x100] sm:$0xff]
    %v342 = vld [vmem:[#allocation8 + $0x108] sm:$0xff]
    %v343 = vld [vmem:[#allocation8 + $0x110] sm:$0xff]
    %v344 = vld [vmem:[#allocation8 + $0x118] sm:$0xff]
    %v345 = vld [vmem:[#allocation8 + $0x120] sm:$0xff]
    %v346 = vld [vmem:[#allocation8 + $0x128] sm:$0xff]
    %v347 = vld [vmem:[#allocation8 + $0x130] sm:$0xff]
    %v348 = vld [vmem:[#allocation8 + $0x138] sm:$0xff]
    %v349 = vld [vmem:[#allocation8 + $0x140] sm:$0xff]
    %v350 = vld [vmem:[#allocation8 + $0x148] sm:$0xff]
    %v351 = vld [vmem:[#allocation8 + $0x150] sm:$0xff]
    %v352 = vld [vmem:[#allocation8 + $0x158] sm:$0xff]
    %v353 = vld [vmem:[#allocation8 + $0x160] sm:$0xff]
    %v354 = vld [vmem:[#allocation8 + $0x168] sm:$0xff]
    %v355 = vld [vmem:[#allocation8 + $0x170] sm:$0xff]
    %v356 = vld [vmem:[#allocation8 + $0x178] sm:$0xff]
    %v357 = vld [vmem:[#allocation8 + $0x180] sm:$0xff]
    %v358 = vld [vmem:[#allocation8 + $0x188] sm:$0xff]
    %v359 = vld [vmem:[#allocation8 + $0x190] sm:$0xff]
    %v360 = vld [vmem:[#allocation8 + $0x198] sm:$0xff]
    %v361 = vld [vmem:[#allocation8 + $0x1a0] sm:$0xff]
    %v362 = vld [vmem:[#allocation8 + $0x1a8] sm:$0xff]
    %v363 = vld [vmem:[#allocation8 + $0x1b0] sm:$0xff]
    %v364 = vld [vmem:[#allocation8 + $0x1b8] sm:$0xff]
    %v365 = vld [vmem:[#allocation8 + $0x1c0] sm:$0xff]
    %v366 = vld [vmem:[#allocation8 + $0x1c8] sm:$0xff]
    %v367 = vld [vmem:[#allocation8 + $0x1d0] sm:$0xff]
    %v368 = vld [vmem:[#allocation8 + $0x1d8] sm:$0xff]
    %v369 = vld [vmem:[#allocation8 + $0x1e0] sm:$0xff]
    %v370 = vld [vmem:[#allocation8 + $0x1e8] sm:$0xff]
    %v371 = vld [vmem:[#allocation8 + $0x1f0] sm:$0xff]
    %v372 = vld [vmem:[#allocation8 + $0x1f8] sm:$0xff]
    %v373 = vld [vmem:[#allocation10] sm:$0xf]
    %v375 = vperm.slane %v373, 0
    %v376 = vperm.slane %v373, 1
    %v377 = vperm.slane %v373, 2
    %v378 = vperm.slane %v373, 3
    %v447 = vunpack.c.l.b16 %v309
    %v448 = vunpack.c.h.b16 %v309
    %v449 = vunpack.c.l.b16 %v310
    %v450 = vunpack.c.h.b16 %v310
    %v451 = vunpack.c.l.b16 %v311
    %v452 = vunpack.c.h.b16 %v311
    %v453 = vunpack.c.l.b16 %v312
    %v454 = vunpack.c.h.b16 %v312
    %v455 = vunpack.c.l.b16 %v313
    %v456 = vunpack.c.h.b16 %v313
    %v457 = vunpack.c.l.b16 %v314
    %v458 = vunpack.c.h.b16 %v314
    %v459 = vunpack.c.l.b16 %v315
    %v460 = vunpack.c.h.b16 %v315
    %v461 = vunpack.c.l.b16 %v316
    %v462 = vunpack.c.h.b16 %v316
    %v463 = vunpack.c.l.b16 %v317
    %v464 = vunpack.c.h.b16 %v317
    %v465 = vunpack.c.l.b16 %v318
    %v466 = vunpack.c.h.b16 %v318
    %v467 = vunpack.c.l.b16 %v319
    %v468 = vunpack.c.h.b16 %v319
    %v469 = vunpack.c.l.b16 %v320
    %v470 = vunpack.c.h.b16 %v320
    %v471 = vunpack.c.l.b16 %v321
    %v472 = vunpack.c.h.b16 %v321
    %v473 = vunpack.c.l.b16 %v322
    %v474 = vunpack.c.h.b16 %v322
    %v475 = vunpack.c.l.b16 %v323
    %v476 = vunpack.c.h.b16 %v323
    %v477 = vunpack.c.l.b16 %v324
    %v478 = vunpack.c.h.b16 %v324
    %v479 = vunpack.c.l.b16 %v325
    %v480 = vunpack.c.h.b16 %v325
    %v481 = vunpack.c.l.b16 %v326
    %v482 = vunpack.c.h.b16 %v326
    %v483 = vunpack.c.l.b16 %v327
    %v484 = vunpack.c.h.b16 %v327
    %v485 = vunpack.c.l.b16 %v328
    %v486 = vunpack.c.h.b16 %v328
    %v487 = vunpack.c.l.b16 %v329
    %v488 = vunpack.c.h.b16 %v329
    %v489 = vunpack.c.l.b16 %v330
    %v490 = vunpack.c.h.b16 %v330
    %v491 = vunpack.c.l.b16 %v331
    %v492 = vunpack.c.h.b16 %v331
    %v493 = vunpack.c.l.b16 %v332
    %v494 = vunpack.c.h.b16 %v332
    %v495 = vunpack.c.l.b16 %v333
    %v496 = vunpack.c.h.b16 %v333
    %v497 = vunpack.c.l.b16 %v334
    %v498 = vunpack.c.h.b16 %v334
    %v499 = vunpack.c.l.b16 %v335
    %v500 = vunpack.c.h.b16 %v335
    %v501 = vunpack.c.l.b16 %v336
    %v502 = vunpack.c.h.b16 %v336
    %v503 = vunpack.c.l.b16 %v337
    %v504 = vunpack.c.h.b16 %v337
    %v505 = vunpack.c.l.b16 %v338
    %v506 = vunpack.c.h.b16 %v338
    %v507 = vunpack.c.l.b16 %v339
    %v508 = vunpack.c.h.b16 %v339
    %v509 = vunpack.c.l.b16 %v340
    %v510 = vunpack.c.h.b16 %v340
    %v511 = vunpack.c.l.b16 %v341
    %v512 = vunpack.c.h.b16 %v341
    %v513 = vunpack.c.l.b16 %v342
    %v514 = vunpack.c.h.b16 %v342
    %v515 = vunpack.c.l.b16 %v343
    %v516 = vunpack.c.h.b16 %v343
    %v517 = vunpack.c.l.b16 %v344
    %v518 = vunpack.c.h.b16 %v344
    %v519 = vunpack.c.l.b16 %v345
    %v520 = vunpack.c.h.b16 %v345
    %v521 = vunpack.c.l.b16 %v346
    %v522 = vunpack.c.h.b16 %v346
    %v523 = vunpack.c.l.b16 %v347
    %v524 = vunpack.c.h.b16 %v347
    %v525 = vunpack.c.l.b16 %v348
    %v526 = vunpack.c.h.b16 %v348
    %v527 = vunpack.c.l.b16 %v349
    %v528 = vunpack.c.h.b16 %v349
    %v529 = vunpack.c.l.b16 %v350
    %v530 = vunpack.c.h.b16 %v350
    %v531 = vunpack.c.l.b16 %v351
    %v532 = vunpack.c.h.b16 %v351
    %v533 = vunpack.c.l.b16 %v352
    %v534 = vunpack.c.h.b16 %v352
    %v535 = vunpack.c.l.b16 %v353
    %v536 = vunpack.c.h.b16 %v353
    %v537 = vunpack.c.l.b16 %v354
    %v538 = vunpack.c.h.b16 %v354
    %v539 = vunpack.c.l.b16 %v355
    %v540 = vunpack.c.h.b16 %v355
    %v541 = vunpack.c.l.b16 %v356
    %v542 = vunpack.c.h.b16 %v356
    %v543 = vunpack.c.l.b16 %v357
    %v544 = vunpack.c.h.b16 %v357
    %v545 = vunpack.c.l.b16 %v358
    %v546 = vunpack.c.h.b16 %v358
    %v547 = vunpack.c.l.b16 %v359
    %v548 = vunpack.c.h.b16 %v359
    %v549 = vunpack.c.l.b16 %v360
    %v550 = vunpack.c.h.b16 %v360
    %v551 = vunpack.c.l.b16 %v361
    %v552 = vunpack.c.h.b16 %v361
    %v553 = vunpack.c.l.b16 %v362
    %v554 = vunpack.c.h.b16 %v362
    %v555 = vunpack.c.l.b16 %v363
    %v556 = vunpack.c.h.b16 %v363
    %v557 = vunpack.c.l.b16 %v364
    %v558 = vunpack.c.h.b16 %v364
    %v559 = vunpack.c.l.b16 %v365
    %v560 = vunpack.c.h.b16 %v365
    %v561 = vunpack.c.l.b16 %v366
    %v562 = vunpack.c.h.b16 %v366
    %v563 = vunpack.c.l.b16 %v367
    %v564 = vunpack.c.h.b16 %v367
    %v565 = vunpack.c.l.b16 %v368
    %v566 = vunpack.c.h.b16 %v368
    %v567 = vunpack.c.l.b16 %v369
    %v568 = vunpack.c.h.b16 %v369
    %v569 = vunpack.c.l.b16 %v370
    %v570 = vunpack.c.h.b16 %v370
    %v571 = vunpack.c.l.b16 %v371
    %v572 = vunpack.c.h.b16 %v371
    %v573 = vunpack.c.l.b16 %v372
    %v574 = vunpack.c.h.b16 %v372
    %v575 = vpack.c.b16 %v451, %v447
    %v576 = vpack.c.b16 %v452, %v448
    %v577 = vpack.c.b16 %v453, %v449
    %v578 = vpack.c.b16 %v454, %v450
    %v579 = vpack.c.b16 %v459, %v455
    %v580 = vpack.c.b16 %v460, %v456
    %v581 = vpack.c.b16 %v461, %v457
    %v582 = vpack.c.b16 %v462, %v458
    %v583 = vpack.c.b16 %v467, %v463
    %v584 = vpack.c.b16 %v468, %v464
    %v585 = vpack.c.b16 %v469, %v465
    %v586 = vpack.c.b16 %v470, %v466
    %v587 = vpack.c.b16 %v475, %v471
    %v588 = vpack.c.b16 %v476, %v472
    %v589 = vpack.c.b16 %v477, %v473
    %v590 = vpack.c.b16 %v478, %v474
    %v591 = vpack.c.b16 %v483, %v479
    %v592 = vpack.c.b16 %v484, %v480
    %v593 = vpack.c.b16 %v485, %v481
    %v594 = vpack.c.b16 %v486, %v482
    %v595 = vpack.c.b16 %v491, %v487
    %v596 = vpack.c.b16 %v492, %v488
    %v597 = vpack.c.b16 %v493, %v489
    %v598 = vpack.c.b16 %v494, %v490
    %v599 = vpack.c.b16 %v499, %v495
    %v600 = vpack.c.b16 %v500, %v496
    %v601 = vpack.c.b16 %v501, %v497
    %v602 = vpack.c.b16 %v502, %v498
    %v603 = vpack.c.b16 %v507, %v503
    %v604 = vpack.c.b16 %v508, %v504
    %v605 = vpack.c.b16 %v509, %v505
    %v606 = vpack.c.b16 %v510, %v506
    %v607 = vpack.c.b16 %v515, %v511
    %v608 = vpack.c.b16 %v516, %v512
    %v609 = vpack.c.b16 %v517, %v513
    %v610 = vpack.c.b16 %v518, %v514
    %v611 = vpack.c.b16 %v523, %v519
    %v612 = vpack.c.b16 %v524, %v520
    %v613 = vpack.c.b16 %v525, %v521
    %v614 = vpack.c.b16 %v526, %v522
    %v615 = vpack.c.b16 %v531, %v527
    %v616 = vpack.c.b16 %v532, %v528
    %v617 = vpack.c.b16 %v533, %v529
    %v618 = vpack.c.b16 %v534, %v530
    %v619 = vpack.c.b16 %v539, %v535
    %v620 = vpack.c.b16 %v540, %v536
    %v621 = vpack.c.b16 %v541, %v537
    %v622 = vpack.c.b16 %v542, %v538
    %v623 = vpack.c.b16 %v547, %v543
    %v624 = vpack.c.b16 %v548, %v544
    %v625 = vpack.c.b16 %v549, %v545
    %v626 = vpack.c.b16 %v550, %v546
    %v627 = vpack.c.b16 %v555, %v551
    %v628 = vpack.c.b16 %v556, %v552
    %v629 = vpack.c.b16 %v557, %v553
    %v630 = vpack.c.b16 %v558, %v554
    %v631 = vpack.c.b16 %v563, %v559
    %v632 = vpack.c.b16 %v564, %v560
    %v633 = vpack.c.b16 %v565, %v561
    %v634 = vpack.c.b16 %v566, %v562
    %v635 = vpack.c.b16 %v571, %v567
    %v636 = vpack.c.b16 %v572, %v568
    %v637 = vpack.c.b16 %v573, %v569
    %v638 = vpack.c.b16 %v574, %v570
    %703 = vmatpush.bf16.msra.mxu0 %v603
    %704 = vmatpush.bf16.msra.mxu0 %v599
    %705 = vmatpush.bf16.msra.mxu0 %v595
    %706 = vmatpush.bf16.msra.mxu0 %v591
    %707 = vmatpush.bf16.msra.mxu0 %v587
    %708 = vmatpush.bf16.msra.mxu0 %v583
    %709 = vmatpush.bf16.msra.mxu0 %v579
    %710 = vmatpush.bf16.msra.mxu0 %v575
    %711 = vmatmul.bf16.gmra.mxu0 %v307
    %v712 = vpop.f32.mrf.mxu0
    %v713 = vadd.f32 %v375, %v712
    %v714 = vpop.f32.mrf.mxu0
    %v715 = vadd.f32 %v375, %v714
    %716 = vdwg.mxu0
    %717 = vmatpush.bf16.msra.mxu0 %v635
    %718 = vmatpush.bf16.msra.mxu0 %v631
    %719 = vmatpush.bf16.msra.mxu0 %v627
    %720 = vmatpush.bf16.msra.mxu0 %v623
    %721 = vmatpush.bf16.msra.mxu0 %v619
    %722 = vmatpush.bf16.msra.mxu0 %v615
    %723 = vmatpush.bf16.msra.mxu0 %v611
    %724 = vmatpush.bf16.msra.mxu0 %v607
    %725 = vmatmul.bf16.gmra.mxu0 %v308
    %v726 = vpop.f32.mrf.mxu0
    %v727 = vadd.f32 %v713, %v726
    %v728 = vpop.f32.mrf.mxu0
    %v729 = vadd.f32 %v715, %v728
    %730 = vdwg.mxu0
    %731 = vmatpush.bf16.msra.mxu0 %v604
    %732 = vmatpush.bf16.msra.mxu0 %v600
    %733 = vmatpush.bf16.msra.mxu0 %v596
    %734 = vmatpush.bf16.msra.mxu0 %v592
    %735 = vmatpush.bf16.msra.mxu0 %v588
    %736 = vmatpush.bf16.msra.mxu0 %v584
    %737 = vmatpush.bf16.msra.mxu0 %v580
    %738 = vmatpush.bf16.msra.mxu0 %v576
    %739 = vmatmul.bf16.gmra.mxu0 %v307
    %v740 = vpop.f32.mrf.mxu0
    %v741 = vadd.f32 %v376, %v740
    %v742 = vpop.f32.mrf.mxu0
    %v743 = vadd.f32 %v376, %v742
    %744 = vdwg.mxu0
    %745 = vmatpush.bf16.msra.mxu0 %v636
    %746 = vmatpush.bf16.msra.mxu0 %v632
    %747 = vmatpush.bf16.msra.mxu0 %v628
    %748 = vmatpush.bf16.msra.mxu0 %v624
    %749 = vmatpush.bf16.msra.mxu0 %v620
    %750 = vmatpush.bf16.msra.mxu0 %v616
    %751 = vmatpush.bf16.msra.mxu0 %v612
    %752 = vmatpush.bf16.msra.mxu0 %v608
    %753 = vmatmul.bf16.gmra.mxu0 %v308
    %v754 = vpop.f32.mrf.mxu0
    %v755 = vadd.f32 %v741, %v754
    %v756 = vpop.f32.mrf.mxu0
    %v757 = vadd.f32 %v743, %v756
    %758 = vdwg.mxu0
    %759 = vmatpush.bf16.msra.mxu0 %v605
    %760 = vmatpush.bf16.msra.mxu0 %v601
    %761 = vmatpush.bf16.msra.mxu0 %v597
    %762 = vmatpush.bf16.msra.mxu0 %v593
    %763 = vmatpush.bf16.msra.mxu0 %v589
    %764 = vmatpush.bf16.msra.mxu0 %v585
    %765 = vmatpush.bf16.msra.mxu0 %v581
    %766 = vmatpush.bf16.msra.mxu0 %v577
    %767 = vmatmul.bf16.gmra.mxu0 %v307
    %v768 = vpop.f32.mrf.mxu0
    %v769 = vadd.f32 %v377, %v768
    %v770 = vpop.f32.mrf.mxu0
    %v771 = vadd.f32 %v377, %v770
    %772 = vdwg.mxu0
    %773 = vmatpush.bf16.msra.mxu0 %v637
    %774 = vmatpush.bf16.msra.mxu0 %v633
    %775 = vmatpush.bf16.msra.mxu0 %v629
    %776 = vmatpush.bf16.msra.mxu0 %v625
    %777 = vmatpush.bf16.msra.mxu0 %v621
    %778 = vmatpush.bf16.msra.mxu0 %v617
    %779 = vmatpush.bf16.msra.mxu0 %v613
    %780 = vmatpush.bf16.msra.mxu0 %v609
    %781 = vmatmul.bf16.gmra.mxu0 %v308
    %v782 = vpop.f32.mrf.mxu0
    %v783 = vadd.f32 %v769, %v782
    %v784 = vpop.f32.mrf.mxu0
    %v785 = vadd.f32 %v771, %v784
    %786 = vdwg.mxu0
    %787 = vmatpush.bf16.msra.mxu0 %v606
    %788 = vmatpush.bf16.msra.mxu0 %v602
    %789 = vmatpush.bf16.msra.mxu0 %v598
    %790 = vmatpush.bf16.msra.mxu0 %v594
    %791 = vmatpush.bf16.msra.mxu0 %v590
    %792 = vmatpush.bf16.msra.mxu0 %v586
    %793 = vmatpush.bf16.msra.mxu0 %v582
    %794 = vmatpush.bf16.msra.mxu0 %v578
    %795 = vmatmul.bf16.gmra.mxu0 %v307
    %v796 = vpop.f32.mrf.mxu0
    %v797 = vadd.f32 %v378, %v796
    %v798 = vpop.f32.mrf.mxu0
    %v799 = vadd.f32 %v378, %v798
    %800 = vdwg.mxu0
    %801 = vmatpush.bf16.msra.mxu0 %v638
    %802 = vmatpush.bf16.msra.mxu0 %v634
    %803 = vmatpush.bf16.msra.mxu0 %v630
    %804 = vmatpush.bf16.msra.mxu0 %v626
    %805 = vmatpush.bf16.msra.mxu0 %v622
    %806 = vmatpush.bf16.msra.mxu0 %v618
    %807 = vmatpush.bf16.msra.mxu0 %v614
    %808 = vmatpush.bf16.msra.mxu0 %v610
    %809 = vmatmul.bf16.gmra.mxu0 %v308
    %v810 = vpop.f32.mrf.mxu0
    %v811 = vadd.f32 %v797, %v810
    %v812 = vpop.f32.mrf.mxu0
    %v813 = vadd.f32 %v799, %v812
    %814 = vdwg.mxu0
    %v815 = vmax.f32 %v727, 0.0
    %v816 = vmax.f32 %v755, 0.0
    %v817 = vmax.f32 %v783, 0.0
    %v818 = vmax.f32 %v811, 0.0
    %v819 = vmax.f32 %v729, 0.0
    %v820 = vmax.f32 %v757, 0.0
    %v821 = vmax.f32 %v785, 0.0
    %v822 = vmax.f32 %v813, 0.0
    %v823 = vpack.c.bf16 %v819, %v815
    %v824 = vpack.c.bf16 %v820, %v816
    %v825 = vpack.c.bf16 %v821, %v817
    %v826 = vpack.c.bf16 %v822, %v818
    %v827 = vld [vmem:[#allocation11] sm:$0xff]
    %v828 = vld [vmem:[#allocation11 + $0x8] sm:$0xff]
    %v829 = vld [vmem:[#allocation11 + $0x10] sm:$0xff]
    %v830 = vld [vmem:[#allocation11 + $0x18] sm:$0xff]
    %v831 = vld [vmem:[#allocation11 + $0x20] sm:$0xff]
    %v832 = vld [vmem:[#allocation11 + $0x28] sm:$0xff]
    %v833 = vld [vmem:[#allocation11 + $0x30] sm:$0xff]
    %v834 = vld [vmem:[#allocation11 + $0x38] sm:$0xff]
    %v835 = vld [vmem:[#allocation11 + $0x40] sm:$0xff]
    %v836 = vld [vmem:[#allocation11 + $0x48] sm:$0xff]
    %v837 = vld [vmem:[#allocation11 + $0x50] sm:$0xff]
    %v838 = vld [vmem:[#allocation11 + $0x58] sm:$0xff]
    %v839 = vld [vmem:[#allocation11 + $0x60] sm:$0xff]
    %v840 = vld [vmem:[#allocation11 + $0x68] sm:$0xff]
    %v841 = vld [vmem:[#allocation11 + $0x70] sm:$0xff]
    %v842 = vld [vmem:[#allocation11 + $0x78] sm:$0xff]
    %v843 = vld [vmem:[#allocation11 + $0x80] sm:$0xff]
    %v844 = vld [vmem:[#allocation11 + $0x88] sm:$0xff]
    %v845 = vld [vmem:[#allocation11 + $0x90] sm:$0xff]
    %v846 = vld [vmem:[#allocation11 + $0x98] sm:$0xff]
    %v847 = vld [vmem:[#allocation11 + $0xa0] sm:$0xff]
    %v848 = vld [vmem:[#allocation11 + $0xa8] sm:$0xff]
    %v849 = vld [vmem:[#allocation11 + $0xb0] sm:$0xff]
    %v850 = vld [vmem:[#allocation11 + $0xb8] sm:$0xff]
    %v851 = vld [vmem:[#allocation11 + $0xc0] sm:$0xff]
    %v852 = vld [vmem:[#allocation11 + $0xc8] sm:$0xff]
    %v853 = vld [vmem:[#allocation11 + $0xd0] sm:$0xff]
    %v854 = vld [vmem:[#allocation11 + $0xd8] sm:$0xff]
    %v855 = vld [vmem:[#allocation11 + $0xe0] sm:$0xff]
    %v856 = vld [vmem:[#allocation11 + $0xe8] sm:$0xff]
    %v857 = vld [vmem:[#allocation11 + $0xf0] sm:$0xff]
    %v858 = vld [vmem:[#allocation11 + $0xf8] sm:$0xff]
    %v859 = vld [vmem:[#allocation11 + $0x100] sm:$0xff]
    %v860 = vld [vmem:[#allocation11 + $0x108] sm:$0xff]
    %v861 = vld [vmem:[#allocation11 + $0x110] sm:$0xff]
    %v862 = vld [vmem:[#allocation11 + $0x118] sm:$0xff]
    %v863 = vld [vmem:[#allocation11 + $0x120] sm:$0xff]
    %v864 = vld [vmem:[#allocation11 + $0x128] sm:$0xff]
    %v865 = vld [vmem:[#allocation11 + $0x130] sm:$0xff]
    %v866 = vld [vmem:[#allocation11 + $0x138] sm:$0xff]
    %v867 = vld [vmem:[#allocation11 + $0x140] sm:$0xff]
    %v868 = vld [vmem:[#allocation11 + $0x148] sm:$0xff]
    %v869 = vld [vmem:[#allocation11 + $0x150] sm:$0xff]
    %v870 = vld [vmem:[#allocation11 + $0x158] sm:$0xff]
    %v871 = vld [vmem:[#allocation11 + $0x160] sm:$0xff]
    %v872 = vld [vmem:[#allocation11 + $0x168] sm:$0xff]
    %v873 = vld [vmem:[#allocation11 + $0x170] sm:$0xff]
    %v874 = vld [vmem:[#allocation11 + $0x178] sm:$0xff]
    %v875 = vld [vmem:[#allocation11 + $0x180] sm:$0xff]
    %v876 = vld [vmem:[#allocation11 + $0x188] sm:$0xff]
    %v877 = vld [vmem:[#allocation11 + $0x190] sm:$0xff]
    %v878 = vld [vmem:[#allocation11 + $0x198] sm:$0xff]
    %v879 = vld [vmem:[#allocation11 + $0x1a0] sm:$0xff]
    %v880 = vld [vmem:[#allocation11 + $0x1a8] sm:$0xff]
    %v881 = vld [vmem:[#allocation11 + $0x1b0] sm:$0xff]
    %v882 = vld [vmem:[#allocation11 + $0x1b8] sm:$0xff]
    %v883 = vld [vmem:[#allocation11 + $0x1c0] sm:$0xff]
    %v884 = vld [vmem:[#allocation11 + $0x1c8] sm:$0xff]
    %v885 = vld [vmem:[#allocation11 + $0x1d0] sm:$0xff]
    %v886 = vld [vmem:[#allocation11 + $0x1d8] sm:$0xff]
    %v887 = vld [vmem:[#allocation11 + $0x1e0] sm:$0xff]
    %v888 = vld [vmem:[#allocation11 + $0x1e8] sm:$0xff]
    %v889 = vld [vmem:[#allocation11 + $0x1f0] sm:$0xff]
    %v890 = vld [vmem:[#allocation11 + $0x1f8] sm:$0xff]
    %v891 = vld [vmem:[#allocation11 + $0x200] sm:$0xff]
    %v892 = vld [vmem:[#allocation11 + $0x208] sm:$0xff]
    %v893 = vld [vmem:[#allocation11 + $0x210] sm:$0xff]
    %v894 = vld [vmem:[#allocation11 + $0x218] sm:$0xff]
    %v895 = vld [vmem:[#allocation11 + $0x220] sm:$0xff]
    %v896 = vld [vmem:[#allocation11 + $0x228] sm:$0xff]
    %v897 = vld [vmem:[#allocation11 + $0x230] sm:$0xff]
    %v898 = vld [vmem:[#allocation11 + $0x238] sm:$0xff]
    %v899 = vld [vmem:[#allocation11 + $0x240] sm:$0xff]
    %v900 = vld [vmem:[#allocation11 + $0x248] sm:$0xff]
    %v901 = vld [vmem:[#allocation11 + $0x250] sm:$0xff]
    %v902 = vld [vmem:[#allocation11 + $0x258] sm:$0xff]
    %v903 = vld [vmem:[#allocation11 + $0x260] sm:$0xff]
    %v904 = vld [vmem:[#allocation11 + $0x268] sm:$0xff]
    %v905 = vld [vmem:[#allocation11 + $0x270] sm:$0xff]
    %v906 = vld [vmem:[#allocation11 + $0x278] sm:$0xff]
    %v907 = vld [vmem:[#allocation11 + $0x280] sm:$0xff]
    %v908 = vld [vmem:[#allocation11 + $0x288] sm:$0xff]
    %v909 = vld [vmem:[#allocation11 + $0x290] sm:$0xff]
    %v910 = vld [vmem:[#allocation11 + $0x298] sm:$0xff]
    %v911 = vld [vmem:[#allocation11 + $0x2a0] sm:$0xff]
    %v912 = vld [vmem:[#allocation11 + $0x2a8] sm:$0xff]
    %v913 = vld [vmem:[#allocation11 + $0x2b0] sm:$0xff]
    %v914 = vld [vmem:[#allocation11 + $0x2b8] sm:$0xff]
    %v915 = vld [vmem:[#allocation11 + $0x2c0] sm:$0xff]
    %v916 = vld [vmem:[#allocation11 + $0x2c8] sm:$0xff]
    %v917 = vld [vmem:[#allocation11 + $0x2d0] sm:$0xff]
    %v918 = vld [vmem:[#allocation11 + $0x2d8] sm:$0xff]
    %v919 = vld [vmem:[#allocation11 + $0x2e0] sm:$0xff]
    %v920 = vld [vmem:[#allocation11 + $0x2e8] sm:$0xff]
    %v921 = vld [vmem:[#allocation11 + $0x2f0] sm:$0xff]
    %v922 = vld [vmem:[#allocation11 + $0x2f8] sm:$0xff]
    %v923 = vld [vmem:[#allocation11 + $0x300] sm:$0xff]
    %v924 = vld [vmem:[#allocation11 + $0x308] sm:$0xff]
    %v925 = vld [vmem:[#allocation11 + $0x310] sm:$0xff]
    %v926 = vld [vmem:[#allocation11 + $0x318] sm:$0xff]
    %v927 = vld [vmem:[#allocation11 + $0x320] sm:$0xff]
    %v928 = vld [vmem:[#allocation11 + $0x328] sm:$0xff]
    %v929 = vld [vmem:[#allocation11 + $0x330] sm:$0xff]
    %v930 = vld [vmem:[#allocation11 + $0x338] sm:$0xff]
    %v931 = vld [vmem:[#allocation11 + $0x340] sm:$0xff]
    %v932 = vld [vmem:[#allocation11 + $0x348] sm:$0xff]
    %v933 = vld [vmem:[#allocation11 + $0x350] sm:$0xff]
    %v934 = vld [vmem:[#allocation11 + $0x358] sm:$0xff]
    %v935 = vld [vmem:[#allocation11 + $0x360] sm:$0xff]
    %v936 = vld [vmem:[#allocation11 + $0x368] sm:$0xff]
    %v937 = vld [vmem:[#allocation11 + $0x370] sm:$0xff]
    %v938 = vld [vmem:[#allocation11 + $0x378] sm:$0xff]
    %v939 = vld [vmem:[#allocation11 + $0x380] sm:$0xff]
    %v940 = vld [vmem:[#allocation11 + $0x388] sm:$0xff]
    %v941 = vld [vmem:[#allocation11 + $0x390] sm:$0xff]
    %v942 = vld [vmem:[#allocation11 + $0x398] sm:$0xff]
    %v943 = vld [vmem:[#allocation11 + $0x3a0] sm:$0xff]
    %v944 = vld [vmem:[#allocation11 + $0x3a8] sm:$0xff]
    %v945 = vld [vmem:[#allocation11 + $0x3b0] sm:$0xff]
    %v946 = vld [vmem:[#allocation11 + $0x3b8] sm:$0xff]
    %v947 = vld [vmem:[#allocation11 + $0x3c0] sm:$0xff]
    %v948 = vld [vmem:[#allocation11 + $0x3c8] sm:$0xff]
    %v949 = vld [vmem:[#allocation11 + $0x3d0] sm:$0xff]
    %v950 = vld [vmem:[#allocation11 + $0x3d8] sm:$0xff]
    %v951 = vld [vmem:[#allocation11 + $0x3e0] sm:$0xff]
    %v952 = vld [vmem:[#allocation11 + $0x3e8] sm:$0xff]
    %v953 = vld [vmem:[#allocation11 + $0x3f0] sm:$0xff]
    %v954 = vld [vmem:[#allocation11 + $0x3f8] sm:$0xff]
    %v955 = vld [vmem:[#allocation11 + $0x400] sm:$0xff]
    %v956 = vld [vmem:[#allocation11 + $0x408] sm:$0xff]
    %v957 = vld [vmem:[#allocation11 + $0x410] sm:$0xff]
    %v958 = vld [vmem:[#allocation11 + $0x418] sm:$0xff]
    %v959 = vld [vmem:[#allocation11 + $0x420] sm:$0xff]
    %v960 = vld [vmem:[#allocation11 + $0x428] sm:$0xff]
    %v961 = vld [vmem:[#allocation11 + $0x430] sm:$0xff]
    %v962 = vld [vmem:[#allocation11 + $0x438] sm:$0xff]
    %v963 = vld [vmem:[#allocation11 + $0x440] sm:$0xff]
    %v964 = vld [vmem:[#allocation11 + $0x448] sm:$0xff]
    %v965 = vld [vmem:[#allocation11 + $0x450] sm:$0xff]
    %v966 = vld [vmem:[#allocation11 + $0x458] sm:$0xff]
    %v967 = vld [vmem:[#allocation11 + $0x460] sm:$0xff]
    %v968 = vld [vmem:[#allocation11 + $0x468] sm:$0xff]
    %v969 = vld [vmem:[#allocation11 + $0x470] sm:$0xff]
    %v970 = vld [vmem:[#allocation11 + $0x478] sm:$0xff]
    %v971 = vld [vmem:[#allocation11 + $0x480] sm:$0xff]
    %v972 = vld [vmem:[#allocation11 + $0x488] sm:$0xff]
    %v973 = vld [vmem:[#allocation11 + $0x490] sm:$0xff]
    %v974 = vld [vmem:[#allocation11 + $0x498] sm:$0xff]
    %v975 = vld [vmem:[#allocation11 + $0x4a0] sm:$0xff]
    %v976 = vld [vmem:[#allocation11 + $0x4a8] sm:$0xff]
    %v977 = vld [vmem:[#allocation11 + $0x4b0] sm:$0xff]
    %v978 = vld [vmem:[#allocation11 + $0x4b8] sm:$0xff]
    %v979 = vld [vmem:[#allocation11 + $0x4c0] sm:$0xff]
    %v980 = vld [vmem:[#allocation11 + $0x4c8] sm:$0xff]
    %v981 = vld [vmem:[#allocation11 + $0x4d0] sm:$0xff]
    %v982 = vld [vmem:[#allocation11 + $0x4d8] sm:$0xff]
    %v983 = vld [vmem:[#allocation11 + $0x4e0] sm:$0xff]
    %v984 = vld [vmem:[#allocation11 + $0x4e8] sm:$0xff]
    %v985 = vld [vmem:[#allocation11 + $0x4f0] sm:$0xff]
    %v986 = vld [vmem:[#allocation11 + $0x4f8] sm:$0xff]
    %v987 = vld [vmem:[#allocation11 + $0x500] sm:$0xff]
    %v988 = vld [vmem:[#allocation11 + $0x508] sm:$0xff]
    %v989 = vld [vmem:[#allocation11 + $0x510] sm:$0xff]
    %v990 = vld [vmem:[#allocation11 + $0x518] sm:$0xff]
    %v991 = vld [vmem:[#allocation11 + $0x520] sm:$0xff]
    %v992 = vld [vmem:[#allocation11 + $0x528] sm:$0xff]
    %v993 = vld [vmem:[#allocation11 + $0x530] sm:$0xff]
    %v994 = vld [vmem:[#allocation11 + $0x538] sm:$0xff]
    %v995 = vld [vmem:[#allocation11 + $0x540] sm:$0xff]
    %v996 = vld [vmem:[#allocation11 + $0x548] sm:$0xff]
    %v997 = vld [vmem:[#allocation11 + $0x550] sm:$0xff]
    %v998 = vld [vmem:[#allocation11 + $0x558] sm:$0xff]
    %v999 = vld [vmem:[#allocation11 + $0x560] sm:$0xff]
    %v1000 = vld [vmem:[#allocation11 + $0x568] sm:$0xff]
    %v1001 = vld [vmem:[#allocation11 + $0x570] sm:$0xff]
    %v1002 = vld [vmem:[#allocation11 + $0x578] sm:$0xff]
    %v1003 = vld [vmem:[#allocation11 + $0x580] sm:$0xff]
    %v1004 = vld [vmem:[#allocation11 + $0x588] sm:$0xff]
    %v1005 = vld [vmem:[#allocation11 + $0x590] sm:$0xff]
    %v1006 = vld [vmem:[#allocation11 + $0x598] sm:$0xff]
    %v1007 = vld [vmem:[#allocation11 + $0x5a0] sm:$0xff]
    %v1008 = vld [vmem:[#allocation11 + $0x5a8] sm:$0xff]
    %v1009 = vld [vmem:[#allocation11 + $0x5b0] sm:$0xff]
    %v1010 = vld [vmem:[#allocation11 + $0x5b8] sm:$0xff]
    %v1011 = vld [vmem:[#allocation11 + $0x5c0] sm:$0xff]
    %v1012 = vld [vmem:[#allocation11 + $0x5c8] sm:$0xff]
    %v1013 = vld [vmem:[#allocation11 + $0x5d0] sm:$0xff]
    %v1014 = vld [vmem:[#allocation11 + $0x5d8] sm:$0xff]
    %v1015 = vld [vmem:[#allocation11 + $0x5e0] sm:$0xff]
    %v1016 = vld [vmem:[#allocation11 + $0x5e8] sm:$0xff]
    %v1017 = vld [vmem:[#allocation11 + $0x5f0] sm:$0xff]
    %v1018 = vld [vmem:[#allocation11 + $0x5f8] sm:$0xff]
    %v1019 = vld [vmem:[#allocation11 + $0x600] sm:$0xff]
    %v1020 = vld [vmem:[#allocation11 + $0x608] sm:$0xff]
    %v1021 = vld [vmem:[#allocation11 + $0x610] sm:$0xff]
    %v1022 = vld [vmem:[#allocation11 + $0x618] sm:$0xff]
    %v1023 = vld [vmem:[#allocation11 + $0x620] sm:$0xff]
    %v1024 = vld [vmem:[#allocation11 + $0x628] sm:$0xff]
    %v1025 = vld [vmem:[#allocation11 + $0x630] sm:$0xff]
    %v1026 = vld [vmem:[#allocation11 + $0x638] sm:$0xff]
    %v1027 = vld [vmem:[#allocation11 + $0x640] sm:$0xff]
    %v1028 = vld [vmem:[#allocation11 + $0x648] sm:$0xff]
    %v1029 = vld [vmem:[#allocation11 + $0x650] sm:$0xff]
    %v1030 = vld [vmem:[#allocation11 + $0x658] sm:$0xff]
    %v1031 = vld [vmem:[#allocation11 + $0x660] sm:$0xff]
    %v1032 = vld [vmem:[#allocation11 + $0x668] sm:$0xff]
    %v1033 = vld [vmem:[#allocation11 + $0x670] sm:$0xff]
    %v1034 = vld [vmem:[#allocation11 + $0x678] sm:$0xff]
    %v1035 = vld [vmem:[#allocation11 + $0x680] sm:$0xff]
    %v1036 = vld [vmem:[#allocation11 + $0x688] sm:$0xff]
    %v1037 = vld [vmem:[#allocation11 + $0x690] sm:$0xff]
    %v1038 = vld [vmem:[#allocation11 + $0x698] sm:$0xff]
    %v1039 = vld [vmem:[#allocation11 + $0x6a0] sm:$0xff]
    %v1040 = vld [vmem:[#allocation11 + $0x6a8] sm:$0xff]
    %v1041 = vld [vmem:[#allocation11 + $0x6b0] sm:$0xff]
    %v1042 = vld [vmem:[#allocation11 + $0x6b8] sm:$0xff]
    %v1043 = vld [vmem:[#allocation11 + $0x6c0] sm:$0xff]
    %v1044 = vld [vmem:[#allocation11 + $0x6c8] sm:$0xff]
    %v1045 = vld [vmem:[#allocation11 + $0x6d0] sm:$0xff]
    %v1046 = vld [vmem:[#allocation11 + $0x6d8] sm:$0xff]
    %v1047 = vld [vmem:[#allocation11 + $0x6e0] sm:$0xff]
    %v1048 = vld [vmem:[#allocation11 + $0x6e8] sm:$0xff]
    %v1049 = vld [vmem:[#allocation11 + $0x6f0] sm:$0xff]
    %v1050 = vld [vmem:[#allocation11 + $0x6f8] sm:$0xff]
    %v1051 = vld [vmem:[#allocation11 + $0x700] sm:$0xff]
    %v1052 = vld [vmem:[#allocation11 + $0x708] sm:$0xff]
    %v1053 = vld [vmem:[#allocation11 + $0x710] sm:$0xff]
    %v1054 = vld [vmem:[#allocation11 + $0x718] sm:$0xff]
    %v1055 = vld [vmem:[#allocation11 + $0x720] sm:$0xff]
    %v1056 = vld [vmem:[#allocation11 + $0x728] sm:$0xff]
    %v1057 = vld [vmem:[#allocation11 + $0x730] sm:$0xff]
    %v1058 = vld [vmem:[#allocation11 + $0x738] sm:$0xff]
    %v1059 = vld [vmem:[#allocation11 + $0x740] sm:$0xff]
    %v1060 = vld [vmem:[#allocation11 + $0x748] sm:$0xff]
    %v1061 = vld [vmem:[#allocation11 + $0x750] sm:$0xff]
    %v1062 = vld [vmem:[#allocation11 + $0x758] sm:$0xff]
    %v1063 = vld [vmem:[#allocation11 + $0x760] sm:$0xff]
    %v1064 = vld [vmem:[#allocation11 + $0x768] sm:$0xff]
    %v1065 = vld [vmem:[#allocation11 + $0x770] sm:$0xff]
    %v1066 = vld [vmem:[#allocation11 + $0x778] sm:$0xff]
    %v1067 = vld [vmem:[#allocation11 + $0x780] sm:$0xff]
    %v1068 = vld [vmem:[#allocation11 + $0x788] sm:$0xff]
    %v1069 = vld [vmem:[#allocation11 + $0x790] sm:$0xff]
    %v1070 = vld [vmem:[#allocation11 + $0x798] sm:$0xff]
    %v1071 = vld [vmem:[#allocation11 + $0x7a0] sm:$0xff]
    %v1072 = vld [vmem:[#allocation11 + $0x7a8] sm:$0xff]
    %v1073 = vld [vmem:[#allocation11 + $0x7b0] sm:$0xff]
    %v1074 = vld [vmem:[#allocation11 + $0x7b8] sm:$0xff]
    %v1075 = vld [vmem:[#allocation11 + $0x7c0] sm:$0xff]
    %v1076 = vld [vmem:[#allocation11 + $0x7c8] sm:$0xff]
    %v1077 = vld [vmem:[#allocation11 + $0x7d0] sm:$0xff]
    %v1078 = vld [vmem:[#allocation11 + $0x7d8] sm:$0xff]
    %v1079 = vld [vmem:[#allocation11 + $0x7e0] sm:$0xff]
    %v1080 = vld [vmem:[#allocation11 + $0x7e8] sm:$0xff]
    %v1081 = vld [vmem:[#allocation11 + $0x7f0] sm:$0xff]
    %v1082 = vld [vmem:[#allocation11 + $0x7f8] sm:$0xff]
    %v1083 = vld [vmem:[#allocation13] sm:$0xff]
    %v1085 = vperm.slane %v1083, 0
    %v1086 = vperm.slane %v1083, 1
    %v1087 = vperm.slane %v1083, 2
    %v1088 = vperm.slane %v1083, 3
    %v1089 = vperm.slane %v1083, 4
    %v1090 = vperm.slane %v1083, 5
    %v1091 = vperm.slane %v1083, 6
    %v1092 = vperm.slane %v1083, 7
    %v1357 = vunpack.c.l.b16 %v827
    %v1358 = vunpack.c.h.b16 %v827
    %v1359 = vunpack.c.l.b16 %v828
    %v1360 = vunpack.c.h.b16 %v828
    %v1361 = vunpack.c.l.b16 %v829
    %v1362 = vunpack.c.h.b16 %v829
    %v1363 = vunpack.c.l.b16 %v830
    %v1364 = vunpack.c.h.b16 %v830
    %v1365 = vunpack.c.l.b16 %v831
    %v1366 = vunpack.c.h.b16 %v831
    %v1367 = vunpack.c.l.b16 %v832
    %v1368 = vunpack.c.h.b16 %v832
    %v1369 = vunpack.c.l.b16 %v833
    %v1370 = vunpack.c.h.b16 %v833
    %v1371 = vunpack.c.l.b16 %v834
    %v1372 = vunpack.c.h.b16 %v834
    %v1373 = vunpack.c.l.b16 %v835
    %v1374 = vunpack.c.h.b16 %v835
    %v1375 = vunpack.c.l.b16 %v836
    %v1376 = vunpack.c.h.b16 %v836
    %v1377 = vunpack.c.l.b16 %v837
    %v1378 = vunpack.c.h.b16 %v837
    %v1379 = vunpack.c.l.b16 %v838
    %v1380 = vunpack.c.h.b16 %v838
    %v1381 = vunpack.c.l.b16 %v839
    %v1382 = vunpack.c.h.b16 %v839
    %v1383 = vunpack.c.l.b16 %v840
    %v1384 = vunpack.c.h.b16 %v840
    %v1385 = vunpack.c.l.b16 %v841
    %v1386 = vunpack.c.h.b16 %v841
    %v1387 = vunpack.c.l.b16 %v842
    %v1388 = vunpack.c.h.b16 %v842
    %v1389 = vunpack.c.l.b16 %v843
    %v1390 = vunpack.c.h.b16 %v843
    %v1391 = vunpack.c.l.b16 %v844
    %v1392 = vunpack.c.h.b16 %v844
    %v1393 = vunpack.c.l.b16 %v845
    %v1394 = vunpack.c.h.b16 %v845
    %v1395 = vunpack.c.l.b16 %v846
    %v1396 = vunpack.c.h.b16 %v846
    %v1397 = vunpack.c.l.b16 %v847
    %v1398 = vunpack.c.h.b16 %v847
    %v1399 = vunpack.c.l.b16 %v848
    %v1400 = vunpack.c.h.b16 %v848
    %v1401 = vunpack.c.l.b16 %v849
    %v1402 = vunpack.c.h.b16 %v849
    %v1403 = vunpack.c.l.b16 %v850
    %v1404 = vunpack.c.h.b16 %v850
    %v1405 = vunpack.c.l.b16 %v851
    %v1406 = vunpack.c.h.b16 %v851
    %v1407 = vunpack.c.l.b16 %v852
    %v1408 = vunpack.c.h.b16 %v852
    %v1409 = vunpack.c.l.b16 %v853
    %v1410 = vunpack.c.h.b16 %v853
    %v1411 = vunpack.c.l.b16 %v854
    %v1412 = vunpack.c.h.b16 %v854
    %v1413 = vunpack.c.l.b16 %v855
    %v1414 = vunpack.c.h.b16 %v855
    %v1415 = vunpack.c.l.b16 %v856
    %v1416 = vunpack.c.h.b16 %v856
    %v1417 = vunpack.c.l.b16 %v857
    %v1418 = vunpack.c.h.b16 %v857
    %v1419 = vunpack.c.l.b16 %v858
    %v1420 = vunpack.c.h.b16 %v858
    %v1421 = vunpack.c.l.b16 %v859
    %v1422 = vunpack.c.h.b16 %v859
    %v1423 = vunpack.c.l.b16 %v860
    %v1424 = vunpack.c.h.b16 %v860
    %v1425 = vunpack.c.l.b16 %v861
    %v1426 = vunpack.c.h.b16 %v861
    %v1427 = vunpack.c.l.b16 %v862
    %v1428 = vunpack.c.h.b16 %v862
    %v1429 = vunpack.c.l.b16 %v863
    %v1430 = vunpack.c.h.b16 %v863
    %v1431 = vunpack.c.l.b16 %v864
    %v1432 = vunpack.c.h.b16 %v864
    %v1433 = vunpack.c.l.b16 %v865
    %v1434 = vunpack.c.h.b16 %v865
    %v1435 = vunpack.c.l.b16 %v866
    %v1436 = vunpack.c.h.b16 %v866
    %v1437 = vunpack.c.l.b16 %v867
    %v1438 = vunpack.c.h.b16 %v867
    %v1439 = vunpack.c.l.b16 %v868
    %v1440 = vunpack.c.h.b16 %v868
    %v1441 = vunpack.c.l.b16 %v869
    %v1442 = vunpack.c.h.b16 %v869
    %v1443 = vunpack.c.l.b16 %v870
    %v1444 = vunpack.c.h.b16 %v870
    %v1445 = vunpack.c.l.b16 %v871
    %v1446 = vunpack.c.h.b16 %v871
    %v1447 = vunpack.c.l.b16 %v872
    %v1448 = vunpack.c.h.b16 %v872
    %v1449 = vunpack.c.l.b16 %v873
    %v1450 = vunpack.c.h.b16 %v873
    %v1451 = vunpack.c.l.b16 %v874
    %v1452 = vunpack.c.h.b16 %v874
    %v1453 = vunpack.c.l.b16 %v875
    %v1454 = vunpack.c.h.b16 %v875
    %v1455 = vunpack.c.l.b16 %v876
    %v1456 = vunpack.c.h.b16 %v876
    %v1457 = vunpack.c.l.b16 %v877
    %v1458 = vunpack.c.h.b16 %v877
    %v1459 = vunpack.c.l.b16 %v878
    %v1460 = vunpack.c.h.b16 %v878
    %v1461 = vunpack.c.l.b16 %v879
    %v1462 = vunpack.c.h.b16 %v879
    %v1463 = vunpack.c.l.b16 %v880
    %v1464 = vunpack.c.h.b16 %v880
    %v1465 = vunpack.c.l.b16 %v881
    %v1466 = vunpack.c.h.b16 %v881
    %v1467 = vunpack.c.l.b16 %v882
    %v1468 = vunpack.c.h.b16 %v882
    %v1469 = vunpack.c.l.b16 %v883
    %v1470 = vunpack.c.h.b16 %v883
    %v1471 = vunpack.c.l.b16 %v884
    %v1472 = vunpack.c.h.b16 %v884
    %v1473 = vunpack.c.l.b16 %v885
    %v1474 = vunpack.c.h.b16 %v885
    %v1475 = vunpack.c.l.b16 %v886
    %v1476 = vunpack.c.h.b16 %v886
    %v1477 = vunpack.c.l.b16 %v887
    %v1478 = vunpack.c.h.b16 %v887
    %v1479 = vunpack.c.l.b16 %v888
    %v1480 = vunpack.c.h.b16 %v888
    %v1481 = vunpack.c.l.b16 %v889
    %v1482 = vunpack.c.h.b16 %v889
    %v1483 = vunpack.c.l.b16 %v890
    %v1484 = vunpack.c.h.b16 %v890
    %v1485 = vunpack.c.l.b16 %v891
    %v1486 = vunpack.c.h.b16 %v891
    %v1487 = vunpack.c.l.b16 %v892
    %v1488 = vunpack.c.h.b16 %v892
    %v1489 = vunpack.c.l.b16 %v893
    %v1490 = vunpack.c.h.b16 %v893
    %v1491 = vunpack.c.l.b16 %v894
    %v1492 = vunpack.c.h.b16 %v894
    %v1493 = vunpack.c.l.b16 %v895
    %v1494 = vunpack.c.h.b16 %v895
    %v1495 = vunpack.c.l.b16 %v896
    %v1496 = vunpack.c.h.b16 %v896
    %v1497 = vunpack.c.l.b16 %v897
    %v1498 = vunpack.c.h.b16 %v897
    %v1499 = vunpack.c.l.b16 %v898
    %v1500 = vunpack.c.h.b16 %v898
    %v1501 = vunpack.c.l.b16 %v899
    %v1502 = vunpack.c.h.b16 %v899
    %v1503 = vunpack.c.l.b16 %v900
    %v1504 = vunpack.c.h.b16 %v900
    %v1505 = vunpack.c.l.b16 %v901
    %v1506 = vunpack.c.h.b16 %v901
    %v1507 = vunpack.c.l.b16 %v902
    %v1508 = vunpack.c.h.b16 %v902
    %v1509 = vunpack.c.l.b16 %v903
    %v1510 = vunpack.c.h.b16 %v903
    %v1511 = vunpack.c.l.b16 %v904
    %v1512 = vunpack.c.h.b16 %v904
    %v1513 = vunpack.c.l.b16 %v905
    %v1514 = vunpack.c.h.b16 %v905
    %v1515 = vunpack.c.l.b16 %v906
    %v1516 = vunpack.c.h.b16 %v906
    %v1517 = vunpack.c.l.b16 %v907
    %v1518 = vunpack.c.h.b16 %v907
    %v1519 = vunpack.c.l.b16 %v908
    %v1520 = vunpack.c.h.b16 %v908
    %v1521 = vunpack.c.l.b16 %v909
    %v1522 = vunpack.c.h.b16 %v909
    %v1523 = vunpack.c.l.b16 %v910
    %v1524 = vunpack.c.h.b16 %v910
    %v1525 = vunpack.c.l.b16 %v911
    %v1526 = vunpack.c.h.b16 %v911
    %v1527 = vunpack.c.l.b16 %v912
    %v1528 = vunpack.c.h.b16 %v912
    %v1529 = vunpack.c.l.b16 %v913
    %v1530 = vunpack.c.h.b16 %v913
    %v1531 = vunpack.c.l.b16 %v914
    %v1532 = vunpack.c.h.b16 %v914
    %v1533 = vunpack.c.l.b16 %v915
    %v1534 = vunpack.c.h.b16 %v915
    %v1535 = vunpack.c.l.b16 %v916
    %v1536 = vunpack.c.h.b16 %v916
    %v1537 = vunpack.c.l.b16 %v917
    %v1538 = vunpack.c.h.b16 %v917
    %v1539 = vunpack.c.l.b16 %v918
    %v1540 = vunpack.c.h.b16 %v918
    %v1541 = vunpack.c.l.b16 %v919
    %v1542 = vunpack.c.h.b16 %v919
    %v1543 = vunpack.c.l.b16 %v920
    %v1544 = vunpack.c.h.b16 %v920
    %v1545 = vunpack.c.l.b16 %v921
    %v1546 = vunpack.c.h.b16 %v921
    %v1547 = vunpack.c.l.b16 %v922
    %v1548 = vunpack.c.h.b16 %v922
    %v1549 = vunpack.c.l.b16 %v923
    %v1550 = vunpack.c.h.b16 %v923
    %v1551 = vunpack.c.l.b16 %v924
    %v1552 = vunpack.c.h.b16 %v924
    %v1553 = vunpack.c.l.b16 %v925
    %v1554 = vunpack.c.h.b16 %v925
    %v1555 = vunpack.c.l.b16 %v926
    %v1556 = vunpack.c.h.b16 %v926
    %v1557 = vunpack.c.l.b16 %v927
    %v1558 = vunpack.c.h.b16 %v927
    %v1559 = vunpack.c.l.b16 %v928
    %v1560 = vunpack.c.h.b16 %v928
    %v1561 = vunpack.c.l.b16 %v929
    %v1562 = vunpack.c.h.b16 %v929
    %v1563 = vunpack.c.l.b16 %v930
    %v1564 = vunpack.c.h.b16 %v930
    %v1565 = vunpack.c.l.b16 %v931
    %v1566 = vunpack.c.h.b16 %v931
    %v1567 = vunpack.c.l.b16 %v932
    %v1568 = vunpack.c.h.b16 %v932
    %v1569 = vunpack.c.l.b16 %v933
    %v1570 = vunpack.c.h.b16 %v933
    %v1571 = vunpack.c.l.b16 %v934
    %v1572 = vunpack.c.h.b16 %v934
    %v1573 = vunpack.c.l.b16 %v935
    %v1574 = vunpack.c.h.b16 %v935
    %v1575 = vunpack.c.l.b16 %v936
    %v1576 = vunpack.c.h.b16 %v936
    %v1577 = vunpack.c.l.b16 %v937
    %v1578 = vunpack.c.h.b16 %v937
    %v1579 = vunpack.c.l.b16 %v938
    %v1580 = vunpack.c.h.b16 %v938
    %v1581 = vunpack.c.l.b16 %v939
    %v1582 = vunpack.c.h.b16 %v939
    %v1583 = vunpack.c.l.b16 %v940
    %v1584 = vunpack.c.h.b16 %v940
    %v1585 = vunpack.c.l.b16 %v941
    %v1586 = vunpack.c.h.b16 %v941
    %v1587 = vunpack.c.l.b16 %v942
    %v1588 = vunpack.c.h.b16 %v942
    %v1589 = vunpack.c.l.b16 %v943
    %v1590 = vunpack.c.h.b16 %v943
    %v1591 = vunpack.c.l.b16 %v944
    %v1592 = vunpack.c.h.b16 %v944
    %v1593 = vunpack.c.l.b16 %v945
    %v1594 = vunpack.c.h.b16 %v945
    %v1595 = vunpack.c.l.b16 %v946
    %v1596 = vunpack.c.h.b16 %v946
    %v1597 = vunpack.c.l.b16 %v947
    %v1598 = vunpack.c.h.b16 %v947
    %v1599 = vunpack.c.l.b16 %v948
    %v1600 = vunpack.c.h.b16 %v948
    %v1601 = vunpack.c.l.b16 %v949
    %v1602 = vunpack.c.h.b16 %v949
    %v1603 = vunpack.c.l.b16 %v950
    %v1604 = vunpack.c.h.b16 %v950
    %v1605 = vunpack.c.l.b16 %v951
    %v1606 = vunpack.c.h.b16 %v951
    %v1607 = vunpack.c.l.b16 %v952
    %v1608 = vunpack.c.h.b16 %v952
    %v1609 = vunpack.c.l.b16 %v953
    %v1610 = vunpack.c.h.b16 %v953
    %v1611 = vunpack.c.l.b16 %v954
    %v1612 = vunpack.c.h.b16 %v954
    %v1613 = vunpack.c.l.b16 %v955
    %v1614 = vunpack.c.h.b16 %v955
    %v1615 = vunpack.c.l.b16 %v956
    %v1616 = vunpack.c.h.b16 %v956
    %v1617 = vunpack.c.l.b16 %v957
    %v1618 = vunpack.c.h.b16 %v957
    %v1619 = vunpack.c.l.b16 %v958
    %v1620 = vunpack.c.h.b16 %v958
    %v1621 = vunpack.c.l.b16 %v959
    %v1622 = vunpack.c.h.b16 %v959
    %v1623 = vunpack.c.l.b16 %v960
    %v1624 = vunpack.c.h.b16 %v960
    %v1625 = vunpack.c.l.b16 %v961
    %v1626 = vunpack.c.h.b16 %v961
    %v1627 = vunpack.c.l.b16 %v962
    %v1628 = vunpack.c.h.b16 %v962
    %v1629 = vunpack.c.l.b16 %v963
    %v1630 = vunpack.c.h.b16 %v963
    %v1631 = vunpack.c.l.b16 %v964
    %v1632 = vunpack.c.h.b16 %v964
    %v1633 = vunpack.c.l.b16 %v965
    %v1634 = vunpack.c.h.b16 %v965
    %v1635 = vunpack.c.l.b16 %v966
    %v1636 = vunpack.c.h.b16 %v966
    %v1637 = vunpack.c.l.b16 %v967
    %v1638 = vunpack.c.h.b16 %v967
    %v1639 = vunpack.c.l.b16 %v968
    %v1640 = vunpack.c.h.b16 %v968
    %v1641 = vunpack.c.l.b16 %v969
    %v1642 = vunpack.c.h.b16 %v969
    %v1643 = vunpack.c.l.b16 %v970
    %v1644 = vunpack.c.h.b16 %v970
    %v1645 = vunpack.c.l.b16 %v971
    %v1646 = vunpack.c.h.b16 %v971
    %v1647 = vunpack.c.l.b16 %v972
    %v1648 = vunpack.c.h.b16 %v972
    %v1649 = vunpack.c.l.b16 %v973
    %v1650 = vunpack.c.h.b16 %v973
    %v1651 = vunpack.c.l.b16 %v974
    %v1652 = vunpack.c.h.b16 %v974
    %v1653 = vunpack.c.l.b16 %v975
    %v1654 = vunpack.c.h.b16 %v975
    %v1655 = vunpack.c.l.b16 %v976
    %v1656 = vunpack.c.h.b16 %v976
    %v1657 = vunpack.c.l.b16 %v977
    %v1658 = vunpack.c.h.b16 %v977
    %v1659 = vunpack.c.l.b16 %v978
    %v1660 = vunpack.c.h.b16 %v978
    %v1661 = vunpack.c.l.b16 %v979
    %v1662 = vunpack.c.h.b16 %v979
    %v1663 = vunpack.c.l.b16 %v980
    %v1664 = vunpack.c.h.b16 %v980
    %v1665 = vunpack.c.l.b16 %v981
    %v1666 = vunpack.c.h.b16 %v981
    %v1667 = vunpack.c.l.b16 %v982
    %v1668 = vunpack.c.h.b16 %v982
    %v1669 = vunpack.c.l.b16 %v983
    %v1670 = vunpack.c.h.b16 %v983
    %v1671 = vunpack.c.l.b16 %v984
    %v1672 = vunpack.c.h.b16 %v984
    %v1673 = vunpack.c.l.b16 %v985
    %v1674 = vunpack.c.h.b16 %v985
    %v1675 = vunpack.c.l.b16 %v986
    %v1676 = vunpack.c.h.b16 %v986
    %v1677 = vunpack.c.l.b16 %v987
    %v1678 = vunpack.c.h.b16 %v987
    %v1679 = vunpack.c.l.b16 %v988
    %v1680 = vunpack.c.h.b16 %v988
    %v1681 = vunpack.c.l.b16 %v989
    %v1682 = vunpack.c.h.b16 %v989
    %v1683 = vunpack.c.l.b16 %v990
    %v1684 = vunpack.c.h.b16 %v990
    %v1685 = vunpack.c.l.b16 %v991
    %v1686 = vunpack.c.h.b16 %v991
    %v1687 = vunpack.c.l.b16 %v992
    %v1688 = vunpack.c.h.b16 %v992
    %v1689 = vunpack.c.l.b16 %v993
    %v1690 = vunpack.c.h.b16 %v993
    %v1691 = vunpack.c.l.b16 %v994
    %v1692 = vunpack.c.h.b16 %v994
    %v1693 = vunpack.c.l.b16 %v995
    %v1694 = vunpack.c.h.b16 %v995
    %v1695 = vunpack.c.l.b16 %v996
    %v1696 = vunpack.c.h.b16 %v996
    %v1697 = vunpack.c.l.b16 %v997
    %v1698 = vunpack.c.h.b16 %v997
    %v1699 = vunpack.c.l.b16 %v998
    %v1700 = vunpack.c.h.b16 %v998
    %v1701 = vunpack.c.l.b16 %v999
    %v1702 = vunpack.c.h.b16 %v999
    %v1703 = vunpack.c.l.b16 %v1000
    %v1704 = vunpack.c.h.b16 %v1000
    %v1705 = vunpack.c.l.b16 %v1001
    %v1706 = vunpack.c.h.b16 %v1001
    %v1707 = vunpack.c.l.b16 %v1002
    %v1708 = vunpack.c.h.b16 %v1002
    %v1709 = vunpack.c.l.b16 %v1003
    %v1710 = vunpack.c.h.b16 %v1003
    %v1711 = vunpack.c.l.b16 %v1004
    %v1712 = vunpack.c.h.b16 %v1004
    %v1713 = vunpack.c.l.b16 %v1005
    %v1714 = vunpack.c.h.b16 %v1005
    %v1715 = vunpack.c.l.b16 %v1006
    %v1716 = vunpack.c.h.b16 %v1006
    %v1717 = vunpack.c.l.b16 %v1007
    %v1718 = vunpack.c.h.b16 %v1007
    %v1719 = vunpack.c.l.b16 %v1008
    %v1720 = vunpack.c.h.b16 %v1008
    %v1721 = vunpack.c.l.b16 %v1009
    %v1722 = vunpack.c.h.b16 %v1009
    %v1723 = vunpack.c.l.b16 %v1010
    %v1724 = vunpack.c.h.b16 %v1010
    %v1725 = vunpack.c.l.b16 %v1011
    %v1726 = vunpack.c.h.b16 %v1011
    %v1727 = vunpack.c.l.b16 %v1012
    %v1728 = vunpack.c.h.b16 %v1012
    %v1729 = vunpack.c.l.b16 %v1013
    %v1730 = vunpack.c.h.b16 %v1013
    %v1731 = vunpack.c.l.b16 %v1014
    %v1732 = vunpack.c.h.b16 %v1014
    %v1733 = vunpack.c.l.b16 %v1015
    %v1734 = vunpack.c.h.b16 %v1015
    %v1735 = vunpack.c.l.b16 %v1016
    %v1736 = vunpack.c.h.b16 %v1016
    %v1737 = vunpack.c.l.b16 %v1017
    %v1738 = vunpack.c.h.b16 %v1017
    %v1739 = vunpack.c.l.b16 %v1018
    %v1740 = vunpack.c.h.b16 %v1018
    %v1741 = vunpack.c.l.b16 %v1019
    %v1742 = vunpack.c.h.b16 %v1019
    %v1743 = vunpack.c.l.b16 %v1020
    %v1744 = vunpack.c.h.b16 %v1020
    %v1745 = vunpack.c.l.b16 %v1021
    %v1746 = vunpack.c.h.b16 %v1021
    %v1747 = vunpack.c.l.b16 %v1022
    %v1748 = vunpack.c.h.b16 %v1022
    %v1749 = vunpack.c.l.b16 %v1023
    %v1750 = vunpack.c.h.b16 %v1023
    %v1751 = vunpack.c.l.b16 %v1024
    %v1752 = vunpack.c.h.b16 %v1024
    %v1753 = vunpack.c.l.b16 %v1025
    %v1754 = vunpack.c.h.b16 %v1025
    %v1755 = vunpack.c.l.b16 %v1026
    %v1756 = vunpack.c.h.b16 %v1026
    %v1757 = vunpack.c.l.b16 %v1027
    %v1758 = vunpack.c.h.b16 %v1027
    %v1759 = vunpack.c.l.b16 %v1028
    %v1760 = vunpack.c.h.b16 %v1028
    %v1761 = vunpack.c.l.b16 %v1029
    %v1762 = vunpack.c.h.b16 %v1029
    %v1763 = vunpack.c.l.b16 %v1030
    %v1764 = vunpack.c.h.b16 %v1030
    %v1765 = vunpack.c.l.b16 %v1031
    %v1766 = vunpack.c.h.b16 %v1031
    %v1767 = vunpack.c.l.b16 %v1032
    %v1768 = vunpack.c.h.b16 %v1032
    %v1769 = vunpack.c.l.b16 %v1033
    %v1770 = vunpack.c.h.b16 %v1033
    %v1771 = vunpack.c.l.b16 %v1034
    %v1772 = vunpack.c.h.b16 %v1034
    %v1773 = vunpack.c.l.b16 %v1035
    %v1774 = vunpack.c.h.b16 %v1035
    %v1775 = vunpack.c.l.b16 %v1036
    %v1776 = vunpack.c.h.b16 %v1036
    %v1777 = vunpack.c.l.b16 %v1037
    %v1778 = vunpack.c.h.b16 %v1037
    %v1779 = vunpack.c.l.b16 %v1038
    %v1780 = vunpack.c.h.b16 %v1038
    %v1781 = vunpack.c.l.b16 %v1039
    %v1782 = vunpack.c.h.b16 %v1039
    %v1783 = vunpack.c.l.b16 %v1040
    %v1784 = vunpack.c.h.b16 %v1040
    %v1785 = vunpack.c.l.b16 %v1041
    %v1786 = vunpack.c.h.b16 %v1041
    %v1787 = vunpack.c.l.b16 %v1042
    %v1788 = vunpack.c.h.b16 %v1042
    %v1789 = vunpack.c.l.b16 %v1043
    %v1790 = vunpack.c.h.b16 %v1043
    %v1791 = vunpack.c.l.b16 %v1044
    %v1792 = vunpack.c.h.b16 %v1044
    %v1793 = vunpack.c.l.b16 %v1045
    %v1794 = vunpack.c.h.b16 %v1045
    %v1795 = vunpack.c.l.b16 %v1046
    %v1796 = vunpack.c.h.b16 %v1046
    %v1797 = vunpack.c.l.b16 %v1047
    %v1798 = vunpack.c.h.b16 %v1047
    %v1799 = vunpack.c.l.b16 %v1048
    %v1800 = vunpack.c.h.b16 %v1048
    %v1801 = vunpack.c.l.b16 %v1049
    %v1802 = vunpack.c.h.b16 %v1049
    %v1803 = vunpack.c.l.b16 %v1050
    %v1804 = vunpack.c.h.b16 %v1050
    %v1805 = vunpack.c.l.b16 %v1051
    %v1806 = vunpack.c.h.b16 %v1051
    %v1807 = vunpack.c.l.b16 %v1052
    %v1808 = vunpack.c.h.b16 %v1052
    %v1809 = vunpack.c.l.b16 %v1053
    %v1810 = vunpack.c.h.b16 %v1053
    %v1811 = vunpack.c.l.b16 %v1054
    %v1812 = vunpack.c.h.b16 %v1054
    %v1813 = vunpack.c.l.b16 %v1055
    %v1814 = vunpack.c.h.b16 %v1055
    %v1815 = vunpack.c.l.b16 %v1056
    %v1816 = vunpack.c.h.b16 %v1056
    %v1817 = vunpack.c.l.b16 %v1057
    %v1818 = vunpack.c.h.b16 %v1057
    %v1819 = vunpack.c.l.b16 %v1058
    %v1820 = vunpack.c.h.b16 %v1058
    %v1821 = vunpack.c.l.b16 %v1059
    %v1822 = vunpack.c.h.b16 %v1059
    %v1823 = vunpack.c.l.b16 %v1060
    %v1824 = vunpack.c.h.b16 %v1060
    %v1825 = vunpack.c.l.b16 %v1061
    %v1826 = vunpack.c.h.b16 %v1061
    %v1827 = vunpack.c.l.b16 %v1062
    %v1828 = vunpack.c.h.b16 %v1062
    %v1829 = vunpack.c.l.b16 %v1063
    %v1830 = vunpack.c.h.b16 %v1063
    %v1831 = vunpack.c.l.b16 %v1064
    %v1832 = vunpack.c.h.b16 %v1064
    %v1833 = vunpack.c.l.b16 %v1065
    %v1834 = vunpack.c.h.b16 %v1065
    %v1835 = vunpack.c.l.b16 %v1066
    %v1836 = vunpack.c.h.b16 %v1066
    %v1837 = vunpack.c.l.b16 %v1067
    %v1838 = vunpack.c.h.b16 %v1067
    %v1839 = vunpack.c.l.b16 %v1068
    %v1840 = vunpack.c.h.b16 %v1068
    %v1841 = vunpack.c.l.b16 %v1069
    %v1842 = vunpack.c.h.b16 %v1069
    %v1843 = vunpack.c.l.b16 %v1070
    %v1844 = vunpack.c.h.b16 %v1070
    %v1845 = vunpack.c.l.b16 %v1071
    %v1846 = vunpack.c.h.b16 %v1071
    %v1847 = vunpack.c.l.b16 %v1072
    %v1848 = vunpack.c.h.b16 %v1072
    %v1849 = vunpack.c.l.b16 %v1073
    %v1850 = vunpack.c.h.b16 %v1073
    %v1851 = vunpack.c.l.b16 %v1074
    %v1852 = vunpack.c.h.b16 %v1074
    %v1853 = vunpack.c.l.b16 %v1075
    %v1854 = vunpack.c.h.b16 %v1075
    %v1855 = vunpack.c.l.b16 %v1076
    %v1856 = vunpack.c.h.b16 %v1076
    %v1857 = vunpack.c.l.b16 %v1077
    %v1858 = vunpack.c.h.b16 %v1077
    %v1859 = vunpack.c.l.b16 %v1078
    %v1860 = vunpack.c.h.b16 %v1078
    %v1861 = vunpack.c.l.b16 %v1079
    %v1862 = vunpack.c.h.b16 %v1079
    %v1863 = vunpack.c.l.b16 %v1080
    %v1864 = vunpack.c.h.b16 %v1080
    %v1865 = vunpack.c.l.b16 %v1081
    %v1866 = vunpack.c.h.b16 %v1081
    %v1867 = vunpack.c.l.b16 %v1082
    %v1868 = vunpack.c.h.b16 %v1082
    %v1869 = vpack.c.b16 %v1365, %v1357
    %v1870 = vpack.c.b16 %v1366, %v1358
    %v1871 = vpack.c.b16 %v1367, %v1359
    %v1872 = vpack.c.b16 %v1368, %v1360
    %v1873 = vpack.c.b16 %v1369, %v1361
    %v1874 = vpack.c.b16 %v1370, %v1362
    %v1875 = vpack.c.b16 %v1371, %v1363
    %v1876 = vpack.c.b16 %v1372, %v1364
    %v1877 = vpack.c.b16 %v1381, %v1373
    %v1878 = vpack.c.b16 %v1382, %v1374
    %v1879 = vpack.c.b16 %v1383, %v1375
    %v1880 = vpack.c.b16 %v1384, %v1376
    %v1881 = vpack.c.b16 %v1385, %v1377
    %v1882 = vpack.c.b16 %v1386, %v1378
    %v1883 = vpack.c.b16 %v1387, %v1379
    %v1884 = vpack.c.b16 %v1388, %v1380
    %v1885 = vpack.c.b16 %v1397, %v1389
    %v1886 = vpack.c.b16 %v1398, %v1390
    %v1887 = vpack.c.b16 %v1399, %v1391
    %v1888 = vpack.c.b16 %v1400, %v1392
    %v1889 = vpack.c.b16 %v1401, %v1393
    %v1890 = vpack.c.b16 %v1402, %v1394
    %v1891 = vpack.c.b16 %v1403, %v1395
    %v1892 = vpack.c.b16 %v1404, %v1396
    %v1893 = vpack.c.b16 %v1413, %v1405
    %v1894 = vpack.c.b16 %v1414, %v1406
    %v1895 = vpack.c.b16 %v1415, %v1407
    %v1896 = vpack.c.b16 %v1416, %v1408
    %v1897 = vpack.c.b16 %v1417, %v1409
    %v1898 = vpack.c.b16 %v1418, %v1410
    %v1899 = vpack.c.b16 %v1419, %v1411
    %v1900 = vpack.c.b16 %v1420, %v1412
    %v1901 = vpack.c.b16 %v1429, %v1421
    %v1902 = vpack.c.b16 %v1430, %v1422
    %v1903 = vpack.c.b16 %v1431, %v1423
    %v1904 = vpack.c.b16 %v1432, %v1424
    %v1905 = vpack.c.b16 %v1433, %v1425
    %v1906 = vpack.c.b16 %v1434, %v1426
    %v1907 = vpack.c.b16 %v1435, %v1427
    %v1908 = vpack.c.b16 %v1436, %v1428
    %v1909 = vpack.c.b16 %v1445, %v1437
    %v1910 = vpack.c.b16 %v1446, %v1438
    %v1911 = vpack.c.b16 %v1447, %v1439
    %v1912 = vpack.c.b16 %v1448, %v1440
    %v1913 = vpack.c.b16 %v1449, %v1441
    %v1914 = vpack.c.b16 %v1450, %v1442
    %v1915 = vpack.c.b16 %v1451, %v1443
    %v1916 = vpack.c.b16 %v1452, %v1444
    %v1917 = vpack.c.b16 %v1461, %v1453
    %v1918 = vpack.c.b16 %v1462, %v1454
    %v1919 = vpack.c.b16 %v1463, %v1455
    %v1920 = vpack.c.b16 %v1464, %v1456
    %v1921 = vpack.c.b16 %v1465, %v1457
    %v1922 = vpack.c.b16 %v1466, %v1458
    %v1923 = vpack.c.b16 %v1467, %v1459
    %v1924 = vpack.c.b16 %v1468, %v1460
    %v1925 = vpack.c.b16 %v1477, %v1469
    %v1926 = vpack.c.b16 %v1478, %v1470
    %v1927 = vpack.c.b16 %v1479, %v1471
    %v1928 = vpack.c.b16 %v1480, %v1472
    %v1929 = vpack.c.b16 %v1481, %v1473
    %v1930 = vpack.c.b16 %v1482, %v1474
    %v1931 = vpack.c.b16 %v1483, %v1475
    %v1932 = vpack.c.b16 %v1484, %v1476
    %v1933 = vpack.c.b16 %v1493, %v1485
    %v1934 = vpack.c.b16 %v1494, %v1486
    %v1935 = vpack.c.b16 %v1495, %v1487
    %v1936 = vpack.c.b16 %v1496, %v1488
    %v1937 = vpack.c.b16 %v1497, %v1489
    %v1938 = vpack.c.b16 %v1498, %v1490
    %v1939 = vpack.c.b16 %v1499, %v1491
    %v1940 = vpack.c.b16 %v1500, %v1492
    %v1941 = vpack.c.b16 %v1509, %v1501
    %v1942 = vpack.c.b16 %v1510, %v1502
    %v1943 = vpack.c.b16 %v1511, %v1503
    %v1944 = vpack.c.b16 %v1512, %v1504
    %v1945 = vpack.c.b16 %v1513, %v1505
    %v1946 = vpack.c.b16 %v1514, %v1506
    %v1947 = vpack.c.b16 %v1515, %v1507
    %v1948 = vpack.c.b16 %v1516, %v1508
    %v1949 = vpack.c.b16 %v1525, %v1517
    %v1950 = vpack.c.b16 %v1526, %v1518
    %v1951 = vpack.c.b16 %v1527, %v1519
    %v1952 = vpack.c.b16 %v1528, %v1520
    %v1953 = vpack.c.b16 %v1529, %v1521
    %v1954 = vpack.c.b16 %v1530, %v1522
    %v1955 = vpack.c.b16 %v1531, %v1523
    %v1956 = vpack.c.b16 %v1532, %v1524
    %v1957 = vpack.c.b16 %v1541, %v1533
    %v1958 = vpack.c.b16 %v1542, %v1534
    %v1959 = vpack.c.b16 %v1543, %v1535
    %v1960 = vpack.c.b16 %v1544, %v1536
    %v1961 = vpack.c.b16 %v1545, %v1537
    %v1962 = vpack.c.b16 %v1546, %v1538
    %v1963 = vpack.c.b16 %v1547, %v1539
    %v1964 = vpack.c.b16 %v1548, %v1540
    %v1965 = vpack.c.b16 %v1557, %v1549
    %v1966 = vpack.c.b16 %v1558, %v1550
    %v1967 = vpack.c.b16 %v1559, %v1551
    %v1968 = vpack.c.b16 %v1560, %v1552
    %v1969 = vpack.c.b16 %v1561, %v1553
    %v1970 = vpack.c.b16 %v1562, %v1554
    %v1971 = vpack.c.b16 %v1563, %v1555
    %v1972 = vpack.c.b16 %v1564, %v1556
    %v1973 = vpack.c.b16 %v1573, %v1565
    %v1974 = vpack.c.b16 %v1574, %v1566
    %v1975 = vpack.c.b16 %v1575, %v1567
    %v1976 = vpack.c.b16 %v1576, %v1568
    %v1977 = vpack.c.b16 %v1577, %v1569
    %v1978 = vpack.c.b16 %v1578, %v1570
    %v1979 = vpack.c.b16 %v1579, %v1571
    %v1980 = vpack.c.b16 %v1580, %v1572
    %v1981 = vpack.c.b16 %v1589, %v1581
    %v1982 = vpack.c.b16 %v1590, %v1582
    %v1983 = vpack.c.b16 %v1591, %v1583
    %v1984 = vpack.c.b16 %v1592, %v1584
    %v1985 = vpack.c.b16 %v1593, %v1585
    %v1986 = vpack.c.b16 %v1594, %v1586
    %v1987 = vpack.c.b16 %v1595, %v1587
    %v1988 = vpack.c.b16 %v1596, %v1588
    %v1989 = vpack.c.b16 %v1605, %v1597
    %v1990 = vpack.c.b16 %v1606, %v1598
    %v1991 = vpack.c.b16 %v1607, %v1599
    %v1992 = vpack.c.b16 %v1608, %v1600
    %v1993 = vpack.c.b16 %v1609, %v1601
    %v1994 = vpack.c.b16 %v1610, %v1602
    %v1995 = vpack.c.b16 %v1611, %v1603
    %v1996 = vpack.c.b16 %v1612, %v1604
    %v1997 = vpack.c.b16 %v1621, %v1613
    %v1998 = vpack.c.b16 %v1622, %v1614
    %v1999 = vpack.c.b16 %v1623, %v1615
    %v2000 = vpack.c.b16 %v1624, %v1616
    %v2001 = vpack.c.b16 %v1625, %v1617
    %v2002 = vpack.c.b16 %v1626, %v1618
    %v2003 = vpack.c.b16 %v1627, %v1619
    %v2004 = vpack.c.b16 %v1628, %v1620
    %v2005 = vpack.c.b16 %v1637, %v1629
    %v2006 = vpack.c.b16 %v1638, %v1630
    %v2007 = vpack.c.b16 %v1639, %v1631
    %v2008 = vpack.c.b16 %v1640, %v1632
    %v2009 = vpack.c.b16 %v1641, %v1633
    %v2010 = vpack.c.b16 %v1642, %v1634
    %v2011 = vpack.c.b16 %v1643, %v1635
    %v2012 = vpack.c.b16 %v1644, %v1636
    %v2013 = vpack.c.b16 %v1653, %v1645
    %v2014 = vpack.c.b16 %v1654, %v1646
    %v2015 = vpack.c.b16 %v1655, %v1647
    %v2016 = vpack.c.b16 %v1656, %v1648
    %v2017 = vpack.c.b16 %v1657, %v1649
    %v2018 = vpack.c.b16 %v1658, %v1650
    %v2019 = vpack.c.b16 %v1659, %v1651
    %v2020 = vpack.c.b16 %v1660, %v1652
    %v2021 = vpack.c.b16 %v1669, %v1661
    %v2022 = vpack.c.b16 %v1670, %v1662
    %v2023 = vpack.c.b16 %v1671, %v1663
    %v2024 = vpack.c.b16 %v1672, %v1664
    %v2025 = vpack.c.b16 %v1673, %v1665
    %v2026 = vpack.c.b16 %v1674, %v1666
    %v2027 = vpack.c.b16 %v1675, %v1667
    %v2028 = vpack.c.b16 %v1676, %v1668
    %v2029 = vpack.c.b16 %v1685, %v1677
    %v2030 = vpack.c.b16 %v1686, %v1678
    %v2031 = vpack.c.b16 %v1687, %v1679
    %v2032 = vpack.c.b16 %v1688, %v1680
    %v2033 = vpack.c.b16 %v1689, %v1681
    %v2034 = vpack.c.b16 %v1690, %v1682
    %v2035 = vpack.c.b16 %v1691, %v1683
    %v2036 = vpack.c.b16 %v1692, %v1684
    %v2037 = vpack.c.b16 %v1701, %v1693
    %v2038 = vpack.c.b16 %v1702, %v1694
    %v2039 = vpack.c.b16 %v1703, %v1695
    %v2040 = vpack.c.b16 %v1704, %v1696
    %v2041 = vpack.c.b16 %v1705, %v1697
    %v2042 = vpack.c.b16 %v1706, %v1698
    %v2043 = vpack.c.b16 %v1707, %v1699
    %v2044 = vpack.c.b16 %v1708, %v1700
    %v2045 = vpack.c.b16 %v1717, %v1709
    %v2046 = vpack.c.b16 %v1718, %v1710
    %v2047 = vpack.c.b16 %v1719, %v1711
    %v2048 = vpack.c.b16 %v1720, %v1712
    %v2049 = vpack.c.b16 %v1721, %v1713
    %v2050 = vpack.c.b16 %v1722, %v1714
    %v2051 = vpack.c.b16 %v1723, %v1715
    %v2052 = vpack.c.b16 %v1724, %v1716
    %v2053 = vpack.c.b16 %v1733, %v1725
    %v2054 = vpack.c.b16 %v1734, %v1726
    %v2055 = vpack.c.b16 %v1735, %v1727
    %v2056 = vpack.c.b16 %v1736, %v1728
    %v2057 = vpack.c.b16 %v1737, %v1729
    %v2058 = vpack.c.b16 %v1738, %v1730
    %v2059 = vpack.c.b16 %v1739, %v1731
    %v2060 = vpack.c.b16 %v1740, %v1732
    %v2061 = vpack.c.b16 %v1749, %v1741
    %v2062 = vpack.c.b16 %v1750, %v1742
    %v2063 = vpack.c.b16 %v1751, %v1743
    %v2064 = vpack.c.b16 %v1752, %v1744
    %v2065 = vpack.c.b16 %v1753, %v1745
    %v2066 = vpack.c.b16 %v1754, %v1746
    %v2067 = vpack.c.b16 %v1755, %v1747
    %v2068 = vpack.c.b16 %v1756, %v1748
    %v2069 = vpack.c.b16 %v1765, %v1757
    %v2070 = vpack.c.b16 %v1766, %v1758
    %v2071 = vpack.c.b16 %v1767, %v1759
    %v2072 = vpack.c.b16 %v1768, %v1760
    %v2073 = vpack.c.b16 %v1769, %v1761
    %v2074 = vpack.c.b16 %v1770, %v1762
    %v2075 = vpack.c.b16 %v1771, %v1763
    %v2076 = vpack.c.b16 %v1772, %v1764
    %v2077 = vpack.c.b16 %v1781, %v1773
    %v2078 = vpack.c.b16 %v1782, %v1774
    %v2079 = vpack.c.b16 %v1783, %v1775
    %v2080 = vpack.c.b16 %v1784, %v1776
    %v2081 = vpack.c.b16 %v1785, %v1777
    %v2082 = vpack.c.b16 %v1786, %v1778
    %v2083 = vpack.c.b16 %v1787, %v1779
    %v2084 = vpack.c.b16 %v1788, %v1780
    %v2085 = vpack.c.b16 %v1797, %v1789
    %v2086 = vpack.c.b16 %v1798, %v1790
    %v2087 = vpack.c.b16 %v1799, %v1791
    %v2088 = vpack.c.b16 %v1800, %v1792
    %v2089 = vpack.c.b16 %v1801, %v1793
    %v2090 = vpack.c.b16 %v1802, %v1794
    %v2091 = vpack.c.b16 %v1803, %v1795
    %v2092 = vpack.c.b16 %v1804, %v1796
    %v2093 = vpack.c.b16 %v1813, %v1805
    %v2094 = vpack.c.b16 %v1814, %v1806
    %v2095 = vpack.c.b16 %v1815, %v1807
    %v2096 = vpack.c.b16 %v1816, %v1808
    %v2097 = vpack.c.b16 %v1817, %v1809
    %v2098 = vpack.c.b16 %v1818, %v1810
    %v2099 = vpack.c.b16 %v1819, %v1811
    %v2100 = vpack.c.b16 %v1820, %v1812
    %v2101 = vpack.c.b16 %v1829, %v1821
    %v2102 = vpack.c.b16 %v1830, %v1822
    %v2103 = vpack.c.b16 %v1831, %v1823
    %v2104 = vpack.c.b16 %v1832, %v1824
    %v2105 = vpack.c.b16 %v1833, %v1825
    %v2106 = vpack.c.b16 %v1834, %v1826
    %v2107 = vpack.c.b16 %v1835, %v1827
    %v2108 = vpack.c.b16 %v1836, %v1828
    %v2109 = vpack.c.b16 %v1845, %v1837
    %v2110 = vpack.c.b16 %v1846, %v1838
    %v2111 = vpack.c.b16 %v1847, %v1839
    %v2112 = vpack.c.b16 %v1848, %v1840
    %v2113 = vpack.c.b16 %v1849, %v1841
    %v2114 = vpack.c.b16 %v1850, %v1842
    %v2115 = vpack.c.b16 %v1851, %v1843
    %v2116 = vpack.c.b16 %v1852, %v1844
    %v2117 = vpack.c.b16 %v1861, %v1853
    %v2118 = vpack.c.b16 %v1862, %v1854
    %v2119 = vpack.c.b16 %v1863, %v1855
    %v2120 = vpack.c.b16 %v1864, %v1856
    %v2121 = vpack.c.b16 %v1865, %v1857
    %v2122 = vpack.c.b16 %v1866, %v1858
    %v2123 = vpack.c.b16 %v1867, %v1859
    %v2124 = vpack.c.b16 %v1868, %v1860
    %2381 = vmatpush.bf16.msra.mxu0 %v1925
    %2382 = vmatpush.bf16.msra.mxu0 %v1917
    %2383 = vmatpush.bf16.msra.mxu0 %v1909
    %2384 = vmatpush.bf16.msra.mxu0 %v1901
    %2385 = vmatpush.bf16.msra.mxu0 %v1893
    %2386 = vmatpush.bf16.msra.mxu0 %v1885
    %2387 = vmatpush.bf16.msra.mxu0 %v1877
    %2388 = vmatpush.bf16.msra.mxu0 %v1869
    %2389 = vmatmul.bf16.gmra.mxu0 %v823
    %v2390 = vpop.f32.mrf.mxu0
    %v2391 = vadd.f32 %v1085, %v2390
    %v2392 = vpop.f32.mrf.mxu0
    %v2393 = vadd.f32 %v1085, %v2392
    %2394 = vdwg.mxu0
    %2395 = vmatpush.bf16.msra.mxu0 %v1989
    %2396 = vmatpush.bf16.msra.mxu0 %v1981
    %2397 = vmatpush.bf16.msra.mxu0 %v1973
    %2398 = vmatpush.bf16.msra.mxu0 %v1965
    %2399 = vmatpush.bf16.msra.mxu0 %v1957
    %2400 = vmatpush.bf16.msra.mxu0 %v1949
    %2401 = vmatpush.bf16.msra.mxu0 %v1941
    %2402 = vmatpush.bf16.msra.mxu0 %v1933
    %2403 = vmatmul.bf16.gmra.mxu0 %v824
    %v2404 = vpop.f32.mrf.mxu0
    %v2405 = vadd.f32 %v2391, %v2404
    %v2406 = vpop.f32.mrf.mxu0
    %v2407 = vadd.f32 %v2393, %v2406
    %2408 = vdwg.mxu0
    %2409 = vmatpush.bf16.msra.mxu0 %v2053
    %2410 = vmatpush.bf16.msra.mxu0 %v2045
    %2411 = vmatpush.bf16.msra.mxu0 %v2037
    %2412 = vmatpush.bf16.msra.mxu0 %v2029
    %2413 = vmatpush.bf16.msra.mxu0 %v2021
    %2414 = vmatpush.bf16.msra.mxu0 %v2013
    %2415 = vmatpush.bf16.msra.mxu0 %v2005
    %2416 = vmatpush.bf16.msra.mxu0 %v1997
    %2417 = vmatmul.bf16.gmra.mxu0 %v825
    %v2418 = vpop.f32.mrf.mxu0
    %v2419 = vadd.f32 %v2405, %v2418
    %v2420 = vpop.f32.mrf.mxu0
    %v2421 = vadd.f32 %v2407, %v2420
    %2422 = vdwg.mxu0
    %2423 = vmatpush.bf16.msra.mxu0 %v2117
    %2424 = vmatpush.bf16.msra.mxu0 %v2109
    %2425 = vmatpush.bf16.msra.mxu0 %v2101
    %2426 = vmatpush.bf16.msra.mxu0 %v2093
    %2427 = vmatpush.bf16.msra.mxu0 %v2085
    %2428 = vmatpush.bf16.msra.mxu0 %v2077
    %2429 = vmatpush.bf16.msra.mxu0 %v2069
    %2430 = vmatpush.bf16.msra.mxu0 %v2061
    %2431 = vmatmul.bf16.gmra.mxu0 %v826
    %v2432 = vpop.f32.mrf.mxu0
    %v2433 = vadd.f32 %v2419, %v2432
    %v2434 = vpop.f32.mrf.mxu0
    %v2435 = vadd.f32 %v2421, %v2434
    %2436 = vdwg.mxu0
    %2437 = vmatpush.bf16.msra.mxu0 %v1926
    %2438 = vmatpush.bf16.msra.mxu0 %v1918
    %2439 = vmatpush.bf16.msra.mxu0 %v1910
    %2440 = vmatpush.bf16.msra.mxu0 %v1902
    %2441 = vmatpush.bf16.msra.mxu0 %v1894
    %2442 = vmatpush.bf16.msra.mxu0 %v1886
    %2443 = vmatpush.bf16.msra.mxu0 %v1878
    %2444 = vmatpush.bf16.msra.mxu0 %v1870
    %2445 = vmatmul.bf16.gmra.mxu0 %v823
    %v2446 = vpop.f32.mrf.mxu0
    %v2447 = vadd.f32 %v1086, %v2446
    %v2448 = vpop.f32.mrf.mxu0
    %v2449 = vadd.f32 %v1086, %v2448
    %2450 = vdwg.mxu0
    %2451 = vmatpush.bf16.msra.mxu0 %v1990
    %2452 = vmatpush.bf16.msra.mxu0 %v1982
    %2453 = vmatpush.bf16.msra.mxu0 %v1974
    %2454 = vmatpush.bf16.msra.mxu0 %v1966
    %2455 = vmatpush.bf16.msra.mxu0 %v1958
    %2456 = vmatpush.bf16.msra.mxu0 %v1950
    %2457 = vmatpush.bf16.msra.mxu0 %v1942
    %2458 = vmatpush.bf16.msra.mxu0 %v1934
    %2459 = vmatmul.bf16.gmra.mxu0 %v824
    %v2460 = vpop.f32.mrf.mxu0
    %v2461 = vadd.f32 %v2447, %v2460
    %v2462 = vpop.f32.mrf.mxu0
    %v2463 = vadd.f32 %v2449, %v2462
    %2464 = vdwg.mxu0
    %2465 = vmatpush.bf16.msra.mxu0 %v2054
    %2466 = vmatpush.bf16.msra.mxu0 %v2046
    %2467 = vmatpush.bf16.msra.mxu0 %v2038
    %2468 = vmatpush.bf16.msra.mxu0 %v2030
    %2469 = vmatpush.bf16.msra.mxu0 %v2022
    %2470 = vmatpush.bf16.msra.mxu0 %v2014
    %2471 = vmatpush.bf16.msra.mxu0 %v2006
    %2472 = vmatpush.bf16.msra.mxu0 %v1998
    %2473 = vmatmul.bf16.gmra.mxu0 %v825
    %v2474 = vpop.f32.mrf.mxu0
    %v2475 = vadd.f32 %v2461, %v2474
    %v2476 = vpop.f32.mrf.mxu0
    %v2477 = vadd.f32 %v2463, %v2476
    %2478 = vdwg.mxu0
    %2479 = vmatpush.bf16.msra.mxu0 %v2118
    %2480 = vmatpush.bf16.msra.mxu0 %v2110
    %2481 = vmatpush.bf16.msra.mxu0 %v2102
    %2482 = vmatpush.bf16.msra.mxu0 %v2094
    %2483 = vmatpush.bf16.msra.mxu0 %v2086
    %2484 = vmatpush.bf16.msra.mxu0 %v2078
    %2485 = vmatpush.bf16.msra.mxu0 %v2070
    %2486 = vmatpush.bf16.msra.mxu0 %v2062
    %2487 = vmatmul.bf16.gmra.mxu0 %v826
    %v2488 = vpop.f32.mrf.mxu0
    %v2489 = vadd.f32 %v2475, %v2488
    %v2490 = vpop.f32.mrf.mxu0
    %v2491 = vadd.f32 %v2477, %v2490
    %2492 = vdwg.mxu0
    %2493 = vmatpush.bf16.msra.mxu0 %v1927
    %2494 = vmatpush.bf16.msra.mxu0 %v1919
    %2495 = vmatpush.bf16.msra.mxu0 %v1911
    %2496 = vmatpush.bf16.msra.mxu0 %v1903
    %2497 = vmatpush.bf16.msra.mxu0 %v1895
    %2498 = vmatpush.bf16.msra.mxu0 %v1887
    %2499 = vmatpush.bf16.msra.mxu0 %v1879
    %2500 = vmatpush.bf16.msra.mxu0 %v1871
    %2501 = vmatmul.bf16.gmra.mxu0 %v823
    %v2502 = vpop.f32.mrf.mxu0
    %v2503 = vadd.f32 %v1087, %v2502
    %v2504 = vpop.f32.mrf.mxu0
    %v2505 = vadd.f32 %v1087, %v2504
    %2506 = vdwg.mxu0
    %2507 = vmatpush.bf16.msra.mxu0 %v1991
    %2508 = vmatpush.bf16.msra.mxu0 %v1983
    %2509 = vmatpush.bf16.msra.mxu0 %v1975
    %2510 = vmatpush.bf16.msra.mxu0 %v1967
    %2511 = vmatpush.bf16.msra.mxu0 %v1959
    %2512 = vmatpush.bf16.msra.mxu0 %v1951
    %2513 = vmatpush.bf16.msra.mxu0 %v1943
    %2514 = vmatpush.bf16.msra.mxu0 %v1935
    %2515 = vmatmul.bf16.gmra.mxu0 %v824
    %v2516 = vpop.f32.mrf.mxu0
    %v2517 = vadd.f32 %v2503, %v2516
    %v2518 = vpop.f32.mrf.mxu0
    %v2519 = vadd.f32 %v2505, %v2518
    %2520 = vdwg.mxu0
    %2521 = vmatpush.bf16.msra.mxu0 %v2055
    %2522 = vmatpush.bf16.msra.mxu0 %v2047
    %2523 = vmatpush.bf16.msra.mxu0 %v2039
    %2524 = vmatpush.bf16.msra.mxu0 %v2031
    %2525 = vmatpush.bf16.msra.mxu0 %v2023
    %2526 = vmatpush.bf16.msra.mxu0 %v2015
    %2527 = vmatpush.bf16.msra.mxu0 %v2007
    %2528 = vmatpush.bf16.msra.mxu0 %v1999
    %2529 = vmatmul.bf16.gmra.mxu0 %v825
    %v2530 = vpop.f32.mrf.mxu0
    %v2531 = vadd.f32 %v2517, %v2530
    %v2532 = vpop.f32.mrf.mxu0
    %v2533 = vadd.f32 %v2519, %v2532
    %2534 = vdwg.mxu0
    %2535 = vmatpush.bf16.msra.mxu0 %v2119
    %2536 = vmatpush.bf16.msra.mxu0 %v2111
    %2537 = vmatpush.bf16.msra.mxu0 %v2103
    %2538 = vmatpush.bf16.msra.mxu0 %v2095
    %2539 = vmatpush.bf16.msra.mxu0 %v2087
    %2540 = vmatpush.bf16.msra.mxu0 %v2079
    %2541 = vmatpush.bf16.msra.mxu0 %v2071
    %2542 = vmatpush.bf16.msra.mxu0 %v2063
    %2543 = vmatmul.bf16.gmra.mxu0 %v826
    %v2544 = vpop.f32.mrf.mxu0
    %v2545 = vadd.f32 %v2531, %v2544
    %v2546 = vpop.f32.mrf.mxu0
    %v2547 = vadd.f32 %v2533, %v2546
    %2548 = vdwg.mxu0
    %2549 = vmatpush.bf16.msra.mxu0 %v1928
    %2550 = vmatpush.bf16.msra.mxu0 %v1920
    %2551 = vmatpush.bf16.msra.mxu0 %v1912
    %2552 = vmatpush.bf16.msra.mxu0 %v1904
    %2553 = vmatpush.bf16.msra.mxu0 %v1896
    %2554 = vmatpush.bf16.msra.mxu0 %v1888
    %2555 = vmatpush.bf16.msra.mxu0 %v1880
    %2556 = vmatpush.bf16.msra.mxu0 %v1872
    %2557 = vmatmul.bf16.gmra.mxu0 %v823
    %v2558 = vpop.f32.mrf.mxu0
    %v2559 = vadd.f32 %v1088, %v2558
    %v2560 = vpop.f32.mrf.mxu0
    %v2561 = vadd.f32 %v1088, %v2560
    %2562 = vdwg.mxu0
    %2563 = vmatpush.bf16.msra.mxu0 %v1992
    %2564 = vmatpush.bf16.msra.mxu0 %v1984
    %2565 = vmatpush.bf16.msra.mxu0 %v1976
    %2566 = vmatpush.bf16.msra.mxu0 %v1968
    %2567 = vmatpush.bf16.msra.mxu0 %v1960
    %2568 = vmatpush.bf16.msra.mxu0 %v1952
    %2569 = vmatpush.bf16.msra.mxu0 %v1944
    %2570 = vmatpush.bf16.msra.mxu0 %v1936
    %2571 = vmatmul.bf16.gmra.mxu0 %v824
    %v2572 = vpop.f32.mrf.mxu0
    %v2573 = vadd.f32 %v2559, %v2572
    %v2574 = vpop.f32.mrf.mxu0
    %v2575 = vadd.f32 %v2561, %v2574
    %2576 = vdwg.mxu0
    %2577 = vmatpush.bf16.msra.mxu0 %v2056
    %2578 = vmatpush.bf16.msra.mxu0 %v2048
    %2579 = vmatpush.bf16.msra.mxu0 %v2040
    %2580 = vmatpush.bf16.msra.mxu0 %v2032
    %2581 = vmatpush.bf16.msra.mxu0 %v2024
    %2582 = vmatpush.bf16.msra.mxu0 %v2016
    %2583 = vmatpush.bf16.msra.mxu0 %v2008
    %2584 = vmatpush.bf16.msra.mxu0 %v2000
    %2585 = vmatmul.bf16.gmra.mxu0 %v825
    %v2586 = vpop.f32.mrf.mxu0
    %v2587 = vadd.f32 %v2573, %v2586
    %v2588 = vpop.f32.mrf.mxu0
    %v2589 = vadd.f32 %v2575, %v2588
    %2590 = vdwg.mxu0
    %2591 = vmatpush.bf16.msra.mxu0 %v2120
    %2592 = vmatpush.bf16.msra.mxu0 %v2112
    %2593 = vmatpush.bf16.msra.mxu0 %v2104
    %2594 = vmatpush.bf16.msra.mxu0 %v2096
    %2595 = vmatpush.bf16.msra.mxu0 %v2088
    %2596 = vmatpush.bf16.msra.mxu0 %v2080
    %2597 = vmatpush.bf16.msra.mxu0 %v2072
    %2598 = vmatpush.bf16.msra.mxu0 %v2064
    %2599 = vmatmul.bf16.gmra.mxu0 %v826
    %v2600 = vpop.f32.mrf.mxu0
    %v2601 = vadd.f32 %v2587, %v2600
    %v2602 = vpop.f32.mrf.mxu0
    %v2603 = vadd.f32 %v2589, %v2602
    %2604 = vdwg.mxu0
    %2605 = vmatpush.bf16.msra.mxu0 %v1929
    %2606 = vmatpush.bf16.msra.mxu0 %v1921
    %2607 = vmatpush.bf16.msra.mxu0 %v1913
    %2608 = vmatpush.bf16.msra.mxu0 %v1905
    %2609 = vmatpush.bf16.msra.mxu0 %v1897
    %2610 = vmatpush.bf16.msra.mxu0 %v1889
    %2611 = vmatpush.bf16.msra.mxu0 %v1881
    %2612 = vmatpush.bf16.msra.mxu0 %v1873
    %2613 = vmatmul.bf16.gmra.mxu0 %v823
    %v2614 = vpop.f32.mrf.mxu0
    %v2615 = vadd.f32 %v1089, %v2614
    %v2616 = vpop.f32.mrf.mxu0
    %v2617 = vadd.f32 %v1089, %v2616
    %2618 = vdwg.mxu0
    %2619 = vmatpush.bf16.msra.mxu0 %v1993
    %2620 = vmatpush.bf16.msra.mxu0 %v1985
    %2621 = vmatpush.bf16.msra.mxu0 %v1977
    %2622 = vmatpush.bf16.msra.mxu0 %v1969
    %2623 = vmatpush.bf16.msra.mxu0 %v1961
    %2624 = vmatpush.bf16.msra.mxu0 %v1953
    %2625 = vmatpush.bf16.msra.mxu0 %v1945
    %2626 = vmatpush.bf16.msra.mxu0 %v1937
    %2627 = vmatmul.bf16.gmra.mxu0 %v824
    %v2628 = vpop.f32.mrf.mxu0
    %v2629 = vadd.f32 %v2615, %v2628
    %v2630 = vpop.f32.mrf.mxu0
    %v2631 = vadd.f32 %v2617, %v2630
    %2632 = vdwg.mxu0
    %2633 = vmatpush.bf16.msra.mxu0 %v2057
    %2634 = vmatpush.bf16.msra.mxu0 %v2049
    %2635 = vmatpush.bf16.msra.mxu0 %v2041
    %2636 = vmatpush.bf16.msra.mxu0 %v2033
    %2637 = vmatpush.bf16.msra.mxu0 %v2025
    %2638 = vmatpush.bf16.msra.mxu0 %v2017
    %2639 = vmatpush.bf16.msra.mxu0 %v2009
    %2640 = vmatpush.bf16.msra.mxu0 %v2001
    %2641 = vmatmul.bf16.gmra.mxu0 %v825
    %v2642 = vpop.f32.mrf.mxu0
    %v2643 = vadd.f32 %v2629, %v2642
    %v2644 = vpop.f32.mrf.mxu0
    %v2645 = vadd.f32 %v2631, %v2644
    %2646 = vdwg.mxu0
    %2647 = vmatpush.bf16.msra.mxu0 %v2121
    %2648 = vmatpush.bf16.msra.mxu0 %v2113
    %2649 = vmatpush.bf16.msra.mxu0 %v2105
    %2650 = vmatpush.bf16.msra.mxu0 %v2097
    %2651 = vmatpush.bf16.msra.mxu0 %v2089
    %2652 = vmatpush.bf16.msra.mxu0 %v2081
    %2653 = vmatpush.bf16.msra.mxu0 %v2073
    %2654 = vmatpush.bf16.msra.mxu0 %v2065
    %2655 = vmatmul.bf16.gmra.mxu0 %v826
    %v2656 = vpop.f32.mrf.mxu0
    %v2657 = vadd.f32 %v2643, %v2656
    %v2658 = vpop.f32.mrf.mxu0
    %v2659 = vadd.f32 %v2645, %v2658
    %2660 = vdwg.mxu0
    %2661 = vmatpush.bf16.msra.mxu0 %v1930
    %2662 = vmatpush.bf16.msra.mxu0 %v1922
    %2663 = vmatpush.bf16.msra.mxu0 %v1914
    %2664 = vmatpush.bf16.msra.mxu0 %v1906
    %2665 = vmatpush.bf16.msra.mxu0 %v1898
    %2666 = vmatpush.bf16.msra.mxu0 %v1890
    %2667 = vmatpush.bf16.msra.mxu0 %v1882
    %2668 = vmatpush.bf16.msra.mxu0 %v1874
    %2669 = vmatmul.bf16.gmra.mxu0 %v823
    %v2670 = vpop.f32.mrf.mxu0
    %v2671 = vadd.f32 %v1090, %v2670
    %v2672 = vpop.f32.mrf.mxu0
    %v2673 = vadd.f32 %v1090, %v2672
    %2674 = vdwg.mxu0
    %2675 = vmatpush.bf16.msra.mxu0 %v1994
    %2676 = vmatpush.bf16.msra.mxu0 %v1986
    %2677 = vmatpush.bf16.msra.mxu0 %v1978
    %2678 = vmatpush.bf16.msra.mxu0 %v1970
    %2679 = vmatpush.bf16.msra.mxu0 %v1962
    %2680 = vmatpush.bf16.msra.mxu0 %v1954
    %2681 = vmatpush.bf16.msra.mxu0 %v1946
    %2682 = vmatpush.bf16.msra.mxu0 %v1938
    %2683 = vmatmul.bf16.gmra.mxu0 %v824
    %v2684 = vpop.f32.mrf.mxu0
    %v2685 = vadd.f32 %v2671, %v2684
    %v2686 = vpop.f32.mrf.mxu0
    %v2687 = vadd.f32 %v2673, %v2686
    %2688 = vdwg.mxu0
    %2689 = vmatpush.bf16.msra.mxu0 %v2058
    %2690 = vmatpush.bf16.msra.mxu0 %v2050
    %2691 = vmatpush.bf16.msra.mxu0 %v2042
    %2692 = vmatpush.bf16.msra.mxu0 %v2034
    %2693 = vmatpush.bf16.msra.mxu0 %v2026
    %2694 = vmatpush.bf16.msra.mxu0 %v2018
    %2695 = vmatpush.bf16.msra.mxu0 %v2010
    %2696 = vmatpush.bf16.msra.mxu0 %v2002
    %2697 = vmatmul.bf16.gmra.mxu0 %v825
    %v2698 = vpop.f32.mrf.mxu0
    %v2699 = vadd.f32 %v2685, %v2698
    %v2700 = vpop.f32.mrf.mxu0
    %v2701 = vadd.f32 %v2687, %v2700
    %2702 = vdwg.mxu0
    %2703 = vmatpush.bf16.msra.mxu0 %v2122
    %2704 = vmatpush.bf16.msra.mxu0 %v2114
    %2705 = vmatpush.bf16.msra.mxu0 %v2106
    %2706 = vmatpush.bf16.msra.mxu0 %v2098
    %2707 = vmatpush.bf16.msra.mxu0 %v2090
    %2708 = vmatpush.bf16.msra.mxu0 %v2082
    %2709 = vmatpush.bf16.msra.mxu0 %v2074
    %2710 = vmatpush.bf16.msra.mxu0 %v2066
    %2711 = vmatmul.bf16.gmra.mxu0 %v826
    %v2712 = vpop.f32.mrf.mxu0
    %v2713 = vadd.f32 %v2699, %v2712
    %v2714 = vpop.f32.mrf.mxu0
    %v2715 = vadd.f32 %v2701, %v2714
    %2716 = vdwg.mxu0
    %2717 = vmatpush.bf16.msra.mxu0 %v1931
    %2718 = vmatpush.bf16.msra.mxu0 %v1923
    %2719 = vmatpush.bf16.msra.mxu0 %v1915
    %2720 = vmatpush.bf16.msra.mxu0 %v1907
    %2721 = vmatpush.bf16.msra.mxu0 %v1899
    %2722 = vmatpush.bf16.msra.mxu0 %v1891
    %2723 = vmatpush.bf16.msra.mxu0 %v1883
    %2724 = vmatpush.bf16.msra.mxu0 %v1875
    %2725 = vmatmul.bf16.gmra.mxu0 %v823
    %v2726 = vpop.f32.mrf.mxu0
    %v2727 = vadd.f32 %v1091, %v2726
    %v2728 = vpop.f32.mrf.mxu0
    %v2729 = vadd.f32 %v1091, %v2728
    %2730 = vdwg.mxu0
    %2731 = vmatpush.bf16.msra.mxu0 %v1995
    %2732 = vmatpush.bf16.msra.mxu0 %v1987
    %2733 = vmatpush.bf16.msra.mxu0 %v1979
    %2734 = vmatpush.bf16.msra.mxu0 %v1971
    %2735 = vmatpush.bf16.msra.mxu0 %v1963
    %2736 = vmatpush.bf16.msra.mxu0 %v1955
    %2737 = vmatpush.bf16.msra.mxu0 %v1947
    %2738 = vmatpush.bf16.msra.mxu0 %v1939
    %2739 = vmatmul.bf16.gmra.mxu0 %v824
    %v2740 = vpop.f32.mrf.mxu0
    %v2741 = vadd.f32 %v2727, %v2740
    %v2742 = vpop.f32.mrf.mxu0
    %v2743 = vadd.f32 %v2729, %v2742
    %2744 = vdwg.mxu0
    %2745 = vmatpush.bf16.msra.mxu0 %v2059
    %2746 = vmatpush.bf16.msra.mxu0 %v2051
    %2747 = vmatpush.bf16.msra.mxu0 %v2043
    %2748 = vmatpush.bf16.msra.mxu0 %v2035
    %2749 = vmatpush.bf16.msra.mxu0 %v2027
    %2750 = vmatpush.bf16.msra.mxu0 %v2019
    %2751 = vmatpush.bf16.msra.mxu0 %v2011
    %2752 = vmatpush.bf16.msra.mxu0 %v2003
    %2753 = vmatmul.bf16.gmra.mxu0 %v825
    %v2754 = vpop.f32.mrf.mxu0
    %v2755 = vadd.f32 %v2741, %v2754
    %v2756 = vpop.f32.mrf.mxu0
    %v2757 = vadd.f32 %v2743, %v2756
    %2758 = vdwg.mxu0
    %2759 = vmatpush.bf16.msra.mxu0 %v2123
    %2760 = vmatpush.bf16.msra.mxu0 %v2115
    %2761 = vmatpush.bf16.msra.mxu0 %v2107
    %2762 = vmatpush.bf16.msra.mxu0 %v2099
    %2763 = vmatpush.bf16.msra.mxu0 %v2091
    %2764 = vmatpush.bf16.msra.mxu0 %v2083
    %2765 = vmatpush.bf16.msra.mxu0 %v2075
    %2766 = vmatpush.bf16.msra.mxu0 %v2067
    %2767 = vmatmul.bf16.gmra.mxu0 %v826
    %v2768 = vpop.f32.mrf.mxu0
    %v2769 = vadd.f32 %v2755, %v2768
    %v2770 = vpop.f32.mrf.mxu0
    %v2771 = vadd.f32 %v2757, %v2770
    %2772 = vdwg.mxu0
    %2773 = vmatpush.bf16.msra.mxu0 %v1932
    %2774 = vmatpush.bf16.msra.mxu0 %v1924
    %2775 = vmatpush.bf16.msra.mxu0 %v1916
    %2776 = vmatpush.bf16.msra.mxu0 %v1908
    %2777 = vmatpush.bf16.msra.mxu0 %v1900
    %2778 = vmatpush.bf16.msra.mxu0 %v1892
    %2779 = vmatpush.bf16.msra.mxu0 %v1884
    %2780 = vmatpush.bf16.msra.mxu0 %v1876
    %2781 = vmatmul.bf16.gmra.mxu0 %v823
    %v2782 = vpop.f32.mrf.mxu0
    %v2783 = vadd.f32 %v1092, %v2782
    %v2784 = vpop.f32.mrf.mxu0
    %v2785 = vadd.f32 %v1092, %v2784
    %2786 = vdwg.mxu0
    %2787 = vmatpush.bf16.msra.mxu0 %v1996
    %2788 = vmatpush.bf16.msra.mxu0 %v1988
    %2789 = vmatpush.bf16.msra.mxu0 %v1980
    %2790 = vmatpush.bf16.msra.mxu0 %v1972
    %2791 = vmatpush.bf16.msra.mxu0 %v1964
    %2792 = vmatpush.bf16.msra.mxu0 %v1956
    %2793 = vmatpush.bf16.msra.mxu0 %v1948
    %2794 = vmatpush.bf16.msra.mxu0 %v1940
    %2795 = vmatmul.bf16.gmra.mxu0 %v824
    %v2796 = vpop.f32.mrf.mxu0
    %v2797 = vadd.f32 %v2783, %v2796
    %v2798 = vpop.f32.mrf.mxu0
    %v2799 = vadd.f32 %v2785, %v2798
    %2800 = vdwg.mxu0
    %2801 = vmatpush.bf16.msra.mxu0 %v2060
    %2802 = vmatpush.bf16.msra.mxu0 %v2052
    %2803 = vmatpush.bf16.msra.mxu0 %v2044
    %2804 = vmatpush.bf16.msra.mxu0 %v2036
    %2805 = vmatpush.bf16.msra.mxu0 %v2028
    %2806 = vmatpush.bf16.msra.mxu0 %v2020
    %2807 = vmatpush.bf16.msra.mxu0 %v2012
    %2808 = vmatpush.bf16.msra.mxu0 %v2004
    %2809 = vmatmul.bf16.gmra.mxu0 %v825
    %v2810 = vpop.f32.mrf.mxu0
    %v2811 = vadd.f32 %v2797, %v2810
    %v2812 = vpop.f32.mrf.mxu0
    %v2813 = vadd.f32 %v2799, %v2812
    %2814 = vdwg.mxu0
    %2815 = vmatpush.bf16.msra.mxu0 %v2124
    %2816 = vmatpush.bf16.msra.mxu0 %v2116
    %2817 = vmatpush.bf16.msra.mxu0 %v2108
    %2818 = vmatpush.bf16.msra.mxu0 %v2100
    %2819 = vmatpush.bf16.msra.mxu0 %v2092
    %2820 = vmatpush.bf16.msra.mxu0 %v2084
    %2821 = vmatpush.bf16.msra.mxu0 %v2076
    %2822 = vmatpush.bf16.msra.mxu0 %v2068
    %2823 = vmatmul.bf16.gmra.mxu0 %v826
    %v2824 = vpop.f32.mrf.mxu0
    %v2825 = vadd.f32 %v2811, %v2824
    %v2826 = vpop.f32.mrf.mxu0
    %v2827 = vadd.f32 %v2813, %v2826
    %2828 = vdwg.mxu0
    %v2829 = vmax.f32 %v2433, 0.0
    %v2830 = vmax.f32 %v2489, 0.0
    %v2831 = vmax.f32 %v2545, 0.0
    %v2832 = vmax.f32 %v2601, 0.0
    %v2833 = vmax.f32 %v2657, 0.0
    %v2834 = vmax.f32 %v2713, 0.0
    %v2835 = vmax.f32 %v2769, 0.0
    %v2836 = vmax.f32 %v2825, 0.0
    %v2837 = vmax.f32 %v2435, 0.0
    %v2838 = vmax.f32 %v2491, 0.0
    %v2839 = vmax.f32 %v2547, 0.0
    %v2840 = vmax.f32 %v2603, 0.0
    %v2841 = vmax.f32 %v2659, 0.0
    %v2842 = vmax.f32 %v2715, 0.0
    %v2843 = vmax.f32 %v2771, 0.0
    %v2844 = vmax.f32 %v2827, 0.0
    %v2845 = vpack.c.bf16 %v2837, %v2829
    %v2846 = vpack.c.bf16 %v2838, %v2830
    %v2847 = vpack.c.bf16 %v2839, %v2831
    %v2848 = vpack.c.bf16 %v2840, %v2832
    %v2849 = vpack.c.bf16 %v2841, %v2833
    %v2850 = vpack.c.bf16 %v2842, %v2834
    %v2851 = vpack.c.bf16 %v2843, %v2835
    %v2852 = vpack.c.bf16 %v2844, %v2836
    %v2853 = vld [vmem:[#allocation14] sm:$0xff]
    %v2854 = vld [vmem:[#allocation14 + $0x8] sm:$0xff]
    %v2855 = vld [vmem:[#allocation14 + $0x10] sm:$0xff]
    %v2856 = vld [vmem:[#allocation14 + $0x18] sm:$0xff]
    %v2857 = vld [vmem:[#allocation14 + $0x20] sm:$0xff]
    %v2858 = vld [vmem:[#allocation14 + $0x28] sm:$0xff]
    %v2859 = vld [vmem:[#allocation14 + $0x30] sm:$0xff]
    %v2860 = vld [vmem:[#allocation14 + $0x38] sm:$0xff]
    %v2861 = vld [vmem:[#allocation14 + $0x40] sm:$0xff]
    %v2862 = vld [vmem:[#allocation14 + $0x48] sm:$0xff]
    %v2863 = vld [vmem:[#allocation14 + $0x50] sm:$0xff]
    %v2864 = vld [vmem:[#allocation14 + $0x58] sm:$0xff]
    %v2865 = vld [vmem:[#allocation14 + $0x60] sm:$0xff]
    %v2866 = vld [vmem:[#allocation14 + $0x68] sm:$0xff]
    %v2867 = vld [vmem:[#allocation14 + $0x70] sm:$0xff]
    %v2868 = vld [vmem:[#allocation14 + $0x78] sm:$0xff]
    %v2869 = vld [vmem:[#allocation14 + $0x80] sm:$0xff]
    %v2870 = vld [vmem:[#allocation14 + $0x88] sm:$0xff]
    %v2871 = vld [vmem:[#allocation14 + $0x90] sm:$0xff]
    %v2872 = vld [vmem:[#allocation14 + $0x98] sm:$0xff]
    %v2873 = vld [vmem:[#allocation14 + $0xa0] sm:$0xff]
    %v2874 = vld [vmem:[#allocation14 + $0xa8] sm:$0xff]
    %v2875 = vld [vmem:[#allocation14 + $0xb0] sm:$0xff]
    %v2876 = vld [vmem:[#allocation14 + $0xb8] sm:$0xff]
    %v2877 = vld [vmem:[#allocation14 + $0xc0] sm:$0xff]
    %v2878 = vld [vmem:[#allocation14 + $0xc8] sm:$0xff]
    %v2879 = vld [vmem:[#allocation14 + $0xd0] sm:$0xff]
    %v2880 = vld [vmem:[#allocation14 + $0xd8] sm:$0xff]
    %v2881 = vld [vmem:[#allocation14 + $0xe0] sm:$0xff]
    %v2882 = vld [vmem:[#allocation14 + $0xe8] sm:$0xff]
    %v2883 = vld [vmem:[#allocation14 + $0xf0] sm:$0xff]
    %v2884 = vld [vmem:[#allocation14 + $0xf8] sm:$0xff]
    %v2885 = vld [vmem:[#allocation14 + $0x100] sm:$0xff]
    %v2886 = vld [vmem:[#allocation14 + $0x108] sm:$0xff]
    %v2887 = vld [vmem:[#allocation14 + $0x110] sm:$0xff]
    %v2888 = vld [vmem:[#allocation14 + $0x118] sm:$0xff]
    %v2889 = vld [vmem:[#allocation14 + $0x120] sm:$0xff]
    %v2890 = vld [vmem:[#allocation14 + $0x128] sm:$0xff]
    %v2891 = vld [vmem:[#allocation14 + $0x130] sm:$0xff]
    %v2892 = vld [vmem:[#allocation14 + $0x138] sm:$0xff]
    %v2893 = vld [vmem:[#allocation14 + $0x140] sm:$0xff]
    %v2894 = vld [vmem:[#allocation14 + $0x148] sm:$0xff]
    %v2895 = vld [vmem:[#allocation14 + $0x150] sm:$0xff]
    %v2896 = vld [vmem:[#allocation14 + $0x158] sm:$0xff]
    %v2897 = vld [vmem:[#allocation14 + $0x160] sm:$0xff]
    %v2898 = vld [vmem:[#allocation14 + $0x168] sm:$0xff]
    %v2899 = vld [vmem:[#allocation14 + $0x170] sm:$0xff]
    %v2900 = vld [vmem:[#allocation14 + $0x178] sm:$0xff]
    %v2901 = vld [vmem:[#allocation14 + $0x180] sm:$0xff]
    %v2902 = vld [vmem:[#allocation14 + $0x188] sm:$0xff]
    %v2903 = vld [vmem:[#allocation14 + $0x190] sm:$0xff]
    %v2904 = vld [vmem:[#allocation14 + $0x198] sm:$0xff]
    %v2905 = vld [vmem:[#allocation14 + $0x1a0] sm:$0xff]
    %v2906 = vld [vmem:[#allocation14 + $0x1a8] sm:$0xff]
    %v2907 = vld [vmem:[#allocation14 + $0x1b0] sm:$0xff]
    %v2908 = vld [vmem:[#allocation14 + $0x1b8] sm:$0xff]
    %v2909 = vld [vmem:[#allocation14 + $0x1c0] sm:$0xff]
    %v2910 = vld [vmem:[#allocation14 + $0x1c8] sm:$0xff]
    %v2911 = vld [vmem:[#allocation14 + $0x1d0] sm:$0xff]
    %v2912 = vld [vmem:[#allocation14 + $0x1d8] sm:$0xff]
    %v2913 = vld [vmem:[#allocation14 + $0x1e0] sm:$0xff]
    %v2914 = vld [vmem:[#allocation14 + $0x1e8] sm:$0xff]
    %v2915 = vld [vmem:[#allocation14 + $0x1f0] sm:$0xff]
    %v2916 = vld [vmem:[#allocation14 + $0x1f8] sm:$0xff]
    %v2917 = vld [vmem:[#allocation14 + $0x200] sm:$0xff]
    %v2918 = vld [vmem:[#allocation14 + $0x208] sm:$0xff]
    %v2919 = vld [vmem:[#allocation14 + $0x210] sm:$0xff]
    %v2920 = vld [vmem:[#allocation14 + $0x218] sm:$0xff]
    %v2921 = vld [vmem:[#allocation14 + $0x220] sm:$0xff]
    %v2922 = vld [vmem:[#allocation14 + $0x228] sm:$0xff]
    %v2923 = vld [vmem:[#allocation14 + $0x230] sm:$0xff]
    %v2924 = vld [vmem:[#allocation14 + $0x238] sm:$0xff]
    %v2925 = vld [vmem:[#allocation14 + $0x240] sm:$0xff]
    %v2926 = vld [vmem:[#allocation14 + $0x248] sm:$0xff]
    %v2927 = vld [vmem:[#allocation14 + $0x250] sm:$0xff]
    %v2928 = vld [vmem:[#allocation14 + $0x258] sm:$0xff]
    %v2929 = vld [vmem:[#allocation14 + $0x260] sm:$0xff]
    %v2930 = vld [vmem:[#allocation14 + $0x268] sm:$0xff]
    %v2931 = vld [vmem:[#allocation14 + $0x270] sm:$0xff]
    %v2932 = vld [vmem:[#allocation14 + $0x278] sm:$0xff]
    %v2933 = vld [vmem:[#allocation14 + $0x280] sm:$0xff]
    %v2934 = vld [vmem:[#allocation14 + $0x288] sm:$0xff]
    %v2935 = vld [vmem:[#allocation14 + $0x290] sm:$0xff]
    %v2936 = vld [vmem:[#allocation14 + $0x298] sm:$0xff]
    %v2937 = vld [vmem:[#allocation14 + $0x2a0] sm:$0xff]
    %v2938 = vld [vmem:[#allocation14 + $0x2a8] sm:$0xff]
    %v2939 = vld [vmem:[#allocation14 + $0x2b0] sm:$0xff]
    %v2940 = vld [vmem:[#allocation14 + $0x2b8] sm:$0xff]
    %v2941 = vld [vmem:[#allocation14 + $0x2c0] sm:$0xff]
    %v2942 = vld [vmem:[#allocation14 + $0x2c8] sm:$0xff]
    %v2943 = vld [vmem:[#allocation14 + $0x2d0] sm:$0xff]
    %v2944 = vld [vmem:[#allocation14 + $0x2d8] sm:$0xff]
    %v2945 = vld [vmem:[#allocation14 + $0x2e0] sm:$0xff]
    %v2946 = vld [vmem:[#allocation14 + $0x2e8] sm:$0xff]
    %v2947 = vld [vmem:[#allocation14 + $0x2f0] sm:$0xff]
    %v2948 = vld [vmem:[#allocation14 + $0x2f8] sm:$0xff]
    %v2949 = vld [vmem:[#allocation14 + $0x300] sm:$0xff]
    %v2950 = vld [vmem:[#allocation14 + $0x308] sm:$0xff]
    %v2951 = vld [vmem:[#allocation14 + $0x310] sm:$0xff]
    %v2952 = vld [vmem:[#allocation14 + $0x318] sm:$0xff]
    %v2953 = vld [vmem:[#allocation14 + $0x320] sm:$0xff]
    %v2954 = vld [vmem:[#allocation14 + $0x328] sm:$0xff]
    %v2955 = vld [vmem:[#allocation14 + $0x330] sm:$0xff]
    %v2956 = vld [vmem:[#allocation14 + $0x338] sm:$0xff]
    %v2957 = vld [vmem:[#allocation14 + $0x340] sm:$0xff]
    %v2958 = vld [vmem:[#allocation14 + $0x348] sm:$0xff]
    %v2959 = vld [vmem:[#allocation14 + $0x350] sm:$0xff]
    %v2960 = vld [vmem:[#allocation14 + $0x358] sm:$0xff]
    %v2961 = vld [vmem:[#allocation14 + $0x360] sm:$0xff]
    %v2962 = vld [vmem:[#allocation14 + $0x368] sm:$0xff]
    %v2963 = vld [vmem:[#allocation14 + $0x370] sm:$0xff]
    %v2964 = vld [vmem:[#allocation14 + $0x378] sm:$0xff]
    %v2965 = vld [vmem:[#allocation14 + $0x380] sm:$0xff]
    %v2966 = vld [vmem:[#allocation14 + $0x388] sm:$0xff]
    %v2967 = vld [vmem:[#allocation14 + $0x390] sm:$0xff]
    %v2968 = vld [vmem:[#allocation14 + $0x398] sm:$0xff]
    %v2969 = vld [vmem:[#allocation14 + $0x3a0] sm:$0xff]
    %v2970 = vld [vmem:[#allocation14 + $0x3a8] sm:$0xff]
    %v2971 = vld [vmem:[#allocation14 + $0x3b0] sm:$0xff]
    %v2972 = vld [vmem:[#allocation14 + $0x3b8] sm:$0xff]
    %v2973 = vld [vmem:[#allocation14 + $0x3c0] sm:$0xff]
    %v2974 = vld [vmem:[#allocation14 + $0x3c8] sm:$0xff]
    %v2975 = vld [vmem:[#allocation14 + $0x3d0] sm:$0xff]
    %v2976 = vld [vmem:[#allocation14 + $0x3d8] sm:$0xff]
    %v2977 = vld [vmem:[#allocation14 + $0x3e0] sm:$0xff]
    %v2978 = vld [vmem:[#allocation14 + $0x3e8] sm:$0xff]
    %v2979 = vld [vmem:[#allocation14 + $0x3f0] sm:$0xff]
    %v2980 = vld [vmem:[#allocation14 + $0x3f8] sm:$0xff]
    %v2981 = vld [vmem:[#allocation14 + $0x400] sm:$0xff]
    %v2982 = vld [vmem:[#allocation14 + $0x408] sm:$0xff]
    %v2983 = vld [vmem:[#allocation14 + $0x410] sm:$0xff]
    %v2984 = vld [vmem:[#allocation14 + $0x418] sm:$0xff]
    %v2985 = vld [vmem:[#allocation14 + $0x420] sm:$0xff]
    %v2986 = vld [vmem:[#allocation14 + $0x428] sm:$0xff]
    %v2987 = vld [vmem:[#allocation14 + $0x430] sm:$0xff]
    %v2988 = vld [vmem:[#allocation14 + $0x438] sm:$0xff]
    %v2989 = vld [vmem:[#allocation14 + $0x440] sm:$0xff]
    %v2990 = vld [vmem:[#allocation14 + $0x448] sm:$0xff]
    %v2991 = vld [vmem:[#allocation14 + $0x450] sm:$0xff]
    %v2992 = vld [vmem:[#allocation14 + $0x458] sm:$0xff]
    %v2993 = vld [vmem:[#allocation14 + $0x460] sm:$0xff]
    %v2994 = vld [vmem:[#allocation14 + $0x468] sm:$0xff]
    %v2995 = vld [vmem:[#allocation14 + $0x470] sm:$0xff]
    %v2996 = vld [vmem:[#allocation14 + $0x478] sm:$0xff]
    %v2997 = vld [vmem:[#allocation14 + $0x480] sm:$0xff]
    %v2998 = vld [vmem:[#allocation14 + $0x488] sm:$0xff]
    %v2999 = vld [vmem:[#allocation14 + $0x490] sm:$0xff]
    %v3000 = vld [vmem:[#allocation14 + $0x498] sm:$0xff]
    %v3001 = vld [vmem:[#allocation14 + $0x4a0] sm:$0xff]
    %v3002 = vld [vmem:[#allocation14 + $0x4a8] sm:$0xff]
    %v3003 = vld [vmem:[#allocation14 + $0x4b0] sm:$0xff]
    %v3004 = vld [vmem:[#allocation14 + $0x4b8] sm:$0xff]
    %v3005 = vld [vmem:[#allocation14 + $0x4c0] sm:$0xff]
    %v3006 = vld [vmem:[#allocation14 + $0x4c8] sm:$0xff]
    %v3007 = vld [vmem:[#allocation14 + $0x4d0] sm:$0xff]
    %v3008 = vld [vmem:[#allocation14 + $0x4d8] sm:$0xff]
    %v3009 = vld [vmem:[#allocation14 + $0x4e0] sm:$0xff]
    %v3010 = vld [vmem:[#allocation14 + $0x4e8] sm:$0xff]
    %v3011 = vld [vmem:[#allocation14 + $0x4f0] sm:$0xff]
    %v3012 = vld [vmem:[#allocation14 + $0x4f8] sm:$0xff]
    %v3013 = vld [vmem:[#allocation14 + $0x500] sm:$0xff]
    %v3014 = vld [vmem:[#allocation14 + $0x508] sm:$0xff]
    %v3015 = vld [vmem:[#allocation14 + $0x510] sm:$0xff]
    %v3016 = vld [vmem:[#allocation14 + $0x518] sm:$0xff]
    %v3017 = vld [vmem:[#allocation14 + $0x520] sm:$0xff]
    %v3018 = vld [vmem:[#allocation14 + $0x528] sm:$0xff]
    %v3019 = vld [vmem:[#allocation14 + $0x530] sm:$0xff]
    %v3020 = vld [vmem:[#allocation14 + $0x538] sm:$0xff]
    %v3021 = vld [vmem:[#allocation14 + $0x540] sm:$0xff]
    %v3022 = vld [vmem:[#allocation14 + $0x548] sm:$0xff]
    %v3023 = vld [vmem:[#allocation14 + $0x550] sm:$0xff]
    %v3024 = vld [vmem:[#allocation14 + $0x558] sm:$0xff]
    %v3025 = vld [vmem:[#allocation14 + $0x560] sm:$0xff]
    %v3026 = vld [vmem:[#allocation14 + $0x568] sm:$0xff]
    %v3027 = vld [vmem:[#allocation14 + $0x570] sm:$0xff]
    %v3028 = vld [vmem:[#allocation14 + $0x578] sm:$0xff]
    %v3029 = vld [vmem:[#allocation14 + $0x580] sm:$0xff]
    %v3030 = vld [vmem:[#allocation14 + $0x588] sm:$0xff]
    %v3031 = vld [vmem:[#allocation14 + $0x590] sm:$0xff]
    %v3032 = vld [vmem:[#allocation14 + $0x598] sm:$0xff]
    %v3033 = vld [vmem:[#allocation14 + $0x5a0] sm:$0xff]
    %v3034 = vld [vmem:[#allocation14 + $0x5a8] sm:$0xff]
    %v3035 = vld [vmem:[#allocation14 + $0x5b0] sm:$0xff]
    %v3036 = vld [vmem:[#allocation14 + $0x5b8] sm:$0xff]
    %v3037 = vld [vmem:[#allocation14 + $0x5c0] sm:$0xff]
    %v3038 = vld [vmem:[#allocation14 + $0x5c8] sm:$0xff]
    %v3039 = vld [vmem:[#allocation14 + $0x5d0] sm:$0xff]
    %v3040 = vld [vmem:[#allocation14 + $0x5d8] sm:$0xff]
    %v3041 = vld [vmem:[#allocation14 + $0x5e0] sm:$0xff]
    %v3042 = vld [vmem:[#allocation14 + $0x5e8] sm:$0xff]
    %v3043 = vld [vmem:[#allocation14 + $0x5f0] sm:$0xff]
    %v3044 = vld [vmem:[#allocation14 + $0x5f8] sm:$0xff]
    %v3045 = vld [vmem:[#allocation14 + $0x600] sm:$0xff]
    %v3046 = vld [vmem:[#allocation14 + $0x608] sm:$0xff]
    %v3047 = vld [vmem:[#allocation14 + $0x610] sm:$0xff]
    %v3048 = vld [vmem:[#allocation14 + $0x618] sm:$0xff]
    %v3049 = vld [vmem:[#allocation14 + $0x620] sm:$0xff]
    %v3050 = vld [vmem:[#allocation14 + $0x628] sm:$0xff]
    %v3051 = vld [vmem:[#allocation14 + $0x630] sm:$0xff]
    %v3052 = vld [vmem:[#allocation14 + $0x638] sm:$0xff]
    %v3053 = vld [vmem:[#allocation14 + $0x640] sm:$0xff]
    %v3054 = vld [vmem:[#allocation14 + $0x648] sm:$0xff]
    %v3055 = vld [vmem:[#allocation14 + $0x650] sm:$0xff]
    %v3056 = vld [vmem:[#allocation14 + $0x658] sm:$0xff]
    %v3057 = vld [vmem:[#allocation14 + $0x660] sm:$0xff]
    %v3058 = vld [vmem:[#allocation14 + $0x668] sm:$0xff]
    %v3059 = vld [vmem:[#allocation14 + $0x670] sm:$0xff]
    %v3060 = vld [vmem:[#allocation14 + $0x678] sm:$0xff]
    %v3061 = vld [vmem:[#allocation14 + $0x680] sm:$0xff]
    %v3062 = vld [vmem:[#allocation14 + $0x688] sm:$0xff]
    %v3063 = vld [vmem:[#allocation14 + $0x690] sm:$0xff]
    %v3064 = vld [vmem:[#allocation14 + $0x698] sm:$0xff]
    %v3065 = vld [vmem:[#allocation14 + $0x6a0] sm:$0xff]
    %v3066 = vld [vmem:[#allocation14 + $0x6a8] sm:$0xff]
    %v3067 = vld [vmem:[#allocation14 + $0x6b0] sm:$0xff]
    %v3068 = vld [vmem:[#allocation14 + $0x6b8] sm:$0xff]
    %v3069 = vld [vmem:[#allocation14 + $0x6c0] sm:$0xff]
    %v3070 = vld [vmem:[#allocation14 + $0x6c8] sm:$0xff]
    %v3071 = vld [vmem:[#allocation14 + $0x6d0] sm:$0xff]
    %v3072 = vld [vmem:[#allocation14 + $0x6d8] sm:$0xff]
    %v3073 = vld [vmem:[#allocation14 + $0x6e0] sm:$0xff]
    %v3074 = vld [vmem:[#allocation14 + $0x6e8] sm:$0xff]
    %v3075 = vld [vmem:[#allocation14 + $0x6f0] sm:$0xff]
    %v3076 = vld [vmem:[#allocation14 + $0x6f8] sm:$0xff]
    %v3077 = vld [vmem:[#allocation14 + $0x700] sm:$0xff]
    %v3078 = vld [vmem:[#allocation14 + $0x708] sm:$0xff]
    %v3079 = vld [vmem:[#allocation14 + $0x710] sm:$0xff]
    %v3080 = vld [vmem:[#allocation14 + $0x718] sm:$0xff]
    %v3081 = vld [vmem:[#allocation14 + $0x720] sm:$0xff]
    %v3082 = vld [vmem:[#allocation14 + $0x728] sm:$0xff]
    %v3083 = vld [vmem:[#allocation14 + $0x730] sm:$0xff]
    %v3084 = vld [vmem:[#allocation14 + $0x738] sm:$0xff]
    %v3085 = vld [vmem:[#allocation14 + $0x740] sm:$0xff]
    %v3086 = vld [vmem:[#allocation14 + $0x748] sm:$0xff]
    %v3087 = vld [vmem:[#allocation14 + $0x750] sm:$0xff]
    %v3088 = vld [vmem:[#allocation14 + $0x758] sm:$0xff]
    %v3089 = vld [vmem:[#allocation14 + $0x760] sm:$0xff]
    %v3090 = vld [vmem:[#allocation14 + $0x768] sm:$0xff]
    %v3091 = vld [vmem:[#allocation14 + $0x770] sm:$0xff]
    %v3092 = vld [vmem:[#allocation14 + $0x778] sm:$0xff]
    %v3093 = vld [vmem:[#allocation14 + $0x780] sm:$0xff]
    %v3094 = vld [vmem:[#allocation14 + $0x788] sm:$0xff]
    %v3095 = vld [vmem:[#allocation14 + $0x790] sm:$0xff]
    %v3096 = vld [vmem:[#allocation14 + $0x798] sm:$0xff]
    %v3097 = vld [vmem:[#allocation14 + $0x7a0] sm:$0xff]
    %v3098 = vld [vmem:[#allocation14 + $0x7a8] sm:$0xff]
    %v3099 = vld [vmem:[#allocation14 + $0x7b0] sm:$0xff]
    %v3100 = vld [vmem:[#allocation14 + $0x7b8] sm:$0xff]
    %v3101 = vld [vmem:[#allocation14 + $0x7c0] sm:$0xff]
    %v3102 = vld [vmem:[#allocation14 + $0x7c8] sm:$0xff]
    %v3103 = vld [vmem:[#allocation14 + $0x7d0] sm:$0xff]
    %v3104 = vld [vmem:[#allocation14 + $0x7d8] sm:$0xff]
    %v3105 = vld [vmem:[#allocation14 + $0x7e0] sm:$0xff]
    %v3106 = vld [vmem:[#allocation14 + $0x7e8] sm:$0xff]
    %v3107 = vld [vmem:[#allocation14 + $0x7f0] sm:$0xff]
    %v3108 = vld [vmem:[#allocation14 + $0x7f8] sm:$0xff]
    %v3109 = vld [vmem:[#allocation14 + $0x800] sm:$0xff]
    %v3110 = vld [vmem:[#allocation14 + $0x808] sm:$0xff]
    %v3111 = vld [vmem:[#allocation14 + $0x810] sm:$0xff]
    %v3112 = vld [vmem:[#allocation14 + $0x818] sm:$0xff]
    %v3113 = vld [vmem:[#allocation14 + $0x820] sm:$0xff]
    %v3114 = vld [vmem:[#allocation14 + $0x828] sm:$0xff]
    %v3115 = vld [vmem:[#allocation14 + $0x830] sm:$0xff]
    %v3116 = vld [vmem:[#allocation14 + $0x838] sm:$0xff]
    %v3117 = vld [vmem:[#allocation14 + $0x840] sm:$0xff]
    %v3118 = vld [vmem:[#allocation14 + $0x848] sm:$0xff]
    %v3119 = vld [vmem:[#allocation14 + $0x850] sm:$0xff]
    %v3120 = vld [vmem:[#allocation14 + $0x858] sm:$0xff]
    %v3121 = vld [vmem:[#allocation14 + $0x860] sm:$0xff]
    %v3122 = vld [vmem:[#allocation14 + $0x868] sm:$0xff]
    %v3123 = vld [vmem:[#allocation14 + $0x870] sm:$0xff]
    %v3124 = vld [vmem:[#allocation14 + $0x878] sm:$0xff]
    %v3125 = vld [vmem:[#allocation14 + $0x880] sm:$0xff]
    %v3126 = vld [vmem:[#allocation14 + $0x888] sm:$0xff]
    %v3127 = vld [vmem:[#allocation14 + $0x890] sm:$0xff]
    %v3128 = vld [vmem:[#allocation14 + $0x898] sm:$0xff]
    %v3129 = vld [vmem:[#allocation14 + $0x8a0] sm:$0xff]
    %v3130 = vld [vmem:[#allocation14 + $0x8a8] sm:$0xff]
    %v3131 = vld [vmem:[#allocation14 + $0x8b0] sm:$0xff]
    %v3132 = vld [vmem:[#allocation14 + $0x8b8] sm:$0xff]
    %v3133 = vld [vmem:[#allocation14 + $0x8c0] sm:$0xff]
    %v3134 = vld [vmem:[#allocation14 + $0x8c8] sm:$0xff]
    %v3135 = vld [vmem:[#allocation14 + $0x8d0] sm:$0xff]
    %v3136 = vld [vmem:[#allocation14 + $0x8d8] sm:$0xff]
    %v3137 = vld [vmem:[#allocation14 + $0x8e0] sm:$0xff]
    %v3138 = vld [vmem:[#allocation14 + $0x8e8] sm:$0xff]
    %v3139 = vld [vmem:[#allocation14 + $0x8f0] sm:$0xff]
    %v3140 = vld [vmem:[#allocation14 + $0x8f8] sm:$0xff]
    %v3141 = vld [vmem:[#allocation14 + $0x900] sm:$0xff]
    %v3142 = vld [vmem:[#allocation14 + $0x908] sm:$0xff]
    %v3143 = vld [vmem:[#allocation14 + $0x910] sm:$0xff]
    %v3144 = vld [vmem:[#allocation14 + $0x918] sm:$0xff]
    %v3145 = vld [vmem:[#allocation14 + $0x920] sm:$0xff]
    %v3146 = vld [vmem:[#allocation14 + $0x928] sm:$0xff]
    %v3147 = vld [vmem:[#allocation14 + $0x930] sm:$0xff]
    %v3148 = vld [vmem:[#allocation14 + $0x938] sm:$0xff]
    %v3149 = vld [vmem:[#allocation14 + $0x940] sm:$0xff]
    %v3150 = vld [vmem:[#allocation14 + $0x948] sm:$0xff]
    %v3151 = vld [vmem:[#allocation14 + $0x950] sm:$0xff]
    %v3152 = vld [vmem:[#allocation14 + $0x958] sm:$0xff]
    %v3153 = vld [vmem:[#allocation14 + $0x960] sm:$0xff]
    %v3154 = vld [vmem:[#allocation14 + $0x968] sm:$0xff]
    %v3155 = vld [vmem:[#allocation14 + $0x970] sm:$0xff]
    %v3156 = vld [vmem:[#allocation14 + $0x978] sm:$0xff]
    %v3157 = vld [vmem:[#allocation14 + $0x980] sm:$0xff]
    %v3158 = vld [vmem:[#allocation14 + $0x988] sm:$0xff]
    %v3159 = vld [vmem:[#allocation14 + $0x990] sm:$0xff]
    %v3160 = vld [vmem:[#allocation14 + $0x998] sm:$0xff]
    %v3161 = vld [vmem:[#allocation14 + $0x9a0] sm:$0xff]
    %v3162 = vld [vmem:[#allocation14 + $0x9a8] sm:$0xff]
    %v3163 = vld [vmem:[#allocation14 + $0x9b0] sm:$0xff]
    %v3164 = vld [vmem:[#allocation14 + $0x9b8] sm:$0xff]
    %v3165 = vld [vmem:[#allocation14 + $0x9c0] sm:$0xff]
    %v3166 = vld [vmem:[#allocation14 + $0x9c8] sm:$0xff]
    %v3167 = vld [vmem:[#allocation14 + $0x9d0] sm:$0xff]
    %v3168 = vld [vmem:[#allocation14 + $0x9d8] sm:$0xff]
    %v3169 = vld [vmem:[#allocation14 + $0x9e0] sm:$0xff]
    %v3170 = vld [vmem:[#allocation14 + $0x9e8] sm:$0xff]
    %v3171 = vld [vmem:[#allocation14 + $0x9f0] sm:$0xff]
    %v3172 = vld [vmem:[#allocation14 + $0x9f8] sm:$0xff]
    %v3173 = vld [vmem:[#allocation14 + $0xa00] sm:$0xff]
    %v3174 = vld [vmem:[#allocation14 + $0xa08] sm:$0xff]
    %v3175 = vld [vmem:[#allocation14 + $0xa10] sm:$0xff]
    %v3176 = vld [vmem:[#allocation14 + $0xa18] sm:$0xff]
    %v3177 = vld [vmem:[#allocation14 + $0xa20] sm:$0xff]
    %v3178 = vld [vmem:[#allocation14 + $0xa28] sm:$0xff]
    %v3179 = vld [vmem:[#allocation14 + $0xa30] sm:$0xff]
    %v3180 = vld [vmem:[#allocation14 + $0xa38] sm:$0xff]
    %v3181 = vld [vmem:[#allocation14 + $0xa40] sm:$0xff]
    %v3182 = vld [vmem:[#allocation14 + $0xa48] sm:$0xff]
    %v3183 = vld [vmem:[#allocation14 + $0xa50] sm:$0xff]
    %v3184 = vld [vmem:[#allocation14 + $0xa58] sm:$0xff]
    %v3185 = vld [vmem:[#allocation14 + $0xa60] sm:$0xff]
    %v3186 = vld [vmem:[#allocation14 + $0xa68] sm:$0xff]
    %v3187 = vld [vmem:[#allocation14 + $0xa70] sm:$0xff]
    %v3188 = vld [vmem:[#allocation14 + $0xa78] sm:$0xff]
    %v3189 = vld [vmem:[#allocation14 + $0xa80] sm:$0xff]
    %v3190 = vld [vmem:[#allocation14 + $0xa88] sm:$0xff]
    %v3191 = vld [vmem:[#allocation14 + $0xa90] sm:$0xff]
    %v3192 = vld [vmem:[#allocation14 + $0xa98] sm:$0xff]
    %v3193 = vld [vmem:[#allocation14 + $0xaa0] sm:$0xff]
    %v3194 = vld [vmem:[#allocation14 + $0xaa8] sm:$0xff]
    %v3195 = vld [vmem:[#allocation14 + $0xab0] sm:$0xff]
    %v3196 = vld [vmem:[#allocation14 + $0xab8] sm:$0xff]
    %v3197 = vld [vmem:[#allocation14 + $0xac0] sm:$0xff]
    %v3198 = vld [vmem:[#allocation14 + $0xac8] sm:$0xff]
    %v3199 = vld [vmem:[#allocation14 + $0xad0] sm:$0xff]
    %v3200 = vld [vmem:[#allocation14 + $0xad8] sm:$0xff]
    %v3201 = vld [vmem:[#allocation14 + $0xae0] sm:$0xff]
    %v3202 = vld [vmem:[#allocation14 + $0xae8] sm:$0xff]
    %v3203 = vld [vmem:[#allocation14 + $0xaf0] sm:$0xff]
    %v3204 = vld [vmem:[#allocation14 + $0xaf8] sm:$0xff]
    %v3205 = vld [vmem:[#allocation14 + $0xb00] sm:$0xff]
    %v3206 = vld [vmem:[#allocation14 + $0xb08] sm:$0xff]
    %v3207 = vld [vmem:[#allocation14 + $0xb10] sm:$0xff]
    %v3208 = vld [vmem:[#allocation14 + $0xb18] sm:$0xff]
    %v3209 = vld [vmem:[#allocation14 + $0xb20] sm:$0xff]
    %v3210 = vld [vmem:[#allocation14 + $0xb28] sm:$0xff]
    %v3211 = vld [vmem:[#allocation14 + $0xb30] sm:$0xff]
    %v3212 = vld [vmem:[#allocation14 + $0xb38] sm:$0xff]
    %v3213 = vld [vmem:[#allocation14 + $0xb40] sm:$0xff]
    %v3214 = vld [vmem:[#allocation14 + $0xb48] sm:$0xff]
    %v3215 = vld [vmem:[#allocation14 + $0xb50] sm:$0xff]
    %v3216 = vld [vmem:[#allocation14 + $0xb58] sm:$0xff]
    %v3217 = vld [vmem:[#allocation14 + $0xb60] sm:$0xff]
    %v3218 = vld [vmem:[#allocation14 + $0xb68] sm:$0xff]
    %v3219 = vld [vmem:[#allocation14 + $0xb70] sm:$0xff]
    %v3220 = vld [vmem:[#allocation14 + $0xb78] sm:$0xff]
    %v3221 = vld [vmem:[#allocation14 + $0xb80] sm:$0xff]
    %v3222 = vld [vmem:[#allocation14 + $0xb88] sm:$0xff]
    %v3223 = vld [vmem:[#allocation14 + $0xb90] sm:$0xff]
    %v3224 = vld [vmem:[#allocation14 + $0xb98] sm:$0xff]
    %v3225 = vld [vmem:[#allocation14 + $0xba0] sm:$0xff]
    %v3226 = vld [vmem:[#allocation14 + $0xba8] sm:$0xff]
    %v3227 = vld [vmem:[#allocation14 + $0xbb0] sm:$0xff]
    %v3228 = vld [vmem:[#allocation14 + $0xbb8] sm:$0xff]
    %v3229 = vld [vmem:[#allocation14 + $0xbc0] sm:$0xff]
    %v3230 = vld [vmem:[#allocation14 + $0xbc8] sm:$0xff]
    %v3231 = vld [vmem:[#allocation14 + $0xbd0] sm:$0xff]
    %v3232 = vld [vmem:[#allocation14 + $0xbd8] sm:$0xff]
    %v3233 = vld [vmem:[#allocation14 + $0xbe0] sm:$0xff]
    %v3234 = vld [vmem:[#allocation14 + $0xbe8] sm:$0xff]
    %v3235 = vld [vmem:[#allocation14 + $0xbf0] sm:$0xff]
    %v3236 = vld [vmem:[#allocation14 + $0xbf8] sm:$0xff]
    %v3237 = vld [vmem:[#allocation14 + $0xc00] sm:$0xff]
    %v3238 = vld [vmem:[#allocation14 + $0xc08] sm:$0xff]
    %v3239 = vld [vmem:[#allocation14 + $0xc10] sm:$0xff]
    %v3240 = vld [vmem:[#allocation14 + $0xc18] sm:$0xff]
    %v3241 = vld [vmem:[#allocation14 + $0xc20] sm:$0xff]
    %v3242 = vld [vmem:[#allocation14 + $0xc28] sm:$0xff]
    %v3243 = vld [vmem:[#allocation14 + $0xc30] sm:$0xff]
    %v3244 = vld [vmem:[#allocation14 + $0xc38] sm:$0xff]
    %v3245 = vld [vmem:[#allocation14 + $0xc40] sm:$0xff]
    %v3246 = vld [vmem:[#allocation14 + $0xc48] sm:$0xff]
    %v3247 = vld [vmem:[#allocation14 + $0xc50] sm:$0xff]
    %v3248 = vld [vmem:[#allocation14 + $0xc58] sm:$0xff]
    %v3249 = vld [vmem:[#allocation14 + $0xc60] sm:$0xff]
    %v3250 = vld [vmem:[#allocation14 + $0xc68] sm:$0xff]
    %v3251 = vld [vmem:[#allocation14 + $0xc70] sm:$0xff]
    %v3252 = vld [vmem:[#allocation14 + $0xc78] sm:$0xff]
    %v3253 = vld [vmem:[#allocation14 + $0xc80] sm:$0xff]
    %v3254 = vld [vmem:[#allocation14 + $0xc88] sm:$0xff]
    %v3255 = vld [vmem:[#allocation14 + $0xc90] sm:$0xff]
    %v3256 = vld [vmem:[#allocation14 + $0xc98] sm:$0xff]
    %v3257 = vld [vmem:[#allocation14 + $0xca0] sm:$0xff]
    %v3258 = vld [vmem:[#allocation14 + $0xca8] sm:$0xff]
    %v3259 = vld [vmem:[#allocation14 + $0xcb0] sm:$0xff]
    %v3260 = vld [vmem:[#allocation14 + $0xcb8] sm:$0xff]
    %v3261 = vld [vmem:[#allocation14 + $0xcc0] sm:$0xff]
    %v3262 = vld [vmem:[#allocation14 + $0xcc8] sm:$0xff]
    %v3263 = vld [vmem:[#allocation14 + $0xcd0] sm:$0xff]
    %v3264 = vld [vmem:[#allocation14 + $0xcd8] sm:$0xff]
    %v3265 = vld [vmem:[#allocation14 + $0xce0] sm:$0xff]
    %v3266 = vld [vmem:[#allocation14 + $0xce8] sm:$0xff]
    %v3267 = vld [vmem:[#allocation14 + $0xcf0] sm:$0xff]
    %v3268 = vld [vmem:[#allocation14 + $0xcf8] sm:$0xff]
    %v3269 = vld [vmem:[#allocation14 + $0xd00] sm:$0xff]
    %v3270 = vld [vmem:[#allocation14 + $0xd08] sm:$0xff]
    %v3271 = vld [vmem:[#allocation14 + $0xd10] sm:$0xff]
    %v3272 = vld [vmem:[#allocation14 + $0xd18] sm:$0xff]
    %v3273 = vld [vmem:[#allocation14 + $0xd20] sm:$0xff]
    %v3274 = vld [vmem:[#allocation14 + $0xd28] sm:$0xff]
    %v3275 = vld [vmem:[#allocation14 + $0xd30] sm:$0xff]
    %v3276 = vld [vmem:[#allocation14 + $0xd38] sm:$0xff]
    %v3277 = vld [vmem:[#allocation14 + $0xd40] sm:$0xff]
    %v3278 = vld [vmem:[#allocation14 + $0xd48] sm:$0xff]
    %v3279 = vld [vmem:[#allocation14 + $0xd50] sm:$0xff]
    %v3280 = vld [vmem:[#allocation14 + $0xd58] sm:$0xff]
    %v3281 = vld [vmem:[#allocation14 + $0xd60] sm:$0xff]
    %v3282 = vld [vmem:[#allocation14 + $0xd68] sm:$0xff]
    %v3283 = vld [vmem:[#allocation14 + $0xd70] sm:$0xff]
    %v3284 = vld [vmem:[#allocation14 + $0xd78] sm:$0xff]
    %v3285 = vld [vmem:[#allocation14 + $0xd80] sm:$0xff]
    %v3286 = vld [vmem:[#allocation14 + $0xd88] sm:$0xff]
    %v3287 = vld [vmem:[#allocation14 + $0xd90] sm:$0xff]
    %v3288 = vld [vmem:[#allocation14 + $0xd98] sm:$0xff]
    %v3289 = vld [vmem:[#allocation14 + $0xda0] sm:$0xff]
    %v3290 = vld [vmem:[#allocation14 + $0xda8] sm:$0xff]
    %v3291 = vld [vmem:[#allocation14 + $0xdb0] sm:$0xff]
    %v3292 = vld [vmem:[#allocation14 + $0xdb8] sm:$0xff]
    %v3293 = vld [vmem:[#allocation14 + $0xdc0] sm:$0xff]
    %v3294 = vld [vmem:[#allocation14 + $0xdc8] sm:$0xff]
    %v3295 = vld [vmem:[#allocation14 + $0xdd0] sm:$0xff]
    %v3296 = vld [vmem:[#allocation14 + $0xdd8] sm:$0xff]
    %v3297 = vld [vmem:[#allocation14 + $0xde0] sm:$0xff]
    %v3298 = vld [vmem:[#allocation14 + $0xde8] sm:$0xff]
    %v3299 = vld [vmem:[#allocation14 + $0xdf0] sm:$0xff]
    %v3300 = vld [vmem:[#allocation14 + $0xdf8] sm:$0xff]
    %v3301 = vld [vmem:[#allocation14 + $0xe00] sm:$0xff]
    %v3302 = vld [vmem:[#allocation14 + $0xe08] sm:$0xff]
    %v3303 = vld [vmem:[#allocation14 + $0xe10] sm:$0xff]
    %v3304 = vld [vmem:[#allocation14 + $0xe18] sm:$0xff]
    %v3305 = vld [vmem:[#allocation14 + $0xe20] sm:$0xff]
    %v3306 = vld [vmem:[#allocation14 + $0xe28] sm:$0xff]
    %v3307 = vld [vmem:[#allocation14 + $0xe30] sm:$0xff]
    %v3308 = vld [vmem:[#allocation14 + $0xe38] sm:$0xff]
    %v3309 = vld [vmem:[#allocation14 + $0xe40] sm:$0xff]
    %v3310 = vld [vmem:[#allocation14 + $0xe48] sm:$0xff]
    %v3311 = vld [vmem:[#allocation14 + $0xe50] sm:$0xff]
    %v3312 = vld [vmem:[#allocation14 + $0xe58] sm:$0xff]
    %v3313 = vld [vmem:[#allocation14 + $0xe60] sm:$0xff]
    %v3314 = vld [vmem:[#allocation14 + $0xe68] sm:$0xff]
    %v3315 = vld [vmem:[#allocation14 + $0xe70] sm:$0xff]
    %v3316 = vld [vmem:[#allocation14 + $0xe78] sm:$0xff]
    %v3317 = vld [vmem:[#allocation14 + $0xe80] sm:$0xff]
    %v3318 = vld [vmem:[#allocation14 + $0xe88] sm:$0xff]
    %v3319 = vld [vmem:[#allocation14 + $0xe90] sm:$0xff]
    %v3320 = vld [vmem:[#allocation14 + $0xe98] sm:$0xff]
    %v3321 = vld [vmem:[#allocation14 + $0xea0] sm:$0xff]
    %v3322 = vld [vmem:[#allocation14 + $0xea8] sm:$0xff]
    %v3323 = vld [vmem:[#allocation14 + $0xeb0] sm:$0xff]
    %v3324 = vld [vmem:[#allocation14 + $0xeb8] sm:$0xff]
    %v3325 = vld [vmem:[#allocation14 + $0xec0] sm:$0xff]
    %v3326 = vld [vmem:[#allocation14 + $0xec8] sm:$0xff]
    %v3327 = vld [vmem:[#allocation14 + $0xed0] sm:$0xff]
    %v3328 = vld [vmem:[#allocation14 + $0xed8] sm:$0xff]
    %v3329 = vld [vmem:[#allocation14 + $0xee0] sm:$0xff]
    %v3330 = vld [vmem:[#allocation14 + $0xee8] sm:$0xff]
    %v3331 = vld [vmem:[#allocation14 + $0xef0] sm:$0xff]
    %v3332 = vld [vmem:[#allocation14 + $0xef8] sm:$0xff]
    %v3333 = vld [vmem:[#allocation14 + $0xf00] sm:$0xff]
    %v3334 = vld [vmem:[#allocation14 + $0xf08] sm:$0xff]
    %v3335 = vld [vmem:[#allocation14 + $0xf10] sm:$0xff]
    %v3336 = vld [vmem:[#allocation14 + $0xf18] sm:$0xff]
    %v3337 = vld [vmem:[#allocation14 + $0xf20] sm:$0xff]
    %v3338 = vld [vmem:[#allocation14 + $0xf28] sm:$0xff]
    %v3339 = vld [vmem:[#allocation14 + $0xf30] sm:$0xff]
    %v3340 = vld [vmem:[#allocation14 + $0xf38] sm:$0xff]
    %v3341 = vld [vmem:[#allocation14 + $0xf40] sm:$0xff]
    %v3342 = vld [vmem:[#allocation14 + $0xf48] sm:$0xff]
    %v3343 = vld [vmem:[#allocation14 + $0xf50] sm:$0xff]
    %v3344 = vld [vmem:[#allocation14 + $0xf58] sm:$0xff]
    %v3345 = vld [vmem:[#allocation14 + $0xf60] sm:$0xff]
    %v3346 = vld [vmem:[#allocation14 + $0xf68] sm:$0xff]
    %v3347 = vld [vmem:[#allocation14 + $0xf70] sm:$0xff]
    %v3348 = vld [vmem:[#allocation14 + $0xf78] sm:$0xff]
    %v3349 = vld [vmem:[#allocation14 + $0xf80] sm:$0xff]
    %v3350 = vld [vmem:[#allocation14 + $0xf88] sm:$0xff]
    %v3351 = vld [vmem:[#allocation14 + $0xf90] sm:$0xff]
    %v3352 = vld [vmem:[#allocation14 + $0xf98] sm:$0xff]
    %v3353 = vld [vmem:[#allocation14 + $0xfa0] sm:$0xff]
    %v3354 = vld [vmem:[#allocation14 + $0xfa8] sm:$0xff]
    %v3355 = vld [vmem:[#allocation14 + $0xfb0] sm:$0xff]
    %v3356 = vld [vmem:[#allocation14 + $0xfb8] sm:$0xff]
    %v3357 = vld [vmem:[#allocation14 + $0xfc0] sm:$0xff]
    %v3358 = vld [vmem:[#allocation14 + $0xfc8] sm:$0xff]
    %v3359 = vld [vmem:[#allocation14 + $0xfd0] sm:$0xff]
    %v3360 = vld [vmem:[#allocation14 + $0xfd8] sm:$0xff]
    %v3361 = vld [vmem:[#allocation14 + $0xfe0] sm:$0xff]
    %v3362 = vld [vmem:[#allocation14 + $0xfe8] sm:$0xff]
    %v3363 = vld [vmem:[#allocation14 + $0xff0] sm:$0xff]
    %v3364 = vld [vmem:[#allocation14 + $0xff8] sm:$0xff]
    %v3365 = vld [vmem:[#allocation14 + $0x1000] sm:$0xff]
    %v3366 = vld [vmem:[#allocation14 + $0x1008] sm:$0xff]
    %v3367 = vld [vmem:[#allocation14 + $0x1010] sm:$0xff]
    %v3368 = vld [vmem:[#allocation14 + $0x1018] sm:$0xff]
    %v3369 = vld [vmem:[#allocation14 + $0x1020] sm:$0xff]
    %v3370 = vld [vmem:[#allocation14 + $0x1028] sm:$0xff]
    %v3371 = vld [vmem:[#allocation14 + $0x1030] sm:$0xff]
    %v3372 = vld [vmem:[#allocation14 + $0x1038] sm:$0xff]
    %v3373 = vld [vmem:[#allocation14 + $0x1040] sm:$0xff]
    %v3374 = vld [vmem:[#allocation14 + $0x1048] sm:$0xff]
    %v3375 = vld [vmem:[#allocation14 + $0x1050] sm:$0xff]
    %v3376 = vld [vmem:[#allocation14 + $0x1058] sm:$0xff]
    %v3377 = vld [vmem:[#allocation14 + $0x1060] sm:$0xff]
    %v3378 = vld [vmem:[#allocation14 + $0x1068] sm:$0xff]
    %v3379 = vld [vmem:[#allocation14 + $0x1070] sm:$0xff]
    %v3380 = vld [vmem:[#allocation14 + $0x1078] sm:$0xff]
    %v3381 = vld [vmem:[#allocation14 + $0x1080] sm:$0xff]
    %v3382 = vld [vmem:[#allocation14 + $0x1088] sm:$0xff]
    %v3383 = vld [vmem:[#allocation14 + $0x1090] sm:$0xff]
    %v3384 = vld [vmem:[#allocation14 + $0x1098] sm:$0xff]
    %v3385 = vld [vmem:[#allocation14 + $0x10a0] sm:$0xff]
    %v3386 = vld [vmem:[#allocation14 + $0x10a8] sm:$0xff]
    %v3387 = vld [vmem:[#allocation14 + $0x10b0] sm:$0xff]
    %v3388 = vld [vmem:[#allocation14 + $0x10b8] sm:$0xff]
    %v3389 = vld [vmem:[#allocation14 + $0x10c0] sm:$0xff]
    %v3390 = vld [vmem:[#allocation14 + $0x10c8] sm:$0xff]
    %v3391 = vld [vmem:[#allocation14 + $0x10d0] sm:$0xff]
    %v3392 = vld [vmem:[#allocation14 + $0x10d8] sm:$0xff]
    %v3393 = vld [vmem:[#allocation14 + $0x10e0] sm:$0xff]
    %v3394 = vld [vmem:[#allocation14 + $0x10e8] sm:$0xff]
    %v3395 = vld [vmem:[#allocation14 + $0x10f0] sm:$0xff]
    %v3396 = vld [vmem:[#allocation14 + $0x10f8] sm:$0xff]
    %v3397 = vld [vmem:[#allocation14 + $0x1100] sm:$0xff]
    %v3398 = vld [vmem:[#allocation14 + $0x1108] sm:$0xff]
    %v3399 = vld [vmem:[#allocation14 + $0x1110] sm:$0xff]
    %v3400 = vld [vmem:[#allocation14 + $0x1118] sm:$0xff]
    %v3401 = vld [vmem:[#allocation14 + $0x1120] sm:$0xff]
    %v3402 = vld [vmem:[#allocation14 + $0x1128] sm:$0xff]
    %v3403 = vld [vmem:[#allocation14 + $0x1130] sm:$0xff]
    %v3404 = vld [vmem:[#allocation14 + $0x1138] sm:$0xff]
    %v3405 = vld [vmem:[#allocation14 + $0x1140] sm:$0xff]
    %v3406 = vld [vmem:[#allocation14 + $0x1148] sm:$0xff]
    %v3407 = vld [vmem:[#allocation14 + $0x1150] sm:$0xff]
    %v3408 = vld [vmem:[#allocation14 + $0x1158] sm:$0xff]
    %v3409 = vld [vmem:[#allocation14 + $0x1160] sm:$0xff]
    %v3410 = vld [vmem:[#allocation14 + $0x1168] sm:$0xff]
    %v3411 = vld [vmem:[#allocation14 + $0x1170] sm:$0xff]
    %v3412 = vld [vmem:[#allocation14 + $0x1178] sm:$0xff]
    %v3413 = vld [vmem:[#allocation14 + $0x1180] sm:$0xff]
    %v3414 = vld [vmem:[#allocation14 + $0x1188] sm:$0xff]
    %v3415 = vld [vmem:[#allocation14 + $0x1190] sm:$0xff]
    %v3416 = vld [vmem:[#allocation14 + $0x1198] sm:$0xff]
    %v3417 = vld [vmem:[#allocation14 + $0x11a0] sm:$0xff]
    %v3418 = vld [vmem:[#allocation14 + $0x11a8] sm:$0xff]
    %v3419 = vld [vmem:[#allocation14 + $0x11b0] sm:$0xff]
    %v3420 = vld [vmem:[#allocation14 + $0x11b8] sm:$0xff]
    %v3421 = vld [vmem:[#allocation14 + $0x11c0] sm:$0xff]
    %v3422 = vld [vmem:[#allocation14 + $0x11c8] sm:$0xff]
    %v3423 = vld [vmem:[#allocation14 + $0x11d0] sm:$0xff]
    %v3424 = vld [vmem:[#allocation14 + $0x11d8] sm:$0xff]
    %v3425 = vld [vmem:[#allocation14 + $0x11e0] sm:$0xff]
    %v3426 = vld [vmem:[#allocation14 + $0x11e8] sm:$0xff]
    %v3427 = vld [vmem:[#allocation14 + $0x11f0] sm:$0xff]
    %v3428 = vld [vmem:[#allocation14 + $0x11f8] sm:$0xff]
    %v3429 = vld [vmem:[#allocation14 + $0x1200] sm:$0xff]
    %v3430 = vld [vmem:[#allocation14 + $0x1208] sm:$0xff]
    %v3431 = vld [vmem:[#allocation14 + $0x1210] sm:$0xff]
    %v3432 = vld [vmem:[#allocation14 + $0x1218] sm:$0xff]
    %v3433 = vld [vmem:[#allocation14 + $0x1220] sm:$0xff]
    %v3434 = vld [vmem:[#allocation14 + $0x1228] sm:$0xff]
    %v3435 = vld [vmem:[#allocation14 + $0x1230] sm:$0xff]
    %v3436 = vld [vmem:[#allocation14 + $0x1238] sm:$0xff]
    %v3437 = vld [vmem:[#allocation14 + $0x1240] sm:$0xff]
    %v3438 = vld [vmem:[#allocation14 + $0x1248] sm:$0xff]
    %v3439 = vld [vmem:[#allocation14 + $0x1250] sm:$0xff]
    %v3440 = vld [vmem:[#allocation14 + $0x1258] sm:$0xff]
    %v3441 = vld [vmem:[#allocation14 + $0x1260] sm:$0xff]
    %v3442 = vld [vmem:[#allocation14 + $0x1268] sm:$0xff]
    %v3443 = vld [vmem:[#allocation14 + $0x1270] sm:$0xff]
    %v3444 = vld [vmem:[#allocation14 + $0x1278] sm:$0xff]
    %v3445 = vld [vmem:[#allocation14 + $0x1280] sm:$0xff]
    %v3446 = vld [vmem:[#allocation14 + $0x1288] sm:$0xff]
    %v3447 = vld [vmem:[#allocation14 + $0x1290] sm:$0xff]
    %v3448 = vld [vmem:[#allocation14 + $0x1298] sm:$0xff]
    %v3449 = vld [vmem:[#allocation14 + $0x12a0] sm:$0xff]
    %v3450 = vld [vmem:[#allocation14 + $0x12a8] sm:$0xff]
    %v3451 = vld [vmem:[#allocation14 + $0x12b0] sm:$0xff]
    %v3452 = vld [vmem:[#allocation14 + $0x12b8] sm:$0xff]
    %v3453 = vld [vmem:[#allocation14 + $0x12c0] sm:$0xff]
    %v3454 = vld [vmem:[#allocation14 + $0x12c8] sm:$0xff]
    %v3455 = vld [vmem:[#allocation14 + $0x12d0] sm:$0xff]
    %v3456 = vld [vmem:[#allocation14 + $0x12d8] sm:$0xff]
    %v3457 = vld [vmem:[#allocation14 + $0x12e0] sm:$0xff]
    %v3458 = vld [vmem:[#allocation14 + $0x12e8] sm:$0xff]
    %v3459 = vld [vmem:[#allocation14 + $0x12f0] sm:$0xff]
    %v3460 = vld [vmem:[#allocation14 + $0x12f8] sm:$0xff]
    %v3461 = vld [vmem:[#allocation14 + $0x1300] sm:$0xff]
    %v3462 = vld [vmem:[#allocation14 + $0x1308] sm:$0xff]
    %v3463 = vld [vmem:[#allocation14 + $0x1310] sm:$0xff]
    %v3464 = vld [vmem:[#allocation14 + $0x1318] sm:$0xff]
    %v3465 = vld [vmem:[#allocation14 + $0x1320] sm:$0xff]
    %v3466 = vld [vmem:[#allocation14 + $0x1328] sm:$0xff]
    %v3467 = vld [vmem:[#allocation14 + $0x1330] sm:$0xff]
    %v3468 = vld [vmem:[#allocation14 + $0x1338] sm:$0xff]
    %v3469 = vld [vmem:[#allocation14 + $0x1340] sm:$0xff]
    %v3470 = vld [vmem:[#allocation14 + $0x1348] sm:$0xff]
    %v3471 = vld [vmem:[#allocation14 + $0x1350] sm:$0xff]
    %v3472 = vld [vmem:[#allocation14 + $0x1358] sm:$0xff]
    %v3473 = vld [vmem:[#allocation14 + $0x1360] sm:$0xff]
    %v3474 = vld [vmem:[#allocation14 + $0x1368] sm:$0xff]
    %v3475 = vld [vmem:[#allocation14 + $0x1370] sm:$0xff]
    %v3476 = vld [vmem:[#allocation14 + $0x1378] sm:$0xff]
    %v3477 = vld [vmem:[#allocation14 + $0x1380] sm:$0xff]
    %v3478 = vld [vmem:[#allocation14 + $0x1388] sm:$0xff]
    %v3479 = vld [vmem:[#allocation14 + $0x1390] sm:$0xff]
    %v3480 = vld [vmem:[#allocation14 + $0x1398] sm:$0xff]
    %v3481 = vld [vmem:[#allocation14 + $0x13a0] sm:$0xff]
    %v3482 = vld [vmem:[#allocation14 + $0x13a8] sm:$0xff]
    %v3483 = vld [vmem:[#allocation14 + $0x13b0] sm:$0xff]
    %v3484 = vld [vmem:[#allocation14 + $0x13b8] sm:$0xff]
    %v3485 = vld [vmem:[#allocation14 + $0x13c0] sm:$0xff]
    %v3486 = vld [vmem:[#allocation14 + $0x13c8] sm:$0xff]
    %v3487 = vld [vmem:[#allocation14 + $0x13d0] sm:$0xff]
    %v3488 = vld [vmem:[#allocation14 + $0x13d8] sm:$0xff]
    %v3489 = vld [vmem:[#allocation14 + $0x13e0] sm:$0xff]
    %v3490 = vld [vmem:[#allocation14 + $0x13e8] sm:$0xff]
    %v3491 = vld [vmem:[#allocation14 + $0x13f0] sm:$0xff]
    %v3492 = vld [vmem:[#allocation14 + $0x13f8] sm:$0xff]
    %v3493 = vld [vmem:[#allocation14 + $0x1400] sm:$0xff]
    %v3494 = vld [vmem:[#allocation14 + $0x1408] sm:$0xff]
    %v3495 = vld [vmem:[#allocation14 + $0x1410] sm:$0xff]
    %v3496 = vld [vmem:[#allocation14 + $0x1418] sm:$0xff]
    %v3497 = vld [vmem:[#allocation14 + $0x1420] sm:$0xff]
    %v3498 = vld [vmem:[#allocation14 + $0x1428] sm:$0xff]
    %v3499 = vld [vmem:[#allocation14 + $0x1430] sm:$0xff]
    %v3500 = vld [vmem:[#allocation14 + $0x1438] sm:$0xff]
    %v3501 = vld [vmem:[#allocation14 + $0x1440] sm:$0xff]
    %v3502 = vld [vmem:[#allocation14 + $0x1448] sm:$0xff]
    %v3503 = vld [vmem:[#allocation14 + $0x1450] sm:$0xff]
    %v3504 = vld [vmem:[#allocation14 + $0x1458] sm:$0xff]
    %v3505 = vld [vmem:[#allocation14 + $0x1460] sm:$0xff]
    %v3506 = vld [vmem:[#allocation14 + $0x1468] sm:$0xff]
    %v3507 = vld [vmem:[#allocation14 + $0x1470] sm:$0xff]
    %v3508 = vld [vmem:[#allocation14 + $0x1478] sm:$0xff]
    %v3509 = vld [vmem:[#allocation14 + $0x1480] sm:$0xff]
    %v3510 = vld [vmem:[#allocation14 + $0x1488] sm:$0xff]
    %v3511 = vld [vmem:[#allocation14 + $0x1490] sm:$0xff]
    %v3512 = vld [vmem:[#allocation14 + $0x1498] sm:$0xff]
    %v3513 = vld [vmem:[#allocation14 + $0x14a0] sm:$0xff]
    %v3514 = vld [vmem:[#allocation14 + $0x14a8] sm:$0xff]
    %v3515 = vld [vmem:[#allocation14 + $0x14b0] sm:$0xff]
    %v3516 = vld [vmem:[#allocation14 + $0x14b8] sm:$0xff]
    %v3517 = vld [vmem:[#allocation14 + $0x14c0] sm:$0xff]
    %v3518 = vld [vmem:[#allocation14 + $0x14c8] sm:$0xff]
    %v3519 = vld [vmem:[#allocation14 + $0x14d0] sm:$0xff]
    %v3520 = vld [vmem:[#allocation14 + $0x14d8] sm:$0xff]
    %v3521 = vld [vmem:[#allocation14 + $0x14e0] sm:$0xff]
    %v3522 = vld [vmem:[#allocation14 + $0x14e8] sm:$0xff]
    %v3523 = vld [vmem:[#allocation14 + $0x14f0] sm:$0xff]
    %v3524 = vld [vmem:[#allocation14 + $0x14f8] sm:$0xff]
    %v3525 = vld [vmem:[#allocation14 + $0x1500] sm:$0xff]
    %v3526 = vld [vmem:[#allocation14 + $0x1508] sm:$0xff]
    %v3527 = vld [vmem:[#allocation14 + $0x1510] sm:$0xff]
    %v3528 = vld [vmem:[#allocation14 + $0x1518] sm:$0xff]
    %v3529 = vld [vmem:[#allocation14 + $0x1520] sm:$0xff]
    %v3530 = vld [vmem:[#allocation14 + $0x1528] sm:$0xff]
    %v3531 = vld [vmem:[#allocation14 + $0x1530] sm:$0xff]
    %v3532 = vld [vmem:[#allocation14 + $0x1538] sm:$0xff]
    %v3533 = vld [vmem:[#allocation14 + $0x1540] sm:$0xff]
    %v3534 = vld [vmem:[#allocation14 + $0x1548] sm:$0xff]
    %v3535 = vld [vmem:[#allocation14 + $0x1550] sm:$0xff]
    %v3536 = vld [vmem:[#allocation14 + $0x1558] sm:$0xff]
    %v3537 = vld [vmem:[#allocation14 + $0x1560] sm:$0xff]
    %v3538 = vld [vmem:[#allocation14 + $0x1568] sm:$0xff]
    %v3539 = vld [vmem:[#allocation14 + $0x1570] sm:$0xff]
    %v3540 = vld [vmem:[#allocation14 + $0x1578] sm:$0xff]
    %v3541 = vld [vmem:[#allocation14 + $0x1580] sm:$0xff]
    %v3542 = vld [vmem:[#allocation14 + $0x1588] sm:$0xff]
    %v3543 = vld [vmem:[#allocation14 + $0x1590] sm:$0xff]
    %v3544 = vld [vmem:[#allocation14 + $0x1598] sm:$0xff]
    %v3545 = vld [vmem:[#allocation14 + $0x15a0] sm:$0xff]
    %v3546 = vld [vmem:[#allocation14 + $0x15a8] sm:$0xff]
    %v3547 = vld [vmem:[#allocation14 + $0x15b0] sm:$0xff]
    %v3548 = vld [vmem:[#allocation14 + $0x15b8] sm:$0xff]
    %v3549 = vld [vmem:[#allocation14 + $0x15c0] sm:$0xff]
    %v3550 = vld [vmem:[#allocation14 + $0x15c8] sm:$0xff]
    %v3551 = vld [vmem:[#allocation14 + $0x15d0] sm:$0xff]
    %v3552 = vld [vmem:[#allocation14 + $0x15d8] sm:$0xff]
    %v3553 = vld [vmem:[#allocation14 + $0x15e0] sm:$0xff]
    %v3554 = vld [vmem:[#allocation14 + $0x15e8] sm:$0xff]
    %v3555 = vld [vmem:[#allocation14 + $0x15f0] sm:$0xff]
    %v3556 = vld [vmem:[#allocation14 + $0x15f8] sm:$0xff]
    %v3557 = vld [vmem:[#allocation14 + $0x1600] sm:$0xff]
    %v3558 = vld [vmem:[#allocation14 + $0x1608] sm:$0xff]
    %v3559 = vld [vmem:[#allocation14 + $0x1610] sm:$0xff]
    %v3560 = vld [vmem:[#allocation14 + $0x1618] sm:$0xff]
    %v3561 = vld [vmem:[#allocation14 + $0x1620] sm:$0xff]
    %v3562 = vld [vmem:[#allocation14 + $0x1628] sm:$0xff]
    %v3563 = vld [vmem:[#allocation14 + $0x1630] sm:$0xff]
    %v3564 = vld [vmem:[#allocation14 + $0x1638] sm:$0xff]
    %v3565 = vld [vmem:[#allocation14 + $0x1640] sm:$0xff]
    %v3566 = vld [vmem:[#allocation14 + $0x1648] sm:$0xff]
    %v3567 = vld [vmem:[#allocation14 + $0x1650] sm:$0xff]
    %v3568 = vld [vmem:[#allocation14 + $0x1658] sm:$0xff]
    %v3569 = vld [vmem:[#allocation14 + $0x1660] sm:$0xff]
    %v3570 = vld [vmem:[#allocation14 + $0x1668] sm:$0xff]
    %v3571 = vld [vmem:[#allocation14 + $0x1670] sm:$0xff]
    %v3572 = vld [vmem:[#allocation14 + $0x1678] sm:$0xff]
    %v3573 = vld [vmem:[#allocation14 + $0x1680] sm:$0xff]
    %v3574 = vld [vmem:[#allocation14 + $0x1688] sm:$0xff]
    %v3575 = vld [vmem:[#allocation14 + $0x1690] sm:$0xff]
    %v3576 = vld [vmem:[#allocation14 + $0x1698] sm:$0xff]
    %v3577 = vld [vmem:[#allocation14 + $0x16a0] sm:$0xff]
    %v3578 = vld [vmem:[#allocation14 + $0x16a8] sm:$0xff]
    %v3579 = vld [vmem:[#allocation14 + $0x16b0] sm:$0xff]
    %v3580 = vld [vmem:[#allocation14 + $0x16b8] sm:$0xff]
    %v3581 = vld [vmem:[#allocation14 + $0x16c0] sm:$0xff]
    %v3582 = vld [vmem:[#allocation14 + $0x16c8] sm:$0xff]
    %v3583 = vld [vmem:[#allocation14 + $0x16d0] sm:$0xff]
    %v3584 = vld [vmem:[#allocation14 + $0x16d8] sm:$0xff]
    %v3585 = vld [vmem:[#allocation14 + $0x16e0] sm:$0xff]
    %v3586 = vld [vmem:[#allocation14 + $0x16e8] sm:$0xff]
    %v3587 = vld [vmem:[#allocation14 + $0x16f0] sm:$0xff]
    %v3588 = vld [vmem:[#allocation14 + $0x16f8] sm:$0xff]
    %v3589 = vld [vmem:[#allocation14 + $0x1700] sm:$0xff]
    %v3590 = vld [vmem:[#allocation14 + $0x1708] sm:$0xff]
    %v3591 = vld [vmem:[#allocation14 + $0x1710] sm:$0xff]
    %v3592 = vld [vmem:[#allocation14 + $0x1718] sm:$0xff]
    %v3593 = vld [vmem:[#allocation14 + $0x1720] sm:$0xff]
    %v3594 = vld [vmem:[#allocation14 + $0x1728] sm:$0xff]
    %v3595 = vld [vmem:[#allocation14 + $0x1730] sm:$0xff]
    %v3596 = vld [vmem:[#allocation14 + $0x1738] sm:$0xff]
    %v3597 = vld [vmem:[#allocation14 + $0x1740] sm:$0xff]
    %v3598 = vld [vmem:[#allocation14 + $0x1748] sm:$0xff]
    %v3599 = vld [vmem:[#allocation14 + $0x1750] sm:$0xff]
    %v3600 = vld [vmem:[#allocation14 + $0x1758] sm:$0xff]
    %v3601 = vld [vmem:[#allocation14 + $0x1760] sm:$0xff]
    %v3602 = vld [vmem:[#allocation14 + $0x1768] sm:$0xff]
    %v3603 = vld [vmem:[#allocation14 + $0x1770] sm:$0xff]
    %v3604 = vld [vmem:[#allocation14 + $0x1778] sm:$0xff]
    %v3605 = vld [vmem:[#allocation14 + $0x1780] sm:$0xff]
    %v3606 = vld [vmem:[#allocation14 + $0x1788] sm:$0xff]
    %v3607 = vld [vmem:[#allocation14 + $0x1790] sm:$0xff]
    %v3608 = vld [vmem:[#allocation14 + $0x1798] sm:$0xff]
    %v3609 = vld [vmem:[#allocation14 + $0x17a0] sm:$0xff]
    %v3610 = vld [vmem:[#allocation14 + $0x17a8] sm:$0xff]
    %v3611 = vld [vmem:[#allocation14 + $0x17b0] sm:$0xff]
    %v3612 = vld [vmem:[#allocation14 + $0x17b8] sm:$0xff]
    %v3613 = vld [vmem:[#allocation14 + $0x17c0] sm:$0xff]
    %v3614 = vld [vmem:[#allocation14 + $0x17c8] sm:$0xff]
    %v3615 = vld [vmem:[#allocation14 + $0x17d0] sm:$0xff]
    %v3616 = vld [vmem:[#allocation14 + $0x17d8] sm:$0xff]
    %v3617 = vld [vmem:[#allocation14 + $0x17e0] sm:$0xff]
    %v3618 = vld [vmem:[#allocation14 + $0x17e8] sm:$0xff]
    %v3619 = vld [vmem:[#allocation14 + $0x17f0] sm:$0xff]
    %v3620 = vld [vmem:[#allocation14 + $0x17f8] sm:$0xff]
    %v3621 = vld [vmem:[#allocation14 + $0x1800] sm:$0xff]
    %v3622 = vld [vmem:[#allocation14 + $0x1808] sm:$0xff]
    %v3623 = vld [vmem:[#allocation14 + $0x1810] sm:$0xff]
    %v3624 = vld [vmem:[#allocation14 + $0x1818] sm:$0xff]
    %v3625 = vld [vmem:[#allocation14 + $0x1820] sm:$0xff]
    %v3626 = vld [vmem:[#allocation14 + $0x1828] sm:$0xff]
    %v3627 = vld [vmem:[#allocation14 + $0x1830] sm:$0xff]
    %v3628 = vld [vmem:[#allocation14 + $0x1838] sm:$0xff]
    %v3629 = vld [vmem:[#allocation14 + $0x1840] sm:$0xff]
    %v3630 = vld [vmem:[#allocation14 + $0x1848] sm:$0xff]
    %v3631 = vld [vmem:[#allocation14 + $0x1850] sm:$0xff]
    %v3632 = vld [vmem:[#allocation14 + $0x1858] sm:$0xff]
    %v3633 = vld [vmem:[#allocation14 + $0x1860] sm:$0xff]
    %v3634 = vld [vmem:[#allocation14 + $0x1868] sm:$0xff]
    %v3635 = vld [vmem:[#allocation14 + $0x1870] sm:$0xff]
    %v3636 = vld [vmem:[#allocation14 + $0x1878] sm:$0xff]
    %v3637 = vld [vmem:[#allocation14 + $0x1880] sm:$0xff]
    %v3638 = vld [vmem:[#allocation14 + $0x1888] sm:$0xff]
    %v3639 = vld [vmem:[#allocation14 + $0x1890] sm:$0xff]
    %v3640 = vld [vmem:[#allocation14 + $0x1898] sm:$0xff]
    %v3641 = vld [vmem:[#allocation14 + $0x18a0] sm:$0xff]
    %v3642 = vld [vmem:[#allocation14 + $0x18a8] sm:$0xff]
    %v3643 = vld [vmem:[#allocation14 + $0x18b0] sm:$0xff]
    %v3644 = vld [vmem:[#allocation14 + $0x18b8] sm:$0xff]
    %v3645 = vld [vmem:[#allocation14 + $0x18c0] sm:$0xff]
    %v3646 = vld [vmem:[#allocation14 + $0x18c8] sm:$0xff]
    %v3647 = vld [vmem:[#allocation14 + $0x18d0] sm:$0xff]
    %v3648 = vld [vmem:[#allocation14 + $0x18d8] sm:$0xff]
    %v3649 = vld [vmem:[#allocation14 + $0x18e0] sm:$0xff]
    %v3650 = vld [vmem:[#allocation14 + $0x18e8] sm:$0xff]
    %v3651 = vld [vmem:[#allocation14 + $0x18f0] sm:$0xff]
    %v3652 = vld [vmem:[#allocation14 + $0x18f8] sm:$0xff]
    %v3653 = vld [vmem:[#allocation14 + $0x1900] sm:$0xff]
    %v3654 = vld [vmem:[#allocation14 + $0x1908] sm:$0xff]
    %v3655 = vld [vmem:[#allocation14 + $0x1910] sm:$0xff]
    %v3656 = vld [vmem:[#allocation14 + $0x1918] sm:$0xff]
    %v3657 = vld [vmem:[#allocation14 + $0x1920] sm:$0xff]
    %v3658 = vld [vmem:[#allocation14 + $0x1928] sm:$0xff]
    %v3659 = vld [vmem:[#allocation14 + $0x1930] sm:$0xff]
    %v3660 = vld [vmem:[#allocation14 + $0x1938] sm:$0xff]
    %v3661 = vld [vmem:[#allocation14 + $0x1940] sm:$0xff]
    %v3662 = vld [vmem:[#allocation14 + $0x1948] sm:$0xff]
    %v3663 = vld [vmem:[#allocation14 + $0x1950] sm:$0xff]
    %v3664 = vld [vmem:[#allocation14 + $0x1958] sm:$0xff]
    %v3665 = vld [vmem:[#allocation14 + $0x1960] sm:$0xff]
    %v3666 = vld [vmem:[#allocation14 + $0x1968] sm:$0xff]
    %v3667 = vld [vmem:[#allocation14 + $0x1970] sm:$0xff]
    %v3668 = vld [vmem:[#allocation14 + $0x1978] sm:$0xff]
    %v3669 = vld [vmem:[#allocation14 + $0x1980] sm:$0xff]
    %v3670 = vld [vmem:[#allocation14 + $0x1988] sm:$0xff]
    %v3671 = vld [vmem:[#allocation14 + $0x1990] sm:$0xff]
    %v3672 = vld [vmem:[#allocation14 + $0x1998] sm:$0xff]
    %v3673 = vld [vmem:[#allocation14 + $0x19a0] sm:$0xff]
    %v3674 = vld [vmem:[#allocation14 + $0x19a8] sm:$0xff]
    %v3675 = vld [vmem:[#allocation14 + $0x19b0] sm:$0xff]
    %v3676 = vld [vmem:[#allocation14 + $0x19b8] sm:$0xff]
    %v3677 = vld [vmem:[#allocation14 + $0x19c0] sm:$0xff]
    %v3678 = vld [vmem:[#allocation14 + $0x19c8] sm:$0xff]
    %v3679 = vld [vmem:[#allocation14 + $0x19d0] sm:$0xff]
    %v3680 = vld [vmem:[#allocation14 + $0x19d8] sm:$0xff]
    %v3681 = vld [vmem:[#allocation14 + $0x19e0] sm:$0xff]
    %v3682 = vld [vmem:[#allocation14 + $0x19e8] sm:$0xff]
    %v3683 = vld [vmem:[#allocation14 + $0x19f0] sm:$0xff]
    %v3684 = vld [vmem:[#allocation14 + $0x19f8] sm:$0xff]
    %v3685 = vld [vmem:[#allocation14 + $0x1a00] sm:$0xff]
    %v3686 = vld [vmem:[#allocation14 + $0x1a08] sm:$0xff]
    %v3687 = vld [vmem:[#allocation14 + $0x1a10] sm:$0xff]
    %v3688 = vld [vmem:[#allocation14 + $0x1a18] sm:$0xff]
    %v3689 = vld [vmem:[#allocation14 + $0x1a20] sm:$0xff]
    %v3690 = vld [vmem:[#allocation14 + $0x1a28] sm:$0xff]
    %v3691 = vld [vmem:[#allocation14 + $0x1a30] sm:$0xff]
    %v3692 = vld [vmem:[#allocation14 + $0x1a38] sm:$0xff]
    %v3693 = vld [vmem:[#allocation14 + $0x1a40] sm:$0xff]
    %v3694 = vld [vmem:[#allocation14 + $0x1a48] sm:$0xff]
    %v3695 = vld [vmem:[#allocation14 + $0x1a50] sm:$0xff]
    %v3696 = vld [vmem:[#allocation14 + $0x1a58] sm:$0xff]
    %v3697 = vld [vmem:[#allocation14 + $0x1a60] sm:$0xff]
    %v3698 = vld [vmem:[#allocation14 + $0x1a68] sm:$0xff]
    %v3699 = vld [vmem:[#allocation14 + $0x1a70] sm:$0xff]
    %v3700 = vld [vmem:[#allocation14 + $0x1a78] sm:$0xff]
    %v3701 = vld [vmem:[#allocation14 + $0x1a80] sm:$0xff]
    %v3702 = vld [vmem:[#allocation14 + $0x1a88] sm:$0xff]
    %v3703 = vld [vmem:[#allocation14 + $0x1a90] sm:$0xff]
    %v3704 = vld [vmem:[#allocation14 + $0x1a98] sm:$0xff]
    %v3705 = vld [vmem:[#allocation14 + $0x1aa0] sm:$0xff]
    %v3706 = vld [vmem:[#allocation14 + $0x1aa8] sm:$0xff]
    %v3707 = vld [vmem:[#allocation14 + $0x1ab0] sm:$0xff]
    %v3708 = vld [vmem:[#allocation14 + $0x1ab8] sm:$0xff]
    %v3709 = vld [vmem:[#allocation14 + $0x1ac0] sm:$0xff]
    %v3710 = vld [vmem:[#allocation14 + $0x1ac8] sm:$0xff]
    %v3711 = vld [vmem:[#allocation14 + $0x1ad0] sm:$0xff]
    %v3712 = vld [vmem:[#allocation14 + $0x1ad8] sm:$0xff]
    %v3713 = vld [vmem:[#allocation14 + $0x1ae0] sm:$0xff]
    %v3714 = vld [vmem:[#allocation14 + $0x1ae8] sm:$0xff]
    %v3715 = vld [vmem:[#allocation14 + $0x1af0] sm:$0xff]
    %v3716 = vld [vmem:[#allocation14 + $0x1af8] sm:$0xff]
    %v3717 = vld [vmem:[#allocation14 + $0x1b00] sm:$0xff]
    %v3718 = vld [vmem:[#allocation14 + $0x1b08] sm:$0xff]
    %v3719 = vld [vmem:[#allocation14 + $0x1b10] sm:$0xff]
    %v3720 = vld [vmem:[#allocation14 + $0x1b18] sm:$0xff]
    %v3721 = vld [vmem:[#allocation14 + $0x1b20] sm:$0xff]
    %v3722 = vld [vmem:[#allocation14 + $0x1b28] sm:$0xff]
    %v3723 = vld [vmem:[#allocation14 + $0x1b30] sm:$0xff]
    %v3724 = vld [vmem:[#allocation14 + $0x1b38] sm:$0xff]
    %v3725 = vld [vmem:[#allocation14 + $0x1b40] sm:$0xff]
    %v3726 = vld [vmem:[#allocation14 + $0x1b48] sm:$0xff]
    %v3727 = vld [vmem:[#allocation14 + $0x1b50] sm:$0xff]
    %v3728 = vld [vmem:[#allocation14 + $0x1b58] sm:$0xff]
    %v3729 = vld [vmem:[#allocation14 + $0x1b60] sm:$0xff]
    %v3730 = vld [vmem:[#allocation14 + $0x1b68] sm:$0xff]
    %v3731 = vld [vmem:[#allocation14 + $0x1b70] sm:$0xff]
    %v3732 = vld [vmem:[#allocation14 + $0x1b78] sm:$0xff]
    %v3733 = vld [vmem:[#allocation14 + $0x1b80] sm:$0xff]
    %v3734 = vld [vmem:[#allocation14 + $0x1b88] sm:$0xff]
    %v3735 = vld [vmem:[#allocation14 + $0x1b90] sm:$0xff]
    %v3736 = vld [vmem:[#allocation14 + $0x1b98] sm:$0xff]
    %v3737 = vld [vmem:[#allocation14 + $0x1ba0] sm:$0xff]
    %v3738 = vld [vmem:[#allocation14 + $0x1ba8] sm:$0xff]
    %v3739 = vld [vmem:[#allocation14 + $0x1bb0] sm:$0xff]
    %v3740 = vld [vmem:[#allocation14 + $0x1bb8] sm:$0xff]
    %v3741 = vld [vmem:[#allocation14 + $0x1bc0] sm:$0xff]
    %v3742 = vld [vmem:[#allocation14 + $0x1bc8] sm:$0xff]
    %v3743 = vld [vmem:[#allocation14 + $0x1bd0] sm:$0xff]
    %v3744 = vld [vmem:[#allocation14 + $0x1bd8] sm:$0xff]
    %v3745 = vld [vmem:[#allocation14 + $0x1be0] sm:$0xff]
    %v3746 = vld [vmem:[#allocation14 + $0x1be8] sm:$0xff]
    %v3747 = vld [vmem:[#allocation14 + $0x1bf0] sm:$0xff]
    %v3748 = vld [vmem:[#allocation14 + $0x1bf8] sm:$0xff]
    %v3749 = vld [vmem:[#allocation14 + $0x1c00] sm:$0xff]
    %v3750 = vld [vmem:[#allocation14 + $0x1c08] sm:$0xff]
    %v3751 = vld [vmem:[#allocation14 + $0x1c10] sm:$0xff]
    %v3752 = vld [vmem:[#allocation14 + $0x1c18] sm:$0xff]
    %v3753 = vld [vmem:[#allocation14 + $0x1c20] sm:$0xff]
    %v3754 = vld [vmem:[#allocation14 + $0x1c28] sm:$0xff]
    %v3755 = vld [vmem:[#allocation14 + $0x1c30] sm:$0xff]
    %v3756 = vld [vmem:[#allocation14 + $0x1c38] sm:$0xff]
    %v3757 = vld [vmem:[#allocation14 + $0x1c40] sm:$0xff]
    %v3758 = vld [vmem:[#allocation14 + $0x1c48] sm:$0xff]
    %v3759 = vld [vmem:[#allocation14 + $0x1c50] sm:$0xff]
    %v3760 = vld [vmem:[#allocation14 + $0x1c58] sm:$0xff]
    %v3761 = vld [vmem:[#allocation14 + $0x1c60] sm:$0xff]
    %v3762 = vld [vmem:[#allocation14 + $0x1c68] sm:$0xff]
    %v3763 = vld [vmem:[#allocation14 + $0x1c70] sm:$0xff]
    %v3764 = vld [vmem:[#allocation14 + $0x1c78] sm:$0xff]
    %v3765 = vld [vmem:[#allocation14 + $0x1c80] sm:$0xff]
    %v3766 = vld [vmem:[#allocation14 + $0x1c88] sm:$0xff]
    %v3767 = vld [vmem:[#allocation14 + $0x1c90] sm:$0xff]
    %v3768 = vld [vmem:[#allocation14 + $0x1c98] sm:$0xff]
    %v3769 = vld [vmem:[#allocation14 + $0x1ca0] sm:$0xff]
    %v3770 = vld [vmem:[#allocation14 + $0x1ca8] sm:$0xff]
    %v3771 = vld [vmem:[#allocation14 + $0x1cb0] sm:$0xff]
    %v3772 = vld [vmem:[#allocation14 + $0x1cb8] sm:$0xff]
    %v3773 = vld [vmem:[#allocation14 + $0x1cc0] sm:$0xff]
    %v3774 = vld [vmem:[#allocation14 + $0x1cc8] sm:$0xff]
    %v3775 = vld [vmem:[#allocation14 + $0x1cd0] sm:$0xff]
    %v3776 = vld [vmem:[#allocation14 + $0x1cd8] sm:$0xff]
    %v3777 = vld [vmem:[#allocation14 + $0x1ce0] sm:$0xff]
    %v3778 = vld [vmem:[#allocation14 + $0x1ce8] sm:$0xff]
    %v3779 = vld [vmem:[#allocation14 + $0x1cf0] sm:$0xff]
    %v3780 = vld [vmem:[#allocation14 + $0x1cf8] sm:$0xff]
    %v3781 = vld [vmem:[#allocation14 + $0x1d00] sm:$0xff]
    %v3782 = vld [vmem:[#allocation14 + $0x1d08] sm:$0xff]
    %v3783 = vld [vmem:[#allocation14 + $0x1d10] sm:$0xff]
    %v3784 = vld [vmem:[#allocation14 + $0x1d18] sm:$0xff]
    %v3785 = vld [vmem:[#allocation14 + $0x1d20] sm:$0xff]
    %v3786 = vld [vmem:[#allocation14 + $0x1d28] sm:$0xff]
    %v3787 = vld [vmem:[#allocation14 + $0x1d30] sm:$0xff]
    %v3788 = vld [vmem:[#allocation14 + $0x1d38] sm:$0xff]
    %v3789 = vld [vmem:[#allocation14 + $0x1d40] sm:$0xff]
    %v3790 = vld [vmem:[#allocation14 + $0x1d48] sm:$0xff]
    %v3791 = vld [vmem:[#allocation14 + $0x1d50] sm:$0xff]
    %v3792 = vld [vmem:[#allocation14 + $0x1d58] sm:$0xff]
    %v3793 = vld [vmem:[#allocation14 + $0x1d60] sm:$0xff]
    %v3794 = vld [vmem:[#allocation14 + $0x1d68] sm:$0xff]
    %v3795 = vld [vmem:[#allocation14 + $0x1d70] sm:$0xff]
    %v3796 = vld [vmem:[#allocation14 + $0x1d78] sm:$0xff]
    %v3797 = vld [vmem:[#allocation14 + $0x1d80] sm:$0xff]
    %v3798 = vld [vmem:[#allocation14 + $0x1d88] sm:$0xff]
    %v3799 = vld [vmem:[#allocation14 + $0x1d90] sm:$0xff]
    %v3800 = vld [vmem:[#allocation14 + $0x1d98] sm:$0xff]
    %v3801 = vld [vmem:[#allocation14 + $0x1da0] sm:$0xff]
    %v3802 = vld [vmem:[#allocation14 + $0x1da8] sm:$0xff]
    %v3803 = vld [vmem:[#allocation14 + $0x1db0] sm:$0xff]
    %v3804 = vld [vmem:[#allocation14 + $0x1db8] sm:$0xff]
    %v3805 = vld [vmem:[#allocation14 + $0x1dc0] sm:$0xff]
    %v3806 = vld [vmem:[#allocation14 + $0x1dc8] sm:$0xff]
    %v3807 = vld [vmem:[#allocation14 + $0x1dd0] sm:$0xff]
    %v3808 = vld [vmem:[#allocation14 + $0x1dd8] sm:$0xff]
    %v3809 = vld [vmem:[#allocation14 + $0x1de0] sm:$0xff]
    %v3810 = vld [vmem:[#allocation14 + $0x1de8] sm:$0xff]
    %v3811 = vld [vmem:[#allocation14 + $0x1df0] sm:$0xff]
    %v3812 = vld [vmem:[#allocation14 + $0x1df8] sm:$0xff]
    %v3813 = vld [vmem:[#allocation14 + $0x1e00] sm:$0xff]
    %v3814 = vld [vmem:[#allocation14 + $0x1e08] sm:$0xff]
    %v3815 = vld [vmem:[#allocation14 + $0x1e10] sm:$0xff]
    %v3816 = vld [vmem:[#allocation14 + $0x1e18] sm:$0xff]
    %v3817 = vld [vmem:[#allocation14 + $0x1e20] sm:$0xff]
    %v3818 = vld [vmem:[#allocation14 + $0x1e28] sm:$0xff]
    %v3819 = vld [vmem:[#allocation14 + $0x1e30] sm:$0xff]
    %v3820 = vld [vmem:[#allocation14 + $0x1e38] sm:$0xff]
    %v3821 = vld [vmem:[#allocation14 + $0x1e40] sm:$0xff]
    %v3822 = vld [vmem:[#allocation14 + $0x1e48] sm:$0xff]
    %v3823 = vld [vmem:[#allocation14 + $0x1e50] sm:$0xff]
    %v3824 = vld [vmem:[#allocation14 + $0x1e58] sm:$0xff]
    %v3825 = vld [vmem:[#allocation14 + $0x1e60] sm:$0xff]
    %v3826 = vld [vmem:[#allocation14 + $0x1e68] sm:$0xff]
    %v3827 = vld [vmem:[#allocation14 + $0x1e70] sm:$0xff]
    %v3828 = vld [vmem:[#allocation14 + $0x1e78] sm:$0xff]
    %v3829 = vld [vmem:[#allocation14 + $0x1e80] sm:$0xff]
    %v3830 = vld [vmem:[#allocation14 + $0x1e88] sm:$0xff]
    %v3831 = vld [vmem:[#allocation14 + $0x1e90] sm:$0xff]
    %v3832 = vld [vmem:[#allocation14 + $0x1e98] sm:$0xff]
    %v3833 = vld [vmem:[#allocation14 + $0x1ea0] sm:$0xff]
    %v3834 = vld [vmem:[#allocation14 + $0x1ea8] sm:$0xff]
    %v3835 = vld [vmem:[#allocation14 + $0x1eb0] sm:$0xff]
    %v3836 = vld [vmem:[#allocation14 + $0x1eb8] sm:$0xff]
    %v3837 = vld [vmem:[#allocation14 + $0x1ec0] sm:$0xff]
    %v3838 = vld [vmem:[#allocation14 + $0x1ec8] sm:$0xff]
    %v3839 = vld [vmem:[#allocation14 + $0x1ed0] sm:$0xff]
    %v3840 = vld [vmem:[#allocation14 + $0x1ed8] sm:$0xff]
    %v3841 = vld [vmem:[#allocation14 + $0x1ee0] sm:$0xff]
    %v3842 = vld [vmem:[#allocation14 + $0x1ee8] sm:$0xff]
    %v3843 = vld [vmem:[#allocation14 + $0x1ef0] sm:$0xff]
    %v3844 = vld [vmem:[#allocation14 + $0x1ef8] sm:$0xff]
    %v3845 = vld [vmem:[#allocation14 + $0x1f00] sm:$0xff]
    %v3846 = vld [vmem:[#allocation14 + $0x1f08] sm:$0xff]
    %v3847 = vld [vmem:[#allocation14 + $0x1f10] sm:$0xff]
    %v3848 = vld [vmem:[#allocation14 + $0x1f18] sm:$0xff]
    %v3849 = vld [vmem:[#allocation14 + $0x1f20] sm:$0xff]
    %v3850 = vld [vmem:[#allocation14 + $0x1f28] sm:$0xff]
    %v3851 = vld [vmem:[#allocation14 + $0x1f30] sm:$0xff]
    %v3852 = vld [vmem:[#allocation14 + $0x1f38] sm:$0xff]
    %v3853 = vld [vmem:[#allocation14 + $0x1f40] sm:$0xff]
    %v3854 = vld [vmem:[#allocation14 + $0x1f48] sm:$0xff]
    %v3855 = vld [vmem:[#allocation14 + $0x1f50] sm:$0xff]
    %v3856 = vld [vmem:[#allocation14 + $0x1f58] sm:$0xff]
    %v3857 = vld [vmem:[#allocation14 + $0x1f60] sm:$0xff]
    %v3858 = vld [vmem:[#allocation14 + $0x1f68] sm:$0xff]
    %v3859 = vld [vmem:[#allocation14 + $0x1f70] sm:$0xff]
    %v3860 = vld [vmem:[#allocation14 + $0x1f78] sm:$0xff]
    %v3861 = vld [vmem:[#allocation14 + $0x1f80] sm:$0xff]
    %v3862 = vld [vmem:[#allocation14 + $0x1f88] sm:$0xff]
    %v3863 = vld [vmem:[#allocation14 + $0x1f90] sm:$0xff]
    %v3864 = vld [vmem:[#allocation14 + $0x1f98] sm:$0xff]
    %v3865 = vld [vmem:[#allocation14 + $0x1fa0] sm:$0xff]
    %v3866 = vld [vmem:[#allocation14 + $0x1fa8] sm:$0xff]
    %v3867 = vld [vmem:[#allocation14 + $0x1fb0] sm:$0xff]
    %v3868 = vld [vmem:[#allocation14 + $0x1fb8] sm:$0xff]
    %v3869 = vld [vmem:[#allocation14 + $0x1fc0] sm:$0xff]
    %v3870 = vld [vmem:[#allocation14 + $0x1fc8] sm:$0xff]
    %v3871 = vld [vmem:[#allocation14 + $0x1fd0] sm:$0xff]
    %v3872 = vld [vmem:[#allocation14 + $0x1fd8] sm:$0xff]
    %v3873 = vld [vmem:[#allocation14 + $0x1fe0] sm:$0xff]
    %v3874 = vld [vmem:[#allocation14 + $0x1fe8] sm:$0xff]
    %v3875 = vld [vmem:[#allocation14 + $0x1ff0] sm:$0xff]
    %v3876 = vld [vmem:[#allocation14 + $0x1ff8] sm:$0xff]
    %v3877 = vld [vmem:[#allocation16] sm:$0xff]
    %v3878 = vld [vmem:[#allocation16 + $0x8] sm:$0xff]
    %v3881 = vperm.slane %v3877, 0
    %v3882 = vperm.slane %v3877, 1
    %v3883 = vperm.slane %v3877, 2
    %v3884 = vperm.slane %v3877, 3
    %v3885 = vperm.slane %v3877, 4
    %v3886 = vperm.slane %v3877, 5
    %v3887 = vperm.slane %v3877, 6
    %v3888 = vperm.slane %v3877, 7
    %v3889 = vperm.slane %v3878, 0
    %v3890 = vperm.slane %v3878, 1
    %v3891 = vperm.slane %v3878, 2
    %v3892 = vperm.slane %v3878, 3
    %v3893 = vperm.slane %v3878, 4
    %v3894 = vperm.slane %v3878, 5
    %v3895 = vperm.slane %v3878, 6
    %v3896 = vperm.slane %v3878, 7
    %v4937 = vunpack.c.l.b16 %v2853
    %v4938 = vunpack.c.h.b16 %v2853
    %v4939 = vunpack.c.l.b16 %v2854
    %v4940 = vunpack.c.h.b16 %v2854
    %v4941 = vunpack.c.l.b16 %v2855
    %v4942 = vunpack.c.h.b16 %v2855
    %v4943 = vunpack.c.l.b16 %v2856
    %v4944 = vunpack.c.h.b16 %v2856
    %v4945 = vunpack.c.l.b16 %v2857
    %v4946 = vunpack.c.h.b16 %v2857
    %v4947 = vunpack.c.l.b16 %v2858
    %v4948 = vunpack.c.h.b16 %v2858
    %v4949 = vunpack.c.l.b16 %v2859
    %v4950 = vunpack.c.h.b16 %v2859
    %v4951 = vunpack.c.l.b16 %v2860
    %v4952 = vunpack.c.h.b16 %v2860
    %v4953 = vunpack.c.l.b16 %v2861
    %v4954 = vunpack.c.h.b16 %v2861
    %v4955 = vunpack.c.l.b16 %v2862
    %v4956 = vunpack.c.h.b16 %v2862
    %v4957 = vunpack.c.l.b16 %v2863
    %v4958 = vunpack.c.h.b16 %v2863
    %v4959 = vunpack.c.l.b16 %v2864
    %v4960 = vunpack.c.h.b16 %v2864
    %v4961 = vunpack.c.l.b16 %v2865
    %v4962 = vunpack.c.h.b16 %v2865
    %v4963 = vunpack.c.l.b16 %v2866
    %v4964 = vunpack.c.h.b16 %v2866
    %v4965 = vunpack.c.l.b16 %v2867
    %v4966 = vunpack.c.h.b16 %v2867
    %v4967 = vunpack.c.l.b16 %v2868
    %v4968 = vunpack.c.h.b16 %v2868
    %v4969 = vunpack.c.l.b16 %v2869
    %v4970 = vunpack.c.h.b16 %v2869
    %v4971 = vunpack.c.l.b16 %v2870
    %v4972 = vunpack.c.h.b16 %v2870
    %v4973 = vunpack.c.l.b16 %v2871
    %v4974 = vunpack.c.h.b16 %v2871
    %v4975 = vunpack.c.l.b16 %v2872
    %v4976 = vunpack.c.h.b16 %v2872
    %v4977 = vunpack.c.l.b16 %v2873
    %v4978 = vunpack.c.h.b16 %v2873
    %v4979 = vunpack.c.l.b16 %v2874
    %v4980 = vunpack.c.h.b16 %v2874
    %v4981 = vunpack.c.l.b16 %v2875
    %v4982 = vunpack.c.h.b16 %v2875
    %v4983 = vunpack.c.l.b16 %v2876
    %v4984 = vunpack.c.h.b16 %v2876
    %v4985 = vunpack.c.l.b16 %v2877
    %v4986 = vunpack.c.h.b16 %v2877
    %v4987 = vunpack.c.l.b16 %v2878
    %v4988 = vunpack.c.h.b16 %v2878
    %v4989 = vunpack.c.l.b16 %v2879
    %v4990 = vunpack.c.h.b16 %v2879
    %v4991 = vunpack.c.l.b16 %v2880
    %v4992 = vunpack.c.h.b16 %v2880
    %v4993 = vunpack.c.l.b16 %v2881
    %v4994 = vunpack.c.h.b16 %v2881
    %v4995 = vunpack.c.l.b16 %v2882
    %v4996 = vunpack.c.h.b16 %v2882
    %v4997 = vunpack.c.l.b16 %v2883
    %v4998 = vunpack.c.h.b16 %v2883
    %v4999 = vunpack.c.l.b16 %v2884
    %v5000 = vunpack.c.h.b16 %v2884
    %v5001 = vunpack.c.l.b16 %v2885
    %v5002 = vunpack.c.h.b16 %v2885
    %v5003 = vunpack.c.l.b16 %v2886
    %v5004 = vunpack.c.h.b16 %v2886
    %v5005 = vunpack.c.l.b16 %v2887
    %v5006 = vunpack.c.h.b16 %v2887
    %v5007 = vunpack.c.l.b16 %v2888
    %v5008 = vunpack.c.h.b16 %v2888
    %v5009 = vunpack.c.l.b16 %v2889
    %v5010 = vunpack.c.h.b16 %v2889
    %v5011 = vunpack.c.l.b16 %v2890
    %v5012 = vunpack.c.h.b16 %v2890
    %v5013 = vunpack.c.l.b16 %v2891
    %v5014 = vunpack.c.h.b16 %v2891
    %v5015 = vunpack.c.l.b16 %v2892
    %v5016 = vunpack.c.h.b16 %v2892
    %v5017 = vunpack.c.l.b16 %v2893
    %v5018 = vunpack.c.h.b16 %v2893
    %v5019 = vunpack.c.l.b16 %v2894
    %v5020 = vunpack.c.h.b16 %v2894
    %v5021 = vunpack.c.l.b16 %v2895
    %v5022 = vunpack.c.h.b16 %v2895
    %v5023 = vunpack.c.l.b16 %v2896
    %v5024 = vunpack.c.h.b16 %v2896
    %v5025 = vunpack.c.l.b16 %v2897
    %v5026 = vunpack.c.h.b16 %v2897
    %v5027 = vunpack.c.l.b16 %v2898
    %v5028 = vunpack.c.h.b16 %v2898
    %v5029 = vunpack.c.l.b16 %v2899
    %v5030 = vunpack.c.h.b16 %v2899
    %v5031 = vunpack.c.l.b16 %v2900
    %v5032 = vunpack.c.h.b16 %v2900
    %v5033 = vunpack.c.l.b16 %v2901
    %v5034 = vunpack.c.h.b16 %v2901
    %v5035 = vunpack.c.l.b16 %v2902
    %v5036 = vunpack.c.h.b16 %v2902
    %v5037 = vunpack.c.l.b16 %v2903
    %v5038 = vunpack.c.h.b16 %v2903
    %v5039 = vunpack.c.l.b16 %v2904
    %v5040 = vunpack.c.h.b16 %v2904
    %v5041 = vunpack.c.l.b16 %v2905
    %v5042 = vunpack.c.h.b16 %v2905
    %v5043 = vunpack.c.l.b16 %v2906
    %v5044 = vunpack.c.h.b16 %v2906
    %v5045 = vunpack.c.l.b16 %v2907
    %v5046 = vunpack.c.h.b16 %v2907
    %v5047 = vunpack.c.l.b16 %v2908
    %v5048 = vunpack.c.h.b16 %v2908
    %v5049 = vunpack.c.l.b16 %v2909
    %v5050 = vunpack.c.h.b16 %v2909
    %v5051 = vunpack.c.l.b16 %v2910
    %v5052 = vunpack.c.h.b16 %v2910
    %v5053 = vunpack.c.l.b16 %v2911
    %v5054 = vunpack.c.h.b16 %v2911
    %v5055 = vunpack.c.l.b16 %v2912
    %v5056 = vunpack.c.h.b16 %v2912
    %v5057 = vunpack.c.l.b16 %v2913
    %v5058 = vunpack.c.h.b16 %v2913
    %v5059 = vunpack.c.l.b16 %v2914
    %v5060 = vunpack.c.h.b16 %v2914
    %v5061 = vunpack.c.l.b16 %v2915
    %v5062 = vunpack.c.h.b16 %v2915
    %v5063 = vunpack.c.l.b16 %v2916
    %v5064 = vunpack.c.h.b16 %v2916
    %v5065 = vunpack.c.l.b16 %v2917
    %v5066 = vunpack.c.h.b16 %v2917
    %v5067 = vunpack.c.l.b16 %v2918
    %v5068 = vunpack.c.h.b16 %v2918
    %v5069 = vunpack.c.l.b16 %v2919
    %v5070 = vunpack.c.h.b16 %v2919
    %v5071 = vunpack.c.l.b16 %v2920
    %v5072 = vunpack.c.h.b16 %v2920
    %v5073 = vunpack.c.l.b16 %v2921
    %v5074 = vunpack.c.h.b16 %v2921
    %v5075 = vunpack.c.l.b16 %v2922
    %v5076 = vunpack.c.h.b16 %v2922
    %v5077 = vunpack.c.l.b16 %v2923
    %v5078 = vunpack.c.h.b16 %v2923
    %v5079 = vunpack.c.l.b16 %v2924
    %v5080 = vunpack.c.h.b16 %v2924
    %v5081 = vunpack.c.l.b16 %v2925
    %v5082 = vunpack.c.h.b16 %v2925
    %v5083 = vunpack.c.l.b16 %v2926
    %v5084 = vunpack.c.h.b16 %v2926
    %v5085 = vunpack.c.l.b16 %v2927
    %v5086 = vunpack.c.h.b16 %v2927
    %v5087 = vunpack.c.l.b16 %v2928
    %v5088 = vunpack.c.h.b16 %v2928
    %v5089 = vunpack.c.l.b16 %v2929
    %v5090 = vunpack.c.h.b16 %v2929
    %v5091 = vunpack.c.l.b16 %v2930
    %v5092 = vunpack.c.h.b16 %v2930
    %v5093 = vunpack.c.l.b16 %v2931
    %v5094 = vunpack.c.h.b16 %v2931
    %v5095 = vunpack.c.l.b16 %v2932
    %v5096 = vunpack.c.h.b16 %v2932
    %v5097 = vunpack.c.l.b16 %v2933
    %v5098 = vunpack.c.h.b16 %v2933
    %v5099 = vunpack.c.l.b16 %v2934
    %v5100 = vunpack.c.h.b16 %v2934
    %v5101 = vunpack.c.l.b16 %v2935
    %v5102 = vunpack.c.h.b16 %v2935
    %v5103 = vunpack.c.l.b16 %v2936
    %v5104 = vunpack.c.h.b16 %v2936
    %v5105 = vunpack.c.l.b16 %v2937
    %v5106 = vunpack.c.h.b16 %v2937
    %v5107 = vunpack.c.l.b16 %v2938
    %v5108 = vunpack.c.h.b16 %v2938
    %v5109 = vunpack.c.l.b16 %v2939
    %v5110 = vunpack.c.h.b16 %v2939
    %v5111 = vunpack.c.l.b16 %v2940
    %v5112 = vunpack.c.h.b16 %v2940
    %v5113 = vunpack.c.l.b16 %v2941
    %v5114 = vunpack.c.h.b16 %v2941
    %v5115 = vunpack.c.l.b16 %v2942
    %v5116 = vunpack.c.h.b16 %v2942
    %v5117 = vunpack.c.l.b16 %v2943
    %v5118 = vunpack.c.h.b16 %v2943
    %v5119 = vunpack.c.l.b16 %v2944
    %v5120 = vunpack.c.h.b16 %v2944
    %v5121 = vunpack.c.l.b16 %v2945
    %v5122 = vunpack.c.h.b16 %v2945
    %v5123 = vunpack.c.l.b16 %v2946
    %v5124 = vunpack.c.h.b16 %v2946
    %v5125 = vunpack.c.l.b16 %v2947
    %v5126 = vunpack.c.h.b16 %v2947
    %v5127 = vunpack.c.l.b16 %v2948
    %v5128 = vunpack.c.h.b16 %v2948
    %v5129 = vunpack.c.l.b16 %v2949
    %v5130 = vunpack.c.h.b16 %v2949
    %v5131 = vunpack.c.l.b16 %v2950
    %v5132 = vunpack.c.h.b16 %v2950
    %v5133 = vunpack.c.l.b16 %v2951
    %v5134 = vunpack.c.h.b16 %v2951
    %v5135 = vunpack.c.l.b16 %v2952
    %v5136 = vunpack.c.h.b16 %v2952
    %v5137 = vunpack.c.l.b16 %v2953
    %v5138 = vunpack.c.h.b16 %v2953
    %v5139 = vunpack.c.l.b16 %v2954
    %v5140 = vunpack.c.h.b16 %v2954
    %v5141 = vunpack.c.l.b16 %v2955
    %v5142 = vunpack.c.h.b16 %v2955
    %v5143 = vunpack.c.l.b16 %v2956
    %v5144 = vunpack.c.h.b16 %v2956
    %v5145 = vunpack.c.l.b16 %v2957
    %v5146 = vunpack.c.h.b16 %v2957
    %v5147 = vunpack.c.l.b16 %v2958
    %v5148 = vunpack.c.h.b16 %v2958
    %v5149 = vunpack.c.l.b16 %v2959
    %v5150 = vunpack.c.h.b16 %v2959
    %v5151 = vunpack.c.l.b16 %v2960
    %v5152 = vunpack.c.h.b16 %v2960
    %v5153 = vunpack.c.l.b16 %v2961
    %v5154 = vunpack.c.h.b16 %v2961
    %v5155 = vunpack.c.l.b16 %v2962
    %v5156 = vunpack.c.h.b16 %v2962
    %v5157 = vunpack.c.l.b16 %v2963
    %v5158 = vunpack.c.h.b16 %v2963
    %v5159 = vunpack.c.l.b16 %v2964
    %v5160 = vunpack.c.h.b16 %v2964
    %v5161 = vunpack.c.l.b16 %v2965
    %v5162 = vunpack.c.h.b16 %v2965
    %v5163 = vunpack.c.l.b16 %v2966
    %v5164 = vunpack.c.h.b16 %v2966
    %v5165 = vunpack.c.l.b16 %v2967
    %v5166 = vunpack.c.h.b16 %v2967
    %v5167 = vunpack.c.l.b16 %v2968
    %v5168 = vunpack.c.h.b16 %v2968
    %v5169 = vunpack.c.l.b16 %v2969
    %v5170 = vunpack.c.h.b16 %v2969
    %v5171 = vunpack.c.l.b16 %v2970
    %v5172 = vunpack.c.h.b16 %v2970
    %v5173 = vunpack.c.l.b16 %v2971
    %v5174 = vunpack.c.h.b16 %v2971
    %v5175 = vunpack.c.l.b16 %v2972
    %v5176 = vunpack.c.h.b16 %v2972
    %v5177 = vunpack.c.l.b16 %v2973
    %v5178 = vunpack.c.h.b16 %v2973
    %v5179 = vunpack.c.l.b16 %v2974
    %v5180 = vunpack.c.h.b16 %v2974
    %v5181 = vunpack.c.l.b16 %v2975
    %v5182 = vunpack.c.h.b16 %v2975
    %v5183 = vunpack.c.l.b16 %v2976
    %v5184 = vunpack.c.h.b16 %v2976
    %v5185 = vunpack.c.l.b16 %v2977
    %v5186 = vunpack.c.h.b16 %v2977
    %v5187 = vunpack.c.l.b16 %v2978
    %v5188 = vunpack.c.h.b16 %v2978
    %v5189 = vunpack.c.l.b16 %v2979
    %v5190 = vunpack.c.h.b16 %v2979
    %v5191 = vunpack.c.l.b16 %v2980
    %v5192 = vunpack.c.h.b16 %v2980
    %v5193 = vunpack.c.l.b16 %v2981
    %v5194 = vunpack.c.h.b16 %v2981
    %v5195 = vunpack.c.l.b16 %v2982
    %v5196 = vunpack.c.h.b16 %v2982
    %v5197 = vunpack.c.l.b16 %v2983
    %v5198 = vunpack.c.h.b16 %v2983
    %v5199 = vunpack.c.l.b16 %v2984
    %v5200 = vunpack.c.h.b16 %v2984
    %v5201 = vunpack.c.l.b16 %v2985
    %v5202 = vunpack.c.h.b16 %v2985
    %v5203 = vunpack.c.l.b16 %v2986
    %v5204 = vunpack.c.h.b16 %v2986
    %v5205 = vunpack.c.l.b16 %v2987
    %v5206 = vunpack.c.h.b16 %v2987
    %v5207 = vunpack.c.l.b16 %v2988
    %v5208 = vunpack.c.h.b16 %v2988
    %v5209 = vunpack.c.l.b16 %v2989
    %v5210 = vunpack.c.h.b16 %v2989
    %v5211 = vunpack.c.l.b16 %v2990
    %v5212 = vunpack.c.h.b16 %v2990
    %v5213 = vunpack.c.l.b16 %v2991
    %v5214 = vunpack.c.h.b16 %v2991
    %v5215 = vunpack.c.l.b16 %v2992
    %v5216 = vunpack.c.h.b16 %v2992
    %v5217 = vunpack.c.l.b16 %v2993
    %v5218 = vunpack.c.h.b16 %v2993
    %v5219 = vunpack.c.l.b16 %v2994
    %v5220 = vunpack.c.h.b16 %v2994
    %v5221 = vunpack.c.l.b16 %v2995
    %v5222 = vunpack.c.h.b16 %v2995
    %v5223 = vunpack.c.l.b16 %v2996
    %v5224 = vunpack.c.h.b16 %v2996
    %v5225 = vunpack.c.l.b16 %v2997
    %v5226 = vunpack.c.h.b16 %v2997
    %v5227 = vunpack.c.l.b16 %v2998
    %v5228 = vunpack.c.h.b16 %v2998
    %v5229 = vunpack.c.l.b16 %v2999
    %v5230 = vunpack.c.h.b16 %v2999
    %v5231 = vunpack.c.l.b16 %v3000
    %v5232 = vunpack.c.h.b16 %v3000
    %v5233 = vunpack.c.l.b16 %v3001
    %v5234 = vunpack.c.h.b16 %v3001
    %v5235 = vunpack.c.l.b16 %v3002
    %v5236 = vunpack.c.h.b16 %v3002
    %v5237 = vunpack.c.l.b16 %v3003
    %v5238 = vunpack.c.h.b16 %v3003
    %v5239 = vunpack.c.l.b16 %v3004
    %v5240 = vunpack.c.h.b16 %v3004
    %v5241 = vunpack.c.l.b16 %v3005
    %v5242 = vunpack.c.h.b16 %v3005
    %v5243 = vunpack.c.l.b16 %v3006
    %v5244 = vunpack.c.h.b16 %v3006
    %v5245 = vunpack.c.l.b16 %v3007
    %v5246 = vunpack.c.h.b16 %v3007
    %v5247 = vunpack.c.l.b16 %v3008
    %v5248 = vunpack.c.h.b16 %v3008
    %v5249 = vunpack.c.l.b16 %v3009
    %v5250 = vunpack.c.h.b16 %v3009
    %v5251 = vunpack.c.l.b16 %v3010
    %v5252 = vunpack.c.h.b16 %v3010
    %v5253 = vunpack.c.l.b16 %v3011
    %v5254 = vunpack.c.h.b16 %v3011
    %v5255 = vunpack.c.l.b16 %v3012
    %v5256 = vunpack.c.h.b16 %v3012
    %v5257 = vunpack.c.l.b16 %v3013
    %v5258 = vunpack.c.h.b16 %v3013
    %v5259 = vunpack.c.l.b16 %v3014
    %v5260 = vunpack.c.h.b16 %v3014
    %v5261 = vunpack.c.l.b16 %v3015
    %v5262 = vunpack.c.h.b16 %v3015
    %v5263 = vunpack.c.l.b16 %v3016
    %v5264 = vunpack.c.h.b16 %v3016
    %v5265 = vunpack.c.l.b16 %v3017
    %v5266 = vunpack.c.h.b16 %v3017
    %v5267 = vunpack.c.l.b16 %v3018
    %v5268 = vunpack.c.h.b16 %v3018
    %v5269 = vunpack.c.l.b16 %v3019
    %v5270 = vunpack.c.h.b16 %v3019
    %v5271 = vunpack.c.l.b16 %v3020
    %v5272 = vunpack.c.h.b16 %v3020
    %v5273 = vunpack.c.l.b16 %v3021
    %v5274 = vunpack.c.h.b16 %v3021
    %v5275 = vunpack.c.l.b16 %v3022
    %v5276 = vunpack.c.h.b16 %v3022
    %v5277 = vunpack.c.l.b16 %v3023
    %v5278 = vunpack.c.h.b16 %v3023
    %v5279 = vunpack.c.l.b16 %v3024
    %v5280 = vunpack.c.h.b16 %v3024
    %v5281 = vunpack.c.l.b16 %v3025
    %v5282 = vunpack.c.h.b16 %v3025
    %v5283 = vunpack.c.l.b16 %v3026
    %v5284 = vunpack.c.h.b16 %v3026
    %v5285 = vunpack.c.l.b16 %v3027
    %v5286 = vunpack.c.h.b16 %v3027
    %v5287 = vunpack.c.l.b16 %v3028
    %v5288 = vunpack.c.h.b16 %v3028
    %v5289 = vunpack.c.l.b16 %v3029
    %v5290 = vunpack.c.h.b16 %v3029
    %v5291 = vunpack.c.l.b16 %v3030
    %v5292 = vunpack.c.h.b16 %v3030
    %v5293 = vunpack.c.l.b16 %v3031
    %v5294 = vunpack.c.h.b16 %v3031
    %v5295 = vunpack.c.l.b16 %v3032
    %v5296 = vunpack.c.h.b16 %v3032
    %v5297 = vunpack.c.l.b16 %v3033
    %v5298 = vunpack.c.h.b16 %v3033
    %v5299 = vunpack.c.l.b16 %v3034
    %v5300 = vunpack.c.h.b16 %v3034
    %v5301 = vunpack.c.l.b16 %v3035
    %v5302 = vunpack.c.h.b16 %v3035
    %v5303 = vunpack.c.l.b16 %v3036
    %v5304 = vunpack.c.h.b16 %v3036
    %v5305 = vunpack.c.l.b16 %v3037
    %v5306 = vunpack.c.h.b16 %v3037
    %v5307 = vunpack.c.l.b16 %v3038
    %v5308 = vunpack.c.h.b16 %v3038
    %v5309 = vunpack.c.l.b16 %v3039
    %v5310 = vunpack.c.h.b16 %v3039
    %v5311 = vunpack.c.l.b16 %v3040
    %v5312 = vunpack.c.h.b16 %v3040
    %v5313 = vunpack.c.l.b16 %v3041
    %v5314 = vunpack.c.h.b16 %v3041
    %v5315 = vunpack.c.l.b16 %v3042
    %v5316 = vunpack.c.h.b16 %v3042
    %v5317 = vunpack.c.l.b16 %v3043
    %v5318 = vunpack.c.h.b16 %v3043
    %v5319 = vunpack.c.l.b16 %v3044
    %v5320 = vunpack.c.h.b16 %v3044
    %v5321 = vunpack.c.l.b16 %v3045
    %v5322 = vunpack.c.h.b16 %v3045
    %v5323 = vunpack.c.l.b16 %v3046
    %v5324 = vunpack.c.h.b16 %v3046
    %v5325 = vunpack.c.l.b16 %v3047
    %v5326 = vunpack.c.h.b16 %v3047
    %v5327 = vunpack.c.l.b16 %v3048
    %v5328 = vunpack.c.h.b16 %v3048
    %v5329 = vunpack.c.l.b16 %v3049
    %v5330 = vunpack.c.h.b16 %v3049
    %v5331 = vunpack.c.l.b16 %v3050
    %v5332 = vunpack.c.h.b16 %v3050
    %v5333 = vunpack.c.l.b16 %v3051
    %v5334 = vunpack.c.h.b16 %v3051
    %v5335 = vunpack.c.l.b16 %v3052
    %v5336 = vunpack.c.h.b16 %v3052
    %v5337 = vunpack.c.l.b16 %v3053
    %v5338 = vunpack.c.h.b16 %v3053
    %v5339 = vunpack.c.l.b16 %v3054
    %v5340 = vunpack.c.h.b16 %v3054
    %v5341 = vunpack.c.l.b16 %v3055
    %v5342 = vunpack.c.h.b16 %v3055
    %v5343 = vunpack.c.l.b16 %v3056
    %v5344 = vunpack.c.h.b16 %v3056
    %v5345 = vunpack.c.l.b16 %v3057
    %v5346 = vunpack.c.h.b16 %v3057
    %v5347 = vunpack.c.l.b16 %v3058
    %v5348 = vunpack.c.h.b16 %v3058
    %v5349 = vunpack.c.l.b16 %v3059
    %v5350 = vunpack.c.h.b16 %v3059
    %v5351 = vunpack.c.l.b16 %v3060
    %v5352 = vunpack.c.h.b16 %v3060
    %v5353 = vunpack.c.l.b16 %v3061
    %v5354 = vunpack.c.h.b16 %v3061
    %v5355 = vunpack.c.l.b16 %v3062
    %v5356 = vunpack.c.h.b16 %v3062
    %v5357 = vunpack.c.l.b16 %v3063
    %v5358 = vunpack.c.h.b16 %v3063
    %v5359 = vunpack.c.l.b16 %v3064
    %v5360 = vunpack.c.h.b16 %v3064
    %v5361 = vunpack.c.l.b16 %v3065
    %v5362 = vunpack.c.h.b16 %v3065
    %v5363 = vunpack.c.l.b16 %v3066
    %v5364 = vunpack.c.h.b16 %v3066
    %v5365 = vunpack.c.l.b16 %v3067
    %v5366 = vunpack.c.h.b16 %v3067
    %v5367 = vunpack.c.l.b16 %v3068
    %v5368 = vunpack.c.h.b16 %v3068
    %v5369 = vunpack.c.l.b16 %v3069
    %v5370 = vunpack.c.h.b16 %v3069
    %v5371 = vunpack.c.l.b16 %v3070
    %v5372 = vunpack.c.h.b16 %v3070
    %v5373 = vunpack.c.l.b16 %v3071
    %v5374 = vunpack.c.h.b16 %v3071
    %v5375 = vunpack.c.l.b16 %v3072
    %v5376 = vunpack.c.h.b16 %v3072
    %v5377 = vunpack.c.l.b16 %v3073
    %v5378 = vunpack.c.h.b16 %v3073
    %v5379 = vunpack.c.l.b16 %v3074
    %v5380 = vunpack.c.h.b16 %v3074
    %v5381 = vunpack.c.l.b16 %v3075
    %v5382 = vunpack.c.h.b16 %v3075
    %v5383 = vunpack.c.l.b16 %v3076
    %v5384 = vunpack.c.h.b16 %v3076
    %v5385 = vunpack.c.l.b16 %v3077
    %v5386 = vunpack.c.h.b16 %v3077
    %v5387 = vunpack.c.l.b16 %v3078
    %v5388 = vunpack.c.h.b16 %v3078
    %v5389 = vunpack.c.l.b16 %v3079
    %v5390 = vunpack.c.h.b16 %v3079
    %v5391 = vunpack.c.l.b16 %v3080
    %v5392 = vunpack.c.h.b16 %v3080
    %v5393 = vunpack.c.l.b16 %v3081
    %v5394 = vunpack.c.h.b16 %v3081
    %v5395 = vunpack.c.l.b16 %v3082
    %v5396 = vunpack.c.h.b16 %v3082
    %v5397 = vunpack.c.l.b16 %v3083
    %v5398 = vunpack.c.h.b16 %v3083
    %v5399 = vunpack.c.l.b16 %v3084
    %v5400 = vunpack.c.h.b16 %v3084
    %v5401 = vunpack.c.l.b16 %v3085
    %v5402 = vunpack.c.h.b16 %v3085
    %v5403 = vunpack.c.l.b16 %v3086
    %v5404 = vunpack.c.h.b16 %v3086
    %v5405 = vunpack.c.l.b16 %v3087
    %v5406 = vunpack.c.h.b16 %v3087
    %v5407 = vunpack.c.l.b16 %v3088
    %v5408 = vunpack.c.h.b16 %v3088
    %v5409 = vunpack.c.l.b16 %v3089
    %v5410 = vunpack.c.h.b16 %v3089
    %v5411 = vunpack.c.l.b16 %v3090
    %v5412 = vunpack.c.h.b16 %v3090
    %v5413 = vunpack.c.l.b16 %v3091
    %v5414 = vunpack.c.h.b16 %v3091
    %v5415 = vunpack.c.l.b16 %v3092
    %v5416 = vunpack.c.h.b16 %v3092
    %v5417 = vunpack.c.l.b16 %v3093
    %v5418 = vunpack.c.h.b16 %v3093
    %v5419 = vunpack.c.l.b16 %v3094
    %v5420 = vunpack.c.h.b16 %v3094
    %v5421 = vunpack.c.l.b16 %v3095
    %v5422 = vunpack.c.h.b16 %v3095
    %v5423 = vunpack.c.l.b16 %v3096
    %v5424 = vunpack.c.h.b16 %v3096
    %v5425 = vunpack.c.l.b16 %v3097
    %v5426 = vunpack.c.h.b16 %v3097
    %v5427 = vunpack.c.l.b16 %v3098
    %v5428 = vunpack.c.h.b16 %v3098
    %v5429 = vunpack.c.l.b16 %v3099
    %v5430 = vunpack.c.h.b16 %v3099
    %v5431 = vunpack.c.l.b16 %v3100
    %v5432 = vunpack.c.h.b16 %v3100
    %v5433 = vunpack.c.l.b16 %v3101
    %v5434 = vunpack.c.h.b16 %v3101
    %v5435 = vunpack.c.l.b16 %v3102
    %v5436 = vunpack.c.h.b16 %v3102
    %v5437 = vunpack.c.l.b16 %v3103
    %v5438 = vunpack.c.h.b16 %v3103
    %v5439 = vunpack.c.l.b16 %v3104
    %v5440 = vunpack.c.h.b16 %v3104
    %v5441 = vunpack.c.l.b16 %v3105
    %v5442 = vunpack.c.h.b16 %v3105
    %v5443 = vunpack.c.l.b16 %v3106
    %v5444 = vunpack.c.h.b16 %v3106
    %v5445 = vunpack.c.l.b16 %v3107
    %v5446 = vunpack.c.h.b16 %v3107
    %v5447 = vunpack.c.l.b16 %v3108
    %v5448 = vunpack.c.h.b16 %v3108
    %v5449 = vunpack.c.l.b16 %v3109
    %v5450 = vunpack.c.h.b16 %v3109
    %v5451 = vunpack.c.l.b16 %v3110
    %v5452 = vunpack.c.h.b16 %v3110
    %v5453 = vunpack.c.l.b16 %v3111
    %v5454 = vunpack.c.h.b16 %v3111
    %v5455 = vunpack.c.l.b16 %v3112
    %v5456 = vunpack.c.h.b16 %v3112
    %v5457 = vunpack.c.l.b16 %v3113
    %v5458 = vunpack.c.h.b16 %v3113
    %v5459 = vunpack.c.l.b16 %v3114
    %v5460 = vunpack.c.h.b16 %v3114
    %v5461 = vunpack.c.l.b16 %v3115
    %v5462 = vunpack.c.h.b16 %v3115
    %v5463 = vunpack.c.l.b16 %v3116
    %v5464 = vunpack.c.h.b16 %v3116
    %v5465 = vunpack.c.l.b16 %v3117
    %v5466 = vunpack.c.h.b16 %v3117
    %v5467 = vunpack.c.l.b16 %v3118
    %v5468 = vunpack.c.h.b16 %v3118
    %v5469 = vunpack.c.l.b16 %v3119
    %v5470 = vunpack.c.h.b16 %v3119
    %v5471 = vunpack.c.l.b16 %v3120
    %v5472 = vunpack.c.h.b16 %v3120
    %v5473 = vunpack.c.l.b16 %v3121
    %v5474 = vunpack.c.h.b16 %v3121
    %v5475 = vunpack.c.l.b16 %v3122
    %v5476 = vunpack.c.h.b16 %v3122
    %v5477 = vunpack.c.l.b16 %v3123
    %v5478 = vunpack.c.h.b16 %v3123
    %v5479 = vunpack.c.l.b16 %v3124
    %v5480 = vunpack.c.h.b16 %v3124
    %v5481 = vunpack.c.l.b16 %v3125
    %v5482 = vunpack.c.h.b16 %v3125
    %v5483 = vunpack.c.l.b16 %v3126
    %v5484 = vunpack.c.h.b16 %v3126
    %v5485 = vunpack.c.l.b16 %v3127
    %v5486 = vunpack.c.h.b16 %v3127
    %v5487 = vunpack.c.l.b16 %v3128
    %v5488 = vunpack.c.h.b16 %v3128
    %v5489 = vunpack.c.l.b16 %v3129
    %v5490 = vunpack.c.h.b16 %v3129
    %v5491 = vunpack.c.l.b16 %v3130
    %v5492 = vunpack.c.h.b16 %v3130
    %v5493 = vunpack.c.l.b16 %v3131
    %v5494 = vunpack.c.h.b16 %v3131
    %v5495 = vunpack.c.l.b16 %v3132
    %v5496 = vunpack.c.h.b16 %v3132
    %v5497 = vunpack.c.l.b16 %v3133
    %v5498 = vunpack.c.h.b16 %v3133
    %v5499 = vunpack.c.l.b16 %v3134
    %v5500 = vunpack.c.h.b16 %v3134
    %v5501 = vunpack.c.l.b16 %v3135
    %v5502 = vunpack.c.h.b16 %v3135
    %v5503 = vunpack.c.l.b16 %v3136
    %v5504 = vunpack.c.h.b16 %v3136
    %v5505 = vunpack.c.l.b16 %v3137
    %v5506 = vunpack.c.h.b16 %v3137
    %v5507 = vunpack.c.l.b16 %v3138
    %v5508 = vunpack.c.h.b16 %v3138
    %v5509 = vunpack.c.l.b16 %v3139
    %v5510 = vunpack.c.h.b16 %v3139
    %v5511 = vunpack.c.l.b16 %v3140
    %v5512 = vunpack.c.h.b16 %v3140
    %v5513 = vunpack.c.l.b16 %v3141
    %v5514 = vunpack.c.h.b16 %v3141
    %v5515 = vunpack.c.l.b16 %v3142
    %v5516 = vunpack.c.h.b16 %v3142
    %v5517 = vunpack.c.l.b16 %v3143
    %v5518 = vunpack.c.h.b16 %v3143
    %v5519 = vunpack.c.l.b16 %v3144
    %v5520 = vunpack.c.h.b16 %v3144
    %v5521 = vunpack.c.l.b16 %v3145
    %v5522 = vunpack.c.h.b16 %v3145
    %v5523 = vunpack.c.l.b16 %v3146
    %v5524 = vunpack.c.h.b16 %v3146
    %v5525 = vunpack.c.l.b16 %v3147
    %v5526 = vunpack.c.h.b16 %v3147
    %v5527 = vunpack.c.l.b16 %v3148
    %v5528 = vunpack.c.h.b16 %v3148
    %v5529 = vunpack.c.l.b16 %v3149
    %v5530 = vunpack.c.h.b16 %v3149
    %v5531 = vunpack.c.l.b16 %v3150
    %v5532 = vunpack.c.h.b16 %v3150
    %v5533 = vunpack.c.l.b16 %v3151
    %v5534 = vunpack.c.h.b16 %v3151
    %v5535 = vunpack.c.l.b16 %v3152
    %v5536 = vunpack.c.h.b16 %v3152
    %v5537 = vunpack.c.l.b16 %v3153
    %v5538 = vunpack.c.h.b16 %v3153
    %v5539 = vunpack.c.l.b16 %v3154
    %v5540 = vunpack.c.h.b16 %v3154
    %v5541 = vunpack.c.l.b16 %v3155
    %v5542 = vunpack.c.h.b16 %v3155
    %v5543 = vunpack.c.l.b16 %v3156
    %v5544 = vunpack.c.h.b16 %v3156
    %v5545 = vunpack.c.l.b16 %v3157
    %v5546 = vunpack.c.h.b16 %v3157
    %v5547 = vunpack.c.l.b16 %v3158
    %v5548 = vunpack.c.h.b16 %v3158
    %v5549 = vunpack.c.l.b16 %v3159
    %v5550 = vunpack.c.h.b16 %v3159
    %v5551 = vunpack.c.l.b16 %v3160
    %v5552 = vunpack.c.h.b16 %v3160
    %v5553 = vunpack.c.l.b16 %v3161
    %v5554 = vunpack.c.h.b16 %v3161
    %v5555 = vunpack.c.l.b16 %v3162
    %v5556 = vunpack.c.h.b16 %v3162
    %v5557 = vunpack.c.l.b16 %v3163
    %v5558 = vunpack.c.h.b16 %v3163
    %v5559 = vunpack.c.l.b16 %v3164
    %v5560 = vunpack.c.h.b16 %v3164
    %v5561 = vunpack.c.l.b16 %v3165
    %v5562 = vunpack.c.h.b16 %v3165
    %v5563 = vunpack.c.l.b16 %v3166
    %v5564 = vunpack.c.h.b16 %v3166
    %v5565 = vunpack.c.l.b16 %v3167
    %v5566 = vunpack.c.h.b16 %v3167
    %v5567 = vunpack.c.l.b16 %v3168
    %v5568 = vunpack.c.h.b16 %v3168
    %v5569 = vunpack.c.l.b16 %v3169
    %v5570 = vunpack.c.h.b16 %v3169
    %v5571 = vunpack.c.l.b16 %v3170
    %v5572 = vunpack.c.h.b16 %v3170
    %v5573 = vunpack.c.l.b16 %v3171
    %v5574 = vunpack.c.h.b16 %v3171
    %v5575 = vunpack.c.l.b16 %v3172
    %v5576 = vunpack.c.h.b16 %v3172
    %v5577 = vunpack.c.l.b16 %v3173
    %v5578 = vunpack.c.h.b16 %v3173
    %v5579 = vunpack.c.l.b16 %v3174
    %v5580 = vunpack.c.h.b16 %v3174
    %v5581 = vunpack.c.l.b16 %v3175
    %v5582 = vunpack.c.h.b16 %v3175
    %v5583 = vunpack.c.l.b16 %v3176
    %v5584 = vunpack.c.h.b16 %v3176
    %v5585 = vunpack.c.l.b16 %v3177
    %v5586 = vunpack.c.h.b16 %v3177
    %v5587 = vunpack.c.l.b16 %v3178
    %v5588 = vunpack.c.h.b16 %v3178
    %v5589 = vunpack.c.l.b16 %v3179
    %v5590 = vunpack.c.h.b16 %v3179
    %v5591 = vunpack.c.l.b16 %v3180
    %v5592 = vunpack.c.h.b16 %v3180
    %v5593 = vunpack.c.l.b16 %v3181
    %v5594 = vunpack.c.h.b16 %v3181
    %v5595 = vunpack.c.l.b16 %v3182
    %v5596 = vunpack.c.h.b16 %v3182
    %v5597 = vunpack.c.l.b16 %v3183
    %v5598 = vunpack.c.h.b16 %v3183
    %v5599 = vunpack.c.l.b16 %v3184
    %v5600 = vunpack.c.h.b16 %v3184
    %v5601 = vunpack.c.l.b16 %v3185
    %v5602 = vunpack.c.h.b16 %v3185
    %v5603 = vunpack.c.l.b16 %v3186
    %v5604 = vunpack.c.h.b16 %v3186
    %v5605 = vunpack.c.l.b16 %v3187
    %v5606 = vunpack.c.h.b16 %v3187
    %v5607 = vunpack.c.l.b16 %v3188
    %v5608 = vunpack.c.h.b16 %v3188
    %v5609 = vunpack.c.l.b16 %v3189
    %v5610 = vunpack.c.h.b16 %v3189
    %v5611 = vunpack.c.l.b16 %v3190
    %v5612 = vunpack.c.h.b16 %v3190
    %v5613 = vunpack.c.l.b16 %v3191
    %v5614 = vunpack.c.h.b16 %v3191
    %v5615 = vunpack.c.l.b16 %v3192
    %v5616 = vunpack.c.h.b16 %v3192
    %v5617 = vunpack.c.l.b16 %v3193
    %v5618 = vunpack.c.h.b16 %v3193
    %v5619 = vunpack.c.l.b16 %v3194
    %v5620 = vunpack.c.h.b16 %v3194
    %v5621 = vunpack.c.l.b16 %v3195
    %v5622 = vunpack.c.h.b16 %v3195
    %v5623 = vunpack.c.l.b16 %v3196
    %v5624 = vunpack.c.h.b16 %v3196
    %v5625 = vunpack.c.l.b16 %v3197
    %v5626 = vunpack.c.h.b16 %v3197
    %v5627 = vunpack.c.l.b16 %v3198
    %v5628 = vunpack.c.h.b16 %v3198
    %v5629 = vunpack.c.l.b16 %v3199
    %v5630 = vunpack.c.h.b16 %v3199
    %v5631 = vunpack.c.l.b16 %v3200
    %v5632 = vunpack.c.h.b16 %v3200
    %v5633 = vunpack.c.l.b16 %v3201
    %v5634 = vunpack.c.h.b16 %v3201
    %v5635 = vunpack.c.l.b16 %v3202
    %v5636 = vunpack.c.h.b16 %v3202
    %v5637 = vunpack.c.l.b16 %v3203
    %v5638 = vunpack.c.h.b16 %v3203
    %v5639 = vunpack.c.l.b16 %v3204
    %v5640 = vunpack.c.h.b16 %v3204
    %v5641 = vunpack.c.l.b16 %v3205
    %v5642 = vunpack.c.h.b16 %v3205
    %v5643 = vunpack.c.l.b16 %v3206
    %v5644 = vunpack.c.h.b16 %v3206
    %v5645 = vunpack.c.l.b16 %v3207
    %v5646 = vunpack.c.h.b16 %v3207
    %v5647 = vunpack.c.l.b16 %v3208
    %v5648 = vunpack.c.h.b16 %v3208
    %v5649 = vunpack.c.l.b16 %v3209
    %v5650 = vunpack.c.h.b16 %v3209
    %v5651 = vunpack.c.l.b16 %v3210
    %v5652 = vunpack.c.h.b16 %v3210
    %v5653 = vunpack.c.l.b16 %v3211
    %v5654 = vunpack.c.h.b16 %v3211
    %v5655 = vunpack.c.l.b16 %v3212
    %v5656 = vunpack.c.h.b16 %v3212
    %v5657 = vunpack.c.l.b16 %v3213
    %v5658 = vunpack.c.h.b16 %v3213
    %v5659 = vunpack.c.l.b16 %v3214
    %v5660 = vunpack.c.h.b16 %v3214
    %v5661 = vunpack.c.l.b16 %v3215
    %v5662 = vunpack.c.h.b16 %v3215
    %v5663 = vunpack.c.l.b16 %v3216
    %v5664 = vunpack.c.h.b16 %v3216
    %v5665 = vunpack.c.l.b16 %v3217
    %v5666 = vunpack.c.h.b16 %v3217
    %v5667 = vunpack.c.l.b16 %v3218
    %v5668 = vunpack.c.h.b16 %v3218
    %v5669 = vunpack.c.l.b16 %v3219
    %v5670 = vunpack.c.h.b16 %v3219
    %v5671 = vunpack.c.l.b16 %v3220
    %v5672 = vunpack.c.h.b16 %v3220
    %v5673 = vunpack.c.l.b16 %v3221
    %v5674 = vunpack.c.h.b16 %v3221
    %v5675 = vunpack.c.l.b16 %v3222
    %v5676 = vunpack.c.h.b16 %v3222
    %v5677 = vunpack.c.l.b16 %v3223
    %v5678 = vunpack.c.h.b16 %v3223
    %v5679 = vunpack.c.l.b16 %v3224
    %v5680 = vunpack.c.h.b16 %v3224
    %v5681 = vunpack.c.l.b16 %v3225
    %v5682 = vunpack.c.h.b16 %v3225
    %v5683 = vunpack.c.l.b16 %v3226
    %v5684 = vunpack.c.h.b16 %v3226
    %v5685 = vunpack.c.l.b16 %v3227
    %v5686 = vunpack.c.h.b16 %v3227
    %v5687 = vunpack.c.l.b16 %v3228
    %v5688 = vunpack.c.h.b16 %v3228
    %v5689 = vunpack.c.l.b16 %v3229
    %v5690 = vunpack.c.h.b16 %v3229
    %v5691 = vunpack.c.l.b16 %v3230
    %v5692 = vunpack.c.h.b16 %v3230
    %v5693 = vunpack.c.l.b16 %v3231
    %v5694 = vunpack.c.h.b16 %v3231
    %v5695 = vunpack.c.l.b16 %v3232
    %v5696 = vunpack.c.h.b16 %v3232
    %v5697 = vunpack.c.l.b16 %v3233
    %v5698 = vunpack.c.h.b16 %v3233
    %v5699 = vunpack.c.l.b16 %v3234
    %v5700 = vunpack.c.h.b16 %v3234
    %v5701 = vunpack.c.l.b16 %v3235
    %v5702 = vunpack.c.h.b16 %v3235
    %v5703 = vunpack.c.l.b16 %v3236
    %v5704 = vunpack.c.h.b16 %v3236
    %v5705 = vunpack.c.l.b16 %v3237
    %v5706 = vunpack.c.h.b16 %v3237
    %v5707 = vunpack.c.l.b16 %v3238
    %v5708 = vunpack.c.h.b16 %v3238
    %v5709 = vunpack.c.l.b16 %v3239
    %v5710 = vunpack.c.h.b16 %v3239
    %v5711 = vunpack.c.l.b16 %v3240
    %v5712 = vunpack.c.h.b16 %v3240
    %v5713 = vunpack.c.l.b16 %v3241
    %v5714 = vunpack.c.h.b16 %v3241
    %v5715 = vunpack.c.l.b16 %v3242
    %v5716 = vunpack.c.h.b16 %v3242
    %v5717 = vunpack.c.l.b16 %v3243
    %v5718 = vunpack.c.h.b16 %v3243
    %v5719 = vunpack.c.l.b16 %v3244
    %v5720 = vunpack.c.h.b16 %v3244
    %v5721 = vunpack.c.l.b16 %v3245
    %v5722 = vunpack.c.h.b16 %v3245
    %v5723 = vunpack.c.l.b16 %v3246
    %v5724 = vunpack.c.h.b16 %v3246
    %v5725 = vunpack.c.l.b16 %v3247
    %v5726 = vunpack.c.h.b16 %v3247
    %v5727 = vunpack.c.l.b16 %v3248
    %v5728 = vunpack.c.h.b16 %v3248
    %v5729 = vunpack.c.l.b16 %v3249
    %v5730 = vunpack.c.h.b16 %v3249
    %v5731 = vunpack.c.l.b16 %v3250
    %v5732 = vunpack.c.h.b16 %v3250
    %v5733 = vunpack.c.l.b16 %v3251
    %v5734 = vunpack.c.h.b16 %v3251
    %v5735 = vunpack.c.l.b16 %v3252
    %v5736 = vunpack.c.h.b16 %v3252
    %v5737 = vunpack.c.l.b16 %v3253
    %v5738 = vunpack.c.h.b16 %v3253
    %v5739 = vunpack.c.l.b16 %v3254
    %v5740 = vunpack.c.h.b16 %v3254
    %v5741 = vunpack.c.l.b16 %v3255
    %v5742 = vunpack.c.h.b16 %v3255
    %v5743 = vunpack.c.l.b16 %v3256
    %v5744 = vunpack.c.h.b16 %v3256
    %v5745 = vunpack.c.l.b16 %v3257
    %v5746 = vunpack.c.h.b16 %v3257
    %v5747 = vunpack.c.l.b16 %v3258
    %v5748 = vunpack.c.h.b16 %v3258
    %v5749 = vunpack.c.l.b16 %v3259
    %v5750 = vunpack.c.h.b16 %v3259
    %v5751 = vunpack.c.l.b16 %v3260
    %v5752 = vunpack.c.h.b16 %v3260
    %v5753 = vunpack.c.l.b16 %v3261
    %v5754 = vunpack.c.h.b16 %v3261
    %v5755 = vunpack.c.l.b16 %v3262
    %v5756 = vunpack.c.h.b16 %v3262
    %v5757 = vunpack.c.l.b16 %v3263
    %v5758 = vunpack.c.h.b16 %v3263
    %v5759 = vunpack.c.l.b16 %v3264
    %v5760 = vunpack.c.h.b16 %v3264
    %v5761 = vunpack.c.l.b16 %v3265
    %v5762 = vunpack.c.h.b16 %v3265
    %v5763 = vunpack.c.l.b16 %v3266
    %v5764 = vunpack.c.h.b16 %v3266
    %v5765 = vunpack.c.l.b16 %v3267
    %v5766 = vunpack.c.h.b16 %v3267
    %v5767 = vunpack.c.l.b16 %v3268
    %v5768 = vunpack.c.h.b16 %v3268
    %v5769 = vunpack.c.l.b16 %v3269
    %v5770 = vunpack.c.h.b16 %v3269
    %v5771 = vunpack.c.l.b16 %v3270
    %v5772 = vunpack.c.h.b16 %v3270
    %v5773 = vunpack.c.l.b16 %v3271
    %v5774 = vunpack.c.h.b16 %v3271
    %v5775 = vunpack.c.l.b16 %v3272
    %v5776 = vunpack.c.h.b16 %v3272
    %v5777 = vunpack.c.l.b16 %v3273
    %v5778 = vunpack.c.h.b16 %v3273
    %v5779 = vunpack.c.l.b16 %v3274
    %v5780 = vunpack.c.h.b16 %v3274
    %v5781 = vunpack.c.l.b16 %v3275
    %v5782 = vunpack.c.h.b16 %v3275
    %v5783 = vunpack.c.l.b16 %v3276
    %v5784 = vunpack.c.h.b16 %v3276
    %v5785 = vunpack.c.l.b16 %v3277
    %v5786 = vunpack.c.h.b16 %v3277
    %v5787 = vunpack.c.l.b16 %v3278
    %v5788 = vunpack.c.h.b16 %v3278
    %v5789 = vunpack.c.l.b16 %v3279
    %v5790 = vunpack.c.h.b16 %v3279
    %v5791 = vunpack.c.l.b16 %v3280
    %v5792 = vunpack.c.h.b16 %v3280
    %v5793 = vunpack.c.l.b16 %v3281
    %v5794 = vunpack.c.h.b16 %v3281
    %v5795 = vunpack.c.l.b16 %v3282
    %v5796 = vunpack.c.h.b16 %v3282
    %v5797 = vunpack.c.l.b16 %v3283
    %v5798 = vunpack.c.h.b16 %v3283
    %v5799 = vunpack.c.l.b16 %v3284
    %v5800 = vunpack.c.h.b16 %v3284
    %v5801 = vunpack.c.l.b16 %v3285
    %v5802 = vunpack.c.h.b16 %v3285
    %v5803 = vunpack.c.l.b16 %v3286
    %v5804 = vunpack.c.h.b16 %v3286
    %v5805 = vunpack.c.l.b16 %v3287
    %v5806 = vunpack.c.h.b16 %v3287
    %v5807 = vunpack.c.l.b16 %v3288
    %v5808 = vunpack.c.h.b16 %v3288
    %v5809 = vunpack.c.l.b16 %v3289
    %v5810 = vunpack.c.h.b16 %v3289
    %v5811 = vunpack.c.l.b16 %v3290
    %v5812 = vunpack.c.h.b16 %v3290
    %v5813 = vunpack.c.l.b16 %v3291
    %v5814 = vunpack.c.h.b16 %v3291
    %v5815 = vunpack.c.l.b16 %v3292
    %v5816 = vunpack.c.h.b16 %v3292
    %v5817 = vunpack.c.l.b16 %v3293
    %v5818 = vunpack.c.h.b16 %v3293
    %v5819 = vunpack.c.l.b16 %v3294
    %v5820 = vunpack.c.h.b16 %v3294
    %v5821 = vunpack.c.l.b16 %v3295
    %v5822 = vunpack.c.h.b16 %v3295
    %v5823 = vunpack.c.l.b16 %v3296
    %v5824 = vunpack.c.h.b16 %v3296
    %v5825 = vunpack.c.l.b16 %v3297
    %v5826 = vunpack.c.h.b16 %v3297
    %v5827 = vunpack.c.l.b16 %v3298
    %v5828 = vunpack.c.h.b16 %v3298
    %v5829 = vunpack.c.l.b16 %v3299
    %v5830 = vunpack.c.h.b16 %v3299
    %v5831 = vunpack.c.l.b16 %v3300
    %v5832 = vunpack.c.h.b16 %v3300
    %v5833 = vunpack.c.l.b16 %v3301
    %v5834 = vunpack.c.h.b16 %v3301
    %v5835 = vunpack.c.l.b16 %v3302
    %v5836 = vunpack.c.h.b16 %v3302
    %v5837 = vunpack.c.l.b16 %v3303
    %v5838 = vunpack.c.h.b16 %v3303
    %v5839 = vunpack.c.l.b16 %v3304
    %v5840 = vunpack.c.h.b16 %v3304
    %v5841 = vunpack.c.l.b16 %v3305
    %v5842 = vunpack.c.h.b16 %v3305
    %v5843 = vunpack.c.l.b16 %v3306
    %v5844 = vunpack.c.h.b16 %v3306
    %v5845 = vunpack.c.l.b16 %v3307
    %v5846 = vunpack.c.h.b16 %v3307
    %v5847 = vunpack.c.l.b16 %v3308
    %v5848 = vunpack.c.h.b16 %v3308
    %v5849 = vunpack.c.l.b16 %v3309
    %v5850 = vunpack.c.h.b16 %v3309
    %v5851 = vunpack.c.l.b16 %v3310
    %v5852 = vunpack.c.h.b16 %v3310
    %v5853 = vunpack.c.l.b16 %v3311
    %v5854 = vunpack.c.h.b16 %v3311
    %v5855 = vunpack.c.l.b16 %v3312
    %v5856 = vunpack.c.h.b16 %v3312
    %v5857 = vunpack.c.l.b16 %v3313
    %v5858 = vunpack.c.h.b16 %v3313
    %v5859 = vunpack.c.l.b16 %v3314
    %v5860 = vunpack.c.h.b16 %v3314
    %v5861 = vunpack.c.l.b16 %v3315
    %v5862 = vunpack.c.h.b16 %v3315
    %v5863 = vunpack.c.l.b16 %v3316
    %v5864 = vunpack.c.h.b16 %v3316
    %v5865 = vunpack.c.l.b16 %v3317
    %v5866 = vunpack.c.h.b16 %v3317
    %v5867 = vunpack.c.l.b16 %v3318
    %v5868 = vunpack.c.h.b16 %v3318
    %v5869 = vunpack.c.l.b16 %v3319
    %v5870 = vunpack.c.h.b16 %v3319
    %v5871 = vunpack.c.l.b16 %v3320
    %v5872 = vunpack.c.h.b16 %v3320
    %v5873 = vunpack.c.l.b16 %v3321
    %v5874 = vunpack.c.h.b16 %v3321
    %v5875 = vunpack.c.l.b16 %v3322
    %v5876 = vunpack.c.h.b16 %v3322
    %v5877 = vunpack.c.l.b16 %v3323
    %v5878 = vunpack.c.h.b16 %v3323
    %v5879 = vunpack.c.l.b16 %v3324
    %v5880 = vunpack.c.h.b16 %v3324
    %v5881 = vunpack.c.l.b16 %v3325
    %v5882 = vunpack.c.h.b16 %v3325
    %v5883 = vunpack.c.l.b16 %v3326
    %v5884 = vunpack.c.h.b16 %v3326
    %v5885 = vunpack.c.l.b16 %v3327
    %v5886 = vunpack.c.h.b16 %v3327
    %v5887 = vunpack.c.l.b16 %v3328
    %v5888 = vunpack.c.h.b16 %v3328
    %v5889 = vunpack.c.l.b16 %v3329
    %v5890 = vunpack.c.h.b16 %v3329
    %v5891 = vunpack.c.l.b16 %v3330
    %v5892 = vunpack.c.h.b16 %v3330
    %v5893 = vunpack.c.l.b16 %v3331
    %v5894 = vunpack.c.h.b16 %v3331
    %v5895 = vunpack.c.l.b16 %v3332
    %v5896 = vunpack.c.h.b16 %v3332
    %v5897 = vunpack.c.l.b16 %v3333
    %v5898 = vunpack.c.h.b16 %v3333
    %v5899 = vunpack.c.l.b16 %v3334
    %v5900 = vunpack.c.h.b16 %v3334
    %v5901 = vunpack.c.l.b16 %v3335
    %v5902 = vunpack.c.h.b16 %v3335
    %v5903 = vunpack.c.l.b16 %v3336
    %v5904 = vunpack.c.h.b16 %v3336
    %v5905 = vunpack.c.l.b16 %v3337
    %v5906 = vunpack.c.h.b16 %v3337
    %v5907 = vunpack.c.l.b16 %v3338
    %v5908 = vunpack.c.h.b16 %v3338
    %v5909 = vunpack.c.l.b16 %v3339
    %v5910 = vunpack.c.h.b16 %v3339
    %v5911 = vunpack.c.l.b16 %v3340
    %v5912 = vunpack.c.h.b16 %v3340
    %v5913 = vunpack.c.l.b16 %v3341
    %v5914 = vunpack.c.h.b16 %v3341
    %v5915 = vunpack.c.l.b16 %v3342
    %v5916 = vunpack.c.h.b16 %v3342
    %v5917 = vunpack.c.l.b16 %v3343
    %v5918 = vunpack.c.h.b16 %v3343
    %v5919 = vunpack.c.l.b16 %v3344
    %v5920 = vunpack.c.h.b16 %v3344
    %v5921 = vunpack.c.l.b16 %v3345
    %v5922 = vunpack.c.h.b16 %v3345
    %v5923 = vunpack.c.l.b16 %v3346
    %v5924 = vunpack.c.h.b16 %v3346
    %v5925 = vunpack.c.l.b16 %v3347
    %v5926 = vunpack.c.h.b16 %v3347
    %v5927 = vunpack.c.l.b16 %v3348
    %v5928 = vunpack.c.h.b16 %v3348
    %v5929 = vunpack.c.l.b16 %v3349
    %v5930 = vunpack.c.h.b16 %v3349
    %v5931 = vunpack.c.l.b16 %v3350
    %v5932 = vunpack.c.h.b16 %v3350
    %v5933 = vunpack.c.l.b16 %v3351
    %v5934 = vunpack.c.h.b16 %v3351
    %v5935 = vunpack.c.l.b16 %v3352
    %v5936 = vunpack.c.h.b16 %v3352
    %v5937 = vunpack.c.l.b16 %v3353
    %v5938 = vunpack.c.h.b16 %v3353
    %v5939 = vunpack.c.l.b16 %v3354
    %v5940 = vunpack.c.h.b16 %v3354
    %v5941 = vunpack.c.l.b16 %v3355
    %v5942 = vunpack.c.h.b16 %v3355
    %v5943 = vunpack.c.l.b16 %v3356
    %v5944 = vunpack.c.h.b16 %v3356
    %v5945 = vunpack.c.l.b16 %v3357
    %v5946 = vunpack.c.h.b16 %v3357
    %v5947 = vunpack.c.l.b16 %v3358
    %v5948 = vunpack.c.h.b16 %v3358
    %v5949 = vunpack.c.l.b16 %v3359
    %v5950 = vunpack.c.h.b16 %v3359
    %v5951 = vunpack.c.l.b16 %v3360
    %v5952 = vunpack.c.h.b16 %v3360
    %v5953 = vunpack.c.l.b16 %v3361
    %v5954 = vunpack.c.h.b16 %v3361
    %v5955 = vunpack.c.l.b16 %v3362
    %v5956 = vunpack.c.h.b16 %v3362
    %v5957 = vunpack.c.l.b16 %v3363
    %v5958 = vunpack.c.h.b16 %v3363
    %v5959 = vunpack.c.l.b16 %v3364
    %v5960 = vunpack.c.h.b16 %v3364
    %v5961 = vunpack.c.l.b16 %v3365
    %v5962 = vunpack.c.h.b16 %v3365
    %v5963 = vunpack.c.l.b16 %v3366
    %v5964 = vunpack.c.h.b16 %v3366
    %v5965 = vunpack.c.l.b16 %v3367
    %v5966 = vunpack.c.h.b16 %v3367
    %v5967 = vunpack.c.l.b16 %v3368
    %v5968 = vunpack.c.h.b16 %v3368
    %v5969 = vunpack.c.l.b16 %v3369
    %v5970 = vunpack.c.h.b16 %v3369
    %v5971 = vunpack.c.l.b16 %v3370
    %v5972 = vunpack.c.h.b16 %v3370
    %v5973 = vunpack.c.l.b16 %v3371
    %v5974 = vunpack.c.h.b16 %v3371
    %v5975 = vunpack.c.l.b16 %v3372
    %v5976 = vunpack.c.h.b16 %v3372
    %v5977 = vunpack.c.l.b16 %v3373
    %v5978 = vunpack.c.h.b16 %v3373
    %v5979 = vunpack.c.l.b16 %v3374
    %v5980 = vunpack.c.h.b16 %v3374
    %v5981 = vunpack.c.l.b16 %v3375
    %v5982 = vunpack.c.h.b16 %v3375
    %v5983 = vunpack.c.l.b16 %v3376
    %v5984 = vunpack.c.h.b16 %v3376
    %v5985 = vunpack.c.l.b16 %v3377
    %v5986 = vunpack.c.h.b16 %v3377
    %v5987 = vunpack.c.l.b16 %v3378
    %v5988 = vunpack.c.h.b16 %v3378
    %v5989 = vunpack.c.l.b16 %v3379
    %v5990 = vunpack.c.h.b16 %v3379
    %v5991 = vunpack.c.l.b16 %v3380
    %v5992 = vunpack.c.h.b16 %v3380
    %v5993 = vunpack.c.l.b16 %v3381
    %v5994 = vunpack.c.h.b16 %v3381
    %v5995 = vunpack.c.l.b16 %v3382
    %v5996 = vunpack.c.h.b16 %v3382
    %v5997 = vunpack.c.l.b16 %v3383
    %v5998 = vunpack.c.h.b16 %v3383
    %v5999 = vunpack.c.l.b16 %v3384
    %v6000 = vunpack.c.h.b16 %v3384
    %v6001 = vunpack.c.l.b16 %v3385
    %v6002 = vunpack.c.h.b16 %v3385
    %v6003 = vunpack.c.l.b16 %v3386
    %v6004 = vunpack.c.h.b16 %v3386
    %v6005 = vunpack.c.l.b16 %v3387
    %v6006 = vunpack.c.h.b16 %v3387
    %v6007 = vunpack.c.l.b16 %v3388
    %v6008 = vunpack.c.h.b16 %v3388
    %v6009 = vunpack.c.l.b16 %v3389
    %v6010 = vunpack.c.h.b16 %v3389
    %v6011 = vunpack.c.l.b16 %v3390
    %v6012 = vunpack.c.h.b16 %v3390
    %v6013 = vunpack.c.l.b16 %v3391
    %v6014 = vunpack.c.h.b16 %v3391
    %v6015 = vunpack.c.l.b16 %v3392
    %v6016 = vunpack.c.h.b16 %v3392
    %v6017 = vunpack.c.l.b16 %v3393
    %v6018 = vunpack.c.h.b16 %v3393
    %v6019 = vunpack.c.l.b16 %v3394
    %v6020 = vunpack.c.h.b16 %v3394
    %v6021 = vunpack.c.l.b16 %v3395
    %v6022 = vunpack.c.h.b16 %v3395
    %v6023 = vunpack.c.l.b16 %v3396
    %v6024 = vunpack.c.h.b16 %v3396
    %v6025 = vunpack.c.l.b16 %v3397
    %v6026 = vunpack.c.h.b16 %v3397
    %v6027 = vunpack.c.l.b16 %v3398
    %v6028 = vunpack.c.h.b16 %v3398
    %v6029 = vunpack.c.l.b16 %v3399
    %v6030 = vunpack.c.h.b16 %v3399
    %v6031 = vunpack.c.l.b16 %v3400
    %v6032 = vunpack.c.h.b16 %v3400
    %v6033 = vunpack.c.l.b16 %v3401
    %v6034 = vunpack.c.h.b16 %v3401
    %v6035 = vunpack.c.l.b16 %v3402
    %v6036 = vunpack.c.h.b16 %v3402
    %v6037 = vunpack.c.l.b16 %v3403
    %v6038 = vunpack.c.h.b16 %v3403
    %v6039 = vunpack.c.l.b16 %v3404
    %v6040 = vunpack.c.h.b16 %v3404
    %v6041 = vunpack.c.l.b16 %v3405
    %v6042 = vunpack.c.h.b16 %v3405
    %v6043 = vunpack.c.l.b16 %v3406
    %v6044 = vunpack.c.h.b16 %v3406
    %v6045 = vunpack.c.l.b16 %v3407
    %v6046 = vunpack.c.h.b16 %v3407
    %v6047 = vunpack.c.l.b16 %v3408
    %v6048 = vunpack.c.h.b16 %v3408
    %v6049 = vunpack.c.l.b16 %v3409
    %v6050 = vunpack.c.h.b16 %v3409
    %v6051 = vunpack.c.l.b16 %v3410
    %v6052 = vunpack.c.h.b16 %v3410
    %v6053 = vunpack.c.l.b16 %v3411
    %v6054 = vunpack.c.h.b16 %v3411
    %v6055 = vunpack.c.l.b16 %v3412
    %v6056 = vunpack.c.h.b16 %v3412
    %v6057 = vunpack.c.l.b16 %v3413
    %v6058 = vunpack.c.h.b16 %v3413
    %v6059 = vunpack.c.l.b16 %v3414
    %v6060 = vunpack.c.h.b16 %v3414
    %v6061 = vunpack.c.l.b16 %v3415
    %v6062 = vunpack.c.h.b16 %v3415
    %v6063 = vunpack.c.l.b16 %v3416
    %v6064 = vunpack.c.h.b16 %v3416
    %v6065 = vunpack.c.l.b16 %v3417
    %v6066 = vunpack.c.h.b16 %v3417
    %v6067 = vunpack.c.l.b16 %v3418
    %v6068 = vunpack.c.h.b16 %v3418
    %v6069 = vunpack.c.l.b16 %v3419
    %v6070 = vunpack.c.h.b16 %v3419
    %v6071 = vunpack.c.l.b16 %v3420
    %v6072 = vunpack.c.h.b16 %v3420
    %v6073 = vunpack.c.l.b16 %v3421
    %v6074 = vunpack.c.h.b16 %v3421
    %v6075 = vunpack.c.l.b16 %v3422
    %v6076 = vunpack.c.h.b16 %v3422
    %v6077 = vunpack.c.l.b16 %v3423
    %v6078 = vunpack.c.h.b16 %v3423
    %v6079 = vunpack.c.l.b16 %v3424
    %v6080 = vunpack.c.h.b16 %v3424
    %v6081 = vunpack.c.l.b16 %v3425
    %v6082 = vunpack.c.h.b16 %v3425
    %v6083 = vunpack.c.l.b16 %v3426
    %v6084 = vunpack.c.h.b16 %v3426
    %v6085 = vunpack.c.l.b16 %v3427
    %v6086 = vunpack.c.h.b16 %v3427
    %v6087 = vunpack.c.l.b16 %v3428
    %v6088 = vunpack.c.h.b16 %v3428
    %v6089 = vunpack.c.l.b16 %v3429
    %v6090 = vunpack.c.h.b16 %v3429
    %v6091 = vunpack.c.l.b16 %v3430
    %v6092 = vunpack.c.h.b16 %v3430
    %v6093 = vunpack.c.l.b16 %v3431
    %v6094 = vunpack.c.h.b16 %v3431
    %v6095 = vunpack.c.l.b16 %v3432
    %v6096 = vunpack.c.h.b16 %v3432
    %v6097 = vunpack.c.l.b16 %v3433
    %v6098 = vunpack.c.h.b16 %v3433
    %v6099 = vunpack.c.l.b16 %v3434
    %v6100 = vunpack.c.h.b16 %v3434
    %v6101 = vunpack.c.l.b16 %v3435
    %v6102 = vunpack.c.h.b16 %v3435
    %v6103 = vunpack.c.l.b16 %v3436
    %v6104 = vunpack.c.h.b16 %v3436
    %v6105 = vunpack.c.l.b16 %v3437
    %v6106 = vunpack.c.h.b16 %v3437
    %v6107 = vunpack.c.l.b16 %v3438
    %v6108 = vunpack.c.h.b16 %v3438
    %v6109 = vunpack.c.l.b16 %v3439
    %v6110 = vunpack.c.h.b16 %v3439
    %v6111 = vunpack.c.l.b16 %v3440
    %v6112 = vunpack.c.h.b16 %v3440
    %v6113 = vunpack.c.l.b16 %v3441
    %v6114 = vunpack.c.h.b16 %v3441
    %v6115 = vunpack.c.l.b16 %v3442
    %v6116 = vunpack.c.h.b16 %v3442
    %v6117 = vunpack.c.l.b16 %v3443
    %v6118 = vunpack.c.h.b16 %v3443
    %v6119 = vunpack.c.l.b16 %v3444
    %v6120 = vunpack.c.h.b16 %v3444
    %v6121 = vunpack.c.l.b16 %v3445
    %v6122 = vunpack.c.h.b16 %v3445
    %v6123 = vunpack.c.l.b16 %v3446
    %v6124 = vunpack.c.h.b16 %v3446
    %v6125 = vunpack.c.l.b16 %v3447
    %v6126 = vunpack.c.h.b16 %v3447
    %v6127 = vunpack.c.l.b16 %v3448
    %v6128 = vunpack.c.h.b16 %v3448
    %v6129 = vunpack.c.l.b16 %v3449
    %v6130 = vunpack.c.h.b16 %v3449
    %v6131 = vunpack.c.l.b16 %v3450
    %v6132 = vunpack.c.h.b16 %v3450
    %v6133 = vunpack.c.l.b16 %v3451
    %v6134 = vunpack.c.h.b16 %v3451
    %v6135 = vunpack.c.l.b16 %v3452
    %v6136 = vunpack.c.h.b16 %v3452
    %v6137 = vunpack.c.l.b16 %v3453
    %v6138 = vunpack.c.h.b16 %v3453
    %v6139 = vunpack.c.l.b16 %v3454
    %v6140 = vunpack.c.h.b16 %v3454
    %v6141 = vunpack.c.l.b16 %v3455
    %v6142 = vunpack.c.h.b16 %v3455
    %v6143 = vunpack.c.l.b16 %v3456
    %v6144 = vunpack.c.h.b16 %v3456
    %v6145 = vunpack.c.l.b16 %v3457
    %v6146 = vunpack.c.h.b16 %v3457
    %v6147 = vunpack.c.l.b16 %v3458
    %v6148 = vunpack.c.h.b16 %v3458
    %v6149 = vunpack.c.l.b16 %v3459
    %v6150 = vunpack.c.h.b16 %v3459
    %v6151 = vunpack.c.l.b16 %v3460
    %v6152 = vunpack.c.h.b16 %v3460
    %v6153 = vunpack.c.l.b16 %v3461
    %v6154 = vunpack.c.h.b16 %v3461
    %v6155 = vunpack.c.l.b16 %v3462
    %v6156 = vunpack.c.h.b16 %v3462
    %v6157 = vunpack.c.l.b16 %v3463
    %v6158 = vunpack.c.h.b16 %v3463
    %v6159 = vunpack.c.l.b16 %v3464
    %v6160 = vunpack.c.h.b16 %v3464
    %v6161 = vunpack.c.l.b16 %v3465
    %v6162 = vunpack.c.h.b16 %v3465
    %v6163 = vunpack.c.l.b16 %v3466
    %v6164 = vunpack.c.h.b16 %v3466
    %v6165 = vunpack.c.l.b16 %v3467
    %v6166 = vunpack.c.h.b16 %v3467
    %v6167 = vunpack.c.l.b16 %v3468
    %v6168 = vunpack.c.h.b16 %v3468
    %v6169 = vunpack.c.l.b16 %v3469
    %v6170 = vunpack.c.h.b16 %v3469
    %v6171 = vunpack.c.l.b16 %v3470
    %v6172 = vunpack.c.h.b16 %v3470
    %v6173 = vunpack.c.l.b16 %v3471
    %v6174 = vunpack.c.h.b16 %v3471
    %v6175 = vunpack.c.l.b16 %v3472
    %v6176 = vunpack.c.h.b16 %v3472
    %v6177 = vunpack.c.l.b16 %v3473
    %v6178 = vunpack.c.h.b16 %v3473
    %v6179 = vunpack.c.l.b16 %v3474
    %v6180 = vunpack.c.h.b16 %v3474
    %v6181 = vunpack.c.l.b16 %v3475
    %v6182 = vunpack.c.h.b16 %v3475
    %v6183 = vunpack.c.l.b16 %v3476
    %v6184 = vunpack.c.h.b16 %v3476
    %v6185 = vunpack.c.l.b16 %v3477
    %v6186 = vunpack.c.h.b16 %v3477
    %v6187 = vunpack.c.l.b16 %v3478
    %v6188 = vunpack.c.h.b16 %v3478
    %v6189 = vunpack.c.l.b16 %v3479
    %v6190 = vunpack.c.h.b16 %v3479
    %v6191 = vunpack.c.l.b16 %v3480
    %v6192 = vunpack.c.h.b16 %v3480
    %v6193 = vunpack.c.l.b16 %v3481
    %v6194 = vunpack.c.h.b16 %v3481
    %v6195 = vunpack.c.l.b16 %v3482
    %v6196 = vunpack.c.h.b16 %v3482
    %v6197 = vunpack.c.l.b16 %v3483
    %v6198 = vunpack.c.h.b16 %v3483
    %v6199 = vunpack.c.l.b16 %v3484
    %v6200 = vunpack.c.h.b16 %v3484
    %v6201 = vunpack.c.l.b16 %v3485
    %v6202 = vunpack.c.h.b16 %v3485
    %v6203 = vunpack.c.l.b16 %v3486
    %v6204 = vunpack.c.h.b16 %v3486
    %v6205 = vunpack.c.l.b16 %v3487
    %v6206 = vunpack.c.h.b16 %v3487
    %v6207 = vunpack.c.l.b16 %v3488
    %v6208 = vunpack.c.h.b16 %v3488
    %v6209 = vunpack.c.l.b16 %v3489
    %v6210 = vunpack.c.h.b16 %v3489
    %v6211 = vunpack.c.l.b16 %v3490
    %v6212 = vunpack.c.h.b16 %v3490
    %v6213 = vunpack.c.l.b16 %v3491
    %v6214 = vunpack.c.h.b16 %v3491
    %v6215 = vunpack.c.l.b16 %v3492
    %v6216 = vunpack.c.h.b16 %v3492
    %v6217 = vunpack.c.l.b16 %v3493
    %v6218 = vunpack.c.h.b16 %v3493
    %v6219 = vunpack.c.l.b16 %v3494
    %v6220 = vunpack.c.h.b16 %v3494
    %v6221 = vunpack.c.l.b16 %v3495
    %v6222 = vunpack.c.h.b16 %v3495
    %v6223 = vunpack.c.l.b16 %v3496
    %v6224 = vunpack.c.h.b16 %v3496
    %v6225 = vunpack.c.l.b16 %v3497
    %v6226 = vunpack.c.h.b16 %v3497
    %v6227 = vunpack.c.l.b16 %v3498
    %v6228 = vunpack.c.h.b16 %v3498
    %v6229 = vunpack.c.l.b16 %v3499
    %v6230 = vunpack.c.h.b16 %v3499
    %v6231 = vunpack.c.l.b16 %v3500
    %v6232 = vunpack.c.h.b16 %v3500
    %v6233 = vunpack.c.l.b16 %v3501
    %v6234 = vunpack.c.h.b16 %v3501
    %v6235 = vunpack.c.l.b16 %v3502
    %v6236 = vunpack.c.h.b16 %v3502
    %v6237 = vunpack.c.l.b16 %v3503
    %v6238 = vunpack.c.h.b16 %v3503
    %v6239 = vunpack.c.l.b16 %v3504
    %v6240 = vunpack.c.h.b16 %v3504
    %v6241 = vunpack.c.l.b16 %v3505
    %v6242 = vunpack.c.h.b16 %v3505
    %v6243 = vunpack.c.l.b16 %v3506
    %v6244 = vunpack.c.h.b16 %v3506
    %v6245 = vunpack.c.l.b16 %v3507
    %v6246 = vunpack.c.h.b16 %v3507
    %v6247 = vunpack.c.l.b16 %v3508
    %v6248 = vunpack.c.h.b16 %v3508
    %v6249 = vunpack.c.l.b16 %v3509
    %v6250 = vunpack.c.h.b16 %v3509
    %v6251 = vunpack.c.l.b16 %v3510
    %v6252 = vunpack.c.h.b16 %v3510
    %v6253 = vunpack.c.l.b16 %v3511
    %v6254 = vunpack.c.h.b16 %v3511
    %v6255 = vunpack.c.l.b16 %v3512
    %v6256 = vunpack.c.h.b16 %v3512
    %v6257 = vunpack.c.l.b16 %v3513
    %v6258 = vunpack.c.h.b16 %v3513
    %v6259 = vunpack.c.l.b16 %v3514
    %v6260 = vunpack.c.h.b16 %v3514
    %v6261 = vunpack.c.l.b16 %v3515
    %v6262 = vunpack.c.h.b16 %v3515
    %v6263 = vunpack.c.l.b16 %v3516
    %v6264 = vunpack.c.h.b16 %v3516
    %v6265 = vunpack.c.l.b16 %v3517
    %v6266 = vunpack.c.h.b16 %v3517
    %v6267 = vunpack.c.l.b16 %v3518
    %v6268 = vunpack.c.h.b16 %v3518
    %v6269 = vunpack.c.l.b16 %v3519
    %v6270 = vunpack.c.h.b16 %v3519
    %v6271 = vunpack.c.l.b16 %v3520
    %v6272 = vunpack.c.h.b16 %v3520
    %v6273 = vunpack.c.l.b16 %v3521
    %v6274 = vunpack.c.h.b16 %v3521
    %v6275 = vunpack.c.l.b16 %v3522
    %v6276 = vunpack.c.h.b16 %v3522
    %v6277 = vunpack.c.l.b16 %v3523
    %v6278 = vunpack.c.h.b16 %v3523
    %v6279 = vunpack.c.l.b16 %v3524
    %v6280 = vunpack.c.h.b16 %v3524
    %v6281 = vunpack.c.l.b16 %v3525
    %v6282 = vunpack.c.h.b16 %v3525
    %v6283 = vunpack.c.l.b16 %v3526
    %v6284 = vunpack.c.h.b16 %v3526
    %v6285 = vunpack.c.l.b16 %v3527
    %v6286 = vunpack.c.h.b16 %v3527
    %v6287 = vunpack.c.l.b16 %v3528
    %v6288 = vunpack.c.h.b16 %v3528
    %v6289 = vunpack.c.l.b16 %v3529
    %v6290 = vunpack.c.h.b16 %v3529
    %v6291 = vunpack.c.l.b16 %v3530
    %v6292 = vunpack.c.h.b16 %v3530
    %v6293 = vunpack.c.l.b16 %v3531
    %v6294 = vunpack.c.h.b16 %v3531
    %v6295 = vunpack.c.l.b16 %v3532
    %v6296 = vunpack.c.h.b16 %v3532
    %v6297 = vunpack.c.l.b16 %v3533
    %v6298 = vunpack.c.h.b16 %v3533
    %v6299 = vunpack.c.l.b16 %v3534
    %v6300 = vunpack.c.h.b16 %v3534
    %v6301 = vunpack.c.l.b16 %v3535
    %v6302 = vunpack.c.h.b16 %v3535
    %v6303 = vunpack.c.l.b16 %v3536
    %v6304 = vunpack.c.h.b16 %v3536
    %v6305 = vunpack.c.l.b16 %v3537
    %v6306 = vunpack.c.h.b16 %v3537
    %v6307 = vunpack.c.l.b16 %v3538
    %v6308 = vunpack.c.h.b16 %v3538
    %v6309 = vunpack.c.l.b16 %v3539
    %v6310 = vunpack.c.h.b16 %v3539
    %v6311 = vunpack.c.l.b16 %v3540
    %v6312 = vunpack.c.h.b16 %v3540
    %v6313 = vunpack.c.l.b16 %v3541
    %v6314 = vunpack.c.h.b16 %v3541
    %v6315 = vunpack.c.l.b16 %v3542
    %v6316 = vunpack.c.h.b16 %v3542
    %v6317 = vunpack.c.l.b16 %v3543
    %v6318 = vunpack.c.h.b16 %v3543
    %v6319 = vunpack.c.l.b16 %v3544
    %v6320 = vunpack.c.h.b16 %v3544
    %v6321 = vunpack.c.l.b16 %v3545
    %v6322 = vunpack.c.h.b16 %v3545
    %v6323 = vunpack.c.l.b16 %v3546
    %v6324 = vunpack.c.h.b16 %v3546
    %v6325 = vunpack.c.l.b16 %v3547
    %v6326 = vunpack.c.h.b16 %v3547
    %v6327 = vunpack.c.l.b16 %v3548
    %v6328 = vunpack.c.h.b16 %v3548
    %v6329 = vunpack.c.l.b16 %v3549
    %v6330 = vunpack.c.h.b16 %v3549
    %v6331 = vunpack.c.l.b16 %v3550
    %v6332 = vunpack.c.h.b16 %v3550
    %v6333 = vunpack.c.l.b16 %v3551
    %v6334 = vunpack.c.h.b16 %v3551
    %v6335 = vunpack.c.l.b16 %v3552
    %v6336 = vunpack.c.h.b16 %v3552
    %v6337 = vunpack.c.l.b16 %v3553
    %v6338 = vunpack.c.h.b16 %v3553
    %v6339 = vunpack.c.l.b16 %v3554
    %v6340 = vunpack.c.h.b16 %v3554
    %v6341 = vunpack.c.l.b16 %v3555
    %v6342 = vunpack.c.h.b16 %v3555
    %v6343 = vunpack.c.l.b16 %v3556
    %v6344 = vunpack.c.h.b16 %v3556
    %v6345 = vunpack.c.l.b16 %v3557
    %v6346 = vunpack.c.h.b16 %v3557
    %v6347 = vunpack.c.l.b16 %v3558
    %v6348 = vunpack.c.h.b16 %v3558
    %v6349 = vunpack.c.l.b16 %v3559
    %v6350 = vunpack.c.h.b16 %v3559
    %v6351 = vunpack.c.l.b16 %v3560
    %v6352 = vunpack.c.h.b16 %v3560
    %v6353 = vunpack.c.l.b16 %v3561
    %v6354 = vunpack.c.h.b16 %v3561
    %v6355 = vunpack.c.l.b16 %v3562
    %v6356 = vunpack.c.h.b16 %v3562
    %v6357 = vunpack.c.l.b16 %v3563
    %v6358 = vunpack.c.h.b16 %v3563
    %v6359 = vunpack.c.l.b16 %v3564
    %v6360 = vunpack.c.h.b16 %v3564
    %v6361 = vunpack.c.l.b16 %v3565
    %v6362 = vunpack.c.h.b16 %v3565
    %v6363 = vunpack.c.l.b16 %v3566
    %v6364 = vunpack.c.h.b16 %v3566
    %v6365 = vunpack.c.l.b16 %v3567
    %v6366 = vunpack.c.h.b16 %v3567
    %v6367 = vunpack.c.l.b16 %v3568
    %v6368 = vunpack.c.h.b16 %v3568
    %v6369 = vunpack.c.l.b16 %v3569
    %v6370 = vunpack.c.h.b16 %v3569
    %v6371 = vunpack.c.l.b16 %v3570
    %v6372 = vunpack.c.h.b16 %v3570
    %v6373 = vunpack.c.l.b16 %v3571
    %v6374 = vunpack.c.h.b16 %v3571
    %v6375 = vunpack.c.l.b16 %v3572
    %v6376 = vunpack.c.h.b16 %v3572
    %v6377 = vunpack.c.l.b16 %v3573
    %v6378 = vunpack.c.h.b16 %v3573
    %v6379 = vunpack.c.l.b16 %v3574
    %v6380 = vunpack.c.h.b16 %v3574
    %v6381 = vunpack.c.l.b16 %v3575
    %v6382 = vunpack.c.h.b16 %v3575
    %v6383 = vunpack.c.l.b16 %v3576
    %v6384 = vunpack.c.h.b16 %v3576
    %v6385 = vunpack.c.l.b16 %v3577
    %v6386 = vunpack.c.h.b16 %v3577
    %v6387 = vunpack.c.l.b16 %v3578
    %v6388 = vunpack.c.h.b16 %v3578
    %v6389 = vunpack.c.l.b16 %v3579
    %v6390 = vunpack.c.h.b16 %v3579
    %v6391 = vunpack.c.l.b16 %v3580
    %v6392 = vunpack.c.h.b16 %v3580
    %v6393 = vunpack.c.l.b16 %v3581
    %v6394 = vunpack.c.h.b16 %v3581
    %v6395 = vunpack.c.l.b16 %v3582
    %v6396 = vunpack.c.h.b16 %v3582
    %v6397 = vunpack.c.l.b16 %v3583
    %v6398 = vunpack.c.h.b16 %v3583
    %v6399 = vunpack.c.l.b16 %v3584
    %v6400 = vunpack.c.h.b16 %v3584
    %v6401 = vunpack.c.l.b16 %v3585
    %v6402 = vunpack.c.h.b16 %v3585
    %v6403 = vunpack.c.l.b16 %v3586
    %v6404 = vunpack.c.h.b16 %v3586
    %v6405 = vunpack.c.l.b16 %v3587
    %v6406 = vunpack.c.h.b16 %v3587
    %v6407 = vunpack.c.l.b16 %v3588
    %v6408 = vunpack.c.h.b16 %v3588
    %v6409 = vunpack.c.l.b16 %v3589
    %v6410 = vunpack.c.h.b16 %v3589
    %v6411 = vunpack.c.l.b16 %v3590
    %v6412 = vunpack.c.h.b16 %v3590
    %v6413 = vunpack.c.l.b16 %v3591
    %v6414 = vunpack.c.h.b16 %v3591
    %v6415 = vunpack.c.l.b16 %v3592
    %v6416 = vunpack.c.h.b16 %v3592
    %v6417 = vunpack.c.l.b16 %v3593
    %v6418 = vunpack.c.h.b16 %v3593
    %v6419 = vunpack.c.l.b16 %v3594
    %v6420 = vunpack.c.h.b16 %v3594
    %v6421 = vunpack.c.l.b16 %v3595
    %v6422 = vunpack.c.h.b16 %v3595
    %v6423 = vunpack.c.l.b16 %v3596
    %v6424 = vunpack.c.h.b16 %v3596
    %v6425 = vunpack.c.l.b16 %v3597
    %v6426 = vunpack.c.h.b16 %v3597
    %v6427 = vunpack.c.l.b16 %v3598
    %v6428 = vunpack.c.h.b16 %v3598
    %v6429 = vunpack.c.l.b16 %v3599
    %v6430 = vunpack.c.h.b16 %v3599
    %v6431 = vunpack.c.l.b16 %v3600
    %v6432 = vunpack.c.h.b16 %v3600
    %v6433 = vunpack.c.l.b16 %v3601
    %v6434 = vunpack.c.h.b16 %v3601
    %v6435 = vunpack.c.l.b16 %v3602
    %v6436 = vunpack.c.h.b16 %v3602
    %v6437 = vunpack.c.l.b16 %v3603
    %v6438 = vunpack.c.h.b16 %v3603
    %v6439 = vunpack.c.l.b16 %v3604
    %v6440 = vunpack.c.h.b16 %v3604
    %v6441 = vunpack.c.l.b16 %v3605
    %v6442 = vunpack.c.h.b16 %v3605
    %v6443 = vunpack.c.l.b16 %v3606
    %v6444 = vunpack.c.h.b16 %v3606
    %v6445 = vunpack.c.l.b16 %v3607
    %v6446 = vunpack.c.h.b16 %v3607
    %v6447 = vunpack.c.l.b16 %v3608
    %v6448 = vunpack.c.h.b16 %v3608
    %v6449 = vunpack.c.l.b16 %v3609
    %v6450 = vunpack.c.h.b16 %v3609
    %v6451 = vunpack.c.l.b16 %v3610
    %v6452 = vunpack.c.h.b16 %v3610
    %v6453 = vunpack.c.l.b16 %v3611
    %v6454 = vunpack.c.h.b16 %v3611
    %v6455 = vunpack.c.l.b16 %v3612
    %v6456 = vunpack.c.h.b16 %v3612
    %v6457 = vunpack.c.l.b16 %v3613
    %v6458 = vunpack.c.h.b16 %v3613
    %v6459 = vunpack.c.l.b16 %v3614
    %v6460 = vunpack.c.h.b16 %v3614
    %v6461 = vunpack.c.l.b16 %v3615
    %v6462 = vunpack.c.h.b16 %v3615
    %v6463 = vunpack.c.l.b16 %v3616
    %v6464 = vunpack.c.h.b16 %v3616
    %v6465 = vunpack.c.l.b16 %v3617
    %v6466 = vunpack.c.h.b16 %v3617
    %v6467 = vunpack.c.l.b16 %v3618
    %v6468 = vunpack.c.h.b16 %v3618
    %v6469 = vunpack.c.l.b16 %v3619
    %v6470 = vunpack.c.h.b16 %v3619
    %v6471 = vunpack.c.l.b16 %v3620
    %v6472 = vunpack.c.h.b16 %v3620
    %v6473 = vunpack.c.l.b16 %v3621
    %v6474 = vunpack.c.h.b16 %v3621
    %v6475 = vunpack.c.l.b16 %v3622
    %v6476 = vunpack.c.h.b16 %v3622
    %v6477 = vunpack.c.l.b16 %v3623
    %v6478 = vunpack.c.h.b16 %v3623
    %v6479 = vunpack.c.l.b16 %v3624
    %v6480 = vunpack.c.h.b16 %v3624
    %v6481 = vunpack.c.l.b16 %v3625
    %v6482 = vunpack.c.h.b16 %v3625
    %v6483 = vunpack.c.l.b16 %v3626
    %v6484 = vunpack.c.h.b16 %v3626
    %v6485 = vunpack.c.l.b16 %v3627
    %v6486 = vunpack.c.h.b16 %v3627
    %v6487 = vunpack.c.l.b16 %v3628
    %v6488 = vunpack.c.h.b16 %v3628
    %v6489 = vunpack.c.l.b16 %v3629
    %v6490 = vunpack.c.h.b16 %v3629
    %v6491 = vunpack.c.l.b16 %v3630
    %v6492 = vunpack.c.h.b16 %v3630
    %v6493 = vunpack.c.l.b16 %v3631
    %v6494 = vunpack.c.h.b16 %v3631
    %v6495 = vunpack.c.l.b16 %v3632
    %v6496 = vunpack.c.h.b16 %v3632
    %v6497 = vunpack.c.l.b16 %v3633
    %v6498 = vunpack.c.h.b16 %v3633
    %v6499 = vunpack.c.l.b16 %v3634
    %v6500 = vunpack.c.h.b16 %v3634
    %v6501 = vunpack.c.l.b16 %v3635
    %v6502 = vunpack.c.h.b16 %v3635
    %v6503 = vunpack.c.l.b16 %v3636
    %v6504 = vunpack.c.h.b16 %v3636
    %v6505 = vunpack.c.l.b16 %v3637
    %v6506 = vunpack.c.h.b16 %v3637
    %v6507 = vunpack.c.l.b16 %v3638
    %v6508 = vunpack.c.h.b16 %v3638
    %v6509 = vunpack.c.l.b16 %v3639
    %v6510 = vunpack.c.h.b16 %v3639
    %v6511 = vunpack.c.l.b16 %v3640
    %v6512 = vunpack.c.h.b16 %v3640
    %v6513 = vunpack.c.l.b16 %v3641
    %v6514 = vunpack.c.h.b16 %v3641
    %v6515 = vunpack.c.l.b16 %v3642
    %v6516 = vunpack.c.h.b16 %v3642
    %v6517 = vunpack.c.l.b16 %v3643
    %v6518 = vunpack.c.h.b16 %v3643
    %v6519 = vunpack.c.l.b16 %v3644
    %v6520 = vunpack.c.h.b16 %v3644
    %v6521 = vunpack.c.l.b16 %v3645
    %v6522 = vunpack.c.h.b16 %v3645
    %v6523 = vunpack.c.l.b16 %v3646
    %v6524 = vunpack.c.h.b16 %v3646
    %v6525 = vunpack.c.l.b16 %v3647
    %v6526 = vunpack.c.h.b16 %v3647
    %v6527 = vunpack.c.l.b16 %v3648
    %v6528 = vunpack.c.h.b16 %v3648
    %v6529 = vunpack.c.l.b16 %v3649
    %v6530 = vunpack.c.h.b16 %v3649
    %v6531 = vunpack.c.l.b16 %v3650
    %v6532 = vunpack.c.h.b16 %v3650
    %v6533 = vunpack.c.l.b16 %v3651
    %v6534 = vunpack.c.h.b16 %v3651
    %v6535 = vunpack.c.l.b16 %v3652
    %v6536 = vunpack.c.h.b16 %v3652
    %v6537 = vunpack.c.l.b16 %v3653
    %v6538 = vunpack.c.h.b16 %v3653
    %v6539 = vunpack.c.l.b16 %v3654
    %v6540 = vunpack.c.h.b16 %v3654
    %v6541 = vunpack.c.l.b16 %v3655
    %v6542 = vunpack.c.h.b16 %v3655
    %v6543 = vunpack.c.l.b16 %v3656
    %v6544 = vunpack.c.h.b16 %v3656
    %v6545 = vunpack.c.l.b16 %v3657
    %v6546 = vunpack.c.h.b16 %v3657
    %v6547 = vunpack.c.l.b16 %v3658
    %v6548 = vunpack.c.h.b16 %v3658
    %v6549 = vunpack.c.l.b16 %v3659
    %v6550 = vunpack.c.h.b16 %v3659
    %v6551 = vunpack.c.l.b16 %v3660
    %v6552 = vunpack.c.h.b16 %v3660
    %v6553 = vunpack.c.l.b16 %v3661
    %v6554 = vunpack.c.h.b16 %v3661
    %v6555 = vunpack.c.l.b16 %v3662
    %v6556 = vunpack.c.h.b16 %v3662
    %v6557 = vunpack.c.l.b16 %v3663
    %v6558 = vunpack.c.h.b16 %v3663
    %v6559 = vunpack.c.l.b16 %v3664
    %v6560 = vunpack.c.h.b16 %v3664
    %v6561 = vunpack.c.l.b16 %v3665
    %v6562 = vunpack.c.h.b16 %v3665
    %v6563 = vunpack.c.l.b16 %v3666
    %v6564 = vunpack.c.h.b16 %v3666
    %v6565 = vunpack.c.l.b16 %v3667
    %v6566 = vunpack.c.h.b16 %v3667
    %v6567 = vunpack.c.l.b16 %v3668
    %v6568 = vunpack.c.h.b16 %v3668
    %v6569 = vunpack.c.l.b16 %v3669
    %v6570 = vunpack.c.h.b16 %v3669
    %v6571 = vunpack.c.l.b16 %v3670
    %v6572 = vunpack.c.h.b16 %v3670
    %v6573 = vunpack.c.l.b16 %v3671
    %v6574 = vunpack.c.h.b16 %v3671
    %v6575 = vunpack.c.l.b16 %v3672
    %v6576 = vunpack.c.h.b16 %v3672
    %v6577 = vunpack.c.l.b16 %v3673
    %v6578 = vunpack.c.h.b16 %v3673
    %v6579 = vunpack.c.l.b16 %v3674
    %v6580 = vunpack.c.h.b16 %v3674
    %v6581 = vunpack.c.l.b16 %v3675
    %v6582 = vunpack.c.h.b16 %v3675
    %v6583 = vunpack.c.l.b16 %v3676
    %v6584 = vunpack.c.h.b16 %v3676
    %v6585 = vunpack.c.l.b16 %v3677
    %v6586 = vunpack.c.h.b16 %v3677
    %v6587 = vunpack.c.l.b16 %v3678
    %v6588 = vunpack.c.h.b16 %v3678
    %v6589 = vunpack.c.l.b16 %v3679
    %v6590 = vunpack.c.h.b16 %v3679
    %v6591 = vunpack.c.l.b16 %v3680
    %v6592 = vunpack.c.h.b16 %v3680
    %v6593 = vunpack.c.l.b16 %v3681
    %v6594 = vunpack.c.h.b16 %v3681
    %v6595 = vunpack.c.l.b16 %v3682
    %v6596 = vunpack.c.h.b16 %v3682
    %v6597 = vunpack.c.l.b16 %v3683
    %v6598 = vunpack.c.h.b16 %v3683
    %v6599 = vunpack.c.l.b16 %v3684
    %v6600 = vunpack.c.h.b16 %v3684
    %v6601 = vunpack.c.l.b16 %v3685
    %v6602 = vunpack.c.h.b16 %v3685
    %v6603 = vunpack.c.l.b16 %v3686
    %v6604 = vunpack.c.h.b16 %v3686
    %v6605 = vunpack.c.l.b16 %v3687
    %v6606 = vunpack.c.h.b16 %v3687
    %v6607 = vunpack.c.l.b16 %v3688
    %v6608 = vunpack.c.h.b16 %v3688
    %v6609 = vunpack.c.l.b16 %v3689
    %v6610 = vunpack.c.h.b16 %v3689
    %v6611 = vunpack.c.l.b16 %v3690
    %v6612 = vunpack.c.h.b16 %v3690
    %v6613 = vunpack.c.l.b16 %v3691
    %v6614 = vunpack.c.h.b16 %v3691
    %v6615 = vunpack.c.l.b16 %v3692
    %v6616 = vunpack.c.h.b16 %v3692
    %v6617 = vunpack.c.l.b16 %v3693
    %v6618 = vunpack.c.h.b16 %v3693
    %v6619 = vunpack.c.l.b16 %v3694
    %v6620 = vunpack.c.h.b16 %v3694
    %v6621 = vunpack.c.l.b16 %v3695
    %v6622 = vunpack.c.h.b16 %v3695
    %v6623 = vunpack.c.l.b16 %v3696
    %v6624 = vunpack.c.h.b16 %v3696
    %v6625 = vunpack.c.l.b16 %v3697
    %v6626 = vunpack.c.h.b16 %v3697
    %v6627 = vunpack.c.l.b16 %v3698
    %v6628 = vunpack.c.h.b16 %v3698
    %v6629 = vunpack.c.l.b16 %v3699
    %v6630 = vunpack.c.h.b16 %v3699
    %v6631 = vunpack.c.l.b16 %v3700
    %v6632 = vunpack.c.h.b16 %v3700
    %v6633 = vunpack.c.l.b16 %v3701
    %v6634 = vunpack.c.h.b16 %v3701
    %v6635 = vunpack.c.l.b16 %v3702
    %v6636 = vunpack.c.h.b16 %v3702
    %v6637 = vunpack.c.l.b16 %v3703
    %v6638 = vunpack.c.h.b16 %v3703
    %v6639 = vunpack.c.l.b16 %v3704
    %v6640 = vunpack.c.h.b16 %v3704
    %v6641 = vunpack.c.l.b16 %v3705
    %v6642 = vunpack.c.h.b16 %v3705
    %v6643 = vunpack.c.l.b16 %v3706
    %v6644 = vunpack.c.h.b16 %v3706
    %v6645 = vunpack.c.l.b16 %v3707
    %v6646 = vunpack.c.h.b16 %v3707
    %v6647 = vunpack.c.l.b16 %v3708
    %v6648 = vunpack.c.h.b16 %v3708
    %v6649 = vunpack.c.l.b16 %v3709
    %v6650 = vunpack.c.h.b16 %v3709
    %v6651 = vunpack.c.l.b16 %v3710
    %v6652 = vunpack.c.h.b16 %v3710
    %v6653 = vunpack.c.l.b16 %v3711
    %v6654 = vunpack.c.h.b16 %v3711
    %v6655 = vunpack.c.l.b16 %v3712
    %v6656 = vunpack.c.h.b16 %v3712
    %v6657 = vunpack.c.l.b16 %v3713
    %v6658 = vunpack.c.h.b16 %v3713
    %v6659 = vunpack.c.l.b16 %v3714
    %v6660 = vunpack.c.h.b16 %v3714
    %v6661 = vunpack.c.l.b16 %v3715
    %v6662 = vunpack.c.h.b16 %v3715
    %v6663 = vunpack.c.l.b16 %v3716
    %v6664 = vunpack.c.h.b16 %v3716
    %v6665 = vunpack.c.l.b16 %v3717
    %v6666 = vunpack.c.h.b16 %v3717
    %v6667 = vunpack.c.l.b16 %v3718
    %v6668 = vunpack.c.h.b16 %v3718
    %v6669 = vunpack.c.l.b16 %v3719
    %v6670 = vunpack.c.h.b16 %v3719
    %v6671 = vunpack.c.l.b16 %v3720
    %v6672 = vunpack.c.h.b16 %v3720
    %v6673 = vunpack.c.l.b16 %v3721
    %v6674 = vunpack.c.h.b16 %v3721
    %v6675 = vunpack.c.l.b16 %v3722
    %v6676 = vunpack.c.h.b16 %v3722
    %v6677 = vunpack.c.l.b16 %v3723
    %v6678 = vunpack.c.h.b16 %v3723
    %v6679 = vunpack.c.l.b16 %v3724
    %v6680 = vunpack.c.h.b16 %v3724
    %v6681 = vunpack.c.l.b16 %v3725
    %v6682 = vunpack.c.h.b16 %v3725
    %v6683 = vunpack.c.l.b16 %v3726
    %v6684 = vunpack.c.h.b16 %v3726
    %v6685 = vunpack.c.l.b16 %v3727
    %v6686 = vunpack.c.h.b16 %v3727
    %v6687 = vunpack.c.l.b16 %v3728
    %v6688 = vunpack.c.h.b16 %v3728
    %v6689 = vunpack.c.l.b16 %v3729
    %v6690 = vunpack.c.h.b16 %v3729
    %v6691 = vunpack.c.l.b16 %v3730
    %v6692 = vunpack.c.h.b16 %v3730
    %v6693 = vunpack.c.l.b16 %v3731
    %v6694 = vunpack.c.h.b16 %v3731
    %v6695 = vunpack.c.l.b16 %v3732
    %v6696 = vunpack.c.h.b16 %v3732
    %v6697 = vunpack.c.l.b16 %v3733
    %v6698 = vunpack.c.h.b16 %v3733
    %v6699 = vunpack.c.l.b16 %v3734
    %v6700 = vunpack.c.h.b16 %v3734
    %v6701 = vunpack.c.l.b16 %v3735
    %v6702 = vunpack.c.h.b16 %v3735
    %v6703 = vunpack.c.l.b16 %v3736
    %v6704 = vunpack.c.h.b16 %v3736
    %v6705 = vunpack.c.l.b16 %v3737
    %v6706 = vunpack.c.h.b16 %v3737
    %v6707 = vunpack.c.l.b16 %v3738
    %v6708 = vunpack.c.h.b16 %v3738
    %v6709 = vunpack.c.l.b16 %v3739
    %v6710 = vunpack.c.h.b16 %v3739
    %v6711 = vunpack.c.l.b16 %v3740
    %v6712 = vunpack.c.h.b16 %v3740
    %v6713 = vunpack.c.l.b16 %v3741
    %v6714 = vunpack.c.h.b16 %v3741
    %v6715 = vunpack.c.l.b16 %v3742
    %v6716 = vunpack.c.h.b16 %v3742
    %v6717 = vunpack.c.l.b16 %v3743
    %v6718 = vunpack.c.h.b16 %v3743
    %v6719 = vunpack.c.l.b16 %v3744
    %v6720 = vunpack.c.h.b16 %v3744
    %v6721 = vunpack.c.l.b16 %v3745
    %v6722 = vunpack.c.h.b16 %v3745
    %v6723 = vunpack.c.l.b16 %v3746
    %v6724 = vunpack.c.h.b16 %v3746
    %v6725 = vunpack.c.l.b16 %v3747
    %v6726 = vunpack.c.h.b16 %v3747
    %v6727 = vunpack.c.l.b16 %v3748
    %v6728 = vunpack.c.h.b16 %v3748
    %v6729 = vunpack.c.l.b16 %v3749
    %v6730 = vunpack.c.h.b16 %v3749
    %v6731 = vunpack.c.l.b16 %v3750
    %v6732 = vunpack.c.h.b16 %v3750
    %v6733 = vunpack.c.l.b16 %v3751
    %v6734 = vunpack.c.h.b16 %v3751
    %v6735 = vunpack.c.l.b16 %v3752
    %v6736 = vunpack.c.h.b16 %v3752
    %v6737 = vunpack.c.l.b16 %v3753
    %v6738 = vunpack.c.h.b16 %v3753
    %v6739 = vunpack.c.l.b16 %v3754
    %v6740 = vunpack.c.h.b16 %v3754
    %v6741 = vunpack.c.l.b16 %v3755
    %v6742 = vunpack.c.h.b16 %v3755
    %v6743 = vunpack.c.l.b16 %v3756
    %v6744 = vunpack.c.h.b16 %v3756
    %v6745 = vunpack.c.l.b16 %v3757
    %v6746 = vunpack.c.h.b16 %v3757
    %v6747 = vunpack.c.l.b16 %v3758
    %v6748 = vunpack.c.h.b16 %v3758
    %v6749 = vunpack.c.l.b16 %v3759
    %v6750 = vunpack.c.h.b16 %v3759
    %v6751 = vunpack.c.l.b16 %v3760
    %v6752 = vunpack.c.h.b16 %v3760
    %v6753 = vunpack.c.l.b16 %v3761
    %v6754 = vunpack.c.h.b16 %v3761
    %v6755 = vunpack.c.l.b16 %v3762
    %v6756 = vunpack.c.h.b16 %v3762
    %v6757 = vunpack.c.l.b16 %v3763
    %v6758 = vunpack.c.h.b16 %v3763
    %v6759 = vunpack.c.l.b16 %v3764
    %v6760 = vunpack.c.h.b16 %v3764
    %v6761 = vunpack.c.l.b16 %v3765
    %v6762 = vunpack.c.h.b16 %v3765
    %v6763 = vunpack.c.l.b16 %v3766
    %v6764 = vunpack.c.h.b16 %v3766
    %v6765 = vunpack.c.l.b16 %v3767
    %v6766 = vunpack.c.h.b16 %v3767
    %v6767 = vunpack.c.l.b16 %v3768
    %v6768 = vunpack.c.h.b16 %v3768
    %v6769 = vunpack.c.l.b16 %v3769
    %v6770 = vunpack.c.h.b16 %v3769
    %v6771 = vunpack.c.l.b16 %v3770
    %v6772 = vunpack.c.h.b16 %v3770
    %v6773 = vunpack.c.l.b16 %v3771
    %v6774 = vunpack.c.h.b16 %v3771
    %v6775 = vunpack.c.l.b16 %v3772
    %v6776 = vunpack.c.h.b16 %v3772
    %v6777 = vunpack.c.l.b16 %v3773
    %v6778 = vunpack.c.h.b16 %v3773
    %v6779 = vunpack.c.l.b16 %v3774
    %v6780 = vunpack.c.h.b16 %v3774
    %v6781 = vunpack.c.l.b16 %v3775
    %v6782 = vunpack.c.h.b16 %v3775
    %v6783 = vunpack.c.l.b16 %v3776
    %v6784 = vunpack.c.h.b16 %v3776
    %v6785 = vunpack.c.l.b16 %v3777
    %v6786 = vunpack.c.h.b16 %v3777
    %v6787 = vunpack.c.l.b16 %v3778
    %v6788 = vunpack.c.h.b16 %v3778
    %v6789 = vunpack.c.l.b16 %v3779
    %v6790 = vunpack.c.h.b16 %v3779
    %v6791 = vunpack.c.l.b16 %v3780
    %v6792 = vunpack.c.h.b16 %v3780
    %v6793 = vunpack.c.l.b16 %v3781
    %v6794 = vunpack.c.h.b16 %v3781
    %v6795 = vunpack.c.l.b16 %v3782
    %v6796 = vunpack.c.h.b16 %v3782
    %v6797 = vunpack.c.l.b16 %v3783
    %v6798 = vunpack.c.h.b16 %v3783
    %v6799 = vunpack.c.l.b16 %v3784
    %v6800 = vunpack.c.h.b16 %v3784
    %v6801 = vunpack.c.l.b16 %v3785
    %v6802 = vunpack.c.h.b16 %v3785
    %v6803 = vunpack.c.l.b16 %v3786
    %v6804 = vunpack.c.h.b16 %v3786
    %v6805 = vunpack.c.l.b16 %v3787
    %v6806 = vunpack.c.h.b16 %v3787
    %v6807 = vunpack.c.l.b16 %v3788
    %v6808 = vunpack.c.h.b16 %v3788
    %v6809 = vunpack.c.l.b16 %v3789
    %v6810 = vunpack.c.h.b16 %v3789
    %v6811 = vunpack.c.l.b16 %v3790
    %v6812 = vunpack.c.h.b16 %v3790
    %v6813 = vunpack.c.l.b16 %v3791
    %v6814 = vunpack.c.h.b16 %v3791
    %v6815 = vunpack.c.l.b16 %v3792
    %v6816 = vunpack.c.h.b16 %v3792
    %v6817 = vunpack.c.l.b16 %v3793
    %v6818 = vunpack.c.h.b16 %v3793
    %v6819 = vunpack.c.l.b16 %v3794
    %v6820 = vunpack.c.h.b16 %v3794
    %v6821 = vunpack.c.l.b16 %v3795
    %v6822 = vunpack.c.h.b16 %v3795
    %v6823 = vunpack.c.l.b16 %v3796
    %v6824 = vunpack.c.h.b16 %v3796
    %v6825 = vunpack.c.l.b16 %v3797
    %v6826 = vunpack.c.h.b16 %v3797
    %v6827 = vunpack.c.l.b16 %v3798
    %v6828 = vunpack.c.h.b16 %v3798
    %v6829 = vunpack.c.l.b16 %v3799
    %v6830 = vunpack.c.h.b16 %v3799
    %v6831 = vunpack.c.l.b16 %v3800
    %v6832 = vunpack.c.h.b16 %v3800
    %v6833 = vunpack.c.l.b16 %v3801
    %v6834 = vunpack.c.h.b16 %v3801
    %v6835 = vunpack.c.l.b16 %v3802
    %v6836 = vunpack.c.h.b16 %v3802
    %v6837 = vunpack.c.l.b16 %v3803
    %v6838 = vunpack.c.h.b16 %v3803
    %v6839 = vunpack.c.l.b16 %v3804
    %v6840 = vunpack.c.h.b16 %v3804
    %v6841 = vunpack.c.l.b16 %v3805
    %v6842 = vunpack.c.h.b16 %v3805
    %v6843 = vunpack.c.l.b16 %v3806
    %v6844 = vunpack.c.h.b16 %v3806
    %v6845 = vunpack.c.l.b16 %v3807
    %v6846 = vunpack.c.h.b16 %v3807
    %v6847 = vunpack.c.l.b16 %v3808
    %v6848 = vunpack.c.h.b16 %v3808
    %v6849 = vunpack.c.l.b16 %v3809
    %v6850 = vunpack.c.h.b16 %v3809
    %v6851 = vunpack.c.l.b16 %v3810
    %v6852 = vunpack.c.h.b16 %v3810
    %v6853 = vunpack.c.l.b16 %v3811
    %v6854 = vunpack.c.h.b16 %v3811
    %v6855 = vunpack.c.l.b16 %v3812
    %v6856 = vunpack.c.h.b16 %v3812
    %v6857 = vunpack.c.l.b16 %v3813
    %v6858 = vunpack.c.h.b16 %v3813
    %v6859 = vunpack.c.l.b16 %v3814
    %v6860 = vunpack.c.h.b16 %v3814
    %v6861 = vunpack.c.l.b16 %v3815
    %v6862 = vunpack.c.h.b16 %v3815
    %v6863 = vunpack.c.l.b16 %v3816
    %v6864 = vunpack.c.h.b16 %v3816
    %v6865 = vunpack.c.l.b16 %v3817
    %v6866 = vunpack.c.h.b16 %v3817
    %v6867 = vunpack.c.l.b16 %v3818
    %v6868 = vunpack.c.h.b16 %v3818
    %v6869 = vunpack.c.l.b16 %v3819
    %v6870 = vunpack.c.h.b16 %v3819
    %v6871 = vunpack.c.l.b16 %v3820
    %v6872 = vunpack.c.h.b16 %v3820
    %v6873 = vunpack.c.l.b16 %v3821
    %v6874 = vunpack.c.h.b16 %v3821
    %v6875 = vunpack.c.l.b16 %v3822
    %v6876 = vunpack.c.h.b16 %v3822
    %v6877 = vunpack.c.l.b16 %v3823
    %v6878 = vunpack.c.h.b16 %v3823
    %v6879 = vunpack.c.l.b16 %v3824
    %v6880 = vunpack.c.h.b16 %v3824
    %v6881 = vunpack.c.l.b16 %v3825
    %v6882 = vunpack.c.h.b16 %v3825
    %v6883 = vunpack.c.l.b16 %v3826
    %v6884 = vunpack.c.h.b16 %v3826
    %v6885 = vunpack.c.l.b16 %v3827
    %v6886 = vunpack.c.h.b16 %v3827
    %v6887 = vunpack.c.l.b16 %v3828
    %v6888 = vunpack.c.h.b16 %v3828
    %v6889 = vunpack.c.l.b16 %v3829
    %v6890 = vunpack.c.h.b16 %v3829
    %v6891 = vunpack.c.l.b16 %v3830
    %v6892 = vunpack.c.h.b16 %v3830
    %v6893 = vunpack.c.l.b16 %v3831
    %v6894 = vunpack.c.h.b16 %v3831
    %v6895 = vunpack.c.l.b16 %v3832
    %v6896 = vunpack.c.h.b16 %v3832
    %v6897 = vunpack.c.l.b16 %v3833
    %v6898 = vunpack.c.h.b16 %v3833
    %v6899 = vunpack.c.l.b16 %v3834
    %v6900 = vunpack.c.h.b16 %v3834
    %v6901 = vunpack.c.l.b16 %v3835
    %v6902 = vunpack.c.h.b16 %v3835
    %v6903 = vunpack.c.l.b16 %v3836
    %v6904 = vunpack.c.h.b16 %v3836
    %v6905 = vunpack.c.l.b16 %v3837
    %v6906 = vunpack.c.h.b16 %v3837
    %v6907 = vunpack.c.l.b16 %v3838
    %v6908 = vunpack.c.h.b16 %v3838
    %v6909 = vunpack.c.l.b16 %v3839
    %v6910 = vunpack.c.h.b16 %v3839
    %v6911 = vunpack.c.l.b16 %v3840
    %v6912 = vunpack.c.h.b16 %v3840
    %v6913 = vunpack.c.l.b16 %v3841
    %v6914 = vunpack.c.h.b16 %v3841
    %v6915 = vunpack.c.l.b16 %v3842
    %v6916 = vunpack.c.h.b16 %v3842
    %v6917 = vunpack.c.l.b16 %v3843
    %v6918 = vunpack.c.h.b16 %v3843
    %v6919 = vunpack.c.l.b16 %v3844
    %v6920 = vunpack.c.h.b16 %v3844
    %v6921 = vunpack.c.l.b16 %v3845
    %v6922 = vunpack.c.h.b16 %v3845
    %v6923 = vunpack.c.l.b16 %v3846
    %v6924 = vunpack.c.h.b16 %v3846
    %v6925 = vunpack.c.l.b16 %v3847
    %v6926 = vunpack.c.h.b16 %v3847
    %v6927 = vunpack.c.l.b16 %v3848
    %v6928 = vunpack.c.h.b16 %v3848
    %v6929 = vunpack.c.l.b16 %v3849
    %v6930 = vunpack.c.h.b16 %v3849
    %v6931 = vunpack.c.l.b16 %v3850
    %v6932 = vunpack.c.h.b16 %v3850
    %v6933 = vunpack.c.l.b16 %v3851
    %v6934 = vunpack.c.h.b16 %v3851
    %v6935 = vunpack.c.l.b16 %v3852
    %v6936 = vunpack.c.h.b16 %v3852
    %v6937 = vunpack.c.l.b16 %v3853
    %v6938 = vunpack.c.h.b16 %v3853
    %v6939 = vunpack.c.l.b16 %v3854
    %v6940 = vunpack.c.h.b16 %v3854
    %v6941 = vunpack.c.l.b16 %v3855
    %v6942 = vunpack.c.h.b16 %v3855
    %v6943 = vunpack.c.l.b16 %v3856
    %v6944 = vunpack.c.h.b16 %v3856
    %v6945 = vunpack.c.l.b16 %v3857
    %v6946 = vunpack.c.h.b16 %v3857
    %v6947 = vunpack.c.l.b16 %v3858
    %v6948 = vunpack.c.h.b16 %v3858
    %v6949 = vunpack.c.l.b16 %v3859
    %v6950 = vunpack.c.h.b16 %v3859
    %v6951 = vunpack.c.l.b16 %v3860
    %v6952 = vunpack.c.h.b16 %v3860
    %v6953 = vunpack.c.l.b16 %v3861
    %v6954 = vunpack.c.h.b16 %v3861
    %v6955 = vunpack.c.l.b16 %v3862
    %v6956 = vunpack.c.h.b16 %v3862
    %v6957 = vunpack.c.l.b16 %v3863
    %v6958 = vunpack.c.h.b16 %v3863
    %v6959 = vunpack.c.l.b16 %v3864
    %v6960 = vunpack.c.h.b16 %v3864
    %v6961 = vunpack.c.l.b16 %v3865
    %v6962 = vunpack.c.h.b16 %v3865
    %v6963 = vunpack.c.l.b16 %v3866
    %v6964 = vunpack.c.h.b16 %v3866
    %v6965 = vunpack.c.l.b16 %v3867
    %v6966 = vunpack.c.h.b16 %v3867
    %v6967 = vunpack.c.l.b16 %v3868
    %v6968 = vunpack.c.h.b16 %v3868
    %v6969 = vunpack.c.l.b16 %v3869
    %v6970 = vunpack.c.h.b16 %v3869
    %v6971 = vunpack.c.l.b16 %v3870
    %v6972 = vunpack.c.h.b16 %v3870
    %v6973 = vunpack.c.l.b16 %v3871
    %v6974 = vunpack.c.h.b16 %v3871
    %v6975 = vunpack.c.l.b16 %v3872
    %v6976 = vunpack.c.h.b16 %v3872
    %v6977 = vunpack.c.l.b16 %v3873
    %v6978 = vunpack.c.h.b16 %v3873
    %v6979 = vunpack.c.l.b16 %v3874
    %v6980 = vunpack.c.h.b16 %v3874
    %v6981 = vunpack.c.l.b16 %v3875
    %v6982 = vunpack.c.h.b16 %v3875
    %v6983 = vunpack.c.l.b16 %v3876
    %v6984 = vunpack.c.h.b16 %v3876
    %v6985 = vpack.c.b16 %v4953, %v4937
    %v6986 = vpack.c.b16 %v4954, %v4938
    %v6987 = vpack.c.b16 %v4955, %v4939
    %v6988 = vpack.c.b16 %v4956, %v4940
    %v6989 = vpack.c.b16 %v4957, %v4941
    %v6990 = vpack.c.b16 %v4958, %v4942
    %v6991 = vpack.c.b16 %v4959, %v4943
    %v6992 = vpack.c.b16 %v4960, %v4944
    %v6993 = vpack.c.b16 %v4961, %v4945
    %v6994 = vpack.c.b16 %v4962, %v4946
    %v6995 = vpack.c.b16 %v4963, %v4947
    %v6996 = vpack.c.b16 %v4964, %v4948
    %v6997 = vpack.c.b16 %v4965, %v4949
    %v6998 = vpack.c.b16 %v4966, %v4950
    %v6999 = vpack.c.b16 %v4967, %v4951
    %v7000 = vpack.c.b16 %v4968, %v4952
    %v7001 = vpack.c.b16 %v4985, %v4969
    %v7002 = vpack.c.b16 %v4986, %v4970
    %v7003 = vpack.c.b16 %v4987, %v4971
    %v7004 = vpack.c.b16 %v4988, %v4972
    %v7005 = vpack.c.b16 %v4989, %v4973
    %v7006 = vpack.c.b16 %v4990, %v4974
    %v7007 = vpack.c.b16 %v4991, %v4975
    %v7008 = vpack.c.b16 %v4992, %v4976
    %v7009 = vpack.c.b16 %v4993, %v4977
    %v7010 = vpack.c.b16 %v4994, %v4978
    %v7011 = vpack.c.b16 %v4995, %v4979
    %v7012 = vpack.c.b16 %v4996, %v4980
    %v7013 = vpack.c.b16 %v4997, %v4981
    %v7014 = vpack.c.b16 %v4998, %v4982
    %v7015 = vpack.c.b16 %v4999, %v4983
    %v7016 = vpack.c.b16 %v5000, %v4984
    %v7017 = vpack.c.b16 %v5017, %v5001
    %v7018 = vpack.c.b16 %v5018, %v5002
    %v7019 = vpack.c.b16 %v5019, %v5003
    %v7020 = vpack.c.b16 %v5020, %v5004
    %v7021 = vpack.c.b16 %v5021, %v5005
    %v7022 = vpack.c.b16 %v5022, %v5006
    %v7023 = vpack.c.b16 %v5023, %v5007
    %v7024 = vpack.c.b16 %v5024, %v5008
    %v7025 = vpack.c.b16 %v5025, %v5009
    %v7026 = vpack.c.b16 %v5026, %v5010
    %v7027 = vpack.c.b16 %v5027, %v5011
    %v7028 = vpack.c.b16 %v5028, %v5012
    %v7029 = vpack.c.b16 %v5029, %v5013
    %v7030 = vpack.c.b16 %v5030, %v5014
    %v7031 = vpack.c.b16 %v5031, %v5015
    %v7032 = vpack.c.b16 %v5032, %v5016
    %v7033 = vpack.c.b16 %v5049, %v5033
    %v7034 = vpack.c.b16 %v5050, %v5034
    %v7035 = vpack.c.b16 %v5051, %v5035
    %v7036 = vpack.c.b16 %v5052, %v5036
    %v7037 = vpack.c.b16 %v5053, %v5037
    %v7038 = vpack.c.b16 %v5054, %v5038
    %v7039 = vpack.c.b16 %v5055, %v5039
    %v7040 = vpack.c.b16 %v5056, %v5040
    %v7041 = vpack.c.b16 %v5057, %v5041
    %v7042 = vpack.c.b16 %v5058, %v5042
    %v7043 = vpack.c.b16 %v5059, %v5043
    %v7044 = vpack.c.b16 %v5060, %v5044
    %v7045 = vpack.c.b16 %v5061, %v5045
    %v7046 = vpack.c.b16 %v5062, %v5046
    %v7047 = vpack.c.b16 %v5063, %v5047
    %v7048 = vpack.c.b16 %v5064, %v5048
    %v7049 = vpack.c.b16 %v5081, %v5065
    %v7050 = vpack.c.b16 %v5082, %v5066
    %v7051 = vpack.c.b16 %v5083, %v5067
    %v7052 = vpack.c.b16 %v5084, %v5068
    %v7053 = vpack.c.b16 %v5085, %v5069
    %v7054 = vpack.c.b16 %v5086, %v5070
    %v7055 = vpack.c.b16 %v5087, %v5071
    %v7056 = vpack.c.b16 %v5088, %v5072
    %v7057 = vpack.c.b16 %v5089, %v5073
    %v7058 = vpack.c.b16 %v5090, %v5074
    %v7059 = vpack.c.b16 %v5091, %v5075
    %v7060 = vpack.c.b16 %v5092, %v5076
    %v7061 = vpack.c.b16 %v5093, %v5077
    %v7062 = vpack.c.b16 %v5094, %v5078
    %v7063 = vpack.c.b16 %v5095, %v5079
    %v7064 = vpack.c.b16 %v5096, %v5080
    %v7065 = vpack.c.b16 %v5113, %v5097
    %v7066 = vpack.c.b16 %v5114, %v5098
    %v7067 = vpack.c.b16 %v5115, %v5099
    %v7068 = vpack.c.b16 %v5116, %v5100
    %v7069 = vpack.c.b16 %v5117, %v5101
    %v7070 = vpack.c.b16 %v5118, %v5102
    %v7071 = vpack.c.b16 %v5119, %v5103
    %v7072 = vpack.c.b16 %v5120, %v5104
    %v7073 = vpack.c.b16 %v5121, %v5105
    %v7074 = vpack.c.b16 %v5122, %v5106
    %v7075 = vpack.c.b16 %v5123, %v5107
    %v7076 = vpack.c.b16 %v5124, %v5108
    %v7077 = vpack.c.b16 %v5125, %v5109
    %v7078 = vpack.c.b16 %v5126, %v5110
    %v7079 = vpack.c.b16 %v5127, %v5111
    %v7080 = vpack.c.b16 %v5128, %v5112
    %v7081 = vpack.c.b16 %v5145, %v5129
    %v7082 = vpack.c.b16 %v5146, %v5130
    %v7083 = vpack.c.b16 %v5147, %v5131
    %v7084 = vpack.c.b16 %v5148, %v5132
    %v7085 = vpack.c.b16 %v5149, %v5133
    %v7086 = vpack.c.b16 %v5150, %v5134
    %v7087 = vpack.c.b16 %v5151, %v5135
    %v7088 = vpack.c.b16 %v5152, %v5136
    %v7089 = vpack.c.b16 %v5153, %v5137
    %v7090 = vpack.c.b16 %v5154, %v5138
    %v7091 = vpack.c.b16 %v5155, %v5139
    %v7092 = vpack.c.b16 %v5156, %v5140
    %v7093 = vpack.c.b16 %v5157, %v5141
    %v7094 = vpack.c.b16 %v5158, %v5142
    %v7095 = vpack.c.b16 %v5159, %v5143
    %v7096 = vpack.c.b16 %v5160, %v5144
    %v7097 = vpack.c.b16 %v5177, %v5161
    %v7098 = vpack.c.b16 %v5178, %v5162
    %v7099 = vpack.c.b16 %v5179, %v5163
    %v7100 = vpack.c.b16 %v5180, %v5164
    %v7101 = vpack.c.b16 %v5181, %v5165
    %v7102 = vpack.c.b16 %v5182, %v5166
    %v7103 = vpack.c.b16 %v5183, %v5167
    %v7104 = vpack.c.b16 %v5184, %v5168
    %v7105 = vpack.c.b16 %v5185, %v5169
    %v7106 = vpack.c.b16 %v5186, %v5170
    %v7107 = vpack.c.b16 %v5187, %v5171
    %v7108 = vpack.c.b16 %v5188, %v5172
    %v7109 = vpack.c.b16 %v5189, %v5173
    %v7110 = vpack.c.b16 %v5190, %v5174
    %v7111 = vpack.c.b16 %v5191, %v5175
    %v7112 = vpack.c.b16 %v5192, %v5176
    %v7113 = vpack.c.b16 %v5209, %v5193
    %v7114 = vpack.c.b16 %v5210, %v5194
    %v7115 = vpack.c.b16 %v5211, %v5195
    %v7116 = vpack.c.b16 %v5212, %v5196
    %v7117 = vpack.c.b16 %v5213, %v5197
    %v7118 = vpack.c.b16 %v5214, %v5198
    %v7119 = vpack.c.b16 %v5215, %v5199
    %v7120 = vpack.c.b16 %v5216, %v5200
    %v7121 = vpack.c.b16 %v5217, %v5201
    %v7122 = vpack.c.b16 %v5218, %v5202
    %v7123 = vpack.c.b16 %v5219, %v5203
    %v7124 = vpack.c.b16 %v5220, %v5204
    %v7125 = vpack.c.b16 %v5221, %v5205
    %v7126 = vpack.c.b16 %v5222, %v5206
    %v7127 = vpack.c.b16 %v5223, %v5207
    %v7128 = vpack.c.b16 %v5224, %v5208
    %v7129 = vpack.c.b16 %v5241, %v5225
    %v7130 = vpack.c.b16 %v5242, %v5226
    %v7131 = vpack.c.b16 %v5243, %v5227
    %v7132 = vpack.c.b16 %v5244, %v5228
    %v7133 = vpack.c.b16 %v5245, %v5229
    %v7134 = vpack.c.b16 %v5246, %v5230
    %v7135 = vpack.c.b16 %v5247, %v5231
    %v7136 = vpack.c.b16 %v5248, %v5232
    %v7137 = vpack.c.b16 %v5249, %v5233
    %v7138 = vpack.c.b16 %v5250, %v5234
    %v7139 = vpack.c.b16 %v5251, %v5235
    %v7140 = vpack.c.b16 %v5252, %v5236
    %v7141 = vpack.c.b16 %v5253, %v5237
    %v7142 = vpack.c.b16 %v5254, %v5238
    %v7143 = vpack.c.b16 %v5255, %v5239
    %v7144 = vpack.c.b16 %v5256, %v5240
    %v7145 = vpack.c.b16 %v5273, %v5257
    %v7146 = vpack.c.b16 %v5274, %v5258
    %v7147 = vpack.c.b16 %v5275, %v5259
    %v7148 = vpack.c.b16 %v5276, %v5260
    %v7149 = vpack.c.b16 %v5277, %v5261
    %v7150 = vpack.c.b16 %v5278, %v5262
    %v7151 = vpack.c.b16 %v5279, %v5263
    %v7152 = vpack.c.b16 %v5280, %v5264
    %v7153 = vpack.c.b16 %v5281, %v5265
    %v7154 = vpack.c.b16 %v5282, %v5266
    %v7155 = vpack.c.b16 %v5283, %v5267
    %v7156 = vpack.c.b16 %v5284, %v5268
    %v7157 = vpack.c.b16 %v5285, %v5269
    %v7158 = vpack.c.b16 %v5286, %v5270
    %v7159 = vpack.c.b16 %v5287, %v5271
    %v7160 = vpack.c.b16 %v5288, %v5272
    %v7161 = vpack.c.b16 %v5305, %v5289
    %v7162 = vpack.c.b16 %v5306, %v5290
    %v7163 = vpack.c.b16 %v5307, %v5291
    %v7164 = vpack.c.b16 %v5308, %v5292
    %v7165 = vpack.c.b16 %v5309, %v5293
    %v7166 = vpack.c.b16 %v5310, %v5294
    %v7167 = vpack.c.b16 %v5311, %v5295
    %v7168 = vpack.c.b16 %v5312, %v5296
    %v7169 = vpack.c.b16 %v5313, %v5297
    %v7170 = vpack.c.b16 %v5314, %v5298
    %v7171 = vpack.c.b16 %v5315, %v5299
    %v7172 = vpack.c.b16 %v5316, %v5300
    %v7173 = vpack.c.b16 %v5317, %v5301
    %v7174 = vpack.c.b16 %v5318, %v5302
    %v7175 = vpack.c.b16 %v5319, %v5303
    %v7176 = vpack.c.b16 %v5320, %v5304
    %v7177 = vpack.c.b16 %v5337, %v5321
    %v7178 = vpack.c.b16 %v5338, %v5322
    %v7179 = vpack.c.b16 %v5339, %v5323
    %v7180 = vpack.c.b16 %v5340, %v5324
    %v7181 = vpack.c.b16 %v5341, %v5325
    %v7182 = vpack.c.b16 %v5342, %v5326
    %v7183 = vpack.c.b16 %v5343, %v5327
    %v7184 = vpack.c.b16 %v5344, %v5328
    %v7185 = vpack.c.b16 %v5345, %v5329
    %v7186 = vpack.c.b16 %v5346, %v5330
    %v7187 = vpack.c.b16 %v5347, %v5331
    %v7188 = vpack.c.b16 %v5348, %v5332
    %v7189 = vpack.c.b16 %v5349, %v5333
    %v7190 = vpack.c.b16 %v5350, %v5334
    %v7191 = vpack.c.b16 %v5351, %v5335
    %v7192 = vpack.c.b16 %v5352, %v5336
    %v7193 = vpack.c.b16 %v5369, %v5353
    %v7194 = vpack.c.b16 %v5370, %v5354
    %v7195 = vpack.c.b16 %v5371, %v5355
    %v7196 = vpack.c.b16 %v5372, %v5356
    %v7197 = vpack.c.b16 %v5373, %v5357
    %v7198 = vpack.c.b16 %v5374, %v5358
    %v7199 = vpack.c.b16 %v5375, %v5359
    %v7200 = vpack.c.b16 %v5376, %v5360
    %v7201 = vpack.c.b16 %v5377, %v5361
    %v7202 = vpack.c.b16 %v5378, %v5362
    %v7203 = vpack.c.b16 %v5379, %v5363
    %v7204 = vpack.c.b16 %v5380, %v5364
    %v7205 = vpack.c.b16 %v5381, %v5365
    %v7206 = vpack.c.b16 %v5382, %v5366
    %v7207 = vpack.c.b16 %v5383, %v5367
    %v7208 = vpack.c.b16 %v5384, %v5368
    %v7209 = vpack.c.b16 %v5401, %v5385
    %v7210 = vpack.c.b16 %v5402, %v5386
    %v7211 = vpack.c.b16 %v5403, %v5387
    %v7212 = vpack.c.b16 %v5404, %v5388
    %v7213 = vpack.c.b16 %v5405, %v5389
    %v7214 = vpack.c.b16 %v5406, %v5390
    %v7215 = vpack.c.b16 %v5407, %v5391
    %v7216 = vpack.c.b16 %v5408, %v5392
    %v7217 = vpack.c.b16 %v5409, %v5393
    %v7218 = vpack.c.b16 %v5410, %v5394
    %v7219 = vpack.c.b16 %v5411, %v5395
    %v7220 = vpack.c.b16 %v5412, %v5396
    %v7221 = vpack.c.b16 %v5413, %v5397
    %v7222 = vpack.c.b16 %v5414, %v5398
    %v7223 = vpack.c.b16 %v5415, %v5399
    %v7224 = vpack.c.b16 %v5416, %v5400
    %v7225 = vpack.c.b16 %v5433, %v5417
    %v7226 = vpack.c.b16 %v5434, %v5418
    %v7227 = vpack.c.b16 %v5435, %v5419
    %v7228 = vpack.c.b16 %v5436, %v5420
    %v7229 = vpack.c.b16 %v5437, %v5421
    %v7230 = vpack.c.b16 %v5438, %v5422
    %v7231 = vpack.c.b16 %v5439, %v5423
    %v7232 = vpack.c.b16 %v5440, %v5424
    %v7233 = vpack.c.b16 %v5441, %v5425
    %v7234 = vpack.c.b16 %v5442, %v5426
    %v7235 = vpack.c.b16 %v5443, %v5427
    %v7236 = vpack.c.b16 %v5444, %v5428
    %v7237 = vpack.c.b16 %v5445, %v5429
    %v7238 = vpack.c.b16 %v5446, %v5430
    %v7239 = vpack.c.b16 %v5447, %v5431
    %v7240 = vpack.c.b16 %v5448, %v5432
    %v7241 = vpack.c.b16 %v5465, %v5449
    %v7242 = vpack.c.b16 %v5466, %v5450
    %v7243 = vpack.c.b16 %v5467, %v5451
    %v7244 = vpack.c.b16 %v5468, %v5452
    %v7245 = vpack.c.b16 %v5469, %v5453
    %v7246 = vpack.c.b16 %v5470, %v5454
    %v7247 = vpack.c.b16 %v5471, %v5455
    %v7248 = vpack.c.b16 %v5472, %v5456
    %v7249 = vpack.c.b16 %v5473, %v5457
    %v7250 = vpack.c.b16 %v5474, %v5458
    %v7251 = vpack.c.b16 %v5475, %v5459
    %v7252 = vpack.c.b16 %v5476, %v5460
    %v7253 = vpack.c.b16 %v5477, %v5461
    %v7254 = vpack.c.b16 %v5478, %v5462
    %v7255 = vpack.c.b16 %v5479, %v5463
    %v7256 = vpack.c.b16 %v5480, %v5464
    %v7257 = vpack.c.b16 %v5497, %v5481
    %v7258 = vpack.c.b16 %v5498, %v5482
    %v7259 = vpack.c.b16 %v5499, %v5483
    %v7260 = vpack.c.b16 %v5500, %v5484
    %v7261 = vpack.c.b16 %v5501, %v5485
    %v7262 = vpack.c.b16 %v5502, %v5486
    %v7263 = vpack.c.b16 %v5503, %v5487
    %v7264 = vpack.c.b16 %v5504, %v5488
    %v7265 = vpack.c.b16 %v5505, %v5489
    %v7266 = vpack.c.b16 %v5506, %v5490
    %v7267 = vpack.c.b16 %v5507, %v5491
    %v7268 = vpack.c.b16 %v5508, %v5492
    %v7269 = vpack.c.b16 %v5509, %v5493
    %v7270 = vpack.c.b16 %v5510, %v5494
    %v7271 = vpack.c.b16 %v5511, %v5495
    %v7272 = vpack.c.b16 %v5512, %v5496
    %v7273 = vpack.c.b16 %v5529, %v5513
    %v7274 = vpack.c.b16 %v5530, %v5514
    %v7275 = vpack.c.b16 %v5531, %v5515
    %v7276 = vpack.c.b16 %v5532, %v5516
    %v7277 = vpack.c.b16 %v5533, %v5517
    %v7278 = vpack.c.b16 %v5534, %v5518
    %v7279 = vpack.c.b16 %v5535, %v5519
    %v7280 = vpack.c.b16 %v5536, %v5520
    %v7281 = vpack.c.b16 %v5537, %v5521
    %v7282 = vpack.c.b16 %v5538, %v5522
    %v7283 = vpack.c.b16 %v5539, %v5523
    %v7284 = vpack.c.b16 %v5540, %v5524
    %v7285 = vpack.c.b16 %v5541, %v5525
    %v7286 = vpack.c.b16 %v5542, %v5526
    %v7287 = vpack.c.b16 %v5543, %v5527
    %v7288 = vpack.c.b16 %v5544, %v5528
    %v7289 = vpack.c.b16 %v5561, %v5545
    %v7290 = vpack.c.b16 %v5562, %v5546
    %v7291 = vpack.c.b16 %v5563, %v5547
    %v7292 = vpack.c.b16 %v5564, %v5548
    %v7293 = vpack.c.b16 %v5565, %v5549
    %v7294 = vpack.c.b16 %v5566, %v5550
    %v7295 = vpack.c.b16 %v5567, %v5551
    %v7296 = vpack.c.b16 %v5568, %v5552
    %v7297 = vpack.c.b16 %v5569, %v5553
    %v7298 = vpack.c.b16 %v5570, %v5554
    %v7299 = vpack.c.b16 %v5571, %v5555
    %v7300 = vpack.c.b16 %v5572, %v5556
    %v7301 = vpack.c.b16 %v5573, %v5557
    %v7302 = vpack.c.b16 %v5574, %v5558
    %v7303 = vpack.c.b16 %v5575, %v5559
    %v7304 = vpack.c.b16 %v5576, %v5560
    %v7305 = vpack.c.b16 %v5593, %v5577
    %v7306 = vpack.c.b16 %v5594, %v5578
    %v7307 = vpack.c.b16 %v5595, %v5579
    %v7308 = vpack.c.b16 %v5596, %v5580
    %v7309 = vpack.c.b16 %v5597, %v5581
    %v7310 = vpack.c.b16 %v5598, %v5582
    %v7311 = vpack.c.b16 %v5599, %v5583
    %v7312 = vpack.c.b16 %v5600, %v5584
    %v7313 = vpack.c.b16 %v5601, %v5585
    %v7314 = vpack.c.b16 %v5602, %v5586
    %v7315 = vpack.c.b16 %v5603, %v5587
    %v7316 = vpack.c.b16 %v5604, %v5588
    %v7317 = vpack.c.b16 %v5605, %v5589
    %v7318 = vpack.c.b16 %v5606, %v5590
    %v7319 = vpack.c.b16 %v5607, %v5591
    %v7320 = vpack.c.b16 %v5608, %v5592
    %v7321 = vpack.c.b16 %v5625, %v5609
    %v7322 = vpack.c.b16 %v5626, %v5610
    %v7323 = vpack.c.b16 %v5627, %v5611
    %v7324 = vpack.c.b16 %v5628, %v5612
    %v7325 = vpack.c.b16 %v5629, %v5613
    %v7326 = vpack.c.b16 %v5630, %v5614
    %v7327 = vpack.c.b16 %v5631, %v5615
    %v7328 = vpack.c.b16 %v5632, %v5616
    %v7329 = vpack.c.b16 %v5633, %v5617
    %v7330 = vpack.c.b16 %v5634, %v5618
    %v7331 = vpack.c.b16 %v5635, %v5619
    %v7332 = vpack.c.b16 %v5636, %v5620
    %v7333 = vpack.c.b16 %v5637, %v5621
    %v7334 = vpack.c.b16 %v5638, %v5622
    %v7335 = vpack.c.b16 %v5639, %v5623
    %v7336 = vpack.c.b16 %v5640, %v5624
    %v7337 = vpack.c.b16 %v5657, %v5641
    %v7338 = vpack.c.b16 %v5658, %v5642
    %v7339 = vpack.c.b16 %v5659, %v5643
    %v7340 = vpack.c.b16 %v5660, %v5644
    %v7341 = vpack.c.b16 %v5661, %v5645
    %v7342 = vpack.c.b16 %v5662, %v5646
    %v7343 = vpack.c.b16 %v5663, %v5647
    %v7344 = vpack.c.b16 %v5664, %v5648
    %v7345 = vpack.c.b16 %v5665, %v5649
    %v7346 = vpack.c.b16 %v5666, %v5650
    %v7347 = vpack.c.b16 %v5667, %v5651
    %v7348 = vpack.c.b16 %v5668, %v5652
    %v7349 = vpack.c.b16 %v5669, %v5653
    %v7350 = vpack.c.b16 %v5670, %v5654
    %v7351 = vpack.c.b16 %v5671, %v5655
    %v7352 = vpack.c.b16 %v5672, %v5656
    %v7353 = vpack.c.b16 %v5689, %v5673
    %v7354 = vpack.c.b16 %v5690, %v5674
    %v7355 = vpack.c.b16 %v5691, %v5675
    %v7356 = vpack.c.b16 %v5692, %v5676
    %v7357 = vpack.c.b16 %v5693, %v5677
    %v7358 = vpack.c.b16 %v5694, %v5678
    %v7359 = vpack.c.b16 %v5695, %v5679
    %v7360 = vpack.c.b16 %v5696, %v5680
    %v7361 = vpack.c.b16 %v5697, %v5681
    %v7362 = vpack.c.b16 %v5698, %v5682
    %v7363 = vpack.c.b16 %v5699, %v5683
    %v7364 = vpack.c.b16 %v5700, %v5684
    %v7365 = vpack.c.b16 %v5701, %v5685
    %v7366 = vpack.c.b16 %v5702, %v5686
    %v7367 = vpack.c.b16 %v5703, %v5687
    %v7368 = vpack.c.b16 %v5704, %v5688
    %v7369 = vpack.c.b16 %v5721, %v5705
    %v7370 = vpack.c.b16 %v5722, %v5706
    %v7371 = vpack.c.b16 %v5723, %v5707
    %v7372 = vpack.c.b16 %v5724, %v5708
    %v7373 = vpack.c.b16 %v5725, %v5709
    %v7374 = vpack.c.b16 %v5726, %v5710
    %v7375 = vpack.c.b16 %v5727, %v5711
    %v7376 = vpack.c.b16 %v5728, %v5712
    %v7377 = vpack.c.b16 %v5729, %v5713
    %v7378 = vpack.c.b16 %v5730, %v5714
    %v7379 = vpack.c.b16 %v5731, %v5715
    %v7380 = vpack.c.b16 %v5732, %v5716
    %v7381 = vpack.c.b16 %v5733, %v5717
    %v7382 = vpack.c.b16 %v5734, %v5718
    %v7383 = vpack.c.b16 %v5735, %v5719
    %v7384 = vpack.c.b16 %v5736, %v5720
    %v7385 = vpack.c.b16 %v5753, %v5737
    %v7386 = vpack.c.b16 %v5754, %v5738
    %v7387 = vpack.c.b16 %v5755, %v5739
    %v7388 = vpack.c.b16 %v5756, %v5740
    %v7389 = vpack.c.b16 %v5757, %v5741
    %v7390 = vpack.c.b16 %v5758, %v5742
    %v7391 = vpack.c.b16 %v5759, %v5743
    %v7392 = vpack.c.b16 %v5760, %v5744
    %v7393 = vpack.c.b16 %v5761, %v5745
    %v7394 = vpack.c.b16 %v5762, %v5746
    %v7395 = vpack.c.b16 %v5763, %v5747
    %v7396 = vpack.c.b16 %v5764, %v5748
    %v7397 = vpack.c.b16 %v5765, %v5749
    %v7398 = vpack.c.b16 %v5766, %v5750
    %v7399 = vpack.c.b16 %v5767, %v5751
    %v7400 = vpack.c.b16 %v5768, %v5752
    %v7401 = vpack.c.b16 %v5785, %v5769
    %v7402 = vpack.c.b16 %v5786, %v5770
    %v7403 = vpack.c.b16 %v5787, %v5771
    %v7404 = vpack.c.b16 %v5788, %v5772
    %v7405 = vpack.c.b16 %v5789, %v5773
    %v7406 = vpack.c.b16 %v5790, %v5774
    %v7407 = vpack.c.b16 %v5791, %v5775
    %v7408 = vpack.c.b16 %v5792, %v5776
    %v7409 = vpack.c.b16 %v5793, %v5777
    %v7410 = vpack.c.b16 %v5794, %v5778
    %v7411 = vpack.c.b16 %v5795, %v5779
    %v7412 = vpack.c.b16 %v5796, %v5780
    %v7413 = vpack.c.b16 %v5797, %v5781
    %v7414 = vpack.c.b16 %v5798, %v5782
    %v7415 = vpack.c.b16 %v5799, %v5783
    %v7416 = vpack.c.b16 %v5800, %v5784
    %v7417 = vpack.c.b16 %v5817, %v5801
    %v7418 = vpack.c.b16 %v5818, %v5802
    %v7419 = vpack.c.b16 %v5819, %v5803
    %v7420 = vpack.c.b16 %v5820, %v5804
    %v7421 = vpack.c.b16 %v5821, %v5805
    %v7422 = vpack.c.b16 %v5822, %v5806
    %v7423 = vpack.c.b16 %v5823, %v5807
    %v7424 = vpack.c.b16 %v5824, %v5808
    %v7425 = vpack.c.b16 %v5825, %v5809
    %v7426 = vpack.c.b16 %v5826, %v5810
    %v7427 = vpack.c.b16 %v5827, %v5811
    %v7428 = vpack.c.b16 %v5828, %v5812
    %v7429 = vpack.c.b16 %v5829, %v5813
    %v7430 = vpack.c.b16 %v5830, %v5814
    %v7431 = vpack.c.b16 %v5831, %v5815
    %v7432 = vpack.c.b16 %v5832, %v5816
    %v7433 = vpack.c.b16 %v5849, %v5833
    %v7434 = vpack.c.b16 %v5850, %v5834
    %v7435 = vpack.c.b16 %v5851, %v5835
    %v7436 = vpack.c.b16 %v5852, %v5836
    %v7437 = vpack.c.b16 %v5853, %v5837
    %v7438 = vpack.c.b16 %v5854, %v5838
    %v7439 = vpack.c.b16 %v5855, %v5839
    %v7440 = vpack.c.b16 %v5856, %v5840
    %v7441 = vpack.c.b16 %v5857, %v5841
    %v7442 = vpack.c.b16 %v5858, %v5842
    %v7443 = vpack.c.b16 %v5859, %v5843
    %v7444 = vpack.c.b16 %v5860, %v5844
    %v7445 = vpack.c.b16 %v5861, %v5845
    %v7446 = vpack.c.b16 %v5862, %v5846
    %v7447 = vpack.c.b16 %v5863, %v5847
    %v7448 = vpack.c.b16 %v5864, %v5848
    %v7449 = vpack.c.b16 %v5881, %v5865
    %v7450 = vpack.c.b16 %v5882, %v5866
    %v7451 = vpack.c.b16 %v5883, %v5867
    %v7452 = vpack.c.b16 %v5884, %v5868
    %v7453 = vpack.c.b16 %v5885, %v5869
    %v7454 = vpack.c.b16 %v5886, %v5870
    %v7455 = vpack.c.b16 %v5887, %v5871
    %v7456 = vpack.c.b16 %v5888, %v5872
    %v7457 = vpack.c.b16 %v5889, %v5873
    %v7458 = vpack.c.b16 %v5890, %v5874
    %v7459 = vpack.c.b16 %v5891, %v5875
    %v7460 = vpack.c.b16 %v5892, %v5876
    %v7461 = vpack.c.b16 %v5893, %v5877
    %v7462 = vpack.c.b16 %v5894, %v5878
    %v7463 = vpack.c.b16 %v5895, %v5879
    %v7464 = vpack.c.b16 %v5896, %v5880
    %v7465 = vpack.c.b16 %v5913, %v5897
    %v7466 = vpack.c.b16 %v5914, %v5898
    %v7467 = vpack.c.b16 %v5915, %v5899
    %v7468 = vpack.c.b16 %v5916, %v5900
    %v7469 = vpack.c.b16 %v5917, %v5901
    %v7470 = vpack.c.b16 %v5918, %v5902
    %v7471 = vpack.c.b16 %v5919, %v5903
    %v7472 = vpack.c.b16 %v5920, %v5904
    %v7473 = vpack.c.b16 %v5921, %v5905
    %v7474 = vpack.c.b16 %v5922, %v5906
    %v7475 = vpack.c.b16 %v5923, %v5907
    %v7476 = vpack.c.b16 %v5924, %v5908
    %v7477 = vpack.c.b16 %v5925, %v5909
    %v7478 = vpack.c.b16 %v5926, %v5910
    %v7479 = vpack.c.b16 %v5927, %v5911
    %v7480 = vpack.c.b16 %v5928, %v5912
    %v7481 = vpack.c.b16 %v5945, %v5929
    %v7482 = vpack.c.b16 %v5946, %v5930
    %v7483 = vpack.c.b16 %v5947, %v5931
    %v7484 = vpack.c.b16 %v5948, %v5932
    %v7485 = vpack.c.b16 %v5949, %v5933
    %v7486 = vpack.c.b16 %v5950, %v5934
    %v7487 = vpack.c.b16 %v5951, %v5935
    %v7488 = vpack.c.b16 %v5952, %v5936
    %v7489 = vpack.c.b16 %v5953, %v5937
    %v7490 = vpack.c.b16 %v5954, %v5938
    %v7491 = vpack.c.b16 %v5955, %v5939
    %v7492 = vpack.c.b16 %v5956, %v5940
    %v7493 = vpack.c.b16 %v5957, %v5941
    %v7494 = vpack.c.b16 %v5958, %v5942
    %v7495 = vpack.c.b16 %v5959, %v5943
    %v7496 = vpack.c.b16 %v5960, %v5944
    %v7497 = vpack.c.b16 %v5977, %v5961
    %v7498 = vpack.c.b16 %v5978, %v5962
    %v7499 = vpack.c.b16 %v5979, %v5963
    %v7500 = vpack.c.b16 %v5980, %v5964
    %v7501 = vpack.c.b16 %v5981, %v5965
    %v7502 = vpack.c.b16 %v5982, %v5966
    %v7503 = vpack.c.b16 %v5983, %v5967
    %v7504 = vpack.c.b16 %v5984, %v5968
    %v7505 = vpack.c.b16 %v5985, %v5969
    %v7506 = vpack.c.b16 %v5986, %v5970
    %v7507 = vpack.c.b16 %v5987, %v5971
    %v7508 = vpack.c.b16 %v5988, %v5972
    %v7509 = vpack.c.b16 %v5989, %v5973
    %v7510 = vpack.c.b16 %v5990, %v5974
    %v7511 = vpack.c.b16 %v5991, %v5975
    %v7512 = vpack.c.b16 %v5992, %v5976
    %v7513 = vpack.c.b16 %v6009, %v5993
    %v7514 = vpack.c.b16 %v6010, %v5994
    %v7515 = vpack.c.b16 %v6011, %v5995
    %v7516 = vpack.c.b16 %v6012, %v5996
    %v7517 = vpack.c.b16 %v6013, %v5997
    %v7518 = vpack.c.b16 %v6014, %v5998
    %v7519 = vpack.c.b16 %v6015, %v5999
    %v7520 = vpack.c.b16 %v6016, %v6000
    %v7521 = vpack.c.b16 %v6017, %v6001
    %v7522 = vpack.c.b16 %v6018, %v6002
    %v7523 = vpack.c.b16 %v6019, %v6003
    %v7524 = vpack.c.b16 %v6020, %v6004
    %v7525 = vpack.c.b16 %v6021, %v6005
    %v7526 = vpack.c.b16 %v6022, %v6006
    %v7527 = vpack.c.b16 %v6023, %v6007
    %v7528 = vpack.c.b16 %v6024, %v6008
    %v7529 = vpack.c.b16 %v6041, %v6025
    %v7530 = vpack.c.b16 %v6042, %v6026
    %v7531 = vpack.c.b16 %v6043, %v6027
    %v7532 = vpack.c.b16 %v6044, %v6028
    %v7533 = vpack.c.b16 %v6045, %v6029
    %v7534 = vpack.c.b16 %v6046, %v6030
    %v7535 = vpack.c.b16 %v6047, %v6031
    %v7536 = vpack.c.b16 %v6048, %v6032
    %v7537 = vpack.c.b16 %v6049, %v6033
    %v7538 = vpack.c.b16 %v6050, %v6034
    %v7539 = vpack.c.b16 %v6051, %v6035
    %v7540 = vpack.c.b16 %v6052, %v6036
    %v7541 = vpack.c.b16 %v6053, %v6037
    %v7542 = vpack.c.b16 %v6054, %v6038
    %v7543 = vpack.c.b16 %v6055, %v6039
    %v7544 = vpack.c.b16 %v6056, %v6040
    %v7545 = vpack.c.b16 %v6073, %v6057
    %v7546 = vpack.c.b16 %v6074, %v6058
    %v7547 = vpack.c.b16 %v6075, %v6059
    %v7548 = vpack.c.b16 %v6076, %v6060
    %v7549 = vpack.c.b16 %v6077, %v6061
    %v7550 = vpack.c.b16 %v6078, %v6062
    %v7551 = vpack.c.b16 %v6079, %v6063
    %v7552 = vpack.c.b16 %v6080, %v6064
    %v7553 = vpack.c.b16 %v6081, %v6065
    %v7554 = vpack.c.b16 %v6082, %v6066
    %v7555 = vpack.c.b16 %v6083, %v6067
    %v7556 = vpack.c.b16 %v6084, %v6068
    %v7557 = vpack.c.b16 %v6085, %v6069
    %v7558 = vpack.c.b16 %v6086, %v6070
    %v7559 = vpack.c.b16 %v6087, %v6071
    %v7560 = vpack.c.b16 %v6088, %v6072
    %v7561 = vpack.c.b16 %v6105, %v6089
    %v7562 = vpack.c.b16 %v6106, %v6090
    %v7563 = vpack.c.b16 %v6107, %v6091
    %v7564 = vpack.c.b16 %v6108, %v6092
    %v7565 = vpack.c.b16 %v6109, %v6093
    %v7566 = vpack.c.b16 %v6110, %v6094
    %v7567 = vpack.c.b16 %v6111, %v6095
    %v7568 = vpack.c.b16 %v6112, %v6096
    %v7569 = vpack.c.b16 %v6113, %v6097
    %v7570 = vpack.c.b16 %v6114, %v6098
    %v7571 = vpack.c.b16 %v6115, %v6099
    %v7572 = vpack.c.b16 %v6116, %v6100
    %v7573 = vpack.c.b16 %v6117, %v6101
    %v7574 = vpack.c.b16 %v6118, %v6102
    %v7575 = vpack.c.b16 %v6119, %v6103
    %v7576 = vpack.c.b16 %v6120, %v6104
    %v7577 = vpack.c.b16 %v6137, %v6121
    %v7578 = vpack.c.b16 %v6138, %v6122
    %v7579 = vpack.c.b16 %v6139, %v6123
    %v7580 = vpack.c.b16 %v6140, %v6124
    %v7581 = vpack.c.b16 %v6141, %v6125
    %v7582 = vpack.c.b16 %v6142, %v6126
    %v7583 = vpack.c.b16 %v6143, %v6127
    %v7584 = vpack.c.b16 %v6144, %v6128
    %v7585 = vpack.c.b16 %v6145, %v6129
    %v7586 = vpack.c.b16 %v6146, %v6130
    %v7587 = vpack.c.b16 %v6147, %v6131
    %v7588 = vpack.c.b16 %v6148, %v6132
    %v7589 = vpack.c.b16 %v6149, %v6133
    %v7590 = vpack.c.b16 %v6150, %v6134
    %v7591 = vpack.c.b16 %v6151, %v6135
    %v7592 = vpack.c.b16 %v6152, %v6136
    %v7593 = vpack.c.b16 %v6169, %v6153
    %v7594 = vpack.c.b16 %v6170, %v6154
    %v7595 = vpack.c.b16 %v6171, %v6155
    %v7596 = vpack.c.b16 %v6172, %v6156
    %v7597 = vpack.c.b16 %v6173, %v6157
    %v7598 = vpack.c.b16 %v6174, %v6158
    %v7599 = vpack.c.b16 %v6175, %v6159
    %v7600 = vpack.c.b16 %v6176, %v6160
    %v7601 = vpack.c.b16 %v6177, %v6161
    %v7602 = vpack.c.b16 %v6178, %v6162
    %v7603 = vpack.c.b16 %v6179, %v6163
    %v7604 = vpack.c.b16 %v6180, %v6164
    %v7605 = vpack.c.b16 %v6181, %v6165
    %v7606 = vpack.c.b16 %v6182, %v6166
    %v7607 = vpack.c.b16 %v6183, %v6167
    %v7608 = vpack.c.b16 %v6184, %v6168
    %v7609 = vpack.c.b16 %v6201, %v6185
    %v7610 = vpack.c.b16 %v6202, %v6186
    %v7611 = vpack.c.b16 %v6203, %v6187
    %v7612 = vpack.c.b16 %v6204, %v6188
    %v7613 = vpack.c.b16 %v6205, %v6189
    %v7614 = vpack.c.b16 %v6206, %v6190
    %v7615 = vpack.c.b16 %v6207, %v6191
    %v7616 = vpack.c.b16 %v6208, %v6192
    %v7617 = vpack.c.b16 %v6209, %v6193
    %v7618 = vpack.c.b16 %v6210, %v6194
    %v7619 = vpack.c.b16 %v6211, %v6195
    %v7620 = vpack.c.b16 %v6212, %v6196
    %v7621 = vpack.c.b16 %v6213, %v6197
    %v7622 = vpack.c.b16 %v6214, %v6198
    %v7623 = vpack.c.b16 %v6215, %v6199
    %v7624 = vpack.c.b16 %v6216, %v6200
    %v7625 = vpack.c.b16 %v6233, %v6217
    %v7626 = vpack.c.b16 %v6234, %v6218
    %v7627 = vpack.c.b16 %v6235, %v6219
    %v7628 = vpack.c.b16 %v6236, %v6220
    %v7629 = vpack.c.b16 %v6237, %v6221
    %v7630 = vpack.c.b16 %v6238, %v6222
    %v7631 = vpack.c.b16 %v6239, %v6223
    %v7632 = vpack.c.b16 %v6240, %v6224
    %v7633 = vpack.c.b16 %v6241, %v6225
    %v7634 = vpack.c.b16 %v6242, %v6226
    %v7635 = vpack.c.b16 %v6243, %v6227
    %v7636 = vpack.c.b16 %v6244, %v6228
    %v7637 = vpack.c.b16 %v6245, %v6229
    %v7638 = vpack.c.b16 %v6246, %v6230
    %v7639 = vpack.c.b16 %v6247, %v6231
    %v7640 = vpack.c.b16 %v6248, %v6232
    %v7641 = vpack.c.b16 %v6265, %v6249
    %v7642 = vpack.c.b16 %v6266, %v6250
    %v7643 = vpack.c.b16 %v6267, %v6251
    %v7644 = vpack.c.b16 %v6268, %v6252
    %v7645 = vpack.c.b16 %v6269, %v6253
    %v7646 = vpack.c.b16 %v6270, %v6254
    %v7647 = vpack.c.b16 %v6271, %v6255
    %v7648 = vpack.c.b16 %v6272, %v6256
    %v7649 = vpack.c.b16 %v6273, %v6257
    %v7650 = vpack.c.b16 %v6274, %v6258
    %v7651 = vpack.c.b16 %v6275, %v6259
    %v7652 = vpack.c.b16 %v6276, %v6260
    %v7653 = vpack.c.b16 %v6277, %v6261
    %v7654 = vpack.c.b16 %v6278, %v6262
    %v7655 = vpack.c.b16 %v6279, %v6263
    %v7656 = vpack.c.b16 %v6280, %v6264
    %v7657 = vpack.c.b16 %v6297, %v6281
    %v7658 = vpack.c.b16 %v6298, %v6282
    %v7659 = vpack.c.b16 %v6299, %v6283
    %v7660 = vpack.c.b16 %v6300, %v6284
    %v7661 = vpack.c.b16 %v6301, %v6285
    %v7662 = vpack.c.b16 %v6302, %v6286
    %v7663 = vpack.c.b16 %v6303, %v6287
    %v7664 = vpack.c.b16 %v6304, %v6288
    %v7665 = vpack.c.b16 %v6305, %v6289
    %v7666 = vpack.c.b16 %v6306, %v6290
    %v7667 = vpack.c.b16 %v6307, %v6291
    %v7668 = vpack.c.b16 %v6308, %v6292
    %v7669 = vpack.c.b16 %v6309, %v6293
    %v7670 = vpack.c.b16 %v6310, %v6294
    %v7671 = vpack.c.b16 %v6311, %v6295
    %v7672 = vpack.c.b16 %v6312, %v6296
    %v7673 = vpack.c.b16 %v6329, %v6313
    %v7674 = vpack.c.b16 %v6330, %v6314
    %v7675 = vpack.c.b16 %v6331, %v6315
    %v7676 = vpack.c.b16 %v6332, %v6316
    %v7677 = vpack.c.b16 %v6333, %v6317
    %v7678 = vpack.c.b16 %v6334, %v6318
    %v7679 = vpack.c.b16 %v6335, %v6319
    %v7680 = vpack.c.b16 %v6336, %v6320
    %v7681 = vpack.c.b16 %v6337, %v6321
    %v7682 = vpack.c.b16 %v6338, %v6322
    %v7683 = vpack.c.b16 %v6339, %v6323
    %v7684 = vpack.c.b16 %v6340, %v6324
    %v7685 = vpack.c.b16 %v6341, %v6325
    %v7686 = vpack.c.b16 %v6342, %v6326
    %v7687 = vpack.c.b16 %v6343, %v6327
    %v7688 = vpack.c.b16 %v6344, %v6328
    %v7689 = vpack.c.b16 %v6361, %v6345
    %v7690 = vpack.c.b16 %v6362, %v6346
    %v7691 = vpack.c.b16 %v6363, %v6347
    %v7692 = vpack.c.b16 %v6364, %v6348
    %v7693 = vpack.c.b16 %v6365, %v6349
    %v7694 = vpack.c.b16 %v6366, %v6350
    %v7695 = vpack.c.b16 %v6367, %v6351
    %v7696 = vpack.c.b16 %v6368, %v6352
    %v7697 = vpack.c.b16 %v6369, %v6353
    %v7698 = vpack.c.b16 %v6370, %v6354
    %v7699 = vpack.c.b16 %v6371, %v6355
    %v7700 = vpack.c.b16 %v6372, %v6356
    %v7701 = vpack.c.b16 %v6373, %v6357
    %v7702 = vpack.c.b16 %v6374, %v6358
    %v7703 = vpack.c.b16 %v6375, %v6359
    %v7704 = vpack.c.b16 %v6376, %v6360
    %v7705 = vpack.c.b16 %v6393, %v6377
    %v7706 = vpack.c.b16 %v6394, %v6378
    %v7707 = vpack.c.b16 %v6395, %v6379
    %v7708 = vpack.c.b16 %v6396, %v6380
    %v7709 = vpack.c.b16 %v6397, %v6381
    %v7710 = vpack.c.b16 %v6398, %v6382
    %v7711 = vpack.c.b16 %v6399, %v6383
    %v7712 = vpack.c.b16 %v6400, %v6384
    %v7713 = vpack.c.b16 %v6401, %v6385
    %v7714 = vpack.c.b16 %v6402, %v6386
    %v7715 = vpack.c.b16 %v6403, %v6387
    %v7716 = vpack.c.b16 %v6404, %v6388
    %v7717 = vpack.c.b16 %v6405, %v6389
    %v7718 = vpack.c.b16 %v6406, %v6390
    %v7719 = vpack.c.b16 %v6407, %v6391
    %v7720 = vpack.c.b16 %v6408, %v6392
    %v7721 = vpack.c.b16 %v6425, %v6409
    %v7722 = vpack.c.b16 %v6426, %v6410
    %v7723 = vpack.c.b16 %v6427, %v6411
    %v7724 = vpack.c.b16 %v6428, %v6412
    %v7725 = vpack.c.b16 %v6429, %v6413
    %v7726 = vpack.c.b16 %v6430, %v6414
    %v7727 = vpack.c.b16 %v6431, %v6415
    %v7728 = vpack.c.b16 %v6432, %v6416
    %v7729 = vpack.c.b16 %v6433, %v6417
    %v7730 = vpack.c.b16 %v6434, %v6418
    %v7731 = vpack.c.b16 %v6435, %v6419
    %v7732 = vpack.c.b16 %v6436, %v6420
    %v7733 = vpack.c.b16 %v6437, %v6421
    %v7734 = vpack.c.b16 %v6438, %v6422
    %v7735 = vpack.c.b16 %v6439, %v6423
    %v7736 = vpack.c.b16 %v6440, %v6424
    %v7737 = vpack.c.b16 %v6457, %v6441
    %v7738 = vpack.c.b16 %v6458, %v6442
    %v7739 = vpack.c.b16 %v6459, %v6443
    %v7740 = vpack.c.b16 %v6460, %v6444
    %v7741 = vpack.c.b16 %v6461, %v6445
    %v7742 = vpack.c.b16 %v6462, %v6446
    %v7743 = vpack.c.b16 %v6463, %v6447
    %v7744 = vpack.c.b16 %v6464, %v6448
    %v7745 = vpack.c.b16 %v6465, %v6449
    %v7746 = vpack.c.b16 %v6466, %v6450
    %v7747 = vpack.c.b16 %v6467, %v6451
    %v7748 = vpack.c.b16 %v6468, %v6452
    %v7749 = vpack.c.b16 %v6469, %v6453
    %v7750 = vpack.c.b16 %v6470, %v6454
    %v7751 = vpack.c.b16 %v6471, %v6455
    %v7752 = vpack.c.b16 %v6472, %v6456
    %v7753 = vpack.c.b16 %v6489, %v6473
    %v7754 = vpack.c.b16 %v6490, %v6474
    %v7755 = vpack.c.b16 %v6491, %v6475
    %v7756 = vpack.c.b16 %v6492, %v6476
    %v7757 = vpack.c.b16 %v6493, %v6477
    %v7758 = vpack.c.b16 %v6494, %v6478
    %v7759 = vpack.c.b16 %v6495, %v6479
    %v7760 = vpack.c.b16 %v6496, %v6480
    %v7761 = vpack.c.b16 %v6497, %v6481
    %v7762 = vpack.c.b16 %v6498, %v6482
    %v7763 = vpack.c.b16 %v6499, %v6483
    %v7764 = vpack.c.b16 %v6500, %v6484
    %v7765 = vpack.c.b16 %v6501, %v6485
    %v7766 = vpack.c.b16 %v6502, %v6486
    %v7767 = vpack.c.b16 %v6503, %v6487
    %v7768 = vpack.c.b16 %v6504, %v6488
    %v7769 = vpack.c.b16 %v6521, %v6505
    %v7770 = vpack.c.b16 %v6522, %v6506
    %v7771 = vpack.c.b16 %v6523, %v6507
    %v7772 = vpack.c.b16 %v6524, %v6508
    %v7773 = vpack.c.b16 %v6525, %v6509
    %v7774 = vpack.c.b16 %v6526, %v6510
    %v7775 = vpack.c.b16 %v6527, %v6511
    %v7776 = vpack.c.b16 %v6528, %v6512
    %v7777 = vpack.c.b16 %v6529, %v6513
    %v7778 = vpack.c.b16 %v6530, %v6514
    %v7779 = vpack.c.b16 %v6531, %v6515
    %v7780 = vpack.c.b16 %v6532, %v6516
    %v7781 = vpack.c.b16 %v6533, %v6517
    %v7782 = vpack.c.b16 %v6534, %v6518
    %v7783 = vpack.c.b16 %v6535, %v6519
    %v7784 = vpack.c.b16 %v6536, %v6520
    %v7785 = vpack.c.b16 %v6553, %v6537
    %v7786 = vpack.c.b16 %v6554, %v6538
    %v7787 = vpack.c.b16 %v6555, %v6539
    %v7788 = vpack.c.b16 %v6556, %v6540
    %v7789 = vpack.c.b16 %v6557, %v6541
    %v7790 = vpack.c.b16 %v6558, %v6542
    %v7791 = vpack.c.b16 %v6559, %v6543
    %v7792 = vpack.c.b16 %v6560, %v6544
    %v7793 = vpack.c.b16 %v6561, %v6545
    %v7794 = vpack.c.b16 %v6562, %v6546
    %v7795 = vpack.c.b16 %v6563, %v6547
    %v7796 = vpack.c.b16 %v6564, %v6548
    %v7797 = vpack.c.b16 %v6565, %v6549
    %v7798 = vpack.c.b16 %v6566, %v6550
    %v7799 = vpack.c.b16 %v6567, %v6551
    %v7800 = vpack.c.b16 %v6568, %v6552
    %v7801 = vpack.c.b16 %v6585, %v6569
    %v7802 = vpack.c.b16 %v6586, %v6570
    %v7803 = vpack.c.b16 %v6587, %v6571
    %v7804 = vpack.c.b16 %v6588, %v6572
    %v7805 = vpack.c.b16 %v6589, %v6573
    %v7806 = vpack.c.b16 %v6590, %v6574
    %v7807 = vpack.c.b16 %v6591, %v6575
    %v7808 = vpack.c.b16 %v6592, %v6576
    %v7809 = vpack.c.b16 %v6593, %v6577
    %v7810 = vpack.c.b16 %v6594, %v6578
    %v7811 = vpack.c.b16 %v6595, %v6579
    %v7812 = vpack.c.b16 %v6596, %v6580
    %v7813 = vpack.c.b16 %v6597, %v6581
    %v7814 = vpack.c.b16 %v6598, %v6582
    %v7815 = vpack.c.b16 %v6599, %v6583
    %v7816 = vpack.c.b16 %v6600, %v6584
    %v7817 = vpack.c.b16 %v6617, %v6601
    %v7818 = vpack.c.b16 %v6618, %v6602
    %v7819 = vpack.c.b16 %v6619, %v6603
    %v7820 = vpack.c.b16 %v6620, %v6604
    %v7821 = vpack.c.b16 %v6621, %v6605
    %v7822 = vpack.c.b16 %v6622, %v6606
    %v7823 = vpack.c.b16 %v6623, %v6607
    %v7824 = vpack.c.b16 %v6624, %v6608
    %v7825 = vpack.c.b16 %v6625, %v6609
    %v7826 = vpack.c.b16 %v6626, %v6610
    %v7827 = vpack.c.b16 %v6627, %v6611
    %v7828 = vpack.c.b16 %v6628, %v6612
    %v7829 = vpack.c.b16 %v6629, %v6613
    %v7830 = vpack.c.b16 %v6630, %v6614
    %v7831 = vpack.c.b16 %v6631, %v6615
    %v7832 = vpack.c.b16 %v6632, %v6616
    %v7833 = vpack.c.b16 %v6649, %v6633
    %v7834 = vpack.c.b16 %v6650, %v6634
    %v7835 = vpack.c.b16 %v6651, %v6635
    %v7836 = vpack.c.b16 %v6652, %v6636
    %v7837 = vpack.c.b16 %v6653, %v6637
    %v7838 = vpack.c.b16 %v6654, %v6638
    %v7839 = vpack.c.b16 %v6655, %v6639
    %v7840 = vpack.c.b16 %v6656, %v6640
    %v7841 = vpack.c.b16 %v6657, %v6641
    %v7842 = vpack.c.b16 %v6658, %v6642
    %v7843 = vpack.c.b16 %v6659, %v6643
    %v7844 = vpack.c.b16 %v6660, %v6644
    %v7845 = vpack.c.b16 %v6661, %v6645
    %v7846 = vpack.c.b16 %v6662, %v6646
    %v7847 = vpack.c.b16 %v6663, %v6647
    %v7848 = vpack.c.b16 %v6664, %v6648
    %v7849 = vpack.c.b16 %v6681, %v6665
    %v7850 = vpack.c.b16 %v6682, %v6666
    %v7851 = vpack.c.b16 %v6683, %v6667
    %v7852 = vpack.c.b16 %v6684, %v6668
    %v7853 = vpack.c.b16 %v6685, %v6669
    %v7854 = vpack.c.b16 %v6686, %v6670
    %v7855 = vpack.c.b16 %v6687, %v6671
    %v7856 = vpack.c.b16 %v6688, %v6672
    %v7857 = vpack.c.b16 %v6689, %v6673
    %v7858 = vpack.c.b16 %v6690, %v6674
    %v7859 = vpack.c.b16 %v6691, %v6675
    %v7860 = vpack.c.b16 %v6692, %v6676
    %v7861 = vpack.c.b16 %v6693, %v6677
    %v7862 = vpack.c.b16 %v6694, %v6678
    %v7863 = vpack.c.b16 %v6695, %v6679
    %v7864 = vpack.c.b16 %v6696, %v6680
    %v7865 = vpack.c.b16 %v6713, %v6697
    %v7866 = vpack.c.b16 %v6714, %v6698
    %v7867 = vpack.c.b16 %v6715, %v6699
    %v7868 = vpack.c.b16 %v6716, %v6700
    %v7869 = vpack.c.b16 %v6717, %v6701
    %v7870 = vpack.c.b16 %v6718, %v6702
    %v7871 = vpack.c.b16 %v6719, %v6703
    %v7872 = vpack.c.b16 %v6720, %v6704
    %v7873 = vpack.c.b16 %v6721, %v6705
    %v7874 = vpack.c.b16 %v6722, %v6706
    %v7875 = vpack.c.b16 %v6723, %v6707
    %v7876 = vpack.c.b16 %v6724, %v6708
    %v7877 = vpack.c.b16 %v6725, %v6709
    %v7878 = vpack.c.b16 %v6726, %v6710
    %v7879 = vpack.c.b16 %v6727, %v6711
    %v7880 = vpack.c.b16 %v6728, %v6712
    %v7881 = vpack.c.b16 %v6745, %v6729
    %v7882 = vpack.c.b16 %v6746, %v6730
    %v7883 = vpack.c.b16 %v6747, %v6731
    %v7884 = vpack.c.b16 %v6748, %v6732
    %v7885 = vpack.c.b16 %v6749, %v6733
    %v7886 = vpack.c.b16 %v6750, %v6734
    %v7887 = vpack.c.b16 %v6751, %v6735
    %v7888 = vpack.c.b16 %v6752, %v6736
    %v7889 = vpack.c.b16 %v6753, %v6737
    %v7890 = vpack.c.b16 %v6754, %v6738
    %v7891 = vpack.c.b16 %v6755, %v6739
    %v7892 = vpack.c.b16 %v6756, %v6740
    %v7893 = vpack.c.b16 %v6757, %v6741
    %v7894 = vpack.c.b16 %v6758, %v6742
    %v7895 = vpack.c.b16 %v6759, %v6743
    %v7896 = vpack.c.b16 %v6760, %v6744
    %v7897 = vpack.c.b16 %v6777, %v6761
    %v7898 = vpack.c.b16 %v6778, %v6762
    %v7899 = vpack.c.b16 %v6779, %v6763
    %v7900 = vpack.c.b16 %v6780, %v6764
    %v7901 = vpack.c.b16 %v6781, %v6765
    %v7902 = vpack.c.b16 %v6782, %v6766
    %v7903 = vpack.c.b16 %v6783, %v6767
    %v7904 = vpack.c.b16 %v6784, %v6768
    %v7905 = vpack.c.b16 %v6785, %v6769
    %v7906 = vpack.c.b16 %v6786, %v6770
    %v7907 = vpack.c.b16 %v6787, %v6771
    %v7908 = vpack.c.b16 %v6788, %v6772
    %v7909 = vpack.c.b16 %v6789, %v6773
    %v7910 = vpack.c.b16 %v6790, %v6774
    %v7911 = vpack.c.b16 %v6791, %v6775
    %v7912 = vpack.c.b16 %v6792, %v6776
    %v7913 = vpack.c.b16 %v6809, %v6793
    %v7914 = vpack.c.b16 %v6810, %v6794
    %v7915 = vpack.c.b16 %v6811, %v6795
    %v7916 = vpack.c.b16 %v6812, %v6796
    %v7917 = vpack.c.b16 %v6813, %v6797
    %v7918 = vpack.c.b16 %v6814, %v6798
    %v7919 = vpack.c.b16 %v6815, %v6799
    %v7920 = vpack.c.b16 %v6816, %v6800
    %v7921 = vpack.c.b16 %v6817, %v6801
    %v7922 = vpack.c.b16 %v6818, %v6802
    %v7923 = vpack.c.b16 %v6819, %v6803
    %v7924 = vpack.c.b16 %v6820, %v6804
    %v7925 = vpack.c.b16 %v6821, %v6805
    %v7926 = vpack.c.b16 %v6822, %v6806
    %v7927 = vpack.c.b16 %v6823, %v6807
    %v7928 = vpack.c.b16 %v6824, %v6808
    %v7929 = vpack.c.b16 %v6841, %v6825
    %v7930 = vpack.c.b16 %v6842, %v6826
    %v7931 = vpack.c.b16 %v6843, %v6827
    %v7932 = vpack.c.b16 %v6844, %v6828
    %v7933 = vpack.c.b16 %v6845, %v6829
    %v7934 = vpack.c.b16 %v6846, %v6830
    %v7935 = vpack.c.b16 %v6847, %v6831
    %v7936 = vpack.c.b16 %v6848, %v6832
    %v7937 = vpack.c.b16 %v6849, %v6833
    %v7938 = vpack.c.b16 %v6850, %v6834
    %v7939 = vpack.c.b16 %v6851, %v6835
    %v7940 = vpack.c.b16 %v6852, %v6836
    %v7941 = vpack.c.b16 %v6853, %v6837
    %v7942 = vpack.c.b16 %v6854, %v6838
    %v7943 = vpack.c.b16 %v6855, %v6839
    %v7944 = vpack.c.b16 %v6856, %v6840
    %v7945 = vpack.c.b16 %v6873, %v6857
    %v7946 = vpack.c.b16 %v6874, %v6858
    %v7947 = vpack.c.b16 %v6875, %v6859
    %v7948 = vpack.c.b16 %v6876, %v6860
    %v7949 = vpack.c.b16 %v6877, %v6861
    %v7950 = vpack.c.b16 %v6878, %v6862
    %v7951 = vpack.c.b16 %v6879, %v6863
    %v7952 = vpack.c.b16 %v6880, %v6864
    %v7953 = vpack.c.b16 %v6881, %v6865
    %v7954 = vpack.c.b16 %v6882, %v6866
    %v7955 = vpack.c.b16 %v6883, %v6867
    %v7956 = vpack.c.b16 %v6884, %v6868
    %v7957 = vpack.c.b16 %v6885, %v6869
    %v7958 = vpack.c.b16 %v6886, %v6870
    %v7959 = vpack.c.b16 %v6887, %v6871
    %v7960 = vpack.c.b16 %v6888, %v6872
    %v7961 = vpack.c.b16 %v6905, %v6889
    %v7962 = vpack.c.b16 %v6906, %v6890
    %v7963 = vpack.c.b16 %v6907, %v6891
    %v7964 = vpack.c.b16 %v6908, %v6892
    %v7965 = vpack.c.b16 %v6909, %v6893
    %v7966 = vpack.c.b16 %v6910, %v6894
    %v7967 = vpack.c.b16 %v6911, %v6895
    %v7968 = vpack.c.b16 %v6912, %v6896
    %v7969 = vpack.c.b16 %v6913, %v6897
    %v7970 = vpack.c.b16 %v6914, %v6898
    %v7971 = vpack.c.b16 %v6915, %v6899
    %v7972 = vpack.c.b16 %v6916, %v6900
    %v7973 = vpack.c.b16 %v6917, %v6901
    %v7974 = vpack.c.b16 %v6918, %v6902
    %v7975 = vpack.c.b16 %v6919, %v6903
    %v7976 = vpack.c.b16 %v6920, %v6904
    %v7977 = vpack.c.b16 %v6937, %v6921
    %v7978 = vpack.c.b16 %v6938, %v6922
    %v7979 = vpack.c.b16 %v6939, %v6923
    %v7980 = vpack.c.b16 %v6940, %v6924
    %v7981 = vpack.c.b16 %v6941, %v6925
    %v7982 = vpack.c.b16 %v6942, %v6926
    %v7983 = vpack.c.b16 %v6943, %v6927
    %v7984 = vpack.c.b16 %v6944, %v6928
    %v7985 = vpack.c.b16 %v6945, %v6929
    %v7986 = vpack.c.b16 %v6946, %v6930
    %v7987 = vpack.c.b16 %v6947, %v6931
    %v7988 = vpack.c.b16 %v6948, %v6932
    %v7989 = vpack.c.b16 %v6949, %v6933
    %v7990 = vpack.c.b16 %v6950, %v6934
    %v7991 = vpack.c.b16 %v6951, %v6935
    %v7992 = vpack.c.b16 %v6952, %v6936
    %v7993 = vpack.c.b16 %v6969, %v6953
    %v7994 = vpack.c.b16 %v6970, %v6954
    %v7995 = vpack.c.b16 %v6971, %v6955
    %v7996 = vpack.c.b16 %v6972, %v6956
    %v7997 = vpack.c.b16 %v6973, %v6957
    %v7998 = vpack.c.b16 %v6974, %v6958
    %v7999 = vpack.c.b16 %v6975, %v6959
    %v8000 = vpack.c.b16 %v6976, %v6960
    %v8001 = vpack.c.b16 %v6977, %v6961
    %v8002 = vpack.c.b16 %v6978, %v6962
    %v8003 = vpack.c.b16 %v6979, %v6963
    %v8004 = vpack.c.b16 %v6980, %v6964
    %v8005 = vpack.c.b16 %v6981, %v6965
    %v8006 = vpack.c.b16 %v6982, %v6966
    %v8007 = vpack.c.b16 %v6983, %v6967
    %v8008 = vpack.c.b16 %v6984, %v6968
    %9033 = vmatpush.bf16.msra.mxu0 %v7097
    %9034 = vmatpush.bf16.msra.mxu0 %v7081
    %9035 = vmatpush.bf16.msra.mxu0 %v7065
    %9036 = vmatpush.bf16.msra.mxu0 %v7049
    %9037 = vmatpush.bf16.msra.mxu0 %v7033
    %9038 = vmatpush.bf16.msra.mxu0 %v7017
    %9039 = vmatpush.bf16.msra.mxu0 %v7001
    %9040 = vmatpush.bf16.msra.mxu0 %v6985
    %9041 = vmatmul.bf16.gmra.mxu0 %v2845
    %v9042 = vpop.f32.mrf.mxu0
    %v9043 = vadd.f32 %v3881, %v9042
    %v9044 = vpop.f32.mrf.mxu0
    %v9045 = vadd.f32 %v3881, %v9044
    %9046 = vdwg.mxu0
    %9047 = vmatpush.bf16.msra.mxu0 %v7225
    %9048 = vmatpush.bf16.msra.mxu0 %v7209
    %9049 = vmatpush.bf16.msra.mxu0 %v7193
    %9050 = vmatpush.bf16.msra.mxu0 %v7177
    %9051 = vmatpush.bf16.msra.mxu0 %v7161
    %9052 = vmatpush.bf16.msra.mxu0 %v7145
    %9053 = vmatpush.bf16.msra.mxu0 %v7129
    %9054 = vmatpush.bf16.msra.mxu0 %v7113
    %9055 = vmatmul.bf16.gmra.mxu0 %v2846
    %v9056 = vpop.f32.mrf.mxu0
    %v9057 = vadd.f32 %v9043, %v9056
    %v9058 = vpop.f32.mrf.mxu0
    %v9059 = vadd.f32 %v9045, %v9058
    %9060 = vdwg.mxu0
    %9061 = vmatpush.bf16.msra.mxu0 %v7353
    %9062 = vmatpush.bf16.msra.mxu0 %v7337
    %9063 = vmatpush.bf16.msra.mxu0 %v7321
    %9064 = vmatpush.bf16.msra.mxu0 %v7305
    %9065 = vmatpush.bf16.msra.mxu0 %v7289
    %9066 = vmatpush.bf16.msra.mxu0 %v7273
    %9067 = vmatpush.bf16.msra.mxu0 %v7257
    %9068 = vmatpush.bf16.msra.mxu0 %v7241
    %9069 = vmatmul.bf16.gmra.mxu0 %v2847
    %v9070 = vpop.f32.mrf.mxu0
    %v9071 = vadd.f32 %v9057, %v9070
    %v9072 = vpop.f32.mrf.mxu0
    %v9073 = vadd.f32 %v9059, %v9072
    %9074 = vdwg.mxu0
    %9075 = vmatpush.bf16.msra.mxu0 %v7481
    %9076 = vmatpush.bf16.msra.mxu0 %v7465
    %9077 = vmatpush.bf16.msra.mxu0 %v7449
    %9078 = vmatpush.bf16.msra.mxu0 %v7433
    %9079 = vmatpush.bf16.msra.mxu0 %v7417
    %9080 = vmatpush.bf16.msra.mxu0 %v7401
    %9081 = vmatpush.bf16.msra.mxu0 %v7385
    %9082 = vmatpush.bf16.msra.mxu0 %v7369
    %9083 = vmatmul.bf16.gmra.mxu0 %v2848
    %v9084 = vpop.f32.mrf.mxu0
    %v9085 = vadd.f32 %v9071, %v9084
    %v9086 = vpop.f32.mrf.mxu0
    %v9087 = vadd.f32 %v9073, %v9086
    %9088 = vdwg.mxu0
    %9089 = vmatpush.bf16.msra.mxu0 %v7609
    %9090 = vmatpush.bf16.msra.mxu0 %v7593
    %9091 = vmatpush.bf16.msra.mxu0 %v7577
    %9092 = vmatpush.bf16.msra.mxu0 %v7561
    %9093 = vmatpush.bf16.msra.mxu0 %v7545
    %9094 = vmatpush.bf16.msra.mxu0 %v7529
    %9095 = vmatpush.bf16.msra.mxu0 %v7513
    %9096 = vmatpush.bf16.msra.mxu0 %v7497
    %9097 = vmatmul.bf16.gmra.mxu0 %v2849
    %v9098 = vpop.f32.mrf.mxu0
    %v9099 = vadd.f32 %v9085, %v9098
    %v9100 = vpop.f32.mrf.mxu0
    %v9101 = vadd.f32 %v9087, %v9100
    %9102 = vdwg.mxu0
    %9103 = vmatpush.bf16.msra.mxu0 %v7737
    %9104 = vmatpush.bf16.msra.mxu0 %v7721
    %9105 = vmatpush.bf16.msra.mxu0 %v7705
    %9106 = vmatpush.bf16.msra.mxu0 %v7689
    %9107 = vmatpush.bf16.msra.mxu0 %v7673
    %9108 = vmatpush.bf16.msra.mxu0 %v7657
    %9109 = vmatpush.bf16.msra.mxu0 %v7641
    %9110 = vmatpush.bf16.msra.mxu0 %v7625
    %9111 = vmatmul.bf16.gmra.mxu0 %v2850
    %v9112 = vpop.f32.mrf.mxu0
    %v9113 = vadd.f32 %v9099, %v9112
    %v9114 = vpop.f32.mrf.mxu0
    %v9115 = vadd.f32 %v9101, %v9114
    %9116 = vdwg.mxu0
    %9117 = vmatpush.bf16.msra.mxu0 %v7865
    %9118 = vmatpush.bf16.msra.mxu0 %v7849
    %9119 = vmatpush.bf16.msra.mxu0 %v7833
    %9120 = vmatpush.bf16.msra.mxu0 %v7817
    %9121 = vmatpush.bf16.msra.mxu0 %v7801
    %9122 = vmatpush.bf16.msra.mxu0 %v7785
    %9123 = vmatpush.bf16.msra.mxu0 %v7769
    %9124 = vmatpush.bf16.msra.mxu0 %v7753
    %9125 = vmatmul.bf16.gmra.mxu0 %v2851
    %v9126 = vpop.f32.mrf.mxu0
    %v9127 = vadd.f32 %v9113, %v9126
    %v9128 = vpop.f32.mrf.mxu0
    %v9129 = vadd.f32 %v9115, %v9128
    %9130 = vdwg.mxu0
    %9131 = vmatpush.bf16.msra.mxu0 %v7993
    %9132 = vmatpush.bf16.msra.mxu0 %v7977
    %9133 = vmatpush.bf16.msra.mxu0 %v7961
    %9134 = vmatpush.bf16.msra.mxu0 %v7945
    %9135 = vmatpush.bf16.msra.mxu0 %v7929
    %9136 = vmatpush.bf16.msra.mxu0 %v7913
    %9137 = vmatpush.bf16.msra.mxu0 %v7897
    %9138 = vmatpush.bf16.msra.mxu0 %v7881
    %9139 = vmatmul.bf16.gmra.mxu0 %v2852
    %v9140 = vpop.f32.mrf.mxu0
    %v9141 = vadd.f32 %v9127, %v9140
    %v9142 = vpop.f32.mrf.mxu0
    %v9143 = vadd.f32 %v9129, %v9142
    %9144 = vdwg.mxu0
    %9145 = vmatpush.bf16.msra.mxu0 %v7098
    %9146 = vmatpush.bf16.msra.mxu0 %v7082
    %9147 = vmatpush.bf16.msra.mxu0 %v7066
    %9148 = vmatpush.bf16.msra.mxu0 %v7050
    %9149 = vmatpush.bf16.msra.mxu0 %v7034
    %9150 = vmatpush.bf16.msra.mxu0 %v7018
    %9151 = vmatpush.bf16.msra.mxu0 %v7002
    %9152 = vmatpush.bf16.msra.mxu0 %v6986
    %9153 = vmatmul.bf16.gmra.mxu0 %v2845
    %v9154 = vpop.f32.mrf.mxu0
    %v9155 = vadd.f32 %v3882, %v9154
    %v9156 = vpop.f32.mrf.mxu0
    %v9157 = vadd.f32 %v3882, %v9156
    %9158 = vdwg.mxu0
    %9159 = vmatpush.bf16.msra.mxu0 %v7226
    %9160 = vmatpush.bf16.msra.mxu0 %v7210
    %9161 = vmatpush.bf16.msra.mxu0 %v7194
    %9162 = vmatpush.bf16.msra.mxu0 %v7178
    %9163 = vmatpush.bf16.msra.mxu0 %v7162
    %9164 = vmatpush.bf16.msra.mxu0 %v7146
    %9165 = vmatpush.bf16.msra.mxu0 %v7130
    %9166 = vmatpush.bf16.msra.mxu0 %v7114
    %9167 = vmatmul.bf16.gmra.mxu0 %v2846
    %v9168 = vpop.f32.mrf.mxu0
    %v9169 = vadd.f32 %v9155, %v9168
    %v9170 = vpop.f32.mrf.mxu0
    %v9171 = vadd.f32 %v9157, %v9170
    %9172 = vdwg.mxu0
    %9173 = vmatpush.bf16.msra.mxu0 %v7354
    %9174 = vmatpush.bf16.msra.mxu0 %v7338
    %9175 = vmatpush.bf16.msra.mxu0 %v7322
    %9176 = vmatpush.bf16.msra.mxu0 %v7306
    %9177 = vmatpush.bf16.msra.mxu0 %v7290
    %9178 = vmatpush.bf16.msra.mxu0 %v7274
    %9179 = vmatpush.bf16.msra.mxu0 %v7258
    %9180 = vmatpush.bf16.msra.mxu0 %v7242
    %9181 = vmatmul.bf16.gmra.mxu0 %v2847
    %v9182 = vpop.f32.mrf.mxu0
    %v9183 = vadd.f32 %v9169, %v9182
    %v9184 = vpop.f32.mrf.mxu0
    %v9185 = vadd.f32 %v9171, %v9184
    %9186 = vdwg.mxu0
    %9187 = vmatpush.bf16.msra.mxu0 %v7482
    %9188 = vmatpush.bf16.msra.mxu0 %v7466
    %9189 = vmatpush.bf16.msra.mxu0 %v7450
    %9190 = vmatpush.bf16.msra.mxu0 %v7434
    %9191 = vmatpush.bf16.msra.mxu0 %v7418
    %9192 = vmatpush.bf16.msra.mxu0 %v7402
    %9193 = vmatpush.bf16.msra.mxu0 %v7386
    %9194 = vmatpush.bf16.msra.mxu0 %v7370
    %9195 = vmatmul.bf16.gmra.mxu0 %v2848
    %v9196 = vpop.f32.mrf.mxu0
    %v9197 = vadd.f32 %v9183, %v9196
    %v9198 = vpop.f32.mrf.mxu0
    %v9199 = vadd.f32 %v9185, %v9198
    %9200 = vdwg.mxu0
    %9201 = vmatpush.bf16.msra.mxu0 %v7610
    %9202 = vmatpush.bf16.msra.mxu0 %v7594
    %9203 = vmatpush.bf16.msra.mxu0 %v7578
    %9204 = vmatpush.bf16.msra.mxu0 %v7562
    %9205 = vmatpush.bf16.msra.mxu0 %v7546
    %9206 = vmatpush.bf16.msra.mxu0 %v7530
    %9207 = vmatpush.bf16.msra.mxu0 %v7514
    %9208 = vmatpush.bf16.msra.mxu0 %v7498
    %9209 = vmatmul.bf16.gmra.mxu0 %v2849
    %v9210 = vpop.f32.mrf.mxu0
    %v9211 = vadd.f32 %v9197, %v9210
    %v9212 = vpop.f32.mrf.mxu0
    %v9213 = vadd.f32 %v9199, %v9212
    %9214 = vdwg.mxu0
    %9215 = vmatpush.bf16.msra.mxu0 %v7738
    %9216 = vmatpush.bf16.msra.mxu0 %v7722
    %9217 = vmatpush.bf16.msra.mxu0 %v7706
    %9218 = vmatpush.bf16.msra.mxu0 %v7690
    %9219 = vmatpush.bf16.msra.mxu0 %v7674
    %9220 = vmatpush.bf16.msra.mxu0 %v7658
    %9221 = vmatpush.bf16.msra.mxu0 %v7642
    %9222 = vmatpush.bf16.msra.mxu0 %v7626
    %9223 = vmatmul.bf16.gmra.mxu0 %v2850
    %v9224 = vpop.f32.mrf.mxu0
    %v9225 = vadd.f32 %v9211, %v9224
    %v9226 = vpop.f32.mrf.mxu0
    %v9227 = vadd.f32 %v9213, %v9226
    %9228 = vdwg.mxu0
    %9229 = vmatpush.bf16.msra.mxu0 %v7866
    %9230 = vmatpush.bf16.msra.mxu0 %v7850
    %9231 = vmatpush.bf16.msra.mxu0 %v7834
    %9232 = vmatpush.bf16.msra.mxu0 %v7818
    %9233 = vmatpush.bf16.msra.mxu0 %v7802
    %9234 = vmatpush.bf16.msra.mxu0 %v7786
    %9235 = vmatpush.bf16.msra.mxu0 %v7770
    %9236 = vmatpush.bf16.msra.mxu0 %v7754
    %9237 = vmatmul.bf16.gmra.mxu0 %v2851
    %v9238 = vpop.f32.mrf.mxu0
    %v9239 = vadd.f32 %v9225, %v9238
    %v9240 = vpop.f32.mrf.mxu0
    %v9241 = vadd.f32 %v9227, %v9240
    %9242 = vdwg.mxu0
    %9243 = vmatpush.bf16.msra.mxu0 %v7994
    %9244 = vmatpush.bf16.msra.mxu0 %v7978
    %9245 = vmatpush.bf16.msra.mxu0 %v7962
    %9246 = vmatpush.bf16.msra.mxu0 %v7946
    %9247 = vmatpush.bf16.msra.mxu0 %v7930
    %9248 = vmatpush.bf16.msra.mxu0 %v7914
    %9249 = vmatpush.bf16.msra.mxu0 %v7898
    %9250 = vmatpush.bf16.msra.mxu0 %v7882
    %9251 = vmatmul.bf16.gmra.mxu0 %v2852
    %v9252 = vpop.f32.mrf.mxu0
    %v9253 = vadd.f32 %v9239, %v9252
    %v9254 = vpop.f32.mrf.mxu0
    %v9255 = vadd.f32 %v9241, %v9254
    %9256 = vdwg.mxu0
    %9257 = vmatpush.bf16.msra.mxu0 %v7099
    %9258 = vmatpush.bf16.msra.mxu0 %v7083
    %9259 = vmatpush.bf16.msra.mxu0 %v7067
    %9260 = vmatpush.bf16.msra.mxu0 %v7051
    %9261 = vmatpush.bf16.msra.mxu0 %v7035
    %9262 = vmatpush.bf16.msra.mxu0 %v7019
    %9263 = vmatpush.bf16.msra.mxu0 %v7003
    %9264 = vmatpush.bf16.msra.mxu0 %v6987
    %9265 = vmatmul.bf16.gmra.mxu0 %v2845
    %v9266 = vpop.f32.mrf.mxu0
    %v9267 = vadd.f32 %v3883, %v9266
    %v9268 = vpop.f32.mrf.mxu0
    %v9269 = vadd.f32 %v3883, %v9268
    %9270 = vdwg.mxu0
    %9271 = vmatpush.bf16.msra.mxu0 %v7227
    %9272 = vmatpush.bf16.msra.mxu0 %v7211
    %9273 = vmatpush.bf16.msra.mxu0 %v7195
    %9274 = vmatpush.bf16.msra.mxu0 %v7179
    %9275 = vmatpush.bf16.msra.mxu0 %v7163
    %9276 = vmatpush.bf16.msra.mxu0 %v7147
    %9277 = vmatpush.bf16.msra.mxu0 %v7131
    %9278 = vmatpush.bf16.msra.mxu0 %v7115
    %9279 = vmatmul.bf16.gmra.mxu0 %v2846
    %v9280 = vpop.f32.mrf.mxu0
    %v9281 = vadd.f32 %v9267, %v9280
    %v9282 = vpop.f32.mrf.mxu0
    %v9283 = vadd.f32 %v9269, %v9282
    %9284 = vdwg.mxu0
    %9285 = vmatpush.bf16.msra.mxu0 %v7355
    %9286 = vmatpush.bf16.msra.mxu0 %v7339
    %9287 = vmatpush.bf16.msra.mxu0 %v7323
    %9288 = vmatpush.bf16.msra.mxu0 %v7307
    %9289 = vmatpush.bf16.msra.mxu0 %v7291
    %9290 = vmatpush.bf16.msra.mxu0 %v7275
    %9291 = vmatpush.bf16.msra.mxu0 %v7259
    %9292 = vmatpush.bf16.msra.mxu0 %v7243
    %9293 = vmatmul.bf16.gmra.mxu0 %v2847
    %v9294 = vpop.f32.mrf.mxu0
    %v9295 = vadd.f32 %v9281, %v9294
    %v9296 = vpop.f32.mrf.mxu0
    %v9297 = vadd.f32 %v9283, %v9296
    %9298 = vdwg.mxu0
    %9299 = vmatpush.bf16.msra.mxu0 %v7483
    %9300 = vmatpush.bf16.msra.mxu0 %v7467
    %9301 = vmatpush.bf16.msra.mxu0 %v7451
    %9302 = vmatpush.bf16.msra.mxu0 %v7435
    %9303 = vmatpush.bf16.msra.mxu0 %v7419
    %9304 = vmatpush.bf16.msra.mxu0 %v7403
    %9305 = vmatpush.bf16.msra.mxu0 %v7387
    %9306 = vmatpush.bf16.msra.mxu0 %v7371
    %9307 = vmatmul.bf16.gmra.mxu0 %v2848
    %v9308 = vpop.f32.mrf.mxu0
    %v9309 = vadd.f32 %v9295, %v9308
    %v9310 = vpop.f32.mrf.mxu0
    %v9311 = vadd.f32 %v9297, %v9310
    %9312 = vdwg.mxu0
    %9313 = vmatpush.bf16.msra.mxu0 %v7611
    %9314 = vmatpush.bf16.msra.mxu0 %v7595
    %9315 = vmatpush.bf16.msra.mxu0 %v7579
    %9316 = vmatpush.bf16.msra.mxu0 %v7563
    %9317 = vmatpush.bf16.msra.mxu0 %v7547
    %9318 = vmatpush.bf16.msra.mxu0 %v7531
    %9319 = vmatpush.bf16.msra.mxu0 %v7515
    %9320 = vmatpush.bf16.msra.mxu0 %v7499
    %9321 = vmatmul.bf16.gmra.mxu0 %v2849
    %v9322 = vpop.f32.mrf.mxu0
    %v9323 = vadd.f32 %v9309, %v9322
    %v9324 = vpop.f32.mrf.mxu0
    %v9325 = vadd.f32 %v9311, %v9324
    %9326 = vdwg.mxu0
    %9327 = vmatpush.bf16.msra.mxu0 %v7739
    %9328 = vmatpush.bf16.msra.mxu0 %v7723
    %9329 = vmatpush.bf16.msra.mxu0 %v7707
    %9330 = vmatpush.bf16.msra.mxu0 %v7691
    %9331 = vmatpush.bf16.msra.mxu0 %v7675
    %9332 = vmatpush.bf16.msra.mxu0 %v7659
    %9333 = vmatpush.bf16.msra.mxu0 %v7643
    %9334 = vmatpush.bf16.msra.mxu0 %v7627
    %9335 = vmatmul.bf16.gmra.mxu0 %v2850
    %v9336 = vpop.f32.mrf.mxu0
    %v9337 = vadd.f32 %v9323, %v9336
    %v9338 = vpop.f32.mrf.mxu0
    %v9339 = vadd.f32 %v9325, %v9338
    %9340 = vdwg.mxu0
    %9341 = vmatpush.bf16.msra.mxu0 %v7867
    %9342 = vmatpush.bf16.msra.mxu0 %v7851
    %9343 = vmatpush.bf16.msra.mxu0 %v7835
    %9344 = vmatpush.bf16.msra.mxu0 %v7819
    %9345 = vmatpush.bf16.msra.mxu0 %v7803
    %9346 = vmatpush.bf16.msra.mxu0 %v7787
    %9347 = vmatpush.bf16.msra.mxu0 %v7771
    %9348 = vmatpush.bf16.msra.mxu0 %v7755
    %9349 = vmatmul.bf16.gmra.mxu0 %v2851
    %v9350 = vpop.f32.mrf.mxu0
    %v9351 = vadd.f32 %v9337, %v9350
    %v9352 = vpop.f32.mrf.mxu0
    %v9353 = vadd.f32 %v9339, %v9352
    %9354 = vdwg.mxu0
    %9355 = vmatpush.bf16.msra.mxu0 %v7995
    %9356 = vmatpush.bf16.msra.mxu0 %v7979
    %9357 = vmatpush.bf16.msra.mxu0 %v7963
    %9358 = vmatpush.bf16.msra.mxu0 %v7947
    %9359 = vmatpush.bf16.msra.mxu0 %v7931
    %9360 = vmatpush.bf16.msra.mxu0 %v7915
    %9361 = vmatpush.bf16.msra.mxu0 %v7899
    %9362 = vmatpush.bf16.msra.mxu0 %v7883
    %9363 = vmatmul.bf16.gmra.mxu0 %v2852
    %v9364 = vpop.f32.mrf.mxu0
    %v9365 = vadd.f32 %v9351, %v9364
    %v9366 = vpop.f32.mrf.mxu0
    %v9367 = vadd.f32 %v9353, %v9366
    %9368 = vdwg.mxu0
    %9369 = vmatpush.bf16.msra.mxu0 %v7100
    %9370 = vmatpush.bf16.msra.mxu0 %v7084
    %9371 = vmatpush.bf16.msra.mxu0 %v7068
    %9372 = vmatpush.bf16.msra.mxu0 %v7052
    %9373 = vmatpush.bf16.msra.mxu0 %v7036
    %9374 = vmatpush.bf16.msra.mxu0 %v7020
    %9375 = vmatpush.bf16.msra.mxu0 %v7004
    %9376 = vmatpush.bf16.msra.mxu0 %v6988
    %9377 = vmatmul.bf16.gmra.mxu0 %v2845
    %v9378 = vpop.f32.mrf.mxu0
    %v9379 = vadd.f32 %v3884, %v9378
    %v9380 = vpop.f32.mrf.mxu0
    %v9381 = vadd.f32 %v3884, %v9380
    %9382 = vdwg.mxu0
    %9383 = vmatpush.bf16.msra.mxu0 %v7228
    %9384 = vmatpush.bf16.msra.mxu0 %v7212
    %9385 = vmatpush.bf16.msra.mxu0 %v7196
    %9386 = vmatpush.bf16.msra.mxu0 %v7180
    %9387 = vmatpush.bf16.msra.mxu0 %v7164
    %9388 = vmatpush.bf16.msra.mxu0 %v7148
    %9389 = vmatpush.bf16.msra.mxu0 %v7132
    %9390 = vmatpush.bf16.msra.mxu0 %v7116
    %9391 = vmatmul.bf16.gmra.mxu0 %v2846
    %v9392 = vpop.f32.mrf.mxu0
    %v9393 = vadd.f32 %v9379, %v9392
    %v9394 = vpop.f32.mrf.mxu0
    %v9395 = vadd.f32 %v9381, %v9394
    %9396 = vdwg.mxu0
    %9397 = vmatpush.bf16.msra.mxu0 %v7356
    %9398 = vmatpush.bf16.msra.mxu0 %v7340
    %9399 = vmatpush.bf16.msra.mxu0 %v7324
    %9400 = vmatpush.bf16.msra.mxu0 %v7308
    %9401 = vmatpush.bf16.msra.mxu0 %v7292
    %9402 = vmatpush.bf16.msra.mxu0 %v7276
    %9403 = vmatpush.bf16.msra.mxu0 %v7260
    %9404 = vmatpush.bf16.msra.mxu0 %v7244
    %9405 = vmatmul.bf16.gmra.mxu0 %v2847
    %v9406 = vpop.f32.mrf.mxu0
    %v9407 = vadd.f32 %v9393, %v9406
    %v9408 = vpop.f32.mrf.mxu0
    %v9409 = vadd.f32 %v9395, %v9408
    %9410 = vdwg.mxu0
    %9411 = vmatpush.bf16.msra.mxu0 %v7484
    %9412 = vmatpush.bf16.msra.mxu0 %v7468
    %9413 = vmatpush.bf16.msra.mxu0 %v7452
    %9414 = vmatpush.bf16.msra.mxu0 %v7436
    %9415 = vmatpush.bf16.msra.mxu0 %v7420
    %9416 = vmatpush.bf16.msra.mxu0 %v7404
    %9417 = vmatpush.bf16.msra.mxu0 %v7388
    %9418 = vmatpush.bf16.msra.mxu0 %v7372
    %9419 = vmatmul.bf16.gmra.mxu0 %v2848
    %v9420 = vpop.f32.mrf.mxu0
    %v9421 = vadd.f32 %v9407, %v9420
    %v9422 = vpop.f32.mrf.mxu0
    %v9423 = vadd.f32 %v9409, %v9422
    %9424 = vdwg.mxu0
    %9425 = vmatpush.bf16.msra.mxu0 %v7612
    %9426 = vmatpush.bf16.msra.mxu0 %v7596
    %9427 = vmatpush.bf16.msra.mxu0 %v7580
    %9428 = vmatpush.bf16.msra.mxu0 %v7564
    %9429 = vmatpush.bf16.msra.mxu0 %v7548
    %9430 = vmatpush.bf16.msra.mxu0 %v7532
    %9431 = vmatpush.bf16.msra.mxu0 %v7516
    %9432 = vmatpush.bf16.msra.mxu0 %v7500
    %9433 = vmatmul.bf16.gmra.mxu0 %v2849
    %v9434 = vpop.f32.mrf.mxu0
    %v9435 = vadd.f32 %v9421, %v9434
    %v9436 = vpop.f32.mrf.mxu0
    %v9437 = vadd.f32 %v9423, %v9436
    %9438 = vdwg.mxu0
    %9439 = vmatpush.bf16.msra.mxu0 %v7740
    %9440 = vmatpush.bf16.msra.mxu0 %v7724
    %9441 = vmatpush.bf16.msra.mxu0 %v7708
    %9442 = vmatpush.bf16.msra.mxu0 %v7692
    %9443 = vmatpush.bf16.msra.mxu0 %v7676
    %9444 = vmatpush.bf16.msra.mxu0 %v7660
    %9445 = vmatpush.bf16.msra.mxu0 %v7644
    %9446 = vmatpush.bf16.msra.mxu0 %v7628
    %9447 = vmatmul.bf16.gmra.mxu0 %v2850
    %v9448 = vpop.f32.mrf.mxu0
    %v9449 = vadd.f32 %v9435, %v9448
    %v9450 = vpop.f32.mrf.mxu0
    %v9451 = vadd.f32 %v9437, %v9450
    %9452 = vdwg.mxu0
    %9453 = vmatpush.bf16.msra.mxu0 %v7868
    %9454 = vmatpush.bf16.msra.mxu0 %v7852
    %9455 = vmatpush.bf16.msra.mxu0 %v7836
    %9456 = vmatpush.bf16.msra.mxu0 %v7820
    %9457 = vmatpush.bf16.msra.mxu0 %v7804
    %9458 = vmatpush.bf16.msra.mxu0 %v7788
    %9459 = vmatpush.bf16.msra.mxu0 %v7772
    %9460 = vmatpush.bf16.msra.mxu0 %v7756
    %9461 = vmatmul.bf16.gmra.mxu0 %v2851
    %v9462 = vpop.f32.mrf.mxu0
    %v9463 = vadd.f32 %v9449, %v9462
    %v9464 = vpop.f32.mrf.mxu0
    %v9465 = vadd.f32 %v9451, %v9464
    %9466 = vdwg.mxu0
    %9467 = vmatpush.bf16.msra.mxu0 %v7996
    %9468 = vmatpush.bf16.msra.mxu0 %v7980
    %9469 = vmatpush.bf16.msra.mxu0 %v7964
    %9470 = vmatpush.bf16.msra.mxu0 %v7948
    %9471 = vmatpush.bf16.msra.mxu0 %v7932
    %9472 = vmatpush.bf16.msra.mxu0 %v7916
    %9473 = vmatpush.bf16.msra.mxu0 %v7900
    %9474 = vmatpush.bf16.msra.mxu0 %v7884
    %9475 = vmatmul.bf16.gmra.mxu0 %v2852
    %v9476 = vpop.f32.mrf.mxu0
    %v9477 = vadd.f32 %v9463, %v9476
    %v9478 = vpop.f32.mrf.mxu0
    %v9479 = vadd.f32 %v9465, %v9478
    %9480 = vdwg.mxu0
    %9481 = vmatpush.bf16.msra.mxu0 %v7101
    %9482 = vmatpush.bf16.msra.mxu0 %v7085
    %9483 = vmatpush.bf16.msra.mxu0 %v7069
    %9484 = vmatpush.bf16.msra.mxu0 %v7053
    %9485 = vmatpush.bf16.msra.mxu0 %v7037
    %9486 = vmatpush.bf16.msra.mxu0 %v7021
    %9487 = vmatpush.bf16.msra.mxu0 %v7005
    %9488 = vmatpush.bf16.msra.mxu0 %v6989
    %9489 = vmatmul.bf16.gmra.mxu0 %v2845
    %v9490 = vpop.f32.mrf.mxu0
    %v9491 = vadd.f32 %v3885, %v9490
    %v9492 = vpop.f32.mrf.mxu0
    %v9493 = vadd.f32 %v3885, %v9492
    %9494 = vdwg.mxu0
    %9495 = vmatpush.bf16.msra.mxu0 %v7229
    %9496 = vmatpush.bf16.msra.mxu0 %v7213
    %9497 = vmatpush.bf16.msra.mxu0 %v7197
    %9498 = vmatpush.bf16.msra.mxu0 %v7181
    %9499 = vmatpush.bf16.msra.mxu0 %v7165
    %9500 = vmatpush.bf16.msra.mxu0 %v7149
    %9501 = vmatpush.bf16.msra.mxu0 %v7133
    %9502 = vmatpush.bf16.msra.mxu0 %v7117
    %9503 = vmatmul.bf16.gmra.mxu0 %v2846
    %v9504 = vpop.f32.mrf.mxu0
    %v9505 = vadd.f32 %v9491, %v9504
    %v9506 = vpop.f32.mrf.mxu0
    %v9507 = vadd.f32 %v9493, %v9506
    %9508 = vdwg.mxu0
    %9509 = vmatpush.bf16.msra.mxu0 %v7357
    %9510 = vmatpush.bf16.msra.mxu0 %v7341
    %9511 = vmatpush.bf16.msra.mxu0 %v7325
    %9512 = vmatpush.bf16.msra.mxu0 %v7309
    %9513 = vmatpush.bf16.msra.mxu0 %v7293
    %9514 = vmatpush.bf16.msra.mxu0 %v7277
    %9515 = vmatpush.bf16.msra.mxu0 %v7261
    %9516 = vmatpush.bf16.msra.mxu0 %v7245
    %9517 = vmatmul.bf16.gmra.mxu0 %v2847
    %v9518 = vpop.f32.mrf.mxu0
    %v9519 = vadd.f32 %v9505, %v9518
    %v9520 = vpop.f32.mrf.mxu0
    %v9521 = vadd.f32 %v9507, %v9520
    %9522 = vdwg.mxu0
    %9523 = vmatpush.bf16.msra.mxu0 %v7485
    %9524 = vmatpush.bf16.msra.mxu0 %v7469
    %9525 = vmatpush.bf16.msra.mxu0 %v7453
    %9526 = vmatpush.bf16.msra.mxu0 %v7437
    %9527 = vmatpush.bf16.msra.mxu0 %v7421
    %9528 = vmatpush.bf16.msra.mxu0 %v7405
    %9529 = vmatpush.bf16.msra.mxu0 %v7389
    %9530 = vmatpush.bf16.msra.mxu0 %v7373
    %9531 = vmatmul.bf16.gmra.mxu0 %v2848
    %v9532 = vpop.f32.mrf.mxu0
    %v9533 = vadd.f32 %v9519, %v9532
    %v9534 = vpop.f32.mrf.mxu0
    %v9535 = vadd.f32 %v9521, %v9534
    %9536 = vdwg.mxu0
    %9537 = vmatpush.bf16.msra.mxu0 %v7613
    %9538 = vmatpush.bf16.msra.mxu0 %v7597
    %9539 = vmatpush.bf16.msra.mxu0 %v7581
    %9540 = vmatpush.bf16.msra.mxu0 %v7565
    %9541 = vmatpush.bf16.msra.mxu0 %v7549
    %9542 = vmatpush.bf16.msra.mxu0 %v7533
    %9543 = vmatpush.bf16.msra.mxu0 %v7517
    %9544 = vmatpush.bf16.msra.mxu0 %v7501
    %9545 = vmatmul.bf16.gmra.mxu0 %v2849
    %v9546 = vpop.f32.mrf.mxu0
    %v9547 = vadd.f32 %v9533, %v9546
    %v9548 = vpop.f32.mrf.mxu0
    %v9549 = vadd.f32 %v9535, %v9548
    %9550 = vdwg.mxu0
    %9551 = vmatpush.bf16.msra.mxu0 %v7741
    %9552 = vmatpush.bf16.msra.mxu0 %v7725
    %9553 = vmatpush.bf16.msra.mxu0 %v7709
    %9554 = vmatpush.bf16.msra.mxu0 %v7693
    %9555 = vmatpush.bf16.msra.mxu0 %v7677
    %9556 = vmatpush.bf16.msra.mxu0 %v7661
    %9557 = vmatpush.bf16.msra.mxu0 %v7645
    %9558 = vmatpush.bf16.msra.mxu0 %v7629
    %9559 = vmatmul.bf16.gmra.mxu0 %v2850
    %v9560 = vpop.f32.mrf.mxu0
    %v9561 = vadd.f32 %v9547, %v9560
    %v9562 = vpop.f32.mrf.mxu0
    %v9563 = vadd.f32 %v9549, %v9562
    %9564 = vdwg.mxu0
    %9565 = vmatpush.bf16.msra.mxu0 %v7869
    %9566 = vmatpush.bf16.msra.mxu0 %v7853
    %9567 = vmatpush.bf16.msra.mxu0 %v7837
    %9568 = vmatpush.bf16.msra.mxu0 %v7821
    %9569 = vmatpush.bf16.msra.mxu0 %v7805
    %9570 = vmatpush.bf16.msra.mxu0 %v7789
    %9571 = vmatpush.bf16.msra.mxu0 %v7773
    %9572 = vmatpush.bf16.msra.mxu0 %v7757
    %9573 = vmatmul.bf16.gmra.mxu0 %v2851
    %v9574 = vpop.f32.mrf.mxu0
    %v9575 = vadd.f32 %v9561, %v9574
    %v9576 = vpop.f32.mrf.mxu0
    %v9577 = vadd.f32 %v9563, %v9576
    %9578 = vdwg.mxu0
    %9579 = vmatpush.bf16.msra.mxu0 %v7997
    %9580 = vmatpush.bf16.msra.mxu0 %v7981
    %9581 = vmatpush.bf16.msra.mxu0 %v7965
    %9582 = vmatpush.bf16.msra.mxu0 %v7949
    %9583 = vmatpush.bf16.msra.mxu0 %v7933
    %9584 = vmatpush.bf16.msra.mxu0 %v7917
    %9585 = vmatpush.bf16.msra.mxu0 %v7901
    %9586 = vmatpush.bf16.msra.mxu0 %v7885
    %9587 = vmatmul.bf16.gmra.mxu0 %v2852
    %v9588 = vpop.f32.mrf.mxu0
    %v9589 = vadd.f32 %v9575, %v9588
    %v9590 = vpop.f32.mrf.mxu0
    %v9591 = vadd.f32 %v9577, %v9590
    %9592 = vdwg.mxu0
    %9593 = vmatpush.bf16.msra.mxu0 %v7102
    %9594 = vmatpush.bf16.msra.mxu0 %v7086
    %9595 = vmatpush.bf16.msra.mxu0 %v7070
    %9596 = vmatpush.bf16.msra.mxu0 %v7054
    %9597 = vmatpush.bf16.msra.mxu0 %v7038
    %9598 = vmatpush.bf16.msra.mxu0 %v7022
    %9599 = vmatpush.bf16.msra.mxu0 %v7006
    %9600 = vmatpush.bf16.msra.mxu0 %v6990
    %9601 = vmatmul.bf16.gmra.mxu0 %v2845
    %v9602 = vpop.f32.mrf.mxu0
    %v9603 = vadd.f32 %v3886, %v9602
    %v9604 = vpop.f32.mrf.mxu0
    %v9605 = vadd.f32 %v3886, %v9604
    %9606 = vdwg.mxu0
    %9607 = vmatpush.bf16.msra.mxu0 %v7230
    %9608 = vmatpush.bf16.msra.mxu0 %v7214
    %9609 = vmatpush.bf16.msra.mxu0 %v7198
    %9610 = vmatpush.bf16.msra.mxu0 %v7182
    %9611 = vmatpush.bf16.msra.mxu0 %v7166
    %9612 = vmatpush.bf16.msra.mxu0 %v7150
    %9613 = vmatpush.bf16.msra.mxu0 %v7134
    %9614 = vmatpush.bf16.msra.mxu0 %v7118
    %9615 = vmatmul.bf16.gmra.mxu0 %v2846
    %v9616 = vpop.f32.mrf.mxu0
    %v9617 = vadd.f32 %v9603, %v9616
    %v9618 = vpop.f32.mrf.mxu0
    %v9619 = vadd.f32 %v9605, %v9618
    %9620 = vdwg.mxu0
    %9621 = vmatpush.bf16.msra.mxu0 %v7358
    %9622 = vmatpush.bf16.msra.mxu0 %v7342
    %9623 = vmatpush.bf16.msra.mxu0 %v7326
    %9624 = vmatpush.bf16.msra.mxu0 %v7310
    %9625 = vmatpush.bf16.msra.mxu0 %v7294
    %9626 = vmatpush.bf16.msra.mxu0 %v7278
    %9627 = vmatpush.bf16.msra.mxu0 %v7262
    %9628 = vmatpush.bf16.msra.mxu0 %v7246
    %9629 = vmatmul.bf16.gmra.mxu0 %v2847
    %v9630 = vpop.f32.mrf.mxu0
    %v9631 = vadd.f32 %v9617, %v9630
    %v9632 = vpop.f32.mrf.mxu0
    %v9633 = vadd.f32 %v9619, %v9632
    %9634 = vdwg.mxu0
    %9635 = vmatpush.bf16.msra.mxu0 %v7486
    %9636 = vmatpush.bf16.msra.mxu0 %v7470
    %9637 = vmatpush.bf16.msra.mxu0 %v7454
    %9638 = vmatpush.bf16.msra.mxu0 %v7438
    %9639 = vmatpush.bf16.msra.mxu0 %v7422
    %9640 = vmatpush.bf16.msra.mxu0 %v7406
    %9641 = vmatpush.bf16.msra.mxu0 %v7390
    %9642 = vmatpush.bf16.msra.mxu0 %v7374
    %9643 = vmatmul.bf16.gmra.mxu0 %v2848
    %v9644 = vpop.f32.mrf.mxu0
    %v9645 = vadd.f32 %v9631, %v9644
    %v9646 = vpop.f32.mrf.mxu0
    %v9647 = vadd.f32 %v9633, %v9646
    %9648 = vdwg.mxu0
    %9649 = vmatpush.bf16.msra.mxu0 %v7614
    %9650 = vmatpush.bf16.msra.mxu0 %v7598
    %9651 = vmatpush.bf16.msra.mxu0 %v7582
    %9652 = vmatpush.bf16.msra.mxu0 %v7566
    %9653 = vmatpush.bf16.msra.mxu0 %v7550
    %9654 = vmatpush.bf16.msra.mxu0 %v7534
    %9655 = vmatpush.bf16.msra.mxu0 %v7518
    %9656 = vmatpush.bf16.msra.mxu0 %v7502
    %9657 = vmatmul.bf16.gmra.mxu0 %v2849
    %v9658 = vpop.f32.mrf.mxu0
    %v9659 = vadd.f32 %v9645, %v9658
    %v9660 = vpop.f32.mrf.mxu0
    %v9661 = vadd.f32 %v9647, %v9660
    %9662 = vdwg.mxu0
    %9663 = vmatpush.bf16.msra.mxu0 %v7742
    %9664 = vmatpush.bf16.msra.mxu0 %v7726
    %9665 = vmatpush.bf16.msra.mxu0 %v7710
    %9666 = vmatpush.bf16.msra.mxu0 %v7694
    %9667 = vmatpush.bf16.msra.mxu0 %v7678
    %9668 = vmatpush.bf16.msra.mxu0 %v7662
    %9669 = vmatpush.bf16.msra.mxu0 %v7646
    %9670 = vmatpush.bf16.msra.mxu0 %v7630
    %9671 = vmatmul.bf16.gmra.mxu0 %v2850
    %v9672 = vpop.f32.mrf.mxu0
    %v9673 = vadd.f32 %v9659, %v9672
    %v9674 = vpop.f32.mrf.mxu0
    %v9675 = vadd.f32 %v9661, %v9674
    %9676 = vdwg.mxu0
    %9677 = vmatpush.bf16.msra.mxu0 %v7870
    %9678 = vmatpush.bf16.msra.mxu0 %v7854
    %9679 = vmatpush.bf16.msra.mxu0 %v7838
    %9680 = vmatpush.bf16.msra.mxu0 %v7822
    %9681 = vmatpush.bf16.msra.mxu0 %v7806
    %9682 = vmatpush.bf16.msra.mxu0 %v7790
    %9683 = vmatpush.bf16.msra.mxu0 %v7774
    %9684 = vmatpush.bf16.msra.mxu0 %v7758
    %9685 = vmatmul.bf16.gmra.mxu0 %v2851
    %v9686 = vpop.f32.mrf.mxu0
    %v9687 = vadd.f32 %v9673, %v9686
    %v9688 = vpop.f32.mrf.mxu0
    %v9689 = vadd.f32 %v9675, %v9688
    %9690 = vdwg.mxu0
    %9691 = vmatpush.bf16.msra.mxu0 %v7998
    %9692 = vmatpush.bf16.msra.mxu0 %v7982
    %9693 = vmatpush.bf16.msra.mxu0 %v7966
    %9694 = vmatpush.bf16.msra.mxu0 %v7950
    %9695 = vmatpush.bf16.msra.mxu0 %v7934
    %9696 = vmatpush.bf16.msra.mxu0 %v7918
    %9697 = vmatpush.bf16.msra.mxu0 %v7902
    %9698 = vmatpush.bf16.msra.mxu0 %v7886
    %9699 = vmatmul.bf16.gmra.mxu0 %v2852
    %v9700 = vpop.f32.mrf.mxu0
    %v9701 = vadd.f32 %v9687, %v9700
    %v9702 = vpop.f32.mrf.mxu0
    %v9703 = vadd.f32 %v9689, %v9702
    %9704 = vdwg.mxu0
    %9705 = vmatpush.bf16.msra.mxu0 %v7103
    %9706 = vmatpush.bf16.msra.mxu0 %v7087
    %9707 = vmatpush.bf16.msra.mxu0 %v7071
    %9708 = vmatpush.bf16.msra.mxu0 %v7055
    %9709 = vmatpush.bf16.msra.mxu0 %v7039
    %9710 = vmatpush.bf16.msra.mxu0 %v7023
    %9711 = vmatpush.bf16.msra.mxu0 %v7007
    %9712 = vmatpush.bf16.msra.mxu0 %v6991
    %9713 = vmatmul.bf16.gmra.mxu0 %v2845
    %v9714 = vpop.f32.mrf.mxu0
    %v9715 = vadd.f32 %v3887, %v9714
    %v9716 = vpop.f32.mrf.mxu0
    %v9717 = vadd.f32 %v3887, %v9716
    %9718 = vdwg.mxu0
    %9719 = vmatpush.bf16.msra.mxu0 %v7231
    %9720 = vmatpush.bf16.msra.mxu0 %v7215
    %9721 = vmatpush.bf16.msra.mxu0 %v7199
    %9722 = vmatpush.bf16.msra.mxu0 %v7183
    %9723 = vmatpush.bf16.msra.mxu0 %v7167
    %9724 = vmatpush.bf16.msra.mxu0 %v7151
    %9725 = vmatpush.bf16.msra.mxu0 %v7135
    %9726 = vmatpush.bf16.msra.mxu0 %v7119
    %9727 = vmatmul.bf16.gmra.mxu0 %v2846
    %v9728 = vpop.f32.mrf.mxu0
    %v9729 = vadd.f32 %v9715, %v9728
    %v9730 = vpop.f32.mrf.mxu0
    %v9731 = vadd.f32 %v9717, %v9730
    %9732 = vdwg.mxu0
    %9733 = vmatpush.bf16.msra.mxu0 %v7359
    %9734 = vmatpush.bf16.msra.mxu0 %v7343
    %9735 = vmatpush.bf16.msra.mxu0 %v7327
    %9736 = vmatpush.bf16.msra.mxu0 %v7311
    %9737 = vmatpush.bf16.msra.mxu0 %v7295
    %9738 = vmatpush.bf16.msra.mxu0 %v7279
    %9739 = vmatpush.bf16.msra.mxu0 %v7263
    %9740 = vmatpush.bf16.msra.mxu0 %v7247
    %9741 = vmatmul.bf16.gmra.mxu0 %v2847
    %v9742 = vpop.f32.mrf.mxu0
    %v9743 = vadd.f32 %v9729, %v9742
    %v9744 = vpop.f32.mrf.mxu0
    %v9745 = vadd.f32 %v9731, %v9744
    %9746 = vdwg.mxu0
    %9747 = vmatpush.bf16.msra.mxu0 %v7487
    %9748 = vmatpush.bf16.msra.mxu0 %v7471
    %9749 = vmatpush.bf16.msra.mxu0 %v7455
    %9750 = vmatpush.bf16.msra.mxu0 %v7439
    %9751 = vmatpush.bf16.msra.mxu0 %v7423
    %9752 = vmatpush.bf16.msra.mxu0 %v7407
    %9753 = vmatpush.bf16.msra.mxu0 %v7391
    %9754 = vmatpush.bf16.msra.mxu0 %v7375
    %9755 = vmatmul.bf16.gmra.mxu0 %v2848
    %v9756 = vpop.f32.mrf.mxu0
    %v9757 = vadd.f32 %v9743, %v9756
    %v9758 = vpop.f32.mrf.mxu0
    %v9759 = vadd.f32 %v9745, %v9758
    %9760 = vdwg.mxu0
    %9761 = vmatpush.bf16.msra.mxu0 %v7615
    %9762 = vmatpush.bf16.msra.mxu0 %v7599
    %9763 = vmatpush.bf16.msra.mxu0 %v7583
    %9764 = vmatpush.bf16.msra.mxu0 %v7567
    %9765 = vmatpush.bf16.msra.mxu0 %v7551
    %9766 = vmatpush.bf16.msra.mxu0 %v7535
    %9767 = vmatpush.bf16.msra.mxu0 %v7519
    %9768 = vmatpush.bf16.msra.mxu0 %v7503
    %9769 = vmatmul.bf16.gmra.mxu0 %v2849
    %v9770 = vpop.f32.mrf.mxu0
    %v9771 = vadd.f32 %v9757, %v9770
    %v9772 = vpop.f32.mrf.mxu0
    %v9773 = vadd.f32 %v9759, %v9772
    %9774 = vdwg.mxu0
    %9775 = vmatpush.bf16.msra.mxu0 %v7743
    %9776 = vmatpush.bf16.msra.mxu0 %v7727
    %9777 = vmatpush.bf16.msra.mxu0 %v7711
    %9778 = vmatpush.bf16.msra.mxu0 %v7695
    %9779 = vmatpush.bf16.msra.mxu0 %v7679
    %9780 = vmatpush.bf16.msra.mxu0 %v7663
    %9781 = vmatpush.bf16.msra.mxu0 %v7647
    %9782 = vmatpush.bf16.msra.mxu0 %v7631
    %9783 = vmatmul.bf16.gmra.mxu0 %v2850
    %v9784 = vpop.f32.mrf.mxu0
    %v9785 = vadd.f32 %v9771, %v9784
    %v9786 = vpop.f32.mrf.mxu0
    %v9787 = vadd.f32 %v9773, %v9786
    %9788 = vdwg.mxu0
    %9789 = vmatpush.bf16.msra.mxu0 %v7871
    %9790 = vmatpush.bf16.msra.mxu0 %v7855
    %9791 = vmatpush.bf16.msra.mxu0 %v7839
    %9792 = vmatpush.bf16.msra.mxu0 %v7823
    %9793 = vmatpush.bf16.msra.mxu0 %v7807
    %9794 = vmatpush.bf16.msra.mxu0 %v7791
    %9795 = vmatpush.bf16.msra.mxu0 %v7775
    %9796 = vmatpush.bf16.msra.mxu0 %v7759
    %9797 = vmatmul.bf16.gmra.mxu0 %v2851
    %v9798 = vpop.f32.mrf.mxu0
    %v9799 = vadd.f32 %v9785, %v9798
    %v9800 = vpop.f32.mrf.mxu0
    %v9801 = vadd.f32 %v9787, %v9800
    %9802 = vdwg.mxu0
    %9803 = vmatpush.bf16.msra.mxu0 %v7999
    %9804 = vmatpush.bf16.msra.mxu0 %v7983
    %9805 = vmatpush.bf16.msra.mxu0 %v7967
    %9806 = vmatpush.bf16.msra.mxu0 %v7951
    %9807 = vmatpush.bf16.msra.mxu0 %v7935
    %9808 = vmatpush.bf16.msra.mxu0 %v7919
    %9809 = vmatpush.bf16.msra.mxu0 %v7903
    %9810 = vmatpush.bf16.msra.mxu0 %v7887
    %9811 = vmatmul.bf16.gmra.mxu0 %v2852
    %v9812 = vpop.f32.mrf.mxu0
    %v9813 = vadd.f32 %v9799, %v9812
    %v9814 = vpop.f32.mrf.mxu0
    %v9815 = vadd.f32 %v9801, %v9814
    %9816 = vdwg.mxu0
    %9817 = vmatpush.bf16.msra.mxu0 %v7104
    %9818 = vmatpush.bf16.msra.mxu0 %v7088
    %9819 = vmatpush.bf16.msra.mxu0 %v7072
    %9820 = vmatpush.bf16.msra.mxu0 %v7056
    %9821 = vmatpush.bf16.msra.mxu0 %v7040
    %9822 = vmatpush.bf16.msra.mxu0 %v7024
    %9823 = vmatpush.bf16.msra.mxu0 %v7008
    %9824 = vmatpush.bf16.msra.mxu0 %v6992
    %9825 = vmatmul.bf16.gmra.mxu0 %v2845
    %v9826 = vpop.f32.mrf.mxu0
    %v9827 = vadd.f32 %v3888, %v9826
    %v9828 = vpop.f32.mrf.mxu0
    %v9829 = vadd.f32 %v3888, %v9828
    %9830 = vdwg.mxu0
    %9831 = vmatpush.bf16.msra.mxu0 %v7232
    %9832 = vmatpush.bf16.msra.mxu0 %v7216
    %9833 = vmatpush.bf16.msra.mxu0 %v7200
    %9834 = vmatpush.bf16.msra.mxu0 %v7184
    %9835 = vmatpush.bf16.msra.mxu0 %v7168
    %9836 = vmatpush.bf16.msra.mxu0 %v7152
    %9837 = vmatpush.bf16.msra.mxu0 %v7136
    %9838 = vmatpush.bf16.msra.mxu0 %v7120
    %9839 = vmatmul.bf16.gmra.mxu0 %v2846
    %v9840 = vpop.f32.mrf.mxu0
    %v9841 = vadd.f32 %v9827, %v9840
    %v9842 = vpop.f32.mrf.mxu0
    %v9843 = vadd.f32 %v9829, %v9842
    %9844 = vdwg.mxu0
    %9845 = vmatpush.bf16.msra.mxu0 %v7360
    %9846 = vmatpush.bf16.msra.mxu0 %v7344
    %9847 = vmatpush.bf16.msra.mxu0 %v7328
    %9848 = vmatpush.bf16.msra.mxu0 %v7312
    %9849 = vmatpush.bf16.msra.mxu0 %v7296
    %9850 = vmatpush.bf16.msra.mxu0 %v7280
    %9851 = vmatpush.bf16.msra.mxu0 %v7264
    %9852 = vmatpush.bf16.msra.mxu0 %v7248
    %9853 = vmatmul.bf16.gmra.mxu0 %v2847
    %v9854 = vpop.f32.mrf.mxu0
    %v9855 = vadd.f32 %v9841, %v9854
    %v9856 = vpop.f32.mrf.mxu0
    %v9857 = vadd.f32 %v9843, %v9856
    %9858 = vdwg.mxu0
    %9859 = vmatpush.bf16.msra.mxu0 %v7488
    %9860 = vmatpush.bf16.msra.mxu0 %v7472
    %9861 = vmatpush.bf16.msra.mxu0 %v7456
    %9862 = vmatpush.bf16.msra.mxu0 %v7440
    %9863 = vmatpush.bf16.msra.mxu0 %v7424
    %9864 = vmatpush.bf16.msra.mxu0 %v7408
    %9865 = vmatpush.bf16.msra.mxu0 %v7392
    %9866 = vmatpush.bf16.msra.mxu0 %v7376
    %9867 = vmatmul.bf16.gmra.mxu0 %v2848
    %v9868 = vpop.f32.mrf.mxu0
    %v9869 = vadd.f32 %v9855, %v9868
    %v9870 = vpop.f32.mrf.mxu0
    %v9871 = vadd.f32 %v9857, %v9870
    %9872 = vdwg.mxu0
    %9873 = vmatpush.bf16.msra.mxu0 %v7616
    %9874 = vmatpush.bf16.msra.mxu0 %v7600
    %9875 = vmatpush.bf16.msra.mxu0 %v7584
    %9876 = vmatpush.bf16.msra.mxu0 %v7568
    %9877 = vmatpush.bf16.msra.mxu0 %v7552
    %9878 = vmatpush.bf16.msra.mxu0 %v7536
    %9879 = vmatpush.bf16.msra.mxu0 %v7520
    %9880 = vmatpush.bf16.msra.mxu0 %v7504
    %9881 = vmatmul.bf16.gmra.mxu0 %v2849
    %v9882 = vpop.f32.mrf.mxu0
    %v9883 = vadd.f32 %v9869, %v9882
    %v9884 = vpop.f32.mrf.mxu0
    %v9885 = vadd.f32 %v9871, %v9884
    %9886 = vdwg.mxu0
    %9887 = vmatpush.bf16.msra.mxu0 %v7744
    %9888 = vmatpush.bf16.msra.mxu0 %v7728
    %9889 = vmatpush.bf16.msra.mxu0 %v7712
    %9890 = vmatpush.bf16.msra.mxu0 %v7696
    %9891 = vmatpush.bf16.msra.mxu0 %v7680
    %9892 = vmatpush.bf16.msra.mxu0 %v7664
    %9893 = vmatpush.bf16.msra.mxu0 %v7648
    %9894 = vmatpush.bf16.msra.mxu0 %v7632
    %9895 = vmatmul.bf16.gmra.mxu0 %v2850
    %v9896 = vpop.f32.mrf.mxu0
    %v9897 = vadd.f32 %v9883, %v9896
    %v9898 = vpop.f32.mrf.mxu0
    %v9899 = vadd.f32 %v9885, %v9898
    %9900 = vdwg.mxu0
    %9901 = vmatpush.bf16.msra.mxu0 %v7872
    %9902 = vmatpush.bf16.msra.mxu0 %v7856
    %9903 = vmatpush.bf16.msra.mxu0 %v7840
    %9904 = vmatpush.bf16.msra.mxu0 %v7824
    %9905 = vmatpush.bf16.msra.mxu0 %v7808
    %9906 = vmatpush.bf16.msra.mxu0 %v7792
    %9907 = vmatpush.bf16.msra.mxu0 %v7776
    %9908 = vmatpush.bf16.msra.mxu0 %v7760
    %9909 = vmatmul.bf16.gmra.mxu0 %v2851
    %v9910 = vpop.f32.mrf.mxu0
    %v9911 = vadd.f32 %v9897, %v9910
    %v9912 = vpop.f32.mrf.mxu0
    %v9913 = vadd.f32 %v9899, %v9912
    %9914 = vdwg.mxu0
    %9915 = vmatpush.bf16.msra.mxu0 %v8000
    %9916 = vmatpush.bf16.msra.mxu0 %v7984
    %9917 = vmatpush.bf16.msra.mxu0 %v7968
    %9918 = vmatpush.bf16.msra.mxu0 %v7952
    %9919 = vmatpush.bf16.msra.mxu0 %v7936
    %9920 = vmatpush.bf16.msra.mxu0 %v7920
    %9921 = vmatpush.bf16.msra.mxu0 %v7904
    %9922 = vmatpush.bf16.msra.mxu0 %v7888
    %9923 = vmatmul.bf16.gmra.mxu0 %v2852
    %v9924 = vpop.f32.mrf.mxu0
    %v9925 = vadd.f32 %v9911, %v9924
    %v9926 = vpop.f32.mrf.mxu0
    %v9927 = vadd.f32 %v9913, %v9926
    %9928 = vdwg.mxu0
    %9929 = vmatpush.bf16.msra.mxu0 %v7105
    %9930 = vmatpush.bf16.msra.mxu0 %v7089
    %9931 = vmatpush.bf16.msra.mxu0 %v7073
    %9932 = vmatpush.bf16.msra.mxu0 %v7057
    %9933 = vmatpush.bf16.msra.mxu0 %v7041
    %9934 = vmatpush.bf16.msra.mxu0 %v7025
    %9935 = vmatpush.bf16.msra.mxu0 %v7009
    %9936 = vmatpush.bf16.msra.mxu0 %v6993
    %9937 = vmatmul.bf16.gmra.mxu0 %v2845
    %v9938 = vpop.f32.mrf.mxu0
    %v9939 = vadd.f32 %v3889, %v9938
    %v9940 = vpop.f32.mrf.mxu0
    %v9941 = vadd.f32 %v3889, %v9940
    %9942 = vdwg.mxu0
    %9943 = vmatpush.bf16.msra.mxu0 %v7233
    %9944 = vmatpush.bf16.msra.mxu0 %v7217
    %9945 = vmatpush.bf16.msra.mxu0 %v7201
    %9946 = vmatpush.bf16.msra.mxu0 %v7185
    %9947 = vmatpush.bf16.msra.mxu0 %v7169
    %9948 = vmatpush.bf16.msra.mxu0 %v7153
    %9949 = vmatpush.bf16.msra.mxu0 %v7137
    %9950 = vmatpush.bf16.msra.mxu0 %v7121
    %9951 = vmatmul.bf16.gmra.mxu0 %v2846
    %v9952 = vpop.f32.mrf.mxu0
    %v9953 = vadd.f32 %v9939, %v9952
    %v9954 = vpop.f32.mrf.mxu0
    %v9955 = vadd.f32 %v9941, %v9954
    %9956 = vdwg.mxu0
    %9957 = vmatpush.bf16.msra.mxu0 %v7361
    %9958 = vmatpush.bf16.msra.mxu0 %v7345
    %9959 = vmatpush.bf16.msra.mxu0 %v7329
    %9960 = vmatpush.bf16.msra.mxu0 %v7313
    %9961 = vmatpush.bf16.msra.mxu0 %v7297
    %9962 = vmatpush.bf16.msra.mxu0 %v7281
    %9963 = vmatpush.bf16.msra.mxu0 %v7265
    %9964 = vmatpush.bf16.msra.mxu0 %v7249
    %9965 = vmatmul.bf16.gmra.mxu0 %v2847
    %v9966 = vpop.f32.mrf.mxu0
    %v9967 = vadd.f32 %v9953, %v9966
    %v9968 = vpop.f32.mrf.mxu0
    %v9969 = vadd.f32 %v9955, %v9968
    %9970 = vdwg.mxu0
    %9971 = vmatpush.bf16.msra.mxu0 %v7489
    %9972 = vmatpush.bf16.msra.mxu0 %v7473
    %9973 = vmatpush.bf16.msra.mxu0 %v7457
    %9974 = vmatpush.bf16.msra.mxu0 %v7441
    %9975 = vmatpush.bf16.msra.mxu0 %v7425
    %9976 = vmatpush.bf16.msra.mxu0 %v7409
    %9977 = vmatpush.bf16.msra.mxu0 %v7393
    %9978 = vmatpush.bf16.msra.mxu0 %v7377
    %9979 = vmatmul.bf16.gmra.mxu0 %v2848
    %v9980 = vpop.f32.mrf.mxu0
    %v9981 = vadd.f32 %v9967, %v9980
    %v9982 = vpop.f32.mrf.mxu0
    %v9983 = vadd.f32 %v9969, %v9982
    %9984 = vdwg.mxu0
    %9985 = vmatpush.bf16.msra.mxu0 %v7617
    %9986 = vmatpush.bf16.msra.mxu0 %v7601
    %9987 = vmatpush.bf16.msra.mxu0 %v7585
    %9988 = vmatpush.bf16.msra.mxu0 %v7569
    %9989 = vmatpush.bf16.msra.mxu0 %v7553
    %9990 = vmatpush.bf16.msra.mxu0 %v7537
    %9991 = vmatpush.bf16.msra.mxu0 %v7521
    %9992 = vmatpush.bf16.msra.mxu0 %v7505
    %9993 = vmatmul.bf16.gmra.mxu0 %v2849
    %v9994 = vpop.f32.mrf.mxu0
    %v9995 = vadd.f32 %v9981, %v9994
    %v9996 = vpop.f32.mrf.mxu0
    %v9997 = vadd.f32 %v9983, %v9996
    %9998 = vdwg.mxu0
    %9999 = vmatpush.bf16.msra.mxu0 %v7745
    %10000 = vmatpush.bf16.msra.mxu0 %v7729
    %10001 = vmatpush.bf16.msra.mxu0 %v7713
    %10002 = vmatpush.bf16.msra.mxu0 %v7697
    %10003 = vmatpush.bf16.msra.mxu0 %v7681
    %10004 = vmatpush.bf16.msra.mxu0 %v7665
    %10005 = vmatpush.bf16.msra.mxu0 %v7649
    %10006 = vmatpush.bf16.msra.mxu0 %v7633
    %10007 = vmatmul.bf16.gmra.mxu0 %v2850
    %v10008 = vpop.f32.mrf.mxu0
    %v10009 = vadd.f32 %v9995, %v10008
    %v10010 = vpop.f32.mrf.mxu0
    %v10011 = vadd.f32 %v9997, %v10010
    %10012 = vdwg.mxu0
    %10013 = vmatpush.bf16.msra.mxu0 %v7873
    %10014 = vmatpush.bf16.msra.mxu0 %v7857
    %10015 = vmatpush.bf16.msra.mxu0 %v7841
    %10016 = vmatpush.bf16.msra.mxu0 %v7825
    %10017 = vmatpush.bf16.msra.mxu0 %v7809
    %10018 = vmatpush.bf16.msra.mxu0 %v7793
    %10019 = vmatpush.bf16.msra.mxu0 %v7777
    %10020 = vmatpush.bf16.msra.mxu0 %v7761
    %10021 = vmatmul.bf16.gmra.mxu0 %v2851
    %v10022 = vpop.f32.mrf.mxu0
    %v10023 = vadd.f32 %v10009, %v10022
    %v10024 = vpop.f32.mrf.mxu0
    %v10025 = vadd.f32 %v10011, %v10024
    %10026 = vdwg.mxu0
    %10027 = vmatpush.bf16.msra.mxu0 %v8001
    %10028 = vmatpush.bf16.msra.mxu0 %v7985
    %10029 = vmatpush.bf16.msra.mxu0 %v7969
    %10030 = vmatpush.bf16.msra.mxu0 %v7953
    %10031 = vmatpush.bf16.msra.mxu0 %v7937
    %10032 = vmatpush.bf16.msra.mxu0 %v7921
    %10033 = vmatpush.bf16.msra.mxu0 %v7905
    %10034 = vmatpush.bf16.msra.mxu0 %v7889
    %10035 = vmatmul.bf16.gmra.mxu0 %v2852
    %v10036 = vpop.f32.mrf.mxu0
    %v10037 = vadd.f32 %v10023, %v10036
    %v10038 = vpop.f32.mrf.mxu0
    %v10039 = vadd.f32 %v10025, %v10038
    %10040 = vdwg.mxu0
    %10041 = vmatpush.bf16.msra.mxu0 %v7106
    %10042 = vmatpush.bf16.msra.mxu0 %v7090
    %10043 = vmatpush.bf16.msra.mxu0 %v7074
    %10044 = vmatpush.bf16.msra.mxu0 %v7058
    %10045 = vmatpush.bf16.msra.mxu0 %v7042
    %10046 = vmatpush.bf16.msra.mxu0 %v7026
    %10047 = vmatpush.bf16.msra.mxu0 %v7010
    %10048 = vmatpush.bf16.msra.mxu0 %v6994
    %10049 = vmatmul.bf16.gmra.mxu0 %v2845
    %v10050 = vpop.f32.mrf.mxu0
    %v10051 = vadd.f32 %v3890, %v10050
    %v10052 = vpop.f32.mrf.mxu0
    %v10053 = vadd.f32 %v3890, %v10052
    %10054 = vdwg.mxu0
    %10055 = vmatpush.bf16.msra.mxu0 %v7234
    %10056 = vmatpush.bf16.msra.mxu0 %v7218
    %10057 = vmatpush.bf16.msra.mxu0 %v7202
    %10058 = vmatpush.bf16.msra.mxu0 %v7186
    %10059 = vmatpush.bf16.msra.mxu0 %v7170
    %10060 = vmatpush.bf16.msra.mxu0 %v7154
    %10061 = vmatpush.bf16.msra.mxu0 %v7138
    %10062 = vmatpush.bf16.msra.mxu0 %v7122
    %10063 = vmatmul.bf16.gmra.mxu0 %v2846
    %v10064 = vpop.f32.mrf.mxu0
    %v10065 = vadd.f32 %v10051, %v10064
    %v10066 = vpop.f32.mrf.mxu0
    %v10067 = vadd.f32 %v10053, %v10066
    %10068 = vdwg.mxu0
    %10069 = vmatpush.bf16.msra.mxu0 %v7362
    %10070 = vmatpush.bf16.msra.mxu0 %v7346
    %10071 = vmatpush.bf16.msra.mxu0 %v7330
    %10072 = vmatpush.bf16.msra.mxu0 %v7314
    %10073 = vmatpush.bf16.msra.mxu0 %v7298
    %10074 = vmatpush.bf16.msra.mxu0 %v7282
    %10075 = vmatpush.bf16.msra.mxu0 %v7266
    %10076 = vmatpush.bf16.msra.mxu0 %v7250
    %10077 = vmatmul.bf16.gmra.mxu0 %v2847
    %v10078 = vpop.f32.mrf.mxu0
    %v10079 = vadd.f32 %v10065, %v10078
    %v10080 = vpop.f32.mrf.mxu0
    %v10081 = vadd.f32 %v10067, %v10080
    %10082 = vdwg.mxu0
    %10083 = vmatpush.bf16.msra.mxu0 %v7490
    %10084 = vmatpush.bf16.msra.mxu0 %v7474
    %10085 = vmatpush.bf16.msra.mxu0 %v7458
    %10086 = vmatpush.bf16.msra.mxu0 %v7442
    %10087 = vmatpush.bf16.msra.mxu0 %v7426
    %10088 = vmatpush.bf16.msra.mxu0 %v7410
    %10089 = vmatpush.bf16.msra.mxu0 %v7394
    %10090 = vmatpush.bf16.msra.mxu0 %v7378
    %10091 = vmatmul.bf16.gmra.mxu0 %v2848
    %v10092 = vpop.f32.mrf.mxu0
    %v10093 = vadd.f32 %v10079, %v10092
    %v10094 = vpop.f32.mrf.mxu0
    %v10095 = vadd.f32 %v10081, %v10094
    %10096 = vdwg.mxu0
    %10097 = vmatpush.bf16.msra.mxu0 %v7618
    %10098 = vmatpush.bf16.msra.mxu0 %v7602
    %10099 = vmatpush.bf16.msra.mxu0 %v7586
    %10100 = vmatpush.bf16.msra.mxu0 %v7570
    %10101 = vmatpush.bf16.msra.mxu0 %v7554
    %10102 = vmatpush.bf16.msra.mxu0 %v7538
    %10103 = vmatpush.bf16.msra.mxu0 %v7522
    %10104 = vmatpush.bf16.msra.mxu0 %v7506
    %10105 = vmatmul.bf16.gmra.mxu0 %v2849
    %v10106 = vpop.f32.mrf.mxu0
    %v10107 = vadd.f32 %v10093, %v10106
    %v10108 = vpop.f32.mrf.mxu0
    %v10109 = vadd.f32 %v10095, %v10108
    %10110 = vdwg.mxu0
    %10111 = vmatpush.bf16.msra.mxu0 %v7746
    %10112 = vmatpush.bf16.msra.mxu0 %v7730
    %10113 = vmatpush.bf16.msra.mxu0 %v7714
    %10114 = vmatpush.bf16.msra.mxu0 %v7698
    %10115 = vmatpush.bf16.msra.mxu0 %v7682
    %10116 = vmatpush.bf16.msra.mxu0 %v7666
    %10117 = vmatpush.bf16.msra.mxu0 %v7650
    %10118 = vmatpush.bf16.msra.mxu0 %v7634
    %10119 = vmatmul.bf16.gmra.mxu0 %v2850
    %v10120 = vpop.f32.mrf.mxu0
    %v10121 = vadd.f32 %v10107, %v10120
    %v10122 = vpop.f32.mrf.mxu0
    %v10123 = vadd.f32 %v10109, %v10122
    %10124 = vdwg.mxu0
    %10125 = vmatpush.bf16.msra.mxu0 %v7874
    %10126 = vmatpush.bf16.msra.mxu0 %v7858
    %10127 = vmatpush.bf16.msra.mxu0 %v7842
    %10128 = vmatpush.bf16.msra.mxu0 %v7826
    %10129 = vmatpush.bf16.msra.mxu0 %v7810
    %10130 = vmatpush.bf16.msra.mxu0 %v7794
    %10131 = vmatpush.bf16.msra.mxu0 %v7778
    %10132 = vmatpush.bf16.msra.mxu0 %v7762
    %10133 = vmatmul.bf16.gmra.mxu0 %v2851
    %v10134 = vpop.f32.mrf.mxu0
    %v10135 = vadd.f32 %v10121, %v10134
    %v10136 = vpop.f32.mrf.mxu0
    %v10137 = vadd.f32 %v10123, %v10136
    %10138 = vdwg.mxu0
    %10139 = vmatpush.bf16.msra.mxu0 %v8002
    %10140 = vmatpush.bf16.msra.mxu0 %v7986
    %10141 = vmatpush.bf16.msra.mxu0 %v7970
    %10142 = vmatpush.bf16.msra.mxu0 %v7954
    %10143 = vmatpush.bf16.msra.mxu0 %v7938
    %10144 = vmatpush.bf16.msra.mxu0 %v7922
    %10145 = vmatpush.bf16.msra.mxu0 %v7906
    %10146 = vmatpush.bf16.msra.mxu0 %v7890
    %10147 = vmatmul.bf16.gmra.mxu0 %v2852
    %v10148 = vpop.f32.mrf.mxu0
    %v10149 = vadd.f32 %v10135, %v10148
    %v10150 = vpop.f32.mrf.mxu0
    %v10151 = vadd.f32 %v10137, %v10150
    %10152 = vdwg.mxu0
    %10153 = vmatpush.bf16.msra.mxu0 %v7107
    %10154 = vmatpush.bf16.msra.mxu0 %v7091
    %10155 = vmatpush.bf16.msra.mxu0 %v7075
    %10156 = vmatpush.bf16.msra.mxu0 %v7059
    %10157 = vmatpush.bf16.msra.mxu0 %v7043
    %10158 = vmatpush.bf16.msra.mxu0 %v7027
    %10159 = vmatpush.bf16.msra.mxu0 %v7011
    %10160 = vmatpush.bf16.msra.mxu0 %v6995
    %10161 = vmatmul.bf16.gmra.mxu0 %v2845
    %v10162 = vpop.f32.mrf.mxu0
    %v10163 = vadd.f32 %v3891, %v10162
    %v10164 = vpop.f32.mrf.mxu0
    %v10165 = vadd.f32 %v3891, %v10164
    %10166 = vdwg.mxu0
    %10167 = vmatpush.bf16.msra.mxu0 %v7235
    %10168 = vmatpush.bf16.msra.mxu0 %v7219
    %10169 = vmatpush.bf16.msra.mxu0 %v7203
    %10170 = vmatpush.bf16.msra.mxu0 %v7187
    %10171 = vmatpush.bf16.msra.mxu0 %v7171
    %10172 = vmatpush.bf16.msra.mxu0 %v7155
    %10173 = vmatpush.bf16.msra.mxu0 %v7139
    %10174 = vmatpush.bf16.msra.mxu0 %v7123
    %10175 = vmatmul.bf16.gmra.mxu0 %v2846
    %v10176 = vpop.f32.mrf.mxu0
    %v10177 = vadd.f32 %v10163, %v10176
    %v10178 = vpop.f32.mrf.mxu0
    %v10179 = vadd.f32 %v10165, %v10178
    %10180 = vdwg.mxu0
    %10181 = vmatpush.bf16.msra.mxu0 %v7363
    %10182 = vmatpush.bf16.msra.mxu0 %v7347
    %10183 = vmatpush.bf16.msra.mxu0 %v7331
    %10184 = vmatpush.bf16.msra.mxu0 %v7315
    %10185 = vmatpush.bf16.msra.mxu0 %v7299
    %10186 = vmatpush.bf16.msra.mxu0 %v7283
    %10187 = vmatpush.bf16.msra.mxu0 %v7267
    %10188 = vmatpush.bf16.msra.mxu0 %v7251
    %10189 = vmatmul.bf16.gmra.mxu0 %v2847
    %v10190 = vpop.f32.mrf.mxu0
    %v10191 = vadd.f32 %v10177, %v10190
    %v10192 = vpop.f32.mrf.mxu0
    %v10193 = vadd.f32 %v10179, %v10192
    %10194 = vdwg.mxu0
    %10195 = vmatpush.bf16.msra.mxu0 %v7491
    %10196 = vmatpush.bf16.msra.mxu0 %v7475
    %10197 = vmatpush.bf16.msra.mxu0 %v7459
    %10198 = vmatpush.bf16.msra.mxu0 %v7443
    %10199 = vmatpush.bf16.msra.mxu0 %v7427
    %10200 = vmatpush.bf16.msra.mxu0 %v7411
    %10201 = vmatpush.bf16.msra.mxu0 %v7395
    %10202 = vmatpush.bf16.msra.mxu0 %v7379
    %10203 = vmatmul.bf16.gmra.mxu0 %v2848
    %v10204 = vpop.f32.mrf.mxu0
    %v10205 = vadd.f32 %v10191, %v10204
    %v10206 = vpop.f32.mrf.mxu0
    %v10207 = vadd.f32 %v10193, %v10206
    %10208 = vdwg.mxu0
    %10209 = vmatpush.bf16.msra.mxu0 %v7619
    %10210 = vmatpush.bf16.msra.mxu0 %v7603
    %10211 = vmatpush.bf16.msra.mxu0 %v7587
    %10212 = vmatpush.bf16.msra.mxu0 %v7571
    %10213 = vmatpush.bf16.msra.mxu0 %v7555
    %10214 = vmatpush.bf16.msra.mxu0 %v7539
    %10215 = vmatpush.bf16.msra.mxu0 %v7523
    %10216 = vmatpush.bf16.msra.mxu0 %v7507
    %10217 = vmatmul.bf16.gmra.mxu0 %v2849
    %v10218 = vpop.f32.mrf.mxu0
    %v10219 = vadd.f32 %v10205, %v10218
    %v10220 = vpop.f32.mrf.mxu0
    %v10221 = vadd.f32 %v10207, %v10220
    %10222 = vdwg.mxu0
    %10223 = vmatpush.bf16.msra.mxu0 %v7747
    %10224 = vmatpush.bf16.msra.mxu0 %v7731
    %10225 = vmatpush.bf16.msra.mxu0 %v7715
    %10226 = vmatpush.bf16.msra.mxu0 %v7699
    %10227 = vmatpush.bf16.msra.mxu0 %v7683
    %10228 = vmatpush.bf16.msra.mxu0 %v7667
    %10229 = vmatpush.bf16.msra.mxu0 %v7651
    %10230 = vmatpush.bf16.msra.mxu0 %v7635
    %10231 = vmatmul.bf16.gmra.mxu0 %v2850
    %v10232 = vpop.f32.mrf.mxu0
    %v10233 = vadd.f32 %v10219, %v10232
    %v10234 = vpop.f32.mrf.mxu0
    %v10235 = vadd.f32 %v10221, %v10234
    %10236 = vdwg.mxu0
    %10237 = vmatpush.bf16.msra.mxu0 %v7875
    %10238 = vmatpush.bf16.msra.mxu0 %v7859
    %10239 = vmatpush.bf16.msra.mxu0 %v7843
    %10240 = vmatpush.bf16.msra.mxu0 %v7827
    %10241 = vmatpush.bf16.msra.mxu0 %v7811
    %10242 = vmatpush.bf16.msra.mxu0 %v7795
    %10243 = vmatpush.bf16.msra.mxu0 %v7779
    %10244 = vmatpush.bf16.msra.mxu0 %v7763
    %10245 = vmatmul.bf16.gmra.mxu0 %v2851
    %v10246 = vpop.f32.mrf.mxu0
    %v10247 = vadd.f32 %v10233, %v10246
    %v10248 = vpop.f32.mrf.mxu0
    %v10249 = vadd.f32 %v10235, %v10248
    %10250 = vdwg.mxu0
    %10251 = vmatpush.bf16.msra.mxu0 %v8003
    %10252 = vmatpush.bf16.msra.mxu0 %v7987
    %10253 = vmatpush.bf16.msra.mxu0 %v7971
    %10254 = vmatpush.bf16.msra.mxu0 %v7955
    %10255 = vmatpush.bf16.msra.mxu0 %v7939
    %10256 = vmatpush.bf16.msra.mxu0 %v7923
    %10257 = vmatpush.bf16.msra.mxu0 %v7907
    %10258 = vmatpush.bf16.msra.mxu0 %v7891
    %10259 = vmatmul.bf16.gmra.mxu0 %v2852
    %v10260 = vpop.f32.mrf.mxu0
    %v10261 = vadd.f32 %v10247, %v10260
    %v10262 = vpop.f32.mrf.mxu0
    %v10263 = vadd.f32 %v10249, %v10262
    %10264 = vdwg.mxu0
    %10265 = vmatpush.bf16.msra.mxu0 %v7108
    %10266 = vmatpush.bf16.msra.mxu0 %v7092
    %10267 = vmatpush.bf16.msra.mxu0 %v7076
    %10268 = vmatpush.bf16.msra.mxu0 %v7060
    %10269 = vmatpush.bf16.msra.mxu0 %v7044
    %10270 = vmatpush.bf16.msra.mxu0 %v7028
    %10271 = vmatpush.bf16.msra.mxu0 %v7012
    %10272 = vmatpush.bf16.msra.mxu0 %v6996
    %10273 = vmatmul.bf16.gmra.mxu0 %v2845
    %v10274 = vpop.f32.mrf.mxu0
    %v10275 = vadd.f32 %v3892, %v10274
    %v10276 = vpop.f32.mrf.mxu0
    %v10277 = vadd.f32 %v3892, %v10276
    %10278 = vdwg.mxu0
    %10279 = vmatpush.bf16.msra.mxu0 %v7236
    %10280 = vmatpush.bf16.msra.mxu0 %v7220
    %10281 = vmatpush.bf16.msra.mxu0 %v7204
    %10282 = vmatpush.bf16.msra.mxu0 %v7188
    %10283 = vmatpush.bf16.msra.mxu0 %v7172
    %10284 = vmatpush.bf16.msra.mxu0 %v7156
    %10285 = vmatpush.bf16.msra.mxu0 %v7140
    %10286 = vmatpush.bf16.msra.mxu0 %v7124
    %10287 = vmatmul.bf16.gmra.mxu0 %v2846
    %v10288 = vpop.f32.mrf.mxu0
    %v10289 = vadd.f32 %v10275, %v10288
    %v10290 = vpop.f32.mrf.mxu0
    %v10291 = vadd.f32 %v10277, %v10290
    %10292 = vdwg.mxu0
    %10293 = vmatpush.bf16.msra.mxu0 %v7364
    %10294 = vmatpush.bf16.msra.mxu0 %v7348
    %10295 = vmatpush.bf16.msra.mxu0 %v7332
    %10296 = vmatpush.bf16.msra.mxu0 %v7316
    %10297 = vmatpush.bf16.msra.mxu0 %v7300
    %10298 = vmatpush.bf16.msra.mxu0 %v7284
    %10299 = vmatpush.bf16.msra.mxu0 %v7268
    %10300 = vmatpush.bf16.msra.mxu0 %v7252
    %10301 = vmatmul.bf16.gmra.mxu0 %v2847
    %v10302 = vpop.f32.mrf.mxu0
    %v10303 = vadd.f32 %v10289, %v10302
    %v10304 = vpop.f32.mrf.mxu0
    %v10305 = vadd.f32 %v10291, %v10304
    %10306 = vdwg.mxu0
    %10307 = vmatpush.bf16.msra.mxu0 %v7492
    %10308 = vmatpush.bf16.msra.mxu0 %v7476
    %10309 = vmatpush.bf16.msra.mxu0 %v7460
    %10310 = vmatpush.bf16.msra.mxu0 %v7444
    %10311 = vmatpush.bf16.msra.mxu0 %v7428
    %10312 = vmatpush.bf16.msra.mxu0 %v7412
    %10313 = vmatpush.bf16.msra.mxu0 %v7396
    %10314 = vmatpush.bf16.msra.mxu0 %v7380
    %10315 = vmatmul.bf16.gmra.mxu0 %v2848
    %v10316 = vpop.f32.mrf.mxu0
    %v10317 = vadd.f32 %v10303, %v10316
    %v10318 = vpop.f32.mrf.mxu0
    %v10319 = vadd.f32 %v10305, %v10318
    %10320 = vdwg.mxu0
    %10321 = vmatpush.bf16.msra.mxu0 %v7620
    %10322 = vmatpush.bf16.msra.mxu0 %v7604
    %10323 = vmatpush.bf16.msra.mxu0 %v7588
    %10324 = vmatpush.bf16.msra.mxu0 %v7572
    %10325 = vmatpush.bf16.msra.mxu0 %v7556
    %10326 = vmatpush.bf16.msra.mxu0 %v7540
    %10327 = vmatpush.bf16.msra.mxu0 %v7524
    %10328 = vmatpush.bf16.msra.mxu0 %v7508
    %10329 = vmatmul.bf16.gmra.mxu0 %v2849
    %v10330 = vpop.f32.mrf.mxu0
    %v10331 = vadd.f32 %v10317, %v10330
    %v10332 = vpop.f32.mrf.mxu0
    %v10333 = vadd.f32 %v10319, %v10332
    %10334 = vdwg.mxu0
    %10335 = vmatpush.bf16.msra.mxu0 %v7748
    %10336 = vmatpush.bf16.msra.mxu0 %v7732
    %10337 = vmatpush.bf16.msra.mxu0 %v7716
    %10338 = vmatpush.bf16.msra.mxu0 %v7700
    %10339 = vmatpush.bf16.msra.mxu0 %v7684
    %10340 = vmatpush.bf16.msra.mxu0 %v7668
    %10341 = vmatpush.bf16.msra.mxu0 %v7652
    %10342 = vmatpush.bf16.msra.mxu0 %v7636
    %10343 = vmatmul.bf16.gmra.mxu0 %v2850
    %v10344 = vpop.f32.mrf.mxu0
    %v10345 = vadd.f32 %v10331, %v10344
    %v10346 = vpop.f32.mrf.mxu0
    %v10347 = vadd.f32 %v10333, %v10346
    %10348 = vdwg.mxu0
    %10349 = vmatpush.bf16.msra.mxu0 %v7876
    %10350 = vmatpush.bf16.msra.mxu0 %v7860
    %10351 = vmatpush.bf16.msra.mxu0 %v7844
    %10352 = vmatpush.bf16.msra.mxu0 %v7828
    %10353 = vmatpush.bf16.msra.mxu0 %v7812
    %10354 = vmatpush.bf16.msra.mxu0 %v7796
    %10355 = vmatpush.bf16.msra.mxu0 %v7780
    %10356 = vmatpush.bf16.msra.mxu0 %v7764
    %10357 = vmatmul.bf16.gmra.mxu0 %v2851
    %v10358 = vpop.f32.mrf.mxu0
    %v10359 = vadd.f32 %v10345, %v10358
    %v10360 = vpop.f32.mrf.mxu0
    %v10361 = vadd.f32 %v10347, %v10360
    %10362 = vdwg.mxu0
    %10363 = vmatpush.bf16.msra.mxu0 %v8004
    %10364 = vmatpush.bf16.msra.mxu0 %v7988
    %10365 = vmatpush.bf16.msra.mxu0 %v7972
    %10366 = vmatpush.bf16.msra.mxu0 %v7956
    %10367 = vmatpush.bf16.msra.mxu0 %v7940
    %10368 = vmatpush.bf16.msra.mxu0 %v7924
    %10369 = vmatpush.bf16.msra.mxu0 %v7908
    %10370 = vmatpush.bf16.msra.mxu0 %v7892
    %10371 = vmatmul.bf16.gmra.mxu0 %v2852
    %v10372 = vpop.f32.mrf.mxu0
    %v10373 = vadd.f32 %v10359, %v10372
    %v10374 = vpop.f32.mrf.mxu0
    %v10375 = vadd.f32 %v10361, %v10374
    %10376 = vdwg.mxu0
    %10377 = vmatpush.bf16.msra.mxu0 %v7109
    %10378 = vmatpush.bf16.msra.mxu0 %v7093
    %10379 = vmatpush.bf16.msra.mxu0 %v7077
    %10380 = vmatpush.bf16.msra.mxu0 %v7061
    %10381 = vmatpush.bf16.msra.mxu0 %v7045
    %10382 = vmatpush.bf16.msra.mxu0 %v7029
    %10383 = vmatpush.bf16.msra.mxu0 %v7013
    %10384 = vmatpush.bf16.msra.mxu0 %v6997
    %10385 = vmatmul.bf16.gmra.mxu0 %v2845
    %v10386 = vpop.f32.mrf.mxu0
    %v10387 = vadd.f32 %v3893, %v10386
    %v10388 = vpop.f32.mrf.mxu0
    %v10389 = vadd.f32 %v3893, %v10388
    %10390 = vdwg.mxu0
    %10391 = vmatpush.bf16.msra.mxu0 %v7237
    %10392 = vmatpush.bf16.msra.mxu0 %v7221
    %10393 = vmatpush.bf16.msra.mxu0 %v7205
    %10394 = vmatpush.bf16.msra.mxu0 %v7189
    %10395 = vmatpush.bf16.msra.mxu0 %v7173
    %10396 = vmatpush.bf16.msra.mxu0 %v7157
    %10397 = vmatpush.bf16.msra.mxu0 %v7141
    %10398 = vmatpush.bf16.msra.mxu0 %v7125
    %10399 = vmatmul.bf16.gmra.mxu0 %v2846
    %v10400 = vpop.f32.mrf.mxu0
    %v10401 = vadd.f32 %v10387, %v10400
    %v10402 = vpop.f32.mrf.mxu0
    %v10403 = vadd.f32 %v10389, %v10402
    %10404 = vdwg.mxu0
    %10405 = vmatpush.bf16.msra.mxu0 %v7365
    %10406 = vmatpush.bf16.msra.mxu0 %v7349
    %10407 = vmatpush.bf16.msra.mxu0 %v7333
    %10408 = vmatpush.bf16.msra.mxu0 %v7317
    %10409 = vmatpush.bf16.msra.mxu0 %v7301
    %10410 = vmatpush.bf16.msra.mxu0 %v7285
    %10411 = vmatpush.bf16.msra.mxu0 %v7269
    %10412 = vmatpush.bf16.msra.mxu0 %v7253
    %10413 = vmatmul.bf16.gmra.mxu0 %v2847
    %v10414 = vpop.f32.mrf.mxu0
    %v10415 = vadd.f32 %v10401, %v10414
    %v10416 = vpop.f32.mrf.mxu0
    %v10417 = vadd.f32 %v10403, %v10416
    %10418 = vdwg.mxu0
    %10419 = vmatpush.bf16.msra.mxu0 %v7493
    %10420 = vmatpush.bf16.msra.mxu0 %v7477
    %10421 = vmatpush.bf16.msra.mxu0 %v7461
    %10422 = vmatpush.bf16.msra.mxu0 %v7445
    %10423 = vmatpush.bf16.msra.mxu0 %v7429
    %10424 = vmatpush.bf16.msra.mxu0 %v7413
    %10425 = vmatpush.bf16.msra.mxu0 %v7397
    %10426 = vmatpush.bf16.msra.mxu0 %v7381
    %10427 = vmatmul.bf16.gmra.mxu0 %v2848
    %v10428 = vpop.f32.mrf.mxu0
    %v10429 = vadd.f32 %v10415, %v10428
    %v10430 = vpop.f32.mrf.mxu0
    %v10431 = vadd.f32 %v10417, %v10430
    %10432 = vdwg.mxu0
    %10433 = vmatpush.bf16.msra.mxu0 %v7621
    %10434 = vmatpush.bf16.msra.mxu0 %v7605
    %10435 = vmatpush.bf16.msra.mxu0 %v7589
    %10436 = vmatpush.bf16.msra.mxu0 %v7573
    %10437 = vmatpush.bf16.msra.mxu0 %v7557
    %10438 = vmatpush.bf16.msra.mxu0 %v7541
    %10439 = vmatpush.bf16.msra.mxu0 %v7525
    %10440 = vmatpush.bf16.msra.mxu0 %v7509
    %10441 = vmatmul.bf16.gmra.mxu0 %v2849
    %v10442 = vpop.f32.mrf.mxu0
    %v10443 = vadd.f32 %v10429, %v10442
    %v10444 = vpop.f32.mrf.mxu0
    %v10445 = vadd.f32 %v10431, %v10444
    %10446 = vdwg.mxu0
    %10447 = vmatpush.bf16.msra.mxu0 %v7749
    %10448 = vmatpush.bf16.msra.mxu0 %v7733
    %10449 = vmatpush.bf16.msra.mxu0 %v7717
    %10450 = vmatpush.bf16.msra.mxu0 %v7701
    %10451 = vmatpush.bf16.msra.mxu0 %v7685
    %10452 = vmatpush.bf16.msra.mxu0 %v7669
    %10453 = vmatpush.bf16.msra.mxu0 %v7653
    %10454 = vmatpush.bf16.msra.mxu0 %v7637
    %10455 = vmatmul.bf16.gmra.mxu0 %v2850
    %v10456 = vpop.f32.mrf.mxu0
    %v10457 = vadd.f32 %v10443, %v10456
    %v10458 = vpop.f32.mrf.mxu0
    %v10459 = vadd.f32 %v10445, %v10458
    %10460 = vdwg.mxu0
    %10461 = vmatpush.bf16.msra.mxu0 %v7877
    %10462 = vmatpush.bf16.msra.mxu0 %v7861
    %10463 = vmatpush.bf16.msra.mxu0 %v7845
    %10464 = vmatpush.bf16.msra.mxu0 %v7829
    %10465 = vmatpush.bf16.msra.mxu0 %v7813
    %10466 = vmatpush.bf16.msra.mxu0 %v7797
    %10467 = vmatpush.bf16.msra.mxu0 %v7781
    %10468 = vmatpush.bf16.msra.mxu0 %v7765
    %10469 = vmatmul.bf16.gmra.mxu0 %v2851
    %v10470 = vpop.f32.mrf.mxu0
    %v10471 = vadd.f32 %v10457, %v10470
    %v10472 = vpop.f32.mrf.mxu0
    %v10473 = vadd.f32 %v10459, %v10472
    %10474 = vdwg.mxu0
    %10475 = vmatpush.bf16.msra.mxu0 %v8005
    %10476 = vmatpush.bf16.msra.mxu0 %v7989
    %10477 = vmatpush.bf16.msra.mxu0 %v7973
    %10478 = vmatpush.bf16.msra.mxu0 %v7957
    %10479 = vmatpush.bf16.msra.mxu0 %v7941
    %10480 = vmatpush.bf16.msra.mxu0 %v7925
    %10481 = vmatpush.bf16.msra.mxu0 %v7909
    %10482 = vmatpush.bf16.msra.mxu0 %v7893
    %10483 = vmatmul.bf16.gmra.mxu0 %v2852
    %v10484 = vpop.f32.mrf.mxu0
    %v10485 = vadd.f32 %v10471, %v10484
    %v10486 = vpop.f32.mrf.mxu0
    %v10487 = vadd.f32 %v10473, %v10486
    %10488 = vdwg.mxu0
    %10489 = vmatpush.bf16.msra.mxu0 %v7110
    %10490 = vmatpush.bf16.msra.mxu0 %v7094
    %10491 = vmatpush.bf16.msra.mxu0 %v7078
    %10492 = vmatpush.bf16.msra.mxu0 %v7062
    %10493 = vmatpush.bf16.msra.mxu0 %v7046
    %10494 = vmatpush.bf16.msra.mxu0 %v7030
    %10495 = vmatpush.bf16.msra.mxu0 %v7014
    %10496 = vmatpush.bf16.msra.mxu0 %v6998
    %10497 = vmatmul.bf16.gmra.mxu0 %v2845
    %v10498 = vpop.f32.mrf.mxu0
    %v10499 = vadd.f32 %v3894, %v10498
    %v10500 = vpop.f32.mrf.mxu0
    %v10501 = vadd.f32 %v3894, %v10500
    %10502 = vdwg.mxu0
    %10503 = vmatpush.bf16.msra.mxu0 %v7238
    %10504 = vmatpush.bf16.msra.mxu0 %v7222
    %10505 = vmatpush.bf16.msra.mxu0 %v7206
    %10506 = vmatpush.bf16.msra.mxu0 %v7190
    %10507 = vmatpush.bf16.msra.mxu0 %v7174
    %10508 = vmatpush.bf16.msra.mxu0 %v7158
    %10509 = vmatpush.bf16.msra.mxu0 %v7142
    %10510 = vmatpush.bf16.msra.mxu0 %v7126
    %10511 = vmatmul.bf16.gmra.mxu0 %v2846
    %v10512 = vpop.f32.mrf.mxu0
    %v10513 = vadd.f32 %v10499, %v10512
    %v10514 = vpop.f32.mrf.mxu0
    %v10515 = vadd.f32 %v10501, %v10514
    %10516 = vdwg.mxu0
    %10517 = vmatpush.bf16.msra.mxu0 %v7366
    %10518 = vmatpush.bf16.msra.mxu0 %v7350
    %10519 = vmatpush.bf16.msra.mxu0 %v7334
    %10520 = vmatpush.bf16.msra.mxu0 %v7318
    %10521 = vmatpush.bf16.msra.mxu0 %v7302
    %10522 = vmatpush.bf16.msra.mxu0 %v7286
    %10523 = vmatpush.bf16.msra.mxu0 %v7270
    %10524 = vmatpush.bf16.msra.mxu0 %v7254
    %10525 = vmatmul.bf16.gmra.mxu0 %v2847
    %v10526 = vpop.f32.mrf.mxu0
    %v10527 = vadd.f32 %v10513, %v10526
    %v10528 = vpop.f32.mrf.mxu0
    %v10529 = vadd.f32 %v10515, %v10528
    %10530 = vdwg.mxu0
    %10531 = vmatpush.bf16.msra.mxu0 %v7494
    %10532 = vmatpush.bf16.msra.mxu0 %v7478
    %10533 = vmatpush.bf16.msra.mxu0 %v7462
    %10534 = vmatpush.bf16.msra.mxu0 %v7446
    %10535 = vmatpush.bf16.msra.mxu0 %v7430
    %10536 = vmatpush.bf16.msra.mxu0 %v7414
    %10537 = vmatpush.bf16.msra.mxu0 %v7398
    %10538 = vmatpush.bf16.msra.mxu0 %v7382
    %10539 = vmatmul.bf16.gmra.mxu0 %v2848
    %v10540 = vpop.f32.mrf.mxu0
    %v10541 = vadd.f32 %v10527, %v10540
    %v10542 = vpop.f32.mrf.mxu0
    %v10543 = vadd.f32 %v10529, %v10542
    %10544 = vdwg.mxu0
    %10545 = vmatpush.bf16.msra.mxu0 %v7622
    %10546 = vmatpush.bf16.msra.mxu0 %v7606
    %10547 = vmatpush.bf16.msra.mxu0 %v7590
    %10548 = vmatpush.bf16.msra.mxu0 %v7574
    %10549 = vmatpush.bf16.msra.mxu0 %v7558
    %10550 = vmatpush.bf16.msra.mxu0 %v7542
    %10551 = vmatpush.bf16.msra.mxu0 %v7526
    %10552 = vmatpush.bf16.msra.mxu0 %v7510
    %10553 = vmatmul.bf16.gmra.mxu0 %v2849
    %v10554 = vpop.f32.mrf.mxu0
    %v10555 = vadd.f32 %v10541, %v10554
    %v10556 = vpop.f32.mrf.mxu0
    %v10557 = vadd.f32 %v10543, %v10556
    %10558 = vdwg.mxu0
    %10559 = vmatpush.bf16.msra.mxu0 %v7750
    %10560 = vmatpush.bf16.msra.mxu0 %v7734
    %10561 = vmatpush.bf16.msra.mxu0 %v7718
    %10562 = vmatpush.bf16.msra.mxu0 %v7702
    %10563 = vmatpush.bf16.msra.mxu0 %v7686
    %10564 = vmatpush.bf16.msra.mxu0 %v7670
    %10565 = vmatpush.bf16.msra.mxu0 %v7654
    %10566 = vmatpush.bf16.msra.mxu0 %v7638
    %10567 = vmatmul.bf16.gmra.mxu0 %v2850
    %v10568 = vpop.f32.mrf.mxu0
    %v10569 = vadd.f32 %v10555, %v10568
    %v10570 = vpop.f32.mrf.mxu0
    %v10571 = vadd.f32 %v10557, %v10570
    %10572 = vdwg.mxu0
    %10573 = vmatpush.bf16.msra.mxu0 %v7878
    %10574 = vmatpush.bf16.msra.mxu0 %v7862
    %10575 = vmatpush.bf16.msra.mxu0 %v7846
    %10576 = vmatpush.bf16.msra.mxu0 %v7830
    %10577 = vmatpush.bf16.msra.mxu0 %v7814
    %10578 = vmatpush.bf16.msra.mxu0 %v7798
    %10579 = vmatpush.bf16.msra.mxu0 %v7782
    %10580 = vmatpush.bf16.msra.mxu0 %v7766
    %10581 = vmatmul.bf16.gmra.mxu0 %v2851
    %v10582 = vpop.f32.mrf.mxu0
    %v10583 = vadd.f32 %v10569, %v10582
    %v10584 = vpop.f32.mrf.mxu0
    %v10585 = vadd.f32 %v10571, %v10584
    %10586 = vdwg.mxu0
    %10587 = vmatpush.bf16.msra.mxu0 %v8006
    %10588 = vmatpush.bf16.msra.mxu0 %v7990
    %10589 = vmatpush.bf16.msra.mxu0 %v7974
    %10590 = vmatpush.bf16.msra.mxu0 %v7958
    %10591 = vmatpush.bf16.msra.mxu0 %v7942
    %10592 = vmatpush.bf16.msra.mxu0 %v7926
    %10593 = vmatpush.bf16.msra.mxu0 %v7910
    %10594 = vmatpush.bf16.msra.mxu0 %v7894
    %10595 = vmatmul.bf16.gmra.mxu0 %v2852
    %v10596 = vpop.f32.mrf.mxu0
    %v10597 = vadd.f32 %v10583, %v10596
    %v10598 = vpop.f32.mrf.mxu0
    %v10599 = vadd.f32 %v10585, %v10598
    %10600 = vdwg.mxu0
    %10601 = vmatpush.bf16.msra.mxu0 %v7111
    %10602 = vmatpush.bf16.msra.mxu0 %v7095
    %10603 = vmatpush.bf16.msra.mxu0 %v7079
    %10604 = vmatpush.bf16.msra.mxu0 %v7063
    %10605 = vmatpush.bf16.msra.mxu0 %v7047
    %10606 = vmatpush.bf16.msra.mxu0 %v7031
    %10607 = vmatpush.bf16.msra.mxu0 %v7015
    %10608 = vmatpush.bf16.msra.mxu0 %v6999
    %10609 = vmatmul.bf16.gmra.mxu0 %v2845
    %v10610 = vpop.f32.mrf.mxu0
    %v10611 = vadd.f32 %v3895, %v10610
    %v10612 = vpop.f32.mrf.mxu0
    %v10613 = vadd.f32 %v3895, %v10612
    %10614 = vdwg.mxu0
    %10615 = vmatpush.bf16.msra.mxu0 %v7239
    %10616 = vmatpush.bf16.msra.mxu0 %v7223
    %10617 = vmatpush.bf16.msra.mxu0 %v7207
    %10618 = vmatpush.bf16.msra.mxu0 %v7191
    %10619 = vmatpush.bf16.msra.mxu0 %v7175
    %10620 = vmatpush.bf16.msra.mxu0 %v7159
    %10621 = vmatpush.bf16.msra.mxu0 %v7143
    %10622 = vmatpush.bf16.msra.mxu0 %v7127
    %10623 = vmatmul.bf16.gmra.mxu0 %v2846
    %v10624 = vpop.f32.mrf.mxu0
    %v10625 = vadd.f32 %v10611, %v10624
    %v10626 = vpop.f32.mrf.mxu0
    %v10627 = vadd.f32 %v10613, %v10626
    %10628 = vdwg.mxu0
    %10629 = vmatpush.bf16.msra.mxu0 %v7367
    %10630 = vmatpush.bf16.msra.mxu0 %v7351
    %10631 = vmatpush.bf16.msra.mxu0 %v7335
    %10632 = vmatpush.bf16.msra.mxu0 %v7319
    %10633 = vmatpush.bf16.msra.mxu0 %v7303
    %10634 = vmatpush.bf16.msra.mxu0 %v7287
    %10635 = vmatpush.bf16.msra.mxu0 %v7271
    %10636 = vmatpush.bf16.msra.mxu0 %v7255
    %10637 = vmatmul.bf16.gmra.mxu0 %v2847
    %v10638 = vpop.f32.mrf.mxu0
    %v10639 = vadd.f32 %v10625, %v10638
    %v10640 = vpop.f32.mrf.mxu0
    %v10641 = vadd.f32 %v10627, %v10640
    %10642 = vdwg.mxu0
    %10643 = vmatpush.bf16.msra.mxu0 %v7495
    %10644 = vmatpush.bf16.msra.mxu0 %v7479
    %10645 = vmatpush.bf16.msra.mxu0 %v7463
    %10646 = vmatpush.bf16.msra.mxu0 %v7447
    %10647 = vmatpush.bf16.msra.mxu0 %v7431
    %10648 = vmatpush.bf16.msra.mxu0 %v7415
    %10649 = vmatpush.bf16.msra.mxu0 %v7399
    %10650 = vmatpush.bf16.msra.mxu0 %v7383
    %10651 = vmatmul.bf16.gmra.mxu0 %v2848
    %v10652 = vpop.f32.mrf.mxu0
    %v10653 = vadd.f32 %v10639, %v10652
    %v10654 = vpop.f32.mrf.mxu0
    %v10655 = vadd.f32 %v10641, %v10654
    %10656 = vdwg.mxu0
    %10657 = vmatpush.bf16.msra.mxu0 %v7623
    %10658 = vmatpush.bf16.msra.mxu0 %v7607
    %10659 = vmatpush.bf16.msra.mxu0 %v7591
    %10660 = vmatpush.bf16.msra.mxu0 %v7575
    %10661 = vmatpush.bf16.msra.mxu0 %v7559
    %10662 = vmatpush.bf16.msra.mxu0 %v7543
    %10663 = vmatpush.bf16.msra.mxu0 %v7527
    %10664 = vmatpush.bf16.msra.mxu0 %v7511
    %10665 = vmatmul.bf16.gmra.mxu0 %v2849
    %v10666 = vpop.f32.mrf.mxu0
    %v10667 = vadd.f32 %v10653, %v10666
    %v10668 = vpop.f32.mrf.mxu0
    %v10669 = vadd.f32 %v10655, %v10668
    %10670 = vdwg.mxu0
    %10671 = vmatpush.bf16.msra.mxu0 %v7751
    %10672 = vmatpush.bf16.msra.mxu0 %v7735
    %10673 = vmatpush.bf16.msra.mxu0 %v7719
    %10674 = vmatpush.bf16.msra.mxu0 %v7703
    %10675 = vmatpush.bf16.msra.mxu0 %v7687
    %10676 = vmatpush.bf16.msra.mxu0 %v7671
    %10677 = vmatpush.bf16.msra.mxu0 %v7655
    %10678 = vmatpush.bf16.msra.mxu0 %v7639
    %10679 = vmatmul.bf16.gmra.mxu0 %v2850
    %v10680 = vpop.f32.mrf.mxu0
    %v10681 = vadd.f32 %v10667, %v10680
    %v10682 = vpop.f32.mrf.mxu0
    %v10683 = vadd.f32 %v10669, %v10682
    %10684 = vdwg.mxu0
    %10685 = vmatpush.bf16.msra.mxu0 %v7879
    %10686 = vmatpush.bf16.msra.mxu0 %v7863
    %10687 = vmatpush.bf16.msra.mxu0 %v7847
    %10688 = vmatpush.bf16.msra.mxu0 %v7831
    %10689 = vmatpush.bf16.msra.mxu0 %v7815
    %10690 = vmatpush.bf16.msra.mxu0 %v7799
    %10691 = vmatpush.bf16.msra.mxu0 %v7783
    %10692 = vmatpush.bf16.msra.mxu0 %v7767
    %10693 = vmatmul.bf16.gmra.mxu0 %v2851
    %v10694 = vpop.f32.mrf.mxu0
    %v10695 = vadd.f32 %v10681, %v10694
    %v10696 = vpop.f32.mrf.mxu0
    %v10697 = vadd.f32 %v10683, %v10696
    %10698 = vdwg.mxu0
    %10699 = vmatpush.bf16.msra.mxu0 %v8007
    %10700 = vmatpush.bf16.msra.mxu0 %v7991
    %10701 = vmatpush.bf16.msra.mxu0 %v7975
    %10702 = vmatpush.bf16.msra.mxu0 %v7959
    %10703 = vmatpush.bf16.msra.mxu0 %v7943
    %10704 = vmatpush.bf16.msra.mxu0 %v7927
    %10705 = vmatpush.bf16.msra.mxu0 %v7911
    %10706 = vmatpush.bf16.msra.mxu0 %v7895
    %10707 = vmatmul.bf16.gmra.mxu0 %v2852
    %v10708 = vpop.f32.mrf.mxu0
    %v10709 = vadd.f32 %v10695, %v10708
    %v10710 = vpop.f32.mrf.mxu0
    %v10711 = vadd.f32 %v10697, %v10710
    %10712 = vdwg.mxu0
    %10713 = vmatpush.bf16.msra.mxu0 %v7112
    %10714 = vmatpush.bf16.msra.mxu0 %v7096
    %10715 = vmatpush.bf16.msra.mxu0 %v7080
    %10716 = vmatpush.bf16.msra.mxu0 %v7064
    %10717 = vmatpush.bf16.msra.mxu0 %v7048
    %10718 = vmatpush.bf16.msra.mxu0 %v7032
    %10719 = vmatpush.bf16.msra.mxu0 %v7016
    %10720 = vmatpush.bf16.msra.mxu0 %v7000
    %10721 = vmatmul.bf16.gmra.mxu0 %v2845
    %v10722 = vpop.f32.mrf.mxu0
    %v10723 = vadd.f32 %v3896, %v10722
    %v10724 = vpop.f32.mrf.mxu0
    %v10725 = vadd.f32 %v3896, %v10724
    %10726 = vdwg.mxu0
    %10727 = vmatpush.bf16.msra.mxu0 %v7240
    %10728 = vmatpush.bf16.msra.mxu0 %v7224
    %10729 = vmatpush.bf16.msra.mxu0 %v7208
    %10730 = vmatpush.bf16.msra.mxu0 %v7192
    %10731 = vmatpush.bf16.msra.mxu0 %v7176
    %10732 = vmatpush.bf16.msra.mxu0 %v7160
    %10733 = vmatpush.bf16.msra.mxu0 %v7144
    %10734 = vmatpush.bf16.msra.mxu0 %v7128
    %10735 = vmatmul.bf16.gmra.mxu0 %v2846
    %v10736 = vpop.f32.mrf.mxu0
    %v10737 = vadd.f32 %v10723, %v10736
    %v10738 = vpop.f32.mrf.mxu0
    %v10739 = vadd.f32 %v10725, %v10738
    %10740 = vdwg.mxu0
    %10741 = vmatpush.bf16.msra.mxu0 %v7368
    %10742 = vmatpush.bf16.msra.mxu0 %v7352
    %10743 = vmatpush.bf16.msra.mxu0 %v7336
    %10744 = vmatpush.bf16.msra.mxu0 %v7320
    %10745 = vmatpush.bf16.msra.mxu0 %v7304
    %10746 = vmatpush.bf16.msra.mxu0 %v7288
    %10747 = vmatpush.bf16.msra.mxu0 %v7272
    %10748 = vmatpush.bf16.msra.mxu0 %v7256
    %10749 = vmatmul.bf16.gmra.mxu0 %v2847
    %v10750 = vpop.f32.mrf.mxu0
    %v10751 = vadd.f32 %v10737, %v10750
    %v10752 = vpop.f32.mrf.mxu0
    %v10753 = vadd.f32 %v10739, %v10752
    %10754 = vdwg.mxu0
    %10755 = vmatpush.bf16.msra.mxu0 %v7496
    %10756 = vmatpush.bf16.msra.mxu0 %v7480
    %10757 = vmatpush.bf16.msra.mxu0 %v7464
    %10758 = vmatpush.bf16.msra.mxu0 %v7448
    %10759 = vmatpush.bf16.msra.mxu0 %v7432
    %10760 = vmatpush.bf16.msra.mxu0 %v7416
    %10761 = vmatpush.bf16.msra.mxu0 %v7400
    %10762 = vmatpush.bf16.msra.mxu0 %v7384
    %10763 = vmatmul.bf16.gmra.mxu0 %v2848
    %v10764 = vpop.f32.mrf.mxu0
    %v10765 = vadd.f32 %v10751, %v10764
    %v10766 = vpop.f32.mrf.mxu0
    %v10767 = vadd.f32 %v10753, %v10766
    %10768 = vdwg.mxu0
    %10769 = vmatpush.bf16.msra.mxu0 %v7624
    %10770 = vmatpush.bf16.msra.mxu0 %v7608
    %10771 = vmatpush.bf16.msra.mxu0 %v7592
    %10772 = vmatpush.bf16.msra.mxu0 %v7576
    %10773 = vmatpush.bf16.msra.mxu0 %v7560
    %10774 = vmatpush.bf16.msra.mxu0 %v7544
    %10775 = vmatpush.bf16.msra.mxu0 %v7528
    %10776 = vmatpush.bf16.msra.mxu0 %v7512
    %10777 = vmatmul.bf16.gmra.mxu0 %v2849
    %v10778 = vpop.f32.mrf.mxu0
    %v10779 = vadd.f32 %v10765, %v10778
    %v10780 = vpop.f32.mrf.mxu0
    %v10781 = vadd.f32 %v10767, %v10780
    %10782 = vdwg.mxu0
    %10783 = vmatpush.bf16.msra.mxu0 %v7752
    %10784 = vmatpush.bf16.msra.mxu0 %v7736
    %10785 = vmatpush.bf16.msra.mxu0 %v7720
    %10786 = vmatpush.bf16.msra.mxu0 %v7704
    %10787 = vmatpush.bf16.msra.mxu0 %v7688
    %10788 = vmatpush.bf16.msra.mxu0 %v7672
    %10789 = vmatpush.bf16.msra.mxu0 %v7656
    %10790 = vmatpush.bf16.msra.mxu0 %v7640
    %10791 = vmatmul.bf16.gmra.mxu0 %v2850
    %v10792 = vpop.f32.mrf.mxu0
    %v10793 = vadd.f32 %v10779, %v10792
    %v10794 = vpop.f32.mrf.mxu0
    %v10795 = vadd.f32 %v10781, %v10794
    %10796 = vdwg.mxu0
    %10797 = vmatpush.bf16.msra.mxu0 %v7880
    %10798 = vmatpush.bf16.msra.mxu0 %v7864
    %10799 = vmatpush.bf16.msra.mxu0 %v7848
    %10800 = vmatpush.bf16.msra.mxu0 %v7832
    %10801 = vmatpush.bf16.msra.mxu0 %v7816
    %10802 = vmatpush.bf16.msra.mxu0 %v7800
    %10803 = vmatpush.bf16.msra.mxu0 %v7784
    %10804 = vmatpush.bf16.msra.mxu0 %v7768
    %10805 = vmatmul.bf16.gmra.mxu0 %v2851
    %v10806 = vpop.f32.mrf.mxu0
    %v10807 = vadd.f32 %v10793, %v10806
    %v10808 = vpop.f32.mrf.mxu0
    %v10809 = vadd.f32 %v10795, %v10808
    %10810 = vdwg.mxu0
    %10811 = vmatpush.bf16.msra.mxu0 %v8008
    %10812 = vmatpush.bf16.msra.mxu0 %v7992
    %10813 = vmatpush.bf16.msra.mxu0 %v7976
    %10814 = vmatpush.bf16.msra.mxu0 %v7960
    %10815 = vmatpush.bf16.msra.mxu0 %v7944
    %10816 = vmatpush.bf16.msra.mxu0 %v7928
    %10817 = vmatpush.bf16.msra.mxu0 %v7912
    %10818 = vmatpush.bf16.msra.mxu0 %v7896
    %10819 = vmatmul.bf16.gmra.mxu0 %v2852
    %v10820 = vpop.f32.mrf.mxu0
    %v10821 = vadd.f32 %v10807, %v10820
    %v10822 = vpop.f32.mrf.mxu0
    %v10823 = vadd.f32 %v10809, %v10822
    %10824 = vdwg.mxu0
    %v10825 = vtanh.pop %v9141
    %v10826 = vtanh.pop %v9253
    %v10827 = vtanh.pop %v9365
    %v10828 = vtanh.pop %v9477
    %v10829 = vtanh.pop %v9589
    %v10830 = vtanh.pop %v9701
    %v10831 = vtanh.pop %v9813
    %v10832 = vtanh.pop %v9925
    %v10833 = vtanh.pop %v10037
    %v10834 = vtanh.pop %v10149
    %v10835 = vtanh.pop %v10261
    %v10836 = vtanh.pop %v10373
    %v10837 = vtanh.pop %v10485
    %v10838 = vtanh.pop %v10597
    %v10839 = vtanh.pop %v10709
    %v10840 = vtanh.pop %v10821
    %v10841 = vtanh.pop %v9143
    %v10842 = vtanh.pop %v9255
    %v10843 = vtanh.pop %v9367
    %v10844 = vtanh.pop %v9479
    %v10845 = vtanh.pop %v9591
    %v10846 = vtanh.pop %v9703
    %v10847 = vtanh.pop %v9815
    %v10848 = vtanh.pop %v9927
    %v10849 = vtanh.pop %v10039
    %v10850 = vtanh.pop %v10151
    %v10851 = vtanh.pop %v10263
    %v10852 = vtanh.pop %v10375
    %v10853 = vtanh.pop %v10487
    %v10854 = vtanh.pop %v10599
    %v10855 = vtanh.pop %v10711
    %v10856 = vtanh.pop %v10823
    %10857 = vst [vmem:[#allocation17] sm:$0xff] %v10825
    %10858 = vst [vmem:[#allocation17 + $0x8] sm:$0xff] %v10826
    %10859 = vst [vmem:[#allocation17 + $0x10] sm:$0xff] %v10827
    %10860 = vst [vmem:[#allocation17 + $0x18] sm:$0xff] %v10828
    %10861 = vst [vmem:[#allocation17 + $0x20] sm:$0xff] %v10829
    %10862 = vst [vmem:[#allocation17 + $0x28] sm:$0xff] %v10830
    %10863 = vst [vmem:[#allocation17 + $0x30] sm:$0xff] %v10831
    %10864 = vst [vmem:[#allocation17 + $0x38] sm:$0xff] %v10832
    %10865 = vst [vmem:[#allocation17 + $0x40] sm:$0xff] %v10833
    %10866 = vst [vmem:[#allocation17 + $0x48] sm:$0xff] %v10834
    %10867 = vst [vmem:[#allocation17 + $0x50] sm:$0xff] %v10835
    %10868 = vst [vmem:[#allocation17 + $0x58] sm:$0xff] %v10836
    %10869 = vst [vmem:[#allocation17 + $0x60] sm:$0xff] %v10837
    %10870 = vst [vmem:[#allocation17 + $0x68] sm:$0xff] %v10838
    %10871 = vst [vmem:[#allocation17 + $0x70] sm:$0xff] %v10839
    %10872 = vst [vmem:[#allocation17 + $0x78] sm:$0xff] %v10840
    %10873 = vst [vmem:[#allocation17 + $0x80] sm:$0xff] %v10841
    %10874 = vst [vmem:[#allocation17 + $0x88] sm:$0xff] %v10842
    %10875 = vst [vmem:[#allocation17 + $0x90] sm:$0xff] %v10843
    %10876 = vst [vmem:[#allocation17 + $0x98] sm:$0xff] %v10844
    %10877 = vst [vmem:[#allocation17 + $0xa0] sm:$0xff] %v10845
    %10878 = vst [vmem:[#allocation17 + $0xa8] sm:$0xff] %v10846
    %10879 = vst [vmem:[#allocation17 + $0xb0] sm:$0xff] %v10847
    %10880 = vst [vmem:[#allocation17 + $0xb8] sm:$0xff] %v10848
    %10881 = vst [vmem:[#allocation17 + $0xc0] sm:$0xff] %v10849
    %10882 = vst [vmem:[#allocation17 + $0xc8] sm:$0xff] %v10850
    %10883 = vst [vmem:[#allocation17 + $0xd0] sm:$0xff] %v10851
    %10884 = vst [vmem:[#allocation17 + $0xd8] sm:$0xff] %v10852
    %10885 = vst [vmem:[#allocation17 + $0xe0] sm:$0xff] %v10853
    %10886 = vst [vmem:[#allocation17 + $0xe8] sm:$0xff] %v10854
    %10887 = vst [vmem:[#allocation17 + $0xf0] sm:$0xff] %v10855
    %10888 = vst [vmem:[#allocation17 + $0xf8] sm:$0xff] %v10856
    // Predicated region
    $region74: #{tpu_custom_call.1} parent=1 // pred_check
      _
    $region75: #{tpu_custom_call.1} parent=1 // pred_check_branch
      %10890 = sbr.rel (0) target = $region77
    $region76: #{tpu_custom_call.1} parent=1 // pred_region
      %10892 = vsyncadd [#allocation4], 0
      %s10893 = sshll.u32 [#allocation17], 4
      %s10894 = int_to_ptr.vmem [resolvable:$true] %s10893
      %s10895 = sshll.u32 %s9, 4
      %s10896 = int_to_ptr.hbm [resolvable:$true] %s10895
      %10901 = dma.vmem_to_hbm [thread:$0]  %s10894, 4096, %s10896, [#allocation4], 2048, 2048, 128
    $region77: #{tpu_custom_call.1} parent=1 // pred_fallthru
      _
    // Predicated region
    $region78: #{tpu_custom_call.1} parent=1 // pred_check
      _
    $region79: #{tpu_custom_call.1} parent=1 // pred_check_branch
      %10903 = sbr.rel (0) target = $region81
    $region80: #{tpu_custom_call.1} parent=1 // pred_region
      %10905 = dma.done [#allocation4], 4096
    $region81: #{tpu_custom_call.1} parent=1 // pred_fallthru
      _
    %10906 = vsyncpa [#allocation3], 1
    %10907 = vsyncpa [#allocation6], 1
    %10908 = vsyncpa [#allocation9], 1
    %10909 = vsyncpa [#allocation12], 1
    %10910 = vsyncpa [#allocation15], 1
    %10911 = vsyncpa [#allocation4], 1

</llo_original>
